<compile_context>
chip_gen: v7x
topology: tpu7x:2x2x1
jax: 0.10.0
libtpu: 0.0.40
codegen_flags: <defaults>
</compile_context>

<pallas_src>
import jax
import jax.numpy as jnp
from jax.experimental import pallas as pl
from jax.experimental.pallas import tpu as pltpu

EPS = 1e-6  # GeMFreq eps


def att_head_kernel(x_ref, p_ref, w1_ref, wh_ref, g_ref, out_ref):
    # x_ref : (C, F, L)     L = Bb*T, Bb batch elements folded into the lane axis
    # p_ref : (1,) SMEM     GeM power parameter
    # w1_ref: (A, C+1)      dense Linear weight, bias folded in as the last column
    # wh_ref: (2*NC, A+1)   fused [attention; fix_scale] 1x1 convs, biases folded in
    # g_ref : (L, Bb)       0/1 per-batch time-group sum matrix
    # out_ref: (NC, Bb)     lane-dense output block
    nc = out_ref.shape[0]
    L = x_ref.shape[-1]
    p = p_ref[0]
    inv_p = 1.0 / p

    # ---- GeMFreq: avg_pool2d(clamp(eps)^p, (F, 1))^(1/p) -> (C, L) ----
    xc = jnp.maximum(x_ref[...], EPS)              # clamp(min=eps) > 0
    xp = jnp.exp(p * jnp.log(xc))                  # xc ** p   (EUP-dominated work)
    pooled = jnp.mean(xp, axis=1)                  # mean over freq -> (C, L)
    gem = jnp.exp(jnp.log(pooled) * inv_p)         # pooled ** (1/p)

    ones_row = jnp.ones((1, L), jnp.float32)       # feeds the folded bias columns

    # ---- dense_layers: Linear(C->A) + ReLU (Dropouts are eval-mode identities) ----
    gem_aug = jnp.concatenate([gem, ones_row], axis=0)                        # (C+1, L)
    h = jnp.dot(w1_ref[...], gem_aug, preferred_element_type=jnp.float32)
    h = jnp.maximum(h, 0.0)                                                   # (A, L)

    # ---- fused attention / fix_scale 1x1 Conv1d: one matmul, biases folded ----
    h_aug = jnp.concatenate([h, ones_row], axis=0)                            # (A+1, L)
    heads = jnp.dot(wh_ref[...], h_aug, preferred_element_type=jnp.float32)   # (2NC, L)
    att = jnp.tanh(heads[:nc, :])                  # (NC, L), values in (-1, 1)
    fs = heads[nc:, :]                             # (NC, L)

    # ---- per-batch softmax over time + weighted sum (no in-kernel reshape) ----
    # tanh output is bounded, so exp needs no max subtraction; numerator and
    # denominator grouped sums are ONE matmul of the stacked (2*NC, L) against G.
    e = jnp.exp(att)                                                          # (NC, L)
    stacked = jnp.concatenate([e, fs * e], axis=0)                            # (2NC, L)
    sums = jnp.dot(stacked, g_ref[...], preferred_element_type=jnp.float32)   # (2NC, Bb)
    out_ref[...] = sums[nc:, :] * pl.reciprocal(sums[:nc, :], approx=True)


def _choose_block_batch(B, C, F, T):
    """How many batch elements to fold into the lane axis per grid step.

    Bb is a multiple of 128 so the (NC, Bb) output store is an unmasked, lane-dense
    vst and grid steps are few.  It is capped at 256 because G is (Bb*T, Bb) f32
    (O(Bb^2*T) VMEM/FLOPs) and v7x has only 64 MiB VMEM; B in (128, 512] keeps
    Bb=128 so there are >= 2 parallel grid blocks (both v7x TensorCores).  Small
    B (< 128) is padded up to one lane-dense block (padded lanes are wasted-but-safe
    work, discarded after the kernel).
    """
    vmem_cap = max(1, (4 << 20) // max(1, C * F * T * 4))  # keep x block <= ~4 MiB
    if vmem_cap < 128:
        return max(1, min(B, vmem_cap))   # VMEM-constrained fallback for huge C*F*T
    if B > 512:
        return min(256, vmem_cap)
    return 128


def att_head_forward(x, p_param, w1, b1, wa, ba, wf, bf):
    B, C, F, T = x.shape
    A = w1.shape[0]
    NC = wa.shape[0]

    Bb = _choose_block_batch(B, C, F, T)
    nblocks = pl.cdiv(B, Bb)
    Bp = nblocks * Bb
    L = Bb * T

    # Layout plumbing (pure XLA; allow_input_fusion lets XLA fold it into the
    # pallas_call operand instead of a standalone HBM transpose round trip):
    # (B, C, F, T) -> (nblocks, C, F, Bb*T), batches folded into the lane axis.
    xf = x.astype(jnp.float32)
    if Bp != B:
        # Pad missing batches with ones: numerically safe, results are discarded.
        xf = jnp.concatenate([xf, jnp.ones((Bp - B, C, F, T), jnp.float32)], axis=0)
    xt = xf.reshape(nblocks, Bb, C, F, T)
    xt = jnp.transpose(xt, (0, 2, 3, 1, 4)).reshape(nblocks, C, F, L)

    p1 = p_param.reshape(1).astype(jnp.float32)
    # Fold biases into the weights (extra column, contracted against a ones row).
    w1a = jnp.concatenate([w1, b1.reshape(A, 1)], axis=1).astype(jnp.float32)   # (A, C+1)
    wh = jnp.concatenate([wa, wf], axis=0)                                       # (2NC, A)
    bh = jnp.concatenate([ba, bf], axis=0).reshape(2 * NC, 1)
    wha = jnp.concatenate([wh, bh], axis=1).astype(jnp.float32)                  # (2NC, A+1)

    # Group-sum matrix: G[j, b] = 1 iff lane j belongs to batch b's time window.
    G = (jnp.arange(L)[:, None] // T == jnp.arange(Bb)[None, :]).astype(jnp.float32)

    out = pl.pallas_call(
        att_head_kernel,
        out_shape=jax.ShapeDtypeStruct((nblocks, NC, Bb), jnp.float32),
        grid=(nblocks,),
        in_specs=[
            pl.BlockSpec((None, C, F, L), lambda i: (i, 0, 0, 0)),   # x batch-block
            pl.BlockSpec(memory_space=pltpu.MemorySpace.SMEM),       # p (scalar)
            pl.BlockSpec((A, C + 1), lambda i: (0, 0)),              # w1 (+bias col)
            pl.BlockSpec((2 * NC, A + 1), lambda i: (0, 0)),         # fused heads (+bias col)
            pl.BlockSpec((L, Bb), lambda i: (0, 0)),                 # G
        ],
        out_specs=pl.BlockSpec((None, NC, Bb), lambda i: (i, 0, 0)),
        compiler_params=pltpu.CompilerParams(
            dimension_semantics=("parallel",),          # batch-parallel: both TCs on v7x
            vmem_limit_bytes=32 * 1024 * 1024,          # explicit budget; blocks stay well under
            allow_input_fusion=[True, False, False, False, False],  # fuse x relayout in
        ),
    )(xt, p1, w1a, wha, G)

    # (nblocks, NC, Bb) -> (Bp, NC) -> (B, NC); padded rows dropped.
    return jnp.transpose(out, (0, 2, 1)).reshape(Bp, NC)[:B]


def att_head_ref(x, p, w1, b1, wa, ba, wf, bf):
    """Pure-JAX reference mirroring the PyTorch forward (eval mode)."""
    xc = jnp.maximum(x, EPS)
    pooled = jnp.mean(xc ** p, axis=2) ** (1.0 / p)                       # (B, C, T)
    h = jnp.maximum(jnp.einsum('bct,ac->bat', pooled, w1)
                    + b1[None, :, None], 0.0)                             # (B, A, T)
    att = jnp.tanh(jnp.einsum('bat,na->bnt', h, wa) + ba[None, :, None])  # (B, NC, T)
    fs = jnp.einsum('bat,na->bnt', h, wf) + bf[None, :, None]
    sm = jax.nn.softmax(att, axis=-1)
    return jnp.sum(fs * sm, axis=-1)                                      # (B, NC)


if __name__ == "__main__":
    # Small shapes consistent with the module:
    #   B=2, in_chans=16, freq=8, time=16, attn_length=32, num_classes=4
    B, C, F, T = 2, 16, 8, 16
    A, NC = 32, 4

    key = jax.random.PRNGKey(0)
    ks = jax.random.split(key, 8)
    x = jax.random.normal(ks[0], (B, C, F, T), dtype=jnp.float32)

    # Deterministic parameter init (shapes from the module __init__).
    p_param = jnp.ones((1,), jnp.float32) * 3.0                # GeMFreq.p
    w1 = jax.random.normal(ks[1], (A, C), jnp.float32) * 0.1   # Linear(in_chans, A)
    b1 = jax.random.normal(ks[2], (A,), jnp.float32) * 0.1
    wa = jax.random.normal(ks[3], (NC, A), jnp.float32) * 0.1  # Conv1d(A, NC, 1) weight squeezed
    ba = jax.random.normal(ks[4], (NC,), jnp.float32) * 0.1
    wf = jax.random.normal(ks[5], (NC, A), jnp.float32) * 0.1  # Conv1d(A, NC, 1) weight squeezed
    bf = jax.random.normal(ks[6], (NC,), jnp.float32) * 0.1

    out = att_head_forward(x, p_param, w1, b1, wa, ba, wf, bf)
    out = jax.block_until_ready(out)

    ref = att_head_ref(x, p_param[0], w1, b1, wa, ba, wf, bf)
    assert out.shape == (B, NC), out.shape
    assert jnp.allclose(out, ref, rtol=2e-3, atol=2e-3), (out, ref)
    print("KERNEL_OK")
</pallas_src>

<mosaic_0001>
module attributes {stable_mosaic.version = 11 : i64} {
  func.func @att_head_kernel(%arg0: i32, %arg1: memref<1x16x8x2048xf32, #tpu.memory_space<vmem>>, %arg2: memref<1xf32, #tpu.memory_space<smem>>, %arg3: memref<32x17xf32, #tpu.memory_space<vmem>>, %arg4: memref<8x33xf32, #tpu.memory_space<vmem>>, %arg5: memref<2048x128xf32, #tpu.memory_space<vmem>>, %arg6: memref<1x4x128xf32, #tpu.memory_space<vmem>>) attributes {dimension_semantics = [#tpu.dimension_semantics<parallel>], iteration_bounds = array<i64: 1>, scalar_prefetch = 0 : i64, scratch_operands = 0 : i64, tpu.core_type = #tpu.core_type<tc>, window_params = [{transform_indices = @transform_0, window_bounds = array<i64: 1, 16, 8, 2048>}, {transform_indices = @transform_1, window_bounds = array<i64: 1>}, {pipeline_mode = #tpu.pipeline_mode<synchronous>, transform_indices = @transform_2, window_bounds = array<i64: 32, 17>}, {pipeline_mode = #tpu.pipeline_mode<synchronous>, transform_indices = @transform_3, window_bounds = array<i64: 8, 33>}, {pipeline_mode = #tpu.pipeline_mode<synchronous>, transform_indices = @transform_4, window_bounds = array<i64: 2048, 128>}, {transform_indices = @transform_5, window_bounds = array<i64: 1, 4, 128>}]} {
    %c0 = arith.constant 0 : index
    %0 = memref.load %arg2[%c0] : memref<1xf32, #tpu.memory_space<smem>>
    %cst = arith.constant 1.000000e+00 : f32
    %1 = arith.divf %cst, %0 : f32
    %c0_0 = arith.constant 0 : index
    %c0_1 = arith.constant 0 : index
    %c0_2 = arith.constant 0 : index
    %c0_3 = arith.constant 0 : index
    %2 = vector.load %arg1[%c0_0, %c0_1, %c0_2, %c0_3] : memref<1x16x8x2048xf32, #tpu.memory_space<vmem>>, vector<1x16x8x2048xf32>
    %3 = vector.shape_cast %2 : vector<1x16x8x2048xf32> to vector<16x8x2048xf32>
    %cst_4 = arith.constant 9.99999997E-7 : f32
    %4 = vector.broadcast %cst_4 : f32 to vector<16x8x2048xf32>
    %5 = arith.maximumf %3, %4 : vector<16x8x2048xf32>
    %6 = math.log %5 : vector<16x8x2048xf32>
    %7 = vector.broadcast %0 : f32 to vector<16x8x2048xf32>
    %8 = arith.mulf %7, %6 : vector<16x8x2048xf32>
    %9 = math.exp %8 : vector<16x8x2048xf32>
    %cst_5 = arith.constant dense<0.000000e+00> : vector<16x2048xf32>
    %10 = vector.multi_reduction <add>, %9, %cst_5 [1] : vector<16x8x2048xf32> to vector<16x2048xf32>
    %cst_6 = arith.constant 8.000000e+00 : f32
    %11 = vector.broadcast %cst_6 : f32 to vector<16x2048xf32>
    %12 = arith.divf %10, %11 : vector<16x2048xf32>
    %13 = math.log %12 : vector<16x2048xf32>
    %14 = vector.broadcast %1 : f32 to vector<16x2048xf32>
    %15 = arith.mulf %13, %14 : vector<16x2048xf32>
    %16 = math.exp %15 : vector<16x2048xf32>
    %cst_7 = arith.constant 1.000000e+00 : f32
    %17 = vector.broadcast %cst_7 : f32 to vector<1x2048xf32>
    %18 = tpu.concatenate %16, %17 in 0 : vector<16x2048xf32>, vector<1x2048xf32> -> vector<17x2048xf32>
    %c0_8 = arith.constant 0 : index
    %c0_9 = arith.constant 0 : index
    %19 = vector.load %arg3[%c0_8, %c0_9] : memref<32x17xf32, #tpu.memory_space<vmem>>, vector<32x17xf32>
    %cst_10 = arith.constant dense<0.000000e+00> : vector<32x2048xf32>
    %20 = tpu.matmul %19, %18, %cst_10 {dimension_numbers = #tpu.dot_dimension_numbers<[1], [0], [0], [1], [0, 0, 1, 1], [], []>} : vector<32x17xf32>, vector<17x2048xf32>, vector<32x2048xf32> -> vector<32x2048xf32>
    %cst_11 = arith.constant 0.000000e+00 : f32
    %21 = vector.broadcast %cst_11 : f32 to vector<32x2048xf32>
    %22 = arith.maximumf %20, %21 : vector<32x2048xf32>
    %23 = tpu.concatenate %22, %17 in 0 : vector<32x2048xf32>, vector<1x2048xf32> -> vector<33x2048xf32>
    %c0_12 = arith.constant 0 : index
    %c0_13 = arith.constant 0 : index
    %24 = vector.load %arg4[%c0_12, %c0_13] : memref<8x33xf32, #tpu.memory_space<vmem>>, vector<8x33xf32>
    %cst_14 = arith.constant dense<0.000000e+00> : vector<8x2048xf32>
    %25 = tpu.matmul %24, %23, %cst_14 {dimension_numbers = #tpu.dot_dimension_numbers<[1], [0], [0], [1], [0, 0, 1, 1], [], []>} : vector<8x33xf32>, vector<33x2048xf32>, vector<8x2048xf32> -> vector<8x2048xf32>
    %26 = vector.extract_strided_slice %25 {offsets = [0, 0], sizes = [4, 2048], strides = [1, 1]} : vector<8x2048xf32> to vector<4x2048xf32>
    %27 = math.tanh %26 : vector<4x2048xf32>
    %28 = vector.extract_strided_slice %25 {offsets = [4, 0], sizes = [4, 2048], strides = [1, 1]} : vector<8x2048xf32> to vector<4x2048xf32>
    %29 = math.exp %27 : vector<4x2048xf32>
    %30 = arith.mulf %28, %29 : vector<4x2048xf32>
    %31 = tpu.concatenate %29, %30 in 0 : vector<4x2048xf32>, vector<4x2048xf32> -> vector<8x2048xf32>
    %c0_15 = arith.constant 0 : index
    %c0_16 = arith.constant 0 : index
    %32 = vector.load %arg5[%c0_15, %c0_16] : memref<2048x128xf32, #tpu.memory_space<vmem>>, vector<2048x128xf32>
    %cst_17 = arith.constant dense<0.000000e+00> : vector<8x128xf32>
    %33 = tpu.matmul %31, %32, %cst_17 {dimension_numbers = #tpu.dot_dimension_numbers<[1], [0], [0], [1], [0, 0, 1, 1], [], []>} : vector<8x2048xf32>, vector<2048x128xf32>, vector<8x128xf32> -> vector<8x128xf32>
    %34 = vector.extract_strided_slice %33 {offsets = [4, 0], sizes = [4, 128], strides = [1, 1]} : vector<8x128xf32> to vector<4x128xf32>
    %35 = vector.extract_strided_slice %33 {offsets = [0, 0], sizes = [4, 128], strides = [1, 1]} : vector<8x128xf32> to vector<4x128xf32>
    %36 = tpu.reciprocal %35 {approx = true} : vector<4x128xf32> -> vector<4x128xf32>
    %37 = arith.mulf %34, %36 : vector<4x128xf32>
    %c0_18 = arith.constant 0 : index
    %c0_19 = arith.constant 0 : index
    %c0_20 = arith.constant 0 : index
    %38 = vector.load %arg6[%c0_18, %c0_19, %c0_20] : memref<1x4x128xf32, #tpu.memory_space<vmem>>, vector<1x4x128xf32>
    %39 = vector.shape_cast %38 : vector<1x4x128xf32> to vector<4x128xf32>
    %40 = vector.shape_cast %37 : vector<4x128xf32> to vector<1x4x128xf32>
    tpu.vector_store %arg6[%c0_18, %c0_19, %c0_20], %40 {strides = array<i32>} : memref<1x4x128xf32, #tpu.memory_space<vmem>>, vector<1x4x128xf32>,
    return
  }
  func.func @transform_0(%arg0: i32) -> (i32, i32, i32, i32) {
    %c0_i32 = arith.constant 0 : i32
    %c0_i32_0 = arith.constant 0 : i32
    %c0_i32_1 = arith.constant 0 : i32
    %c0_i32_2 = arith.constant 0 : i32
    return %arg0, %c0_i32, %c0_i32_0, %c0_i32_1 : i32, i32, i32, i32
  }
  func.func @transform_1(%arg0: i32) -> i32 {
    %c0_i32 = arith.constant 0 : i32
    %c0_i32_0 = arith.constant 0 : i32
    return %c0_i32 : i32
  }
  func.func @transform_2(%arg0: i32) -> (i32, i32) {
    %c0_i32 = arith.constant 0 : i32
    %c0_i32_0 = arith.constant 0 : i32
    %c0_i32_1 = arith.constant 0 : i32
    return %c0_i32, %c0_i32_0 : i32, i32
  }
  func.func @transform_3(%arg0: i32) -> (i32, i32) {
    %c0_i32 = arith.constant 0 : i32
    %c0_i32_0 = arith.constant 0 : i32
    %c0_i32_1 = arith.constant 0 : i32
    return %c0_i32, %c0_i32_0 : i32, i32
  }
  func.func @transform_4(%arg0: i32) -> (i32, i32) {
    %c0_i32 = arith.constant 0 : i32
    %c0_i32_0 = arith.constant 0 : i32
    %c0_i32_1 = arith.constant 0 : i32
    return %c0_i32, %c0_i32_0 : i32, i32
  }
  func.func @transform_5(%arg0: i32) -> (i32, i32, i32) {
    %c0_i32 = arith.constant 0 : i32
    %c0_i32_0 = arith.constant 0 : i32
    %c0_i32_1 = arith.constant 0 : i32
    return %arg0, %c0_i32, %c0_i32_0 : i32, i32, i32
  }
}

</mosaic_0001>

<llo_original>
// kernel: tpu_custom_call.1
$region0: #{tpu_custom_call.1}
  #allocation0 [shape = 'u32[]', space=smem, size = 0x4, offset = 0x4, fixed_abs, tag = 'smem constant byte address 0x4 - core index']
  #allocation1 [shape = 'u32[144,128]{1,0:T(1,128)}', space=vmem, size = 0x12000, scoped, tag = 'internal scratch']
  #allocation2 [shape = 'f32[1]{0:T(128)S(6)}', space=smem, size = 0x200, scoped, tag = 'scoped memory for tpu_custom_call.1']
  %s0 = inlined_call_operand.hbm [shape: f32[1,16,8,2048], index: 0, kind: input, shape index: {}]
  %s1 = inlined_call_operand.<no memory space> [shape: f32[1], index: 1, kind: input, shape index: {}]
  %s2 = inlined_call_operand.vmem [shape: f32[32,17], index: 2, kind: input, shape index: {}]
  %s3 = inlined_call_operand.vmem [shape: f32[8,33], index: 3, kind: input, shape index: {}]
  %s4 = inlined_call_operand.hbm [shape: f32[2048,128], index: 4, kind: input, shape index: {}]
  %s5 = inlined_call_operand.hbm [shape: f32[1,4,128], index: 5, kind: output, shape index: {}]
  %s6 = sld [smem:[#allocation0]]
  $region38: #{tpu_custom_call.1} parent=0
    _
  %s8 = ssub.s32 1, %s6
  %s9 = scalar_select 0, %s8, %s6
  %10 = sst [smem:[#allocation2]] %s1
  $region1: #{tpu_custom_call.1} parent=0
    #allocation3 [shape = 'u8[1048576]{0}', space=vmem, size = 0x100000, scoped, tag = 'input window, operand 0, single buffered']
    #allocation4 [shape = 's32[1]{0}', space=sflag, size = 0x4, scoped, tag = 'scoped memory for tpu_custom_call.1']
    #allocation5 [shape = 's32[1]{0}', space=sflag, size = 0x4, scoped, tag = 'scoped memory for tpu_custom_call.1']
    #allocation6 [shape = 'u8[1048576]{0}', space=vmem, size = 0x100000, scoped, tag = 'input window, operand 4, single buffered']
    #allocation7 [shape = 's32[1]{0}', space=sflag, size = 0x4, scoped, tag = 'scoped memory for tpu_custom_call.1']
    #allocation8 [shape = 'u8[2048]{0}', space=vmem, size = 0x800, scoped, tag = 'output window, operand 0, single buffered']
    %11 = vsyncpa [#allocation4], 0
    %12 = vsyncpa [#allocation7], 0
    %13 = vsyncpa [#allocation5], 0
    // Predicated region
    $region2: #{tpu_custom_call.1} parent=1 // pred_check
      _
    $region3: #{tpu_custom_call.1} parent=1 // pred_check_branch
      %15 = sbr.rel (0) target = $region5
    $region4: #{tpu_custom_call.1} parent=1 // pred_region
      %s17 = ssub.s32 32768, 32768
      %18 = vsyncadd [#allocation4], %s17
      %s19 = sshll.u32 [#allocation3], 4
      %s20 = int_to_ptr.vmem [resolvable:$true] %s19
      %25 = dma.hbm_to_vmem [thread:$0]  %s0, 32768, %s20, [#allocation4], 2048, 2048, 128
    $region5: #{tpu_custom_call.1} parent=1 // pred_fallthru
      _
    // Predicated region
    $region6: #{tpu_custom_call.1} parent=1 // pred_check
      _
    $region7: #{tpu_custom_call.1} parent=1 // pred_check_branch
      %27 = sbr.rel (0) target = $region9
    $region8: #{tpu_custom_call.1} parent=1 // pred_region
      _
    $region9: #{tpu_custom_call.1} parent=1 // pred_fallthru
      _
    // Predicated region
    $region10: #{tpu_custom_call.1} parent=1 // pred_check
      _
    $region11: #{tpu_custom_call.1} parent=1 // pred_check_branch
      %29 = sbr.rel (0) target = $region13
    $region12: #{tpu_custom_call.1} parent=1 // pred_region
      _
    $region13: #{tpu_custom_call.1} parent=1 // pred_fallthru
      _
    // Predicated region
    $region14: #{tpu_custom_call.1} parent=1 // pred_check
      _
    $region15: #{tpu_custom_call.1} parent=1 // pred_check_branch
      %31 = sbr.rel (0) target = $region17
    $region16: #{tpu_custom_call.1} parent=1 // pred_region
      _
    $region17: #{tpu_custom_call.1} parent=1 // pred_fallthru
      _
    // Predicated region
    $region18: #{tpu_custom_call.1} parent=1 // pred_check
      _
    $region19: #{tpu_custom_call.1} parent=1 // pred_check_branch
      %33 = sbr.rel (0) target = $region21
    $region20: #{tpu_custom_call.1} parent=1 // pred_region
      %s35 = ssub.s32 32768, 32768
      %36 = vsyncadd [#allocation7], %s35
      %s37 = sshll.u32 [#allocation6], 4
      %s38 = int_to_ptr.vmem [resolvable:$true] %s37
      %43 = dma.hbm_to_vmem [thread:$0]  %s4, 32768, %s38, [#allocation7], 128, 128, 8
    $region21: #{tpu_custom_call.1} parent=1 // pred_fallthru
      _
    // Predicated region
    $region22: #{tpu_custom_call.1} parent=1 // pred_check
      _
    $region23: #{tpu_custom_call.1} parent=1 // pred_check_branch
      %45 = sbr.rel (0) target = $region25
    $region24: #{tpu_custom_call.1} parent=1 // pred_region
      %46 = dma.done [#allocation4], 32768
    $region25: #{tpu_custom_call.1} parent=1 // pred_fallthru
      _
    // Predicated region
    $region26: #{tpu_custom_call.1} parent=1 // pred_check
      _
    $region27: #{tpu_custom_call.1} parent=1 // pred_check_branch
      %48 = sbr.rel (0) target = $region29
    $region28: #{tpu_custom_call.1} parent=1 // pred_region
      %49 = dma.done [#allocation7], 32768
    $region29: #{tpu_custom_call.1} parent=1 // pred_fallthru
      _
    %s50 = sld [smem:[#allocation2]]
    %v51 = vstv %s50
    %v52 = vrcp.pop %v51
    %s53 = vtos %v52
    %v54 = vld [vmem:[#allocation3] sm:$0xff]
    %v55 = vld [vmem:[#allocation3 + $0x8] sm:$0xff]
    %v56 = vld [vmem:[#allocation3 + $0x10] sm:$0xff]
    %v57 = vld [vmem:[#allocation3 + $0x18] sm:$0xff]
    %v58 = vld [vmem:[#allocation3 + $0x20] sm:$0xff]
    %v59 = vld [vmem:[#allocation3 + $0x28] sm:$0xff]
    %v60 = vld [vmem:[#allocation3 + $0x30] sm:$0xff]
    %v61 = vld [vmem:[#allocation3 + $0x38] sm:$0xff]
    %v62 = vld [vmem:[#allocation3 + $0x40] sm:$0xff]
    %v63 = vld [vmem:[#allocation3 + $0x48] sm:$0xff]
    %v64 = vld [vmem:[#allocation3 + $0x50] sm:$0xff]
    %v65 = vld [vmem:[#allocation3 + $0x58] sm:$0xff]
    %v66 = vld [vmem:[#allocation3 + $0x60] sm:$0xff]
    %v67 = vld [vmem:[#allocation3 + $0x68] sm:$0xff]
    %v68 = vld [vmem:[#allocation3 + $0x70] sm:$0xff]
    %v69 = vld [vmem:[#allocation3 + $0x78] sm:$0xff]
    %v70 = vld [vmem:[#allocation3 + $0x80] sm:$0xff]
    %v71 = vld [vmem:[#allocation3 + $0x88] sm:$0xff]
    %v72 = vld [vmem:[#allocation3 + $0x90] sm:$0xff]
    %v73 = vld [vmem:[#allocation3 + $0x98] sm:$0xff]
    %v74 = vld [vmem:[#allocation3 + $0xa0] sm:$0xff]
    %v75 = vld [vmem:[#allocation3 + $0xa8] sm:$0xff]
    %v76 = vld [vmem:[#allocation3 + $0xb0] sm:$0xff]
    %v77 = vld [vmem:[#allocation3 + $0xb8] sm:$0xff]
    %v78 = vld [vmem:[#allocation3 + $0xc0] sm:$0xff]
    %v79 = vld [vmem:[#allocation3 + $0xc8] sm:$0xff]
    %v80 = vld [vmem:[#allocation3 + $0xd0] sm:$0xff]
    %v81 = vld [vmem:[#allocation3 + $0xd8] sm:$0xff]
    %v82 = vld [vmem:[#allocation3 + $0xe0] sm:$0xff]
    %v83 = vld [vmem:[#allocation3 + $0xe8] sm:$0xff]
    %v84 = vld [vmem:[#allocation3 + $0xf0] sm:$0xff]
    %v85 = vld [vmem:[#allocation3 + $0xf8] sm:$0xff]
    %v86 = vld [vmem:[#allocation3 + $0x100] sm:$0xff]
    %v87 = vld [vmem:[#allocation3 + $0x108] sm:$0xff]
    %v88 = vld [vmem:[#allocation3 + $0x110] sm:$0xff]
    %v89 = vld [vmem:[#allocation3 + $0x118] sm:$0xff]
    %v90 = vld [vmem:[#allocation3 + $0x120] sm:$0xff]
    %v91 = vld [vmem:[#allocation3 + $0x128] sm:$0xff]
    %v92 = vld [vmem:[#allocation3 + $0x130] sm:$0xff]
    %v93 = vld [vmem:[#allocation3 + $0x138] sm:$0xff]
    %v94 = vld [vmem:[#allocation3 + $0x140] sm:$0xff]
    %v95 = vld [vmem:[#allocation3 + $0x148] sm:$0xff]
    %v96 = vld [vmem:[#allocation3 + $0x150] sm:$0xff]
    %v97 = vld [vmem:[#allocation3 + $0x158] sm:$0xff]
    %v98 = vld [vmem:[#allocation3 + $0x160] sm:$0xff]
    %v99 = vld [vmem:[#allocation3 + $0x168] sm:$0xff]
    %v100 = vld [vmem:[#allocation3 + $0x170] sm:$0xff]
    %v101 = vld [vmem:[#allocation3 + $0x178] sm:$0xff]
    %v102 = vld [vmem:[#allocation3 + $0x180] sm:$0xff]
    %v103 = vld [vmem:[#allocation3 + $0x188] sm:$0xff]
    %v104 = vld [vmem:[#allocation3 + $0x190] sm:$0xff]
    %v105 = vld [vmem:[#allocation3 + $0x198] sm:$0xff]
    %v106 = vld [vmem:[#allocation3 + $0x1a0] sm:$0xff]
    %v107 = vld [vmem:[#allocation3 + $0x1a8] sm:$0xff]
    %v108 = vld [vmem:[#allocation3 + $0x1b0] sm:$0xff]
    %v109 = vld [vmem:[#allocation3 + $0x1b8] sm:$0xff]
    %v110 = vld [vmem:[#allocation3 + $0x1c0] sm:$0xff]
    %v111 = vld [vmem:[#allocation3 + $0x1c8] sm:$0xff]
    %v112 = vld [vmem:[#allocation3 + $0x1d0] sm:$0xff]
    %v113 = vld [vmem:[#allocation3 + $0x1d8] sm:$0xff]
    %v114 = vld [vmem:[#allocation3 + $0x1e0] sm:$0xff]
    %v115 = vld [vmem:[#allocation3 + $0x1e8] sm:$0xff]
    %v116 = vld [vmem:[#allocation3 + $0x1f0] sm:$0xff]
    %v117 = vld [vmem:[#allocation3 + $0x1f8] sm:$0xff]
    %v118 = vld [vmem:[#allocation3 + $0x200] sm:$0xff]
    %v119 = vld [vmem:[#allocation3 + $0x208] sm:$0xff]
    %v120 = vld [vmem:[#allocation3 + $0x210] sm:$0xff]
    %v121 = vld [vmem:[#allocation3 + $0x218] sm:$0xff]
    %v122 = vld [vmem:[#allocation3 + $0x220] sm:$0xff]
    %v123 = vld [vmem:[#allocation3 + $0x228] sm:$0xff]
    %v124 = vld [vmem:[#allocation3 + $0x230] sm:$0xff]
    %v125 = vld [vmem:[#allocation3 + $0x238] sm:$0xff]
    %v126 = vld [vmem:[#allocation3 + $0x240] sm:$0xff]
    %v127 = vld [vmem:[#allocation3 + $0x248] sm:$0xff]
    %v128 = vld [vmem:[#allocation3 + $0x250] sm:$0xff]
    %v129 = vld [vmem:[#allocation3 + $0x258] sm:$0xff]
    %v130 = vld [vmem:[#allocation3 + $0x260] sm:$0xff]
    %v131 = vld [vmem:[#allocation3 + $0x268] sm:$0xff]
    %v132 = vld [vmem:[#allocation3 + $0x270] sm:$0xff]
    %v133 = vld [vmem:[#allocation3 + $0x278] sm:$0xff]
    %v134 = vld [vmem:[#allocation3 + $0x280] sm:$0xff]
    %v135 = vld [vmem:[#allocation3 + $0x288] sm:$0xff]
    %v136 = vld [vmem:[#allocation3 + $0x290] sm:$0xff]
    %v137 = vld [vmem:[#allocation3 + $0x298] sm:$0xff]
    %v138 = vld [vmem:[#allocation3 + $0x2a0] sm:$0xff]
    %v139 = vld [vmem:[#allocation3 + $0x2a8] sm:$0xff]
    %v140 = vld [vmem:[#allocation3 + $0x2b0] sm:$0xff]
    %v141 = vld [vmem:[#allocation3 + $0x2b8] sm:$0xff]
    %v142 = vld [vmem:[#allocation3 + $0x2c0] sm:$0xff]
    %v143 = vld [vmem:[#allocation3 + $0x2c8] sm:$0xff]
    %v144 = vld [vmem:[#allocation3 + $0x2d0] sm:$0xff]
    %v145 = vld [vmem:[#allocation3 + $0x2d8] sm:$0xff]
    %v146 = vld [vmem:[#allocation3 + $0x2e0] sm:$0xff]
    %v147 = vld [vmem:[#allocation3 + $0x2e8] sm:$0xff]
    %v148 = vld [vmem:[#allocation3 + $0x2f0] sm:$0xff]
    %v149 = vld [vmem:[#allocation3 + $0x2f8] sm:$0xff]
    %v150 = vld [vmem:[#allocation3 + $0x300] sm:$0xff]
    %v151 = vld [vmem:[#allocation3 + $0x308] sm:$0xff]
    %v152 = vld [vmem:[#allocation3 + $0x310] sm:$0xff]
    %v153 = vld [vmem:[#allocation3 + $0x318] sm:$0xff]
    %v154 = vld [vmem:[#allocation3 + $0x320] sm:$0xff]
    %v155 = vld [vmem:[#allocation3 + $0x328] sm:$0xff]
    %v156 = vld [vmem:[#allocation3 + $0x330] sm:$0xff]
    %v157 = vld [vmem:[#allocation3 + $0x338] sm:$0xff]
    %v158 = vld [vmem:[#allocation3 + $0x340] sm:$0xff]
    %v159 = vld [vmem:[#allocation3 + $0x348] sm:$0xff]
    %v160 = vld [vmem:[#allocation3 + $0x350] sm:$0xff]
    %v161 = vld [vmem:[#allocation3 + $0x358] sm:$0xff]
    %v162 = vld [vmem:[#allocation3 + $0x360] sm:$0xff]
    %v163 = vld [vmem:[#allocation3 + $0x368] sm:$0xff]
    %v164 = vld [vmem:[#allocation3 + $0x370] sm:$0xff]
    %v165 = vld [vmem:[#allocation3 + $0x378] sm:$0xff]
    %v166 = vld [vmem:[#allocation3 + $0x380] sm:$0xff]
    %v167 = vld [vmem:[#allocation3 + $0x388] sm:$0xff]
    %v168 = vld [vmem:[#allocation3 + $0x390] sm:$0xff]
    %v169 = vld [vmem:[#allocation3 + $0x398] sm:$0xff]
    %v170 = vld [vmem:[#allocation3 + $0x3a0] sm:$0xff]
    %v171 = vld [vmem:[#allocation3 + $0x3a8] sm:$0xff]
    %v172 = vld [vmem:[#allocation3 + $0x3b0] sm:$0xff]
    %v173 = vld [vmem:[#allocation3 + $0x3b8] sm:$0xff]
    %v174 = vld [vmem:[#allocation3 + $0x3c0] sm:$0xff]
    %v175 = vld [vmem:[#allocation3 + $0x3c8] sm:$0xff]
    %v176 = vld [vmem:[#allocation3 + $0x3d0] sm:$0xff]
    %v177 = vld [vmem:[#allocation3 + $0x3d8] sm:$0xff]
    %v178 = vld [vmem:[#allocation3 + $0x3e0] sm:$0xff]
    %v179 = vld [vmem:[#allocation3 + $0x3e8] sm:$0xff]
    %v180 = vld [vmem:[#allocation3 + $0x3f0] sm:$0xff]
    %v181 = vld [vmem:[#allocation3 + $0x3f8] sm:$0xff]
    %v182 = vld [vmem:[#allocation3 + $0x400] sm:$0xff]
    %v183 = vld [vmem:[#allocation3 + $0x408] sm:$0xff]
    %v184 = vld [vmem:[#allocation3 + $0x410] sm:$0xff]
    %v185 = vld [vmem:[#allocation3 + $0x418] sm:$0xff]
    %v186 = vld [vmem:[#allocation3 + $0x420] sm:$0xff]
    %v187 = vld [vmem:[#allocation3 + $0x428] sm:$0xff]
    %v188 = vld [vmem:[#allocation3 + $0x430] sm:$0xff]
    %v189 = vld [vmem:[#allocation3 + $0x438] sm:$0xff]
    %v190 = vld [vmem:[#allocation3 + $0x440] sm:$0xff]
    %v191 = vld [vmem:[#allocation3 + $0x448] sm:$0xff]
    %v192 = vld [vmem:[#allocation3 + $0x450] sm:$0xff]
    %v193 = vld [vmem:[#allocation3 + $0x458] sm:$0xff]
    %v194 = vld [vmem:[#allocation3 + $0x460] sm:$0xff]
    %v195 = vld [vmem:[#allocation3 + $0x468] sm:$0xff]
    %v196 = vld [vmem:[#allocation3 + $0x470] sm:$0xff]
    %v197 = vld [vmem:[#allocation3 + $0x478] sm:$0xff]
    %v198 = vld [vmem:[#allocation3 + $0x480] sm:$0xff]
    %v199 = vld [vmem:[#allocation3 + $0x488] sm:$0xff]
    %v200 = vld [vmem:[#allocation3 + $0x490] sm:$0xff]
    %v201 = vld [vmem:[#allocation3 + $0x498] sm:$0xff]
    %v202 = vld [vmem:[#allocation3 + $0x4a0] sm:$0xff]
    %v203 = vld [vmem:[#allocation3 + $0x4a8] sm:$0xff]
    %v204 = vld [vmem:[#allocation3 + $0x4b0] sm:$0xff]
    %v205 = vld [vmem:[#allocation3 + $0x4b8] sm:$0xff]
    %v206 = vld [vmem:[#allocation3 + $0x4c0] sm:$0xff]
    %v207 = vld [vmem:[#allocation3 + $0x4c8] sm:$0xff]
    %v208 = vld [vmem:[#allocation3 + $0x4d0] sm:$0xff]
    %v209 = vld [vmem:[#allocation3 + $0x4d8] sm:$0xff]
    %v210 = vld [vmem:[#allocation3 + $0x4e0] sm:$0xff]
    %v211 = vld [vmem:[#allocation3 + $0x4e8] sm:$0xff]
    %v212 = vld [vmem:[#allocation3 + $0x4f0] sm:$0xff]
    %v213 = vld [vmem:[#allocation3 + $0x4f8] sm:$0xff]
    %v214 = vld [vmem:[#allocation3 + $0x500] sm:$0xff]
    %v215 = vld [vmem:[#allocation3 + $0x508] sm:$0xff]
    %v216 = vld [vmem:[#allocation3 + $0x510] sm:$0xff]
    %v217 = vld [vmem:[#allocation3 + $0x518] sm:$0xff]
    %v218 = vld [vmem:[#allocation3 + $0x520] sm:$0xff]
    %v219 = vld [vmem:[#allocation3 + $0x528] sm:$0xff]
    %v220 = vld [vmem:[#allocation3 + $0x530] sm:$0xff]
    %v221 = vld [vmem:[#allocation3 + $0x538] sm:$0xff]
    %v222 = vld [vmem:[#allocation3 + $0x540] sm:$0xff]
    %v223 = vld [vmem:[#allocation3 + $0x548] sm:$0xff]
    %v224 = vld [vmem:[#allocation3 + $0x550] sm:$0xff]
    %v225 = vld [vmem:[#allocation3 + $0x558] sm:$0xff]
    %v226 = vld [vmem:[#allocation3 + $0x560] sm:$0xff]
    %v227 = vld [vmem:[#allocation3 + $0x568] sm:$0xff]
    %v228 = vld [vmem:[#allocation3 + $0x570] sm:$0xff]
    %v229 = vld [vmem:[#allocation3 + $0x578] sm:$0xff]
    %v230 = vld [vmem:[#allocation3 + $0x580] sm:$0xff]
    %v231 = vld [vmem:[#allocation3 + $0x588] sm:$0xff]
    %v232 = vld [vmem:[#allocation3 + $0x590] sm:$0xff]
    %v233 = vld [vmem:[#allocation3 + $0x598] sm:$0xff]
    %v234 = vld [vmem:[#allocation3 + $0x5a0] sm:$0xff]
    %v235 = vld [vmem:[#allocation3 + $0x5a8] sm:$0xff]
    %v236 = vld [vmem:[#allocation3 + $0x5b0] sm:$0xff]
    %v237 = vld [vmem:[#allocation3 + $0x5b8] sm:$0xff]
    %v238 = vld [vmem:[#allocation3 + $0x5c0] sm:$0xff]
    %v239 = vld [vmem:[#allocation3 + $0x5c8] sm:$0xff]
    %v240 = vld [vmem:[#allocation3 + $0x5d0] sm:$0xff]
    %v241 = vld [vmem:[#allocation3 + $0x5d8] sm:$0xff]
    %v242 = vld [vmem:[#allocation3 + $0x5e0] sm:$0xff]
    %v243 = vld [vmem:[#allocation3 + $0x5e8] sm:$0xff]
    %v244 = vld [vmem:[#allocation3 + $0x5f0] sm:$0xff]
    %v245 = vld [vmem:[#allocation3 + $0x5f8] sm:$0xff]
    %v246 = vld [vmem:[#allocation3 + $0x600] sm:$0xff]
    %v247 = vld [vmem:[#allocation3 + $0x608] sm:$0xff]
    %v248 = vld [vmem:[#allocation3 + $0x610] sm:$0xff]
    %v249 = vld [vmem:[#allocation3 + $0x618] sm:$0xff]
    %v250 = vld [vmem:[#allocation3 + $0x620] sm:$0xff]
    %v251 = vld [vmem:[#allocation3 + $0x628] sm:$0xff]
    %v252 = vld [vmem:[#allocation3 + $0x630] sm:$0xff]
    %v253 = vld [vmem:[#allocation3 + $0x638] sm:$0xff]
    %v254 = vld [vmem:[#allocation3 + $0x640] sm:$0xff]
    %v255 = vld [vmem:[#allocation3 + $0x648] sm:$0xff]
    %v256 = vld [vmem:[#allocation3 + $0x650] sm:$0xff]
    %v257 = vld [vmem:[#allocation3 + $0x658] sm:$0xff]
    %v258 = vld [vmem:[#allocation3 + $0x660] sm:$0xff]
    %v259 = vld [vmem:[#allocation3 + $0x668] sm:$0xff]
    %v260 = vld [vmem:[#allocation3 + $0x670] sm:$0xff]
    %v261 = vld [vmem:[#allocation3 + $0x678] sm:$0xff]
    %v262 = vld [vmem:[#allocation3 + $0x680] sm:$0xff]
    %v263 = vld [vmem:[#allocation3 + $0x688] sm:$0xff]
    %v264 = vld [vmem:[#allocation3 + $0x690] sm:$0xff]
    %v265 = vld [vmem:[#allocation3 + $0x698] sm:$0xff]
    %v266 = vld [vmem:[#allocation3 + $0x6a0] sm:$0xff]
    %v267 = vld [vmem:[#allocation3 + $0x6a8] sm:$0xff]
    %v268 = vld [vmem:[#allocation3 + $0x6b0] sm:$0xff]
    %v269 = vld [vmem:[#allocation3 + $0x6b8] sm:$0xff]
    %v270 = vld [vmem:[#allocation3 + $0x6c0] sm:$0xff]
    %v271 = vld [vmem:[#allocation3 + $0x6c8] sm:$0xff]
    %v272 = vld [vmem:[#allocation3 + $0x6d0] sm:$0xff]
    %v273 = vld [vmem:[#allocation3 + $0x6d8] sm:$0xff]
    %v274 = vld [vmem:[#allocation3 + $0x6e0] sm:$0xff]
    %v275 = vld [vmem:[#allocation3 + $0x6e8] sm:$0xff]
    %v276 = vld [vmem:[#allocation3 + $0x6f0] sm:$0xff]
    %v277 = vld [vmem:[#allocation3 + $0x6f8] sm:$0xff]
    %v278 = vld [vmem:[#allocation3 + $0x700] sm:$0xff]
    %v279 = vld [vmem:[#allocation3 + $0x708] sm:$0xff]
    %v280 = vld [vmem:[#allocation3 + $0x710] sm:$0xff]
    %v281 = vld [vmem:[#allocation3 + $0x718] sm:$0xff]
    %v282 = vld [vmem:[#allocation3 + $0x720] sm:$0xff]
    %v283 = vld [vmem:[#allocation3 + $0x728] sm:$0xff]
    %v284 = vld [vmem:[#allocation3 + $0x730] sm:$0xff]
    %v285 = vld [vmem:[#allocation3 + $0x738] sm:$0xff]
    %v286 = vld [vmem:[#allocation3 + $0x740] sm:$0xff]
    %v287 = vld [vmem:[#allocation3 + $0x748] sm:$0xff]
    %v288 = vld [vmem:[#allocation3 + $0x750] sm:$0xff]
    %v289 = vld [vmem:[#allocation3 + $0x758] sm:$0xff]
    %v290 = vld [vmem:[#allocation3 + $0x760] sm:$0xff]
    %v291 = vld [vmem:[#allocation3 + $0x768] sm:$0xff]
    %v292 = vld [vmem:[#allocation3 + $0x770] sm:$0xff]
    %v293 = vld [vmem:[#allocation3 + $0x778] sm:$0xff]
    %v294 = vld [vmem:[#allocation3 + $0x780] sm:$0xff]
    %v295 = vld [vmem:[#allocation3 + $0x788] sm:$0xff]
    %v296 = vld [vmem:[#allocation3 + $0x790] sm:$0xff]
    %v297 = vld [vmem:[#allocation3 + $0x798] sm:$0xff]
    %v298 = vld [vmem:[#allocation3 + $0x7a0] sm:$0xff]
    %v299 = vld [vmem:[#allocation3 + $0x7a8] sm:$0xff]
    %v300 = vld [vmem:[#allocation3 + $0x7b0] sm:$0xff]
    %v301 = vld [vmem:[#allocation3 + $0x7b8] sm:$0xff]
    %v302 = vld [vmem:[#allocation3 + $0x7c0] sm:$0xff]
    %v303 = vld [vmem:[#allocation3 + $0x7c8] sm:$0xff]
    %v304 = vld [vmem:[#allocation3 + $0x7d0] sm:$0xff]
    %v305 = vld [vmem:[#allocation3 + $0x7d8] sm:$0xff]
    %v306 = vld [vmem:[#allocation3 + $0x7e0] sm:$0xff]
    %v307 = vld [vmem:[#allocation3 + $0x7e8] sm:$0xff]
    %v308 = vld [vmem:[#allocation3 + $0x7f0] sm:$0xff]
    %v309 = vld [vmem:[#allocation3 + $0x7f8] sm:$0xff]
    %v310 = vmax.f32 %v54, 1e-06
    %v311 = vmax.f32 %v55, 1e-06
    %v312 = vmax.f32 %v56, 1e-06
    %v313 = vmax.f32 %v57, 1e-06
    %v314 = vmax.f32 %v58, 1e-06
    %v315 = vmax.f32 %v59, 1e-06
    %v316 = vmax.f32 %v60, 1e-06
    %v317 = vmax.f32 %v61, 1e-06
    %v318 = vmax.f32 %v62, 1e-06
    %v319 = vmax.f32 %v63, 1e-06
    %v320 = vmax.f32 %v64, 1e-06
    %v321 = vmax.f32 %v65, 1e-06
    %v322 = vmax.f32 %v66, 1e-06
    %v323 = vmax.f32 %v67, 1e-06
    %v324 = vmax.f32 %v68, 1e-06
    %v325 = vmax.f32 %v69, 1e-06
    %v326 = vmax.f32 %v70, 1e-06
    %v327 = vmax.f32 %v71, 1e-06
    %v328 = vmax.f32 %v72, 1e-06
    %v329 = vmax.f32 %v73, 1e-06
    %v330 = vmax.f32 %v74, 1e-06
    %v331 = vmax.f32 %v75, 1e-06
    %v332 = vmax.f32 %v76, 1e-06
    %v333 = vmax.f32 %v77, 1e-06
    %v334 = vmax.f32 %v78, 1e-06
    %v335 = vmax.f32 %v79, 1e-06
    %v336 = vmax.f32 %v80, 1e-06
    %v337 = vmax.f32 %v81, 1e-06
    %v338 = vmax.f32 %v82, 1e-06
    %v339 = vmax.f32 %v83, 1e-06
    %v340 = vmax.f32 %v84, 1e-06
    %v341 = vmax.f32 %v85, 1e-06
    %v342 = vmax.f32 %v86, 1e-06
    %v343 = vmax.f32 %v87, 1e-06
    %v344 = vmax.f32 %v88, 1e-06
    %v345 = vmax.f32 %v89, 1e-06
    %v346 = vmax.f32 %v90, 1e-06
    %v347 = vmax.f32 %v91, 1e-06
    %v348 = vmax.f32 %v92, 1e-06
    %v349 = vmax.f32 %v93, 1e-06
    %v350 = vmax.f32 %v94, 1e-06
    %v351 = vmax.f32 %v95, 1e-06
    %v352 = vmax.f32 %v96, 1e-06
    %v353 = vmax.f32 %v97, 1e-06
    %v354 = vmax.f32 %v98, 1e-06
    %v355 = vmax.f32 %v99, 1e-06
    %v356 = vmax.f32 %v100, 1e-06
    %v357 = vmax.f32 %v101, 1e-06
    %v358 = vmax.f32 %v102, 1e-06
    %v359 = vmax.f32 %v103, 1e-06
    %v360 = vmax.f32 %v104, 1e-06
    %v361 = vmax.f32 %v105, 1e-06
    %v362 = vmax.f32 %v106, 1e-06
    %v363 = vmax.f32 %v107, 1e-06
    %v364 = vmax.f32 %v108, 1e-06
    %v365 = vmax.f32 %v109, 1e-06
    %v366 = vmax.f32 %v110, 1e-06
    %v367 = vmax.f32 %v111, 1e-06
    %v368 = vmax.f32 %v112, 1e-06
    %v369 = vmax.f32 %v113, 1e-06
    %v370 = vmax.f32 %v114, 1e-06
    %v371 = vmax.f32 %v115, 1e-06
    %v372 = vmax.f32 %v116, 1e-06
    %v373 = vmax.f32 %v117, 1e-06
    %v374 = vmax.f32 %v118, 1e-06
    %v375 = vmax.f32 %v119, 1e-06
    %v376 = vmax.f32 %v120, 1e-06
    %v377 = vmax.f32 %v121, 1e-06
    %v378 = vmax.f32 %v122, 1e-06
    %v379 = vmax.f32 %v123, 1e-06
    %v380 = vmax.f32 %v124, 1e-06
    %v381 = vmax.f32 %v125, 1e-06
    %v382 = vmax.f32 %v126, 1e-06
    %v383 = vmax.f32 %v127, 1e-06
    %v384 = vmax.f32 %v128, 1e-06
    %v385 = vmax.f32 %v129, 1e-06
    %v386 = vmax.f32 %v130, 1e-06
    %v387 = vmax.f32 %v131, 1e-06
    %v388 = vmax.f32 %v132, 1e-06
    %v389 = vmax.f32 %v133, 1e-06
    %v390 = vmax.f32 %v134, 1e-06
    %v391 = vmax.f32 %v135, 1e-06
    %v392 = vmax.f32 %v136, 1e-06
    %v393 = vmax.f32 %v137, 1e-06
    %v394 = vmax.f32 %v138, 1e-06
    %v395 = vmax.f32 %v139, 1e-06
    %v396 = vmax.f32 %v140, 1e-06
    %v397 = vmax.f32 %v141, 1e-06
    %v398 = vmax.f32 %v142, 1e-06
    %v399 = vmax.f32 %v143, 1e-06
    %v400 = vmax.f32 %v144, 1e-06
    %v401 = vmax.f32 %v145, 1e-06
    %v402 = vmax.f32 %v146, 1e-06
    %v403 = vmax.f32 %v147, 1e-06
    %v404 = vmax.f32 %v148, 1e-06
    %v405 = vmax.f32 %v149, 1e-06
    %v406 = vmax.f32 %v150, 1e-06
    %v407 = vmax.f32 %v151, 1e-06
    %v408 = vmax.f32 %v152, 1e-06
    %v409 = vmax.f32 %v153, 1e-06
    %v410 = vmax.f32 %v154, 1e-06
    %v411 = vmax.f32 %v155, 1e-06
    %v412 = vmax.f32 %v156, 1e-06
    %v413 = vmax.f32 %v157, 1e-06
    %v414 = vmax.f32 %v158, 1e-06
    %v415 = vmax.f32 %v159, 1e-06
    %v416 = vmax.f32 %v160, 1e-06
    %v417 = vmax.f32 %v161, 1e-06
    %v418 = vmax.f32 %v162, 1e-06
    %v419 = vmax.f32 %v163, 1e-06
    %v420 = vmax.f32 %v164, 1e-06
    %v421 = vmax.f32 %v165, 1e-06
    %v422 = vmax.f32 %v166, 1e-06
    %v423 = vmax.f32 %v167, 1e-06
    %v424 = vmax.f32 %v168, 1e-06
    %v425 = vmax.f32 %v169, 1e-06
    %v426 = vmax.f32 %v170, 1e-06
    %v427 = vmax.f32 %v171, 1e-06
    %v428 = vmax.f32 %v172, 1e-06
    %v429 = vmax.f32 %v173, 1e-06
    %v430 = vmax.f32 %v174, 1e-06
    %v431 = vmax.f32 %v175, 1e-06
    %v432 = vmax.f32 %v176, 1e-06
    %v433 = vmax.f32 %v177, 1e-06
    %v434 = vmax.f32 %v178, 1e-06
    %v435 = vmax.f32 %v179, 1e-06
    %v436 = vmax.f32 %v180, 1e-06
    %v437 = vmax.f32 %v181, 1e-06
    %v438 = vmax.f32 %v182, 1e-06
    %v439 = vmax.f32 %v183, 1e-06
    %v440 = vmax.f32 %v184, 1e-06
    %v441 = vmax.f32 %v185, 1e-06
    %v442 = vmax.f32 %v186, 1e-06
    %v443 = vmax.f32 %v187, 1e-06
    %v444 = vmax.f32 %v188, 1e-06
    %v445 = vmax.f32 %v189, 1e-06
    %v446 = vmax.f32 %v190, 1e-06
    %v447 = vmax.f32 %v191, 1e-06
    %v448 = vmax.f32 %v192, 1e-06
    %v449 = vmax.f32 %v193, 1e-06
    %v450 = vmax.f32 %v194, 1e-06
    %v451 = vmax.f32 %v195, 1e-06
    %v452 = vmax.f32 %v196, 1e-06
    %v453 = vmax.f32 %v197, 1e-06
    %v454 = vmax.f32 %v198, 1e-06
    %v455 = vmax.f32 %v199, 1e-06
    %v456 = vmax.f32 %v200, 1e-06
    %v457 = vmax.f32 %v201, 1e-06
    %v458 = vmax.f32 %v202, 1e-06
    %v459 = vmax.f32 %v203, 1e-06
    %v460 = vmax.f32 %v204, 1e-06
    %v461 = vmax.f32 %v205, 1e-06
    %v462 = vmax.f32 %v206, 1e-06
    %v463 = vmax.f32 %v207, 1e-06
    %v464 = vmax.f32 %v208, 1e-06
    %v465 = vmax.f32 %v209, 1e-06
    %v466 = vmax.f32 %v210, 1e-06
    %v467 = vmax.f32 %v211, 1e-06
    %v468 = vmax.f32 %v212, 1e-06
    %v469 = vmax.f32 %v213, 1e-06
    %v470 = vmax.f32 %v214, 1e-06
    %v471 = vmax.f32 %v215, 1e-06
    %v472 = vmax.f32 %v216, 1e-06
    %v473 = vmax.f32 %v217, 1e-06
    %v474 = vmax.f32 %v218, 1e-06
    %v475 = vmax.f32 %v219, 1e-06
    %v476 = vmax.f32 %v220, 1e-06
    %v477 = vmax.f32 %v221, 1e-06
    %v478 = vmax.f32 %v222, 1e-06
    %v479 = vmax.f32 %v223, 1e-06
    %v480 = vmax.f32 %v224, 1e-06
    %v481 = vmax.f32 %v225, 1e-06
    %v482 = vmax.f32 %v226, 1e-06
    %v483 = vmax.f32 %v227, 1e-06
    %v484 = vmax.f32 %v228, 1e-06
    %v485 = vmax.f32 %v229, 1e-06
    %v486 = vmax.f32 %v230, 1e-06
    %v487 = vmax.f32 %v231, 1e-06
    %v488 = vmax.f32 %v232, 1e-06
    %v489 = vmax.f32 %v233, 1e-06
    %v490 = vmax.f32 %v234, 1e-06
    %v491 = vmax.f32 %v235, 1e-06
    %v492 = vmax.f32 %v236, 1e-06
    %v493 = vmax.f32 %v237, 1e-06
    %v494 = vmax.f32 %v238, 1e-06
    %v495 = vmax.f32 %v239, 1e-06
    %v496 = vmax.f32 %v240, 1e-06
    %v497 = vmax.f32 %v241, 1e-06
    %v498 = vmax.f32 %v242, 1e-06
    %v499 = vmax.f32 %v243, 1e-06
    %v500 = vmax.f32 %v244, 1e-06
    %v501 = vmax.f32 %v245, 1e-06
    %v502 = vmax.f32 %v246, 1e-06
    %v503 = vmax.f32 %v247, 1e-06
    %v504 = vmax.f32 %v248, 1e-06
    %v505 = vmax.f32 %v249, 1e-06
    %v506 = vmax.f32 %v250, 1e-06
    %v507 = vmax.f32 %v251, 1e-06
    %v508 = vmax.f32 %v252, 1e-06
    %v509 = vmax.f32 %v253, 1e-06
    %v510 = vmax.f32 %v254, 1e-06
    %v511 = vmax.f32 %v255, 1e-06
    %v512 = vmax.f32 %v256, 1e-06
    %v513 = vmax.f32 %v257, 1e-06
    %v514 = vmax.f32 %v258, 1e-06
    %v515 = vmax.f32 %v259, 1e-06
    %v516 = vmax.f32 %v260, 1e-06
    %v517 = vmax.f32 %v261, 1e-06
    %v518 = vmax.f32 %v262, 1e-06
    %v519 = vmax.f32 %v263, 1e-06
    %v520 = vmax.f32 %v264, 1e-06
    %v521 = vmax.f32 %v265, 1e-06
    %v522 = vmax.f32 %v266, 1e-06
    %v523 = vmax.f32 %v267, 1e-06
    %v524 = vmax.f32 %v268, 1e-06
    %v525 = vmax.f32 %v269, 1e-06
    %v526 = vmax.f32 %v270, 1e-06
    %v527 = vmax.f32 %v271, 1e-06
    %v528 = vmax.f32 %v272, 1e-06
    %v529 = vmax.f32 %v273, 1e-06
    %v530 = vmax.f32 %v274, 1e-06
    %v531 = vmax.f32 %v275, 1e-06
    %v532 = vmax.f32 %v276, 1e-06
    %v533 = vmax.f32 %v277, 1e-06
    %v534 = vmax.f32 %v278, 1e-06
    %v535 = vmax.f32 %v279, 1e-06
    %v536 = vmax.f32 %v280, 1e-06
    %v537 = vmax.f32 %v281, 1e-06
    %v538 = vmax.f32 %v282, 1e-06
    %v539 = vmax.f32 %v283, 1e-06
    %v540 = vmax.f32 %v284, 1e-06
    %v541 = vmax.f32 %v285, 1e-06
    %v542 = vmax.f32 %v286, 1e-06
    %v543 = vmax.f32 %v287, 1e-06
    %v544 = vmax.f32 %v288, 1e-06
    %v545 = vmax.f32 %v289, 1e-06
    %v546 = vmax.f32 %v290, 1e-06
    %v547 = vmax.f32 %v291, 1e-06
    %v548 = vmax.f32 %v292, 1e-06
    %v549 = vmax.f32 %v293, 1e-06
    %v550 = vmax.f32 %v294, 1e-06
    %v551 = vmax.f32 %v295, 1e-06
    %v552 = vmax.f32 %v296, 1e-06
    %v553 = vmax.f32 %v297, 1e-06
    %v554 = vmax.f32 %v298, 1e-06
    %v555 = vmax.f32 %v299, 1e-06
    %v556 = vmax.f32 %v300, 1e-06
    %v557 = vmax.f32 %v301, 1e-06
    %v558 = vmax.f32 %v302, 1e-06
    %v559 = vmax.f32 %v303, 1e-06
    %v560 = vmax.f32 %v304, 1e-06
    %v561 = vmax.f32 %v305, 1e-06
    %v562 = vmax.f32 %v306, 1e-06
    %v563 = vmax.f32 %v307, 1e-06
    %v564 = vmax.f32 %v308, 1e-06
    %v565 = vmax.f32 %v309, 1e-06
    %v566 = vlog2.pop %v310
    %v567 = vmul.f32 %v566, 0.6931472
    %v568 = vlog2.pop %v311
    %v569 = vmul.f32 %v568, 0.6931472
    %v570 = vlog2.pop %v312
    %v571 = vmul.f32 %v570, 0.6931472
    %v572 = vlog2.pop %v313
    %v573 = vmul.f32 %v572, 0.6931472
    %v574 = vlog2.pop %v314
    %v575 = vmul.f32 %v574, 0.6931472
    %v576 = vlog2.pop %v315
    %v577 = vmul.f32 %v576, 0.6931472
    %v578 = vlog2.pop %v316
    %v579 = vmul.f32 %v578, 0.6931472
    %v580 = vlog2.pop %v317
    %v581 = vmul.f32 %v580, 0.6931472
    %v582 = vlog2.pop %v318
    %v583 = vmul.f32 %v582, 0.6931472
    %v584 = vlog2.pop %v319
    %v585 = vmul.f32 %v584, 0.6931472
    %v586 = vlog2.pop %v320
    %v587 = vmul.f32 %v586, 0.6931472
    %v588 = vlog2.pop %v321
    %v589 = vmul.f32 %v588, 0.6931472
    %v590 = vlog2.pop %v322
    %v591 = vmul.f32 %v590, 0.6931472
    %v592 = vlog2.pop %v323
    %v593 = vmul.f32 %v592, 0.6931472
    %v594 = vlog2.pop %v324
    %v595 = vmul.f32 %v594, 0.6931472
    %v596 = vlog2.pop %v325
    %v597 = vmul.f32 %v596, 0.6931472
    %v598 = vlog2.pop %v326
    %v599 = vmul.f32 %v598, 0.6931472
    %v600 = vlog2.pop %v327
    %v601 = vmul.f32 %v600, 0.6931472
    %v602 = vlog2.pop %v328
    %v603 = vmul.f32 %v602, 0.6931472
    %v604 = vlog2.pop %v329
    %v605 = vmul.f32 %v604, 0.6931472
    %v606 = vlog2.pop %v330
    %v607 = vmul.f32 %v606, 0.6931472
    %v608 = vlog2.pop %v331
    %v609 = vmul.f32 %v608, 0.6931472
    %v610 = vlog2.pop %v332
    %v611 = vmul.f32 %v610, 0.6931472
    %v612 = vlog2.pop %v333
    %v613 = vmul.f32 %v612, 0.6931472
    %v614 = vlog2.pop %v334
    %v615 = vmul.f32 %v614, 0.6931472
    %v616 = vlog2.pop %v335
    %v617 = vmul.f32 %v616, 0.6931472
    %v618 = vlog2.pop %v336
    %v619 = vmul.f32 %v618, 0.6931472
    %v620 = vlog2.pop %v337
    %v621 = vmul.f32 %v620, 0.6931472
    %v622 = vlog2.pop %v338
    %v623 = vmul.f32 %v622, 0.6931472
    %v624 = vlog2.pop %v339
    %v625 = vmul.f32 %v624, 0.6931472
    %v626 = vlog2.pop %v340
    %v627 = vmul.f32 %v626, 0.6931472
    %v628 = vlog2.pop %v341
    %v629 = vmul.f32 %v628, 0.6931472
    %v630 = vlog2.pop %v342
    %v631 = vmul.f32 %v630, 0.6931472
    %v632 = vlog2.pop %v343
    %v633 = vmul.f32 %v632, 0.6931472
    %v634 = vlog2.pop %v344
    %v635 = vmul.f32 %v634, 0.6931472
    %v636 = vlog2.pop %v345
    %v637 = vmul.f32 %v636, 0.6931472
    %v638 = vlog2.pop %v346
    %v639 = vmul.f32 %v638, 0.6931472
    %v640 = vlog2.pop %v347
    %v641 = vmul.f32 %v640, 0.6931472
    %v642 = vlog2.pop %v348
    %v643 = vmul.f32 %v642, 0.6931472
    %v644 = vlog2.pop %v349
    %v645 = vmul.f32 %v644, 0.6931472
    %v646 = vlog2.pop %v350
    %v647 = vmul.f32 %v646, 0.6931472
    %v648 = vlog2.pop %v351
    %v649 = vmul.f32 %v648, 0.6931472
    %v650 = vlog2.pop %v352
    %v651 = vmul.f32 %v650, 0.6931472
    %v652 = vlog2.pop %v353
    %v653 = vmul.f32 %v652, 0.6931472
    %v654 = vlog2.pop %v354
    %v655 = vmul.f32 %v654, 0.6931472
    %v656 = vlog2.pop %v355
    %v657 = vmul.f32 %v656, 0.6931472
    %v658 = vlog2.pop %v356
    %v659 = vmul.f32 %v658, 0.6931472
    %v660 = vlog2.pop %v357
    %v661 = vmul.f32 %v660, 0.6931472
    %v662 = vlog2.pop %v358
    %v663 = vmul.f32 %v662, 0.6931472
    %v664 = vlog2.pop %v359
    %v665 = vmul.f32 %v664, 0.6931472
    %v666 = vlog2.pop %v360
    %v667 = vmul.f32 %v666, 0.6931472
    %v668 = vlog2.pop %v361
    %v669 = vmul.f32 %v668, 0.6931472
    %v670 = vlog2.pop %v362
    %v671 = vmul.f32 %v670, 0.6931472
    %v672 = vlog2.pop %v363
    %v673 = vmul.f32 %v672, 0.6931472
    %v674 = vlog2.pop %v364
    %v675 = vmul.f32 %v674, 0.6931472
    %v676 = vlog2.pop %v365
    %v677 = vmul.f32 %v676, 0.6931472
    %v678 = vlog2.pop %v366
    %v679 = vmul.f32 %v678, 0.6931472
    %v680 = vlog2.pop %v367
    %v681 = vmul.f32 %v680, 0.6931472
    %v682 = vlog2.pop %v368
    %v683 = vmul.f32 %v682, 0.6931472
    %v684 = vlog2.pop %v369
    %v685 = vmul.f32 %v684, 0.6931472
    %v686 = vlog2.pop %v370
    %v687 = vmul.f32 %v686, 0.6931472
    %v688 = vlog2.pop %v371
    %v689 = vmul.f32 %v688, 0.6931472
    %v690 = vlog2.pop %v372
    %v691 = vmul.f32 %v690, 0.6931472
    %v692 = vlog2.pop %v373
    %v693 = vmul.f32 %v692, 0.6931472
    %v694 = vlog2.pop %v374
    %v695 = vmul.f32 %v694, 0.6931472
    %v696 = vlog2.pop %v375
    %v697 = vmul.f32 %v696, 0.6931472
    %v698 = vlog2.pop %v376
    %v699 = vmul.f32 %v698, 0.6931472
    %v700 = vlog2.pop %v377
    %v701 = vmul.f32 %v700, 0.6931472
    %v702 = vlog2.pop %v378
    %v703 = vmul.f32 %v702, 0.6931472
    %v704 = vlog2.pop %v379
    %v705 = vmul.f32 %v704, 0.6931472
    %v706 = vlog2.pop %v380
    %v707 = vmul.f32 %v706, 0.6931472
    %v708 = vlog2.pop %v381
    %v709 = vmul.f32 %v708, 0.6931472
    %v710 = vlog2.pop %v382
    %v711 = vmul.f32 %v710, 0.6931472
    %v712 = vlog2.pop %v383
    %v713 = vmul.f32 %v712, 0.6931472
    %v714 = vlog2.pop %v384
    %v715 = vmul.f32 %v714, 0.6931472
    %v716 = vlog2.pop %v385
    %v717 = vmul.f32 %v716, 0.6931472
    %v718 = vlog2.pop %v386
    %v719 = vmul.f32 %v718, 0.6931472
    %v720 = vlog2.pop %v387
    %v721 = vmul.f32 %v720, 0.6931472
    %v722 = vlog2.pop %v388
    %v723 = vmul.f32 %v722, 0.6931472
    %v724 = vlog2.pop %v389
    %v725 = vmul.f32 %v724, 0.6931472
    %v726 = vlog2.pop %v390
    %v727 = vmul.f32 %v726, 0.6931472
    %v728 = vlog2.pop %v391
    %v729 = vmul.f32 %v728, 0.6931472
    %v730 = vlog2.pop %v392
    %v731 = vmul.f32 %v730, 0.6931472
    %v732 = vlog2.pop %v393
    %v733 = vmul.f32 %v732, 0.6931472
    %v734 = vlog2.pop %v394
    %v735 = vmul.f32 %v734, 0.6931472
    %v736 = vlog2.pop %v395
    %v737 = vmul.f32 %v736, 0.6931472
    %v738 = vlog2.pop %v396
    %v739 = vmul.f32 %v738, 0.6931472
    %v740 = vlog2.pop %v397
    %v741 = vmul.f32 %v740, 0.6931472
    %v742 = vlog2.pop %v398
    %v743 = vmul.f32 %v742, 0.6931472
    %v744 = vlog2.pop %v399
    %v745 = vmul.f32 %v744, 0.6931472
    %v746 = vlog2.pop %v400
    %v747 = vmul.f32 %v746, 0.6931472
    %v748 = vlog2.pop %v401
    %v749 = vmul.f32 %v748, 0.6931472
    %v750 = vlog2.pop %v402
    %v751 = vmul.f32 %v750, 0.6931472
    %v752 = vlog2.pop %v403
    %v753 = vmul.f32 %v752, 0.6931472
    %v754 = vlog2.pop %v404
    %v755 = vmul.f32 %v754, 0.6931472
    %v756 = vlog2.pop %v405
    %v757 = vmul.f32 %v756, 0.6931472
    %v758 = vlog2.pop %v406
    %v759 = vmul.f32 %v758, 0.6931472
    %v760 = vlog2.pop %v407
    %v761 = vmul.f32 %v760, 0.6931472
    %v762 = vlog2.pop %v408
    %v763 = vmul.f32 %v762, 0.6931472
    %v764 = vlog2.pop %v409
    %v765 = vmul.f32 %v764, 0.6931472
    %v766 = vlog2.pop %v410
    %v767 = vmul.f32 %v766, 0.6931472
    %v768 = vlog2.pop %v411
    %v769 = vmul.f32 %v768, 0.6931472
    %v770 = vlog2.pop %v412
    %v771 = vmul.f32 %v770, 0.6931472
    %v772 = vlog2.pop %v413
    %v773 = vmul.f32 %v772, 0.6931472
    %v774 = vlog2.pop %v414
    %v775 = vmul.f32 %v774, 0.6931472
    %v776 = vlog2.pop %v415
    %v777 = vmul.f32 %v776, 0.6931472
    %v778 = vlog2.pop %v416
    %v779 = vmul.f32 %v778, 0.6931472
    %v780 = vlog2.pop %v417
    %v781 = vmul.f32 %v780, 0.6931472
    %v782 = vlog2.pop %v418
    %v783 = vmul.f32 %v782, 0.6931472
    %v784 = vlog2.pop %v419
    %v785 = vmul.f32 %v784, 0.6931472
    %v786 = vlog2.pop %v420
    %v787 = vmul.f32 %v786, 0.6931472
    %v788 = vlog2.pop %v421
    %v789 = vmul.f32 %v788, 0.6931472
    %v790 = vlog2.pop %v422
    %v791 = vmul.f32 %v790, 0.6931472
    %v792 = vlog2.pop %v423
    %v793 = vmul.f32 %v792, 0.6931472
    %v794 = vlog2.pop %v424
    %v795 = vmul.f32 %v794, 0.6931472
    %v796 = vlog2.pop %v425
    %v797 = vmul.f32 %v796, 0.6931472
    %v798 = vlog2.pop %v426
    %v799 = vmul.f32 %v798, 0.6931472
    %v800 = vlog2.pop %v427
    %v801 = vmul.f32 %v800, 0.6931472
    %v802 = vlog2.pop %v428
    %v803 = vmul.f32 %v802, 0.6931472
    %v804 = vlog2.pop %v429
    %v805 = vmul.f32 %v804, 0.6931472
    %v806 = vlog2.pop %v430
    %v807 = vmul.f32 %v806, 0.6931472
    %v808 = vlog2.pop %v431
    %v809 = vmul.f32 %v808, 0.6931472
    %v810 = vlog2.pop %v432
    %v811 = vmul.f32 %v810, 0.6931472
    %v812 = vlog2.pop %v433
    %v813 = vmul.f32 %v812, 0.6931472
    %v814 = vlog2.pop %v434
    %v815 = vmul.f32 %v814, 0.6931472
    %v816 = vlog2.pop %v435
    %v817 = vmul.f32 %v816, 0.6931472
    %v818 = vlog2.pop %v436
    %v819 = vmul.f32 %v818, 0.6931472
    %v820 = vlog2.pop %v437
    %v821 = vmul.f32 %v820, 0.6931472
    %v822 = vlog2.pop %v438
    %v823 = vmul.f32 %v822, 0.6931472
    %v824 = vlog2.pop %v439
    %v825 = vmul.f32 %v824, 0.6931472
    %v826 = vlog2.pop %v440
    %v827 = vmul.f32 %v826, 0.6931472
    %v828 = vlog2.pop %v441
    %v829 = vmul.f32 %v828, 0.6931472
    %v830 = vlog2.pop %v442
    %v831 = vmul.f32 %v830, 0.6931472
    %v832 = vlog2.pop %v443
    %v833 = vmul.f32 %v832, 0.6931472
    %v834 = vlog2.pop %v444
    %v835 = vmul.f32 %v834, 0.6931472
    %v836 = vlog2.pop %v445
    %v837 = vmul.f32 %v836, 0.6931472
    %v838 = vlog2.pop %v446
    %v839 = vmul.f32 %v838, 0.6931472
    %v840 = vlog2.pop %v447
    %v841 = vmul.f32 %v840, 0.6931472
    %v842 = vlog2.pop %v448
    %v843 = vmul.f32 %v842, 0.6931472
    %v844 = vlog2.pop %v449
    %v845 = vmul.f32 %v844, 0.6931472
    %v846 = vlog2.pop %v450
    %v847 = vmul.f32 %v846, 0.6931472
    %v848 = vlog2.pop %v451
    %v849 = vmul.f32 %v848, 0.6931472
    %v850 = vlog2.pop %v452
    %v851 = vmul.f32 %v850, 0.6931472
    %v852 = vlog2.pop %v453
    %v853 = vmul.f32 %v852, 0.6931472
    %v854 = vlog2.pop %v454
    %v855 = vmul.f32 %v854, 0.6931472
    %v856 = vlog2.pop %v455
    %v857 = vmul.f32 %v856, 0.6931472
    %v858 = vlog2.pop %v456
    %v859 = vmul.f32 %v858, 0.6931472
    %v860 = vlog2.pop %v457
    %v861 = vmul.f32 %v860, 0.6931472
    %v862 = vlog2.pop %v458
    %v863 = vmul.f32 %v862, 0.6931472
    %v864 = vlog2.pop %v459
    %v865 = vmul.f32 %v864, 0.6931472
    %v866 = vlog2.pop %v460
    %v867 = vmul.f32 %v866, 0.6931472
    %v868 = vlog2.pop %v461
    %v869 = vmul.f32 %v868, 0.6931472
    %v870 = vlog2.pop %v462
    %v871 = vmul.f32 %v870, 0.6931472
    %v872 = vlog2.pop %v463
    %v873 = vmul.f32 %v872, 0.6931472
    %v874 = vlog2.pop %v464
    %v875 = vmul.f32 %v874, 0.6931472
    %v876 = vlog2.pop %v465
    %v877 = vmul.f32 %v876, 0.6931472
    %v878 = vlog2.pop %v466
    %v879 = vmul.f32 %v878, 0.6931472
    %v880 = vlog2.pop %v467
    %v881 = vmul.f32 %v880, 0.6931472
    %v882 = vlog2.pop %v468
    %v883 = vmul.f32 %v882, 0.6931472
    %v884 = vlog2.pop %v469
    %v885 = vmul.f32 %v884, 0.6931472
    %v886 = vlog2.pop %v470
    %v887 = vmul.f32 %v886, 0.6931472
    %v888 = vlog2.pop %v471
    %v889 = vmul.f32 %v888, 0.6931472
    %v890 = vlog2.pop %v472
    %v891 = vmul.f32 %v890, 0.6931472
    %v892 = vlog2.pop %v473
    %v893 = vmul.f32 %v892, 0.6931472
    %v894 = vlog2.pop %v474
    %v895 = vmul.f32 %v894, 0.6931472
    %v896 = vlog2.pop %v475
    %v897 = vmul.f32 %v896, 0.6931472
    %v898 = vlog2.pop %v476
    %v899 = vmul.f32 %v898, 0.6931472
    %v900 = vlog2.pop %v477
    %v901 = vmul.f32 %v900, 0.6931472
    %v902 = vlog2.pop %v478
    %v903 = vmul.f32 %v902, 0.6931472
    %v904 = vlog2.pop %v479
    %v905 = vmul.f32 %v904, 0.6931472
    %v906 = vlog2.pop %v480
    %v907 = vmul.f32 %v906, 0.6931472
    %v908 = vlog2.pop %v481
    %v909 = vmul.f32 %v908, 0.6931472
    %v910 = vlog2.pop %v482
    %v911 = vmul.f32 %v910, 0.6931472
    %v912 = vlog2.pop %v483
    %v913 = vmul.f32 %v912, 0.6931472
    %v914 = vlog2.pop %v484
    %v915 = vmul.f32 %v914, 0.6931472
    %v916 = vlog2.pop %v485
    %v917 = vmul.f32 %v916, 0.6931472
    %v918 = vlog2.pop %v486
    %v919 = vmul.f32 %v918, 0.6931472
    %v920 = vlog2.pop %v487
    %v921 = vmul.f32 %v920, 0.6931472
    %v922 = vlog2.pop %v488
    %v923 = vmul.f32 %v922, 0.6931472
    %v924 = vlog2.pop %v489
    %v925 = vmul.f32 %v924, 0.6931472
    %v926 = vlog2.pop %v490
    %v927 = vmul.f32 %v926, 0.6931472
    %v928 = vlog2.pop %v491
    %v929 = vmul.f32 %v928, 0.6931472
    %v930 = vlog2.pop %v492
    %v931 = vmul.f32 %v930, 0.6931472
    %v932 = vlog2.pop %v493
    %v933 = vmul.f32 %v932, 0.6931472
    %v934 = vlog2.pop %v494
    %v935 = vmul.f32 %v934, 0.6931472
    %v936 = vlog2.pop %v495
    %v937 = vmul.f32 %v936, 0.6931472
    %v938 = vlog2.pop %v496
    %v939 = vmul.f32 %v938, 0.6931472
    %v940 = vlog2.pop %v497
    %v941 = vmul.f32 %v940, 0.6931472
    %v942 = vlog2.pop %v498
    %v943 = vmul.f32 %v942, 0.6931472
    %v944 = vlog2.pop %v499
    %v945 = vmul.f32 %v944, 0.6931472
    %v946 = vlog2.pop %v500
    %v947 = vmul.f32 %v946, 0.6931472
    %v948 = vlog2.pop %v501
    %v949 = vmul.f32 %v948, 0.6931472
    %v950 = vlog2.pop %v502
    %v951 = vmul.f32 %v950, 0.6931472
    %v952 = vlog2.pop %v503
    %v953 = vmul.f32 %v952, 0.6931472
    %v954 = vlog2.pop %v504
    %v955 = vmul.f32 %v954, 0.6931472
    %v956 = vlog2.pop %v505
    %v957 = vmul.f32 %v956, 0.6931472
    %v958 = vlog2.pop %v506
    %v959 = vmul.f32 %v958, 0.6931472
    %v960 = vlog2.pop %v507
    %v961 = vmul.f32 %v960, 0.6931472
    %v962 = vlog2.pop %v508
    %v963 = vmul.f32 %v962, 0.6931472
    %v964 = vlog2.pop %v509
    %v965 = vmul.f32 %v964, 0.6931472
    %v966 = vlog2.pop %v510
    %v967 = vmul.f32 %v966, 0.6931472
    %v968 = vlog2.pop %v511
    %v969 = vmul.f32 %v968, 0.6931472
    %v970 = vlog2.pop %v512
    %v971 = vmul.f32 %v970, 0.6931472
    %v972 = vlog2.pop %v513
    %v973 = vmul.f32 %v972, 0.6931472
    %v974 = vlog2.pop %v514
    %v975 = vmul.f32 %v974, 0.6931472
    %v976 = vlog2.pop %v515
    %v977 = vmul.f32 %v976, 0.6931472
    %v978 = vlog2.pop %v516
    %v979 = vmul.f32 %v978, 0.6931472
    %v980 = vlog2.pop %v517
    %v981 = vmul.f32 %v980, 0.6931472
    %v982 = vlog2.pop %v518
    %v983 = vmul.f32 %v982, 0.6931472
    %v984 = vlog2.pop %v519
    %v985 = vmul.f32 %v984, 0.6931472
    %v986 = vlog2.pop %v520
    %v987 = vmul.f32 %v986, 0.6931472
    %v988 = vlog2.pop %v521
    %v989 = vmul.f32 %v988, 0.6931472
    %v990 = vlog2.pop %v522
    %v991 = vmul.f32 %v990, 0.6931472
    %v992 = vlog2.pop %v523
    %v993 = vmul.f32 %v992, 0.6931472
    %v994 = vlog2.pop %v524
    %v995 = vmul.f32 %v994, 0.6931472
    %v996 = vlog2.pop %v525
    %v997 = vmul.f32 %v996, 0.6931472
    %v998 = vlog2.pop %v526
    %v999 = vmul.f32 %v998, 0.6931472
    %v1000 = vlog2.pop %v527
    %v1001 = vmul.f32 %v1000, 0.6931472
    %v1002 = vlog2.pop %v528
    %v1003 = vmul.f32 %v1002, 0.6931472
    %v1004 = vlog2.pop %v529
    %v1005 = vmul.f32 %v1004, 0.6931472
    %v1006 = vlog2.pop %v530
    %v1007 = vmul.f32 %v1006, 0.6931472
    %v1008 = vlog2.pop %v531
    %v1009 = vmul.f32 %v1008, 0.6931472
    %v1010 = vlog2.pop %v532
    %v1011 = vmul.f32 %v1010, 0.6931472
    %v1012 = vlog2.pop %v533
    %v1013 = vmul.f32 %v1012, 0.6931472
    %v1014 = vlog2.pop %v534
    %v1015 = vmul.f32 %v1014, 0.6931472
    %v1016 = vlog2.pop %v535
    %v1017 = vmul.f32 %v1016, 0.6931472
    %v1018 = vlog2.pop %v536
    %v1019 = vmul.f32 %v1018, 0.6931472
    %v1020 = vlog2.pop %v537
    %v1021 = vmul.f32 %v1020, 0.6931472
    %v1022 = vlog2.pop %v538
    %v1023 = vmul.f32 %v1022, 0.6931472
    %v1024 = vlog2.pop %v539
    %v1025 = vmul.f32 %v1024, 0.6931472
    %v1026 = vlog2.pop %v540
    %v1027 = vmul.f32 %v1026, 0.6931472
    %v1028 = vlog2.pop %v541
    %v1029 = vmul.f32 %v1028, 0.6931472
    %v1030 = vlog2.pop %v542
    %v1031 = vmul.f32 %v1030, 0.6931472
    %v1032 = vlog2.pop %v543
    %v1033 = vmul.f32 %v1032, 0.6931472
    %v1034 = vlog2.pop %v544
    %v1035 = vmul.f32 %v1034, 0.6931472
    %v1036 = vlog2.pop %v545
    %v1037 = vmul.f32 %v1036, 0.6931472
    %v1038 = vlog2.pop %v546
    %v1039 = vmul.f32 %v1038, 0.6931472
    %v1040 = vlog2.pop %v547
    %v1041 = vmul.f32 %v1040, 0.6931472
    %v1042 = vlog2.pop %v548
    %v1043 = vmul.f32 %v1042, 0.6931472
    %v1044 = vlog2.pop %v549
    %v1045 = vmul.f32 %v1044, 0.6931472
    %v1046 = vlog2.pop %v550
    %v1047 = vmul.f32 %v1046, 0.6931472
    %v1048 = vlog2.pop %v551
    %v1049 = vmul.f32 %v1048, 0.6931472
    %v1050 = vlog2.pop %v552
    %v1051 = vmul.f32 %v1050, 0.6931472
    %v1052 = vlog2.pop %v553
    %v1053 = vmul.f32 %v1052, 0.6931472
    %v1054 = vlog2.pop %v554
    %v1055 = vmul.f32 %v1054, 0.6931472
    %v1056 = vlog2.pop %v555
    %v1057 = vmul.f32 %v1056, 0.6931472
    %v1058 = vlog2.pop %v556
    %v1059 = vmul.f32 %v1058, 0.6931472
    %v1060 = vlog2.pop %v557
    %v1061 = vmul.f32 %v1060, 0.6931472
    %v1062 = vlog2.pop %v558
    %v1063 = vmul.f32 %v1062, 0.6931472
    %v1064 = vlog2.pop %v559
    %v1065 = vmul.f32 %v1064, 0.6931472
    %v1066 = vlog2.pop %v560
    %v1067 = vmul.f32 %v1066, 0.6931472
    %v1068 = vlog2.pop %v561
    %v1069 = vmul.f32 %v1068, 0.6931472
    %v1070 = vlog2.pop %v562
    %v1071 = vmul.f32 %v1070, 0.6931472
    %v1072 = vlog2.pop %v563
    %v1073 = vmul.f32 %v1072, 0.6931472
    %v1074 = vlog2.pop %v564
    %v1075 = vmul.f32 %v1074, 0.6931472
    %v1076 = vlog2.pop %v565
    %v1077 = vmul.f32 %v1076, 0.6931472
    %v1078 = vstv %s50
    %v1079 = vmul.f32 %v1078, %v567
    %v1080 = vmul.f32 %v1078, %v569
    %v1081 = vmul.f32 %v1078, %v571
    %v1082 = vmul.f32 %v1078, %v573
    %v1083 = vmul.f32 %v1078, %v575
    %v1084 = vmul.f32 %v1078, %v577
    %v1085 = vmul.f32 %v1078, %v579
    %v1086 = vmul.f32 %v1078, %v581
    %v1087 = vmul.f32 %v1078, %v583
    %v1088 = vmul.f32 %v1078, %v585
    %v1089 = vmul.f32 %v1078, %v587
    %v1090 = vmul.f32 %v1078, %v589
    %v1091 = vmul.f32 %v1078, %v591
    %v1092 = vmul.f32 %v1078, %v593
    %v1093 = vmul.f32 %v1078, %v595
    %v1094 = vmul.f32 %v1078, %v597
    %v1095 = vmul.f32 %v1078, %v599
    %v1096 = vmul.f32 %v1078, %v601
    %v1097 = vmul.f32 %v1078, %v603
    %v1098 = vmul.f32 %v1078, %v605
    %v1099 = vmul.f32 %v1078, %v607
    %v1100 = vmul.f32 %v1078, %v609
    %v1101 = vmul.f32 %v1078, %v611
    %v1102 = vmul.f32 %v1078, %v613
    %v1103 = vmul.f32 %v1078, %v615
    %v1104 = vmul.f32 %v1078, %v617
    %v1105 = vmul.f32 %v1078, %v619
    %v1106 = vmul.f32 %v1078, %v621
    %v1107 = vmul.f32 %v1078, %v623
    %v1108 = vmul.f32 %v1078, %v625
    %v1109 = vmul.f32 %v1078, %v627
    %v1110 = vmul.f32 %v1078, %v629
    %v1111 = vmul.f32 %v1078, %v631
    %v1112 = vmul.f32 %v1078, %v633
    %v1113 = vmul.f32 %v1078, %v635
    %v1114 = vmul.f32 %v1078, %v637
    %v1115 = vmul.f32 %v1078, %v639
    %v1116 = vmul.f32 %v1078, %v641
    %v1117 = vmul.f32 %v1078, %v643
    %v1118 = vmul.f32 %v1078, %v645
    %v1119 = vmul.f32 %v1078, %v647
    %v1120 = vmul.f32 %v1078, %v649
    %v1121 = vmul.f32 %v1078, %v651
    %v1122 = vmul.f32 %v1078, %v653
    %v1123 = vmul.f32 %v1078, %v655
    %v1124 = vmul.f32 %v1078, %v657
    %v1125 = vmul.f32 %v1078, %v659
    %v1126 = vmul.f32 %v1078, %v661
    %v1127 = vmul.f32 %v1078, %v663
    %v1128 = vmul.f32 %v1078, %v665
    %v1129 = vmul.f32 %v1078, %v667
    %v1130 = vmul.f32 %v1078, %v669
    %v1131 = vmul.f32 %v1078, %v671
    %v1132 = vmul.f32 %v1078, %v673
    %v1133 = vmul.f32 %v1078, %v675
    %v1134 = vmul.f32 %v1078, %v677
    %v1135 = vmul.f32 %v1078, %v679
    %v1136 = vmul.f32 %v1078, %v681
    %v1137 = vmul.f32 %v1078, %v683
    %v1138 = vmul.f32 %v1078, %v685
    %v1139 = vmul.f32 %v1078, %v687
    %v1140 = vmul.f32 %v1078, %v689
    %v1141 = vmul.f32 %v1078, %v691
    %v1142 = vmul.f32 %v1078, %v693
    %v1143 = vmul.f32 %v1078, %v695
    %v1144 = vmul.f32 %v1078, %v697
    %v1145 = vmul.f32 %v1078, %v699
    %v1146 = vmul.f32 %v1078, %v701
    %v1147 = vmul.f32 %v1078, %v703
    %v1148 = vmul.f32 %v1078, %v705
    %v1149 = vmul.f32 %v1078, %v707
    %v1150 = vmul.f32 %v1078, %v709
    %v1151 = vmul.f32 %v1078, %v711
    %v1152 = vmul.f32 %v1078, %v713
    %v1153 = vmul.f32 %v1078, %v715
    %v1154 = vmul.f32 %v1078, %v717
    %v1155 = vmul.f32 %v1078, %v719
    %v1156 = vmul.f32 %v1078, %v721
    %v1157 = vmul.f32 %v1078, %v723
    %v1158 = vmul.f32 %v1078, %v725
    %v1159 = vmul.f32 %v1078, %v727
    %v1160 = vmul.f32 %v1078, %v729
    %v1161 = vmul.f32 %v1078, %v731
    %v1162 = vmul.f32 %v1078, %v733
    %v1163 = vmul.f32 %v1078, %v735
    %v1164 = vmul.f32 %v1078, %v737
    %v1165 = vmul.f32 %v1078, %v739
    %v1166 = vmul.f32 %v1078, %v741
    %v1167 = vmul.f32 %v1078, %v743
    %v1168 = vmul.f32 %v1078, %v745
    %v1169 = vmul.f32 %v1078, %v747
    %v1170 = vmul.f32 %v1078, %v749
    %v1171 = vmul.f32 %v1078, %v751
    %v1172 = vmul.f32 %v1078, %v753
    %v1173 = vmul.f32 %v1078, %v755
    %v1174 = vmul.f32 %v1078, %v757
    %v1175 = vmul.f32 %v1078, %v759
    %v1176 = vmul.f32 %v1078, %v761
    %v1177 = vmul.f32 %v1078, %v763
    %v1178 = vmul.f32 %v1078, %v765
    %v1179 = vmul.f32 %v1078, %v767
    %v1180 = vmul.f32 %v1078, %v769
    %v1181 = vmul.f32 %v1078, %v771
    %v1182 = vmul.f32 %v1078, %v773
    %v1183 = vmul.f32 %v1078, %v775
    %v1184 = vmul.f32 %v1078, %v777
    %v1185 = vmul.f32 %v1078, %v779
    %v1186 = vmul.f32 %v1078, %v781
    %v1187 = vmul.f32 %v1078, %v783
    %v1188 = vmul.f32 %v1078, %v785
    %v1189 = vmul.f32 %v1078, %v787
    %v1190 = vmul.f32 %v1078, %v789
    %v1191 = vmul.f32 %v1078, %v791
    %v1192 = vmul.f32 %v1078, %v793
    %v1193 = vmul.f32 %v1078, %v795
    %v1194 = vmul.f32 %v1078, %v797
    %v1195 = vmul.f32 %v1078, %v799
    %v1196 = vmul.f32 %v1078, %v801
    %v1197 = vmul.f32 %v1078, %v803
    %v1198 = vmul.f32 %v1078, %v805
    %v1199 = vmul.f32 %v1078, %v807
    %v1200 = vmul.f32 %v1078, %v809
    %v1201 = vmul.f32 %v1078, %v811
    %v1202 = vmul.f32 %v1078, %v813
    %v1203 = vmul.f32 %v1078, %v815
    %v1204 = vmul.f32 %v1078, %v817
    %v1205 = vmul.f32 %v1078, %v819
    %v1206 = vmul.f32 %v1078, %v821
    %v1207 = vmul.f32 %v1078, %v823
    %v1208 = vmul.f32 %v1078, %v825
    %v1209 = vmul.f32 %v1078, %v827
    %v1210 = vmul.f32 %v1078, %v829
    %v1211 = vmul.f32 %v1078, %v831
    %v1212 = vmul.f32 %v1078, %v833
    %v1213 = vmul.f32 %v1078, %v835
    %v1214 = vmul.f32 %v1078, %v837
    %v1215 = vmul.f32 %v1078, %v839
    %v1216 = vmul.f32 %v1078, %v841
    %v1217 = vmul.f32 %v1078, %v843
    %v1218 = vmul.f32 %v1078, %v845
    %v1219 = vmul.f32 %v1078, %v847
    %v1220 = vmul.f32 %v1078, %v849
    %v1221 = vmul.f32 %v1078, %v851
    %v1222 = vmul.f32 %v1078, %v853
    %v1223 = vmul.f32 %v1078, %v855
    %v1224 = vmul.f32 %v1078, %v857
    %v1225 = vmul.f32 %v1078, %v859
    %v1226 = vmul.f32 %v1078, %v861
    %v1227 = vmul.f32 %v1078, %v863
    %v1228 = vmul.f32 %v1078, %v865
    %v1229 = vmul.f32 %v1078, %v867
    %v1230 = vmul.f32 %v1078, %v869
    %v1231 = vmul.f32 %v1078, %v871
    %v1232 = vmul.f32 %v1078, %v873
    %v1233 = vmul.f32 %v1078, %v875
    %v1234 = vmul.f32 %v1078, %v877
    %v1235 = vmul.f32 %v1078, %v879
    %v1236 = vmul.f32 %v1078, %v881
    %v1237 = vmul.f32 %v1078, %v883
    %v1238 = vmul.f32 %v1078, %v885
    %v1239 = vmul.f32 %v1078, %v887
    %v1240 = vmul.f32 %v1078, %v889
    %v1241 = vmul.f32 %v1078, %v891
    %v1242 = vmul.f32 %v1078, %v893
    %v1243 = vmul.f32 %v1078, %v895
    %v1244 = vmul.f32 %v1078, %v897
    %v1245 = vmul.f32 %v1078, %v899
    %v1246 = vmul.f32 %v1078, %v901
    %v1247 = vmul.f32 %v1078, %v903
    %v1248 = vmul.f32 %v1078, %v905
    %v1249 = vmul.f32 %v1078, %v907
    %v1250 = vmul.f32 %v1078, %v909
    %v1251 = vmul.f32 %v1078, %v911
    %v1252 = vmul.f32 %v1078, %v913
    %v1253 = vmul.f32 %v1078, %v915
    %v1254 = vmul.f32 %v1078, %v917
    %v1255 = vmul.f32 %v1078, %v919
    %v1256 = vmul.f32 %v1078, %v921
    %v1257 = vmul.f32 %v1078, %v923
    %v1258 = vmul.f32 %v1078, %v925
    %v1259 = vmul.f32 %v1078, %v927
    %v1260 = vmul.f32 %v1078, %v929
    %v1261 = vmul.f32 %v1078, %v931
    %v1262 = vmul.f32 %v1078, %v933
    %v1263 = vmul.f32 %v1078, %v935
    %v1264 = vmul.f32 %v1078, %v937
    %v1265 = vmul.f32 %v1078, %v939
    %v1266 = vmul.f32 %v1078, %v941
    %v1267 = vmul.f32 %v1078, %v943
    %v1268 = vmul.f32 %v1078, %v945
    %v1269 = vmul.f32 %v1078, %v947
    %v1270 = vmul.f32 %v1078, %v949
    %v1271 = vmul.f32 %v1078, %v951
    %v1272 = vmul.f32 %v1078, %v953
    %v1273 = vmul.f32 %v1078, %v955
    %v1274 = vmul.f32 %v1078, %v957
    %v1275 = vmul.f32 %v1078, %v959
    %v1276 = vmul.f32 %v1078, %v961
    %v1277 = vmul.f32 %v1078, %v963
    %v1278 = vmul.f32 %v1078, %v965
    %v1279 = vmul.f32 %v1078, %v967
    %v1280 = vmul.f32 %v1078, %v969
    %v1281 = vmul.f32 %v1078, %v971
    %v1282 = vmul.f32 %v1078, %v973
    %v1283 = vmul.f32 %v1078, %v975
    %v1284 = vmul.f32 %v1078, %v977
    %v1285 = vmul.f32 %v1078, %v979
    %v1286 = vmul.f32 %v1078, %v981
    %v1287 = vmul.f32 %v1078, %v983
    %v1288 = vmul.f32 %v1078, %v985
    %v1289 = vmul.f32 %v1078, %v987
    %v1290 = vmul.f32 %v1078, %v989
    %v1291 = vmul.f32 %v1078, %v991
    %v1292 = vmul.f32 %v1078, %v993
    %v1293 = vmul.f32 %v1078, %v995
    %v1294 = vmul.f32 %v1078, %v997
    %v1295 = vmul.f32 %v1078, %v999
    %v1296 = vmul.f32 %v1078, %v1001
    %v1297 = vmul.f32 %v1078, %v1003
    %v1298 = vmul.f32 %v1078, %v1005
    %v1299 = vmul.f32 %v1078, %v1007
    %v1300 = vmul.f32 %v1078, %v1009
    %v1301 = vmul.f32 %v1078, %v1011
    %v1302 = vmul.f32 %v1078, %v1013
    %v1303 = vmul.f32 %v1078, %v1015
    %v1304 = vmul.f32 %v1078, %v1017
    %v1305 = vmul.f32 %v1078, %v1019
    %v1306 = vmul.f32 %v1078, %v1021
    %v1307 = vmul.f32 %v1078, %v1023
    %v1308 = vmul.f32 %v1078, %v1025
    %v1309 = vmul.f32 %v1078, %v1027
    %v1310 = vmul.f32 %v1078, %v1029
    %v1311 = vmul.f32 %v1078, %v1031
    %v1312 = vmul.f32 %v1078, %v1033
    %v1313 = vmul.f32 %v1078, %v1035
    %v1314 = vmul.f32 %v1078, %v1037
    %v1315 = vmul.f32 %v1078, %v1039
    %v1316 = vmul.f32 %v1078, %v1041
    %v1317 = vmul.f32 %v1078, %v1043
    %v1318 = vmul.f32 %v1078, %v1045
    %v1319 = vmul.f32 %v1078, %v1047
    %v1320 = vmul.f32 %v1078, %v1049
    %v1321 = vmul.f32 %v1078, %v1051
    %v1322 = vmul.f32 %v1078, %v1053
    %v1323 = vmul.f32 %v1078, %v1055
    %v1324 = vmul.f32 %v1078, %v1057
    %v1325 = vmul.f32 %v1078, %v1059
    %v1326 = vmul.f32 %v1078, %v1061
    %v1327 = vmul.f32 %v1078, %v1063
    %v1328 = vmul.f32 %v1078, %v1065
    %v1329 = vmul.f32 %v1078, %v1067
    %v1330 = vmul.f32 %v1078, %v1069
    %v1331 = vmul.f32 %v1078, %v1071
    %v1332 = vmul.f32 %v1078, %v1073
    %v1333 = vmul.f32 %v1078, %v1075
    %v1334 = vmul.f32 %v1078, %v1077
    %v1335 = vmul.f32 %v1079, 1.442695
    %v1336 = vpow.pop %v1335
    %v1337 = vmul.f32 %v1080, 1.442695
    %v1338 = vpow.pop %v1337
    %v1339 = vmul.f32 %v1081, 1.442695
    %v1340 = vpow.pop %v1339
    %v1341 = vmul.f32 %v1082, 1.442695
    %v1342 = vpow.pop %v1341
    %v1343 = vmul.f32 %v1083, 1.442695
    %v1344 = vpow.pop %v1343
    %v1345 = vmul.f32 %v1084, 1.442695
    %v1346 = vpow.pop %v1345
    %v1347 = vmul.f32 %v1085, 1.442695
    %v1348 = vpow.pop %v1347
    %v1349 = vmul.f32 %v1086, 1.442695
    %v1350 = vpow.pop %v1349
    %v1351 = vmul.f32 %v1087, 1.442695
    %v1352 = vpow.pop %v1351
    %v1353 = vmul.f32 %v1088, 1.442695
    %v1354 = vpow.pop %v1353
    %v1355 = vmul.f32 %v1089, 1.442695
    %v1356 = vpow.pop %v1355
    %v1357 = vmul.f32 %v1090, 1.442695
    %v1358 = vpow.pop %v1357
    %v1359 = vmul.f32 %v1091, 1.442695
    %v1360 = vpow.pop %v1359
    %v1361 = vmul.f32 %v1092, 1.442695
    %v1362 = vpow.pop %v1361
    %v1363 = vmul.f32 %v1093, 1.442695
    %v1364 = vpow.pop %v1363
    %v1365 = vmul.f32 %v1094, 1.442695
    %v1366 = vpow.pop %v1365
    %v1367 = vmul.f32 %v1095, 1.442695
    %v1368 = vpow.pop %v1367
    %v1369 = vmul.f32 %v1096, 1.442695
    %v1370 = vpow.pop %v1369
    %v1371 = vmul.f32 %v1097, 1.442695
    %v1372 = vpow.pop %v1371
    %v1373 = vmul.f32 %v1098, 1.442695
    %v1374 = vpow.pop %v1373
    %v1375 = vmul.f32 %v1099, 1.442695
    %v1376 = vpow.pop %v1375
    %v1377 = vmul.f32 %v1100, 1.442695
    %v1378 = vpow.pop %v1377
    %v1379 = vmul.f32 %v1101, 1.442695
    %v1380 = vpow.pop %v1379
    %v1381 = vmul.f32 %v1102, 1.442695
    %v1382 = vpow.pop %v1381
    %v1383 = vmul.f32 %v1103, 1.442695
    %v1384 = vpow.pop %v1383
    %v1385 = vmul.f32 %v1104, 1.442695
    %v1386 = vpow.pop %v1385
    %v1387 = vmul.f32 %v1105, 1.442695
    %v1388 = vpow.pop %v1387
    %v1389 = vmul.f32 %v1106, 1.442695
    %v1390 = vpow.pop %v1389
    %v1391 = vmul.f32 %v1107, 1.442695
    %v1392 = vpow.pop %v1391
    %v1393 = vmul.f32 %v1108, 1.442695
    %v1394 = vpow.pop %v1393
    %v1395 = vmul.f32 %v1109, 1.442695
    %v1396 = vpow.pop %v1395
    %v1397 = vmul.f32 %v1110, 1.442695
    %v1398 = vpow.pop %v1397
    %v1399 = vmul.f32 %v1111, 1.442695
    %v1400 = vpow.pop %v1399
    %v1401 = vmul.f32 %v1112, 1.442695
    %v1402 = vpow.pop %v1401
    %v1403 = vmul.f32 %v1113, 1.442695
    %v1404 = vpow.pop %v1403
    %v1405 = vmul.f32 %v1114, 1.442695
    %v1406 = vpow.pop %v1405
    %v1407 = vmul.f32 %v1115, 1.442695
    %v1408 = vpow.pop %v1407
    %v1409 = vmul.f32 %v1116, 1.442695
    %v1410 = vpow.pop %v1409
    %v1411 = vmul.f32 %v1117, 1.442695
    %v1412 = vpow.pop %v1411
    %v1413 = vmul.f32 %v1118, 1.442695
    %v1414 = vpow.pop %v1413
    %v1415 = vmul.f32 %v1119, 1.442695
    %v1416 = vpow.pop %v1415
    %v1417 = vmul.f32 %v1120, 1.442695
    %v1418 = vpow.pop %v1417
    %v1419 = vmul.f32 %v1121, 1.442695
    %v1420 = vpow.pop %v1419
    %v1421 = vmul.f32 %v1122, 1.442695
    %v1422 = vpow.pop %v1421
    %v1423 = vmul.f32 %v1123, 1.442695
    %v1424 = vpow.pop %v1423
    %v1425 = vmul.f32 %v1124, 1.442695
    %v1426 = vpow.pop %v1425
    %v1427 = vmul.f32 %v1125, 1.442695
    %v1428 = vpow.pop %v1427
    %v1429 = vmul.f32 %v1126, 1.442695
    %v1430 = vpow.pop %v1429
    %v1431 = vmul.f32 %v1127, 1.442695
    %v1432 = vpow.pop %v1431
    %v1433 = vmul.f32 %v1128, 1.442695
    %v1434 = vpow.pop %v1433
    %v1435 = vmul.f32 %v1129, 1.442695
    %v1436 = vpow.pop %v1435
    %v1437 = vmul.f32 %v1130, 1.442695
    %v1438 = vpow.pop %v1437
    %v1439 = vmul.f32 %v1131, 1.442695
    %v1440 = vpow.pop %v1439
    %v1441 = vmul.f32 %v1132, 1.442695
    %v1442 = vpow.pop %v1441
    %v1443 = vmul.f32 %v1133, 1.442695
    %v1444 = vpow.pop %v1443
    %v1445 = vmul.f32 %v1134, 1.442695
    %v1446 = vpow.pop %v1445
    %v1447 = vmul.f32 %v1135, 1.442695
    %v1448 = vpow.pop %v1447
    %v1449 = vmul.f32 %v1136, 1.442695
    %v1450 = vpow.pop %v1449
    %v1451 = vmul.f32 %v1137, 1.442695
    %v1452 = vpow.pop %v1451
    %v1453 = vmul.f32 %v1138, 1.442695
    %v1454 = vpow.pop %v1453
    %v1455 = vmul.f32 %v1139, 1.442695
    %v1456 = vpow.pop %v1455
    %v1457 = vmul.f32 %v1140, 1.442695
    %v1458 = vpow.pop %v1457
    %v1459 = vmul.f32 %v1141, 1.442695
    %v1460 = vpow.pop %v1459
    %v1461 = vmul.f32 %v1142, 1.442695
    %v1462 = vpow.pop %v1461
    %v1463 = vmul.f32 %v1143, 1.442695
    %v1464 = vpow.pop %v1463
    %v1465 = vmul.f32 %v1144, 1.442695
    %v1466 = vpow.pop %v1465
    %v1467 = vmul.f32 %v1145, 1.442695
    %v1468 = vpow.pop %v1467
    %v1469 = vmul.f32 %v1146, 1.442695
    %v1470 = vpow.pop %v1469
    %v1471 = vmul.f32 %v1147, 1.442695
    %v1472 = vpow.pop %v1471
    %v1473 = vmul.f32 %v1148, 1.442695
    %v1474 = vpow.pop %v1473
    %v1475 = vmul.f32 %v1149, 1.442695
    %v1476 = vpow.pop %v1475
    %v1477 = vmul.f32 %v1150, 1.442695
    %v1478 = vpow.pop %v1477
    %v1479 = vmul.f32 %v1151, 1.442695
    %v1480 = vpow.pop %v1479
    %v1481 = vmul.f32 %v1152, 1.442695
    %v1482 = vpow.pop %v1481
    %v1483 = vmul.f32 %v1153, 1.442695
    %v1484 = vpow.pop %v1483
    %v1485 = vmul.f32 %v1154, 1.442695
    %v1486 = vpow.pop %v1485
    %v1487 = vmul.f32 %v1155, 1.442695
    %v1488 = vpow.pop %v1487
    %v1489 = vmul.f32 %v1156, 1.442695
    %v1490 = vpow.pop %v1489
    %v1491 = vmul.f32 %v1157, 1.442695
    %v1492 = vpow.pop %v1491
    %v1493 = vmul.f32 %v1158, 1.442695
    %v1494 = vpow.pop %v1493
    %v1495 = vmul.f32 %v1159, 1.442695
    %v1496 = vpow.pop %v1495
    %v1497 = vmul.f32 %v1160, 1.442695
    %v1498 = vpow.pop %v1497
    %v1499 = vmul.f32 %v1161, 1.442695
    %v1500 = vpow.pop %v1499
    %v1501 = vmul.f32 %v1162, 1.442695
    %v1502 = vpow.pop %v1501
    %v1503 = vmul.f32 %v1163, 1.442695
    %v1504 = vpow.pop %v1503
    %v1505 = vmul.f32 %v1164, 1.442695
    %v1506 = vpow.pop %v1505
    %v1507 = vmul.f32 %v1165, 1.442695
    %v1508 = vpow.pop %v1507
    %v1509 = vmul.f32 %v1166, 1.442695
    %v1510 = vpow.pop %v1509
    %v1511 = vmul.f32 %v1167, 1.442695
    %v1512 = vpow.pop %v1511
    %v1513 = vmul.f32 %v1168, 1.442695
    %v1514 = vpow.pop %v1513
    %v1515 = vmul.f32 %v1169, 1.442695
    %v1516 = vpow.pop %v1515
    %v1517 = vmul.f32 %v1170, 1.442695
    %v1518 = vpow.pop %v1517
    %v1519 = vmul.f32 %v1171, 1.442695
    %v1520 = vpow.pop %v1519
    %v1521 = vmul.f32 %v1172, 1.442695
    %v1522 = vpow.pop %v1521
    %v1523 = vmul.f32 %v1173, 1.442695
    %v1524 = vpow.pop %v1523
    %v1525 = vmul.f32 %v1174, 1.442695
    %v1526 = vpow.pop %v1525
    %v1527 = vmul.f32 %v1175, 1.442695
    %v1528 = vpow.pop %v1527
    %v1529 = vmul.f32 %v1176, 1.442695
    %v1530 = vpow.pop %v1529
    %v1531 = vmul.f32 %v1177, 1.442695
    %v1532 = vpow.pop %v1531
    %v1533 = vmul.f32 %v1178, 1.442695
    %v1534 = vpow.pop %v1533
    %v1535 = vmul.f32 %v1179, 1.442695
    %v1536 = vpow.pop %v1535
    %v1537 = vmul.f32 %v1180, 1.442695
    %v1538 = vpow.pop %v1537
    %v1539 = vmul.f32 %v1181, 1.442695
    %v1540 = vpow.pop %v1539
    %v1541 = vmul.f32 %v1182, 1.442695
    %v1542 = vpow.pop %v1541
    %v1543 = vmul.f32 %v1183, 1.442695
    %v1544 = vpow.pop %v1543
    %v1545 = vmul.f32 %v1184, 1.442695
    %v1546 = vpow.pop %v1545
    %v1547 = vmul.f32 %v1185, 1.442695
    %v1548 = vpow.pop %v1547
    %v1549 = vmul.f32 %v1186, 1.442695
    %v1550 = vpow.pop %v1549
    %v1551 = vmul.f32 %v1187, 1.442695
    %v1552 = vpow.pop %v1551
    %v1553 = vmul.f32 %v1188, 1.442695
    %v1554 = vpow.pop %v1553
    %v1555 = vmul.f32 %v1189, 1.442695
    %v1556 = vpow.pop %v1555
    %v1557 = vmul.f32 %v1190, 1.442695
    %v1558 = vpow.pop %v1557
    %v1559 = vmul.f32 %v1191, 1.442695
    %v1560 = vpow.pop %v1559
    %v1561 = vmul.f32 %v1192, 1.442695
    %v1562 = vpow.pop %v1561
    %v1563 = vmul.f32 %v1193, 1.442695
    %v1564 = vpow.pop %v1563
    %v1565 = vmul.f32 %v1194, 1.442695
    %v1566 = vpow.pop %v1565
    %v1567 = vmul.f32 %v1195, 1.442695
    %v1568 = vpow.pop %v1567
    %v1569 = vmul.f32 %v1196, 1.442695
    %v1570 = vpow.pop %v1569
    %v1571 = vmul.f32 %v1197, 1.442695
    %v1572 = vpow.pop %v1571
    %v1573 = vmul.f32 %v1198, 1.442695
    %v1574 = vpow.pop %v1573
    %v1575 = vmul.f32 %v1199, 1.442695
    %v1576 = vpow.pop %v1575
    %v1577 = vmul.f32 %v1200, 1.442695
    %v1578 = vpow.pop %v1577
    %v1579 = vmul.f32 %v1201, 1.442695
    %v1580 = vpow.pop %v1579
    %v1581 = vmul.f32 %v1202, 1.442695
    %v1582 = vpow.pop %v1581
    %v1583 = vmul.f32 %v1203, 1.442695
    %v1584 = vpow.pop %v1583
    %v1585 = vmul.f32 %v1204, 1.442695
    %v1586 = vpow.pop %v1585
    %v1587 = vmul.f32 %v1205, 1.442695
    %v1588 = vpow.pop %v1587
    %v1589 = vmul.f32 %v1206, 1.442695
    %v1590 = vpow.pop %v1589
    %v1591 = vmul.f32 %v1207, 1.442695
    %v1592 = vpow.pop %v1591
    %v1593 = vmul.f32 %v1208, 1.442695
    %v1594 = vpow.pop %v1593
    %v1595 = vmul.f32 %v1209, 1.442695
    %v1596 = vpow.pop %v1595
    %v1597 = vmul.f32 %v1210, 1.442695
    %v1598 = vpow.pop %v1597
    %v1599 = vmul.f32 %v1211, 1.442695
    %v1600 = vpow.pop %v1599
    %v1601 = vmul.f32 %v1212, 1.442695
    %v1602 = vpow.pop %v1601
    %v1603 = vmul.f32 %v1213, 1.442695
    %v1604 = vpow.pop %v1603
    %v1605 = vmul.f32 %v1214, 1.442695
    %v1606 = vpow.pop %v1605
    %v1607 = vmul.f32 %v1215, 1.442695
    %v1608 = vpow.pop %v1607
    %v1609 = vmul.f32 %v1216, 1.442695
    %v1610 = vpow.pop %v1609
    %v1611 = vmul.f32 %v1217, 1.442695
    %v1612 = vpow.pop %v1611
    %v1613 = vmul.f32 %v1218, 1.442695
    %v1614 = vpow.pop %v1613
    %v1615 = vmul.f32 %v1219, 1.442695
    %v1616 = vpow.pop %v1615
    %v1617 = vmul.f32 %v1220, 1.442695
    %v1618 = vpow.pop %v1617
    %v1619 = vmul.f32 %v1221, 1.442695
    %v1620 = vpow.pop %v1619
    %v1621 = vmul.f32 %v1222, 1.442695
    %v1622 = vpow.pop %v1621
    %v1623 = vmul.f32 %v1223, 1.442695
    %v1624 = vpow.pop %v1623
    %v1625 = vmul.f32 %v1224, 1.442695
    %v1626 = vpow.pop %v1625
    %v1627 = vmul.f32 %v1225, 1.442695
    %v1628 = vpow.pop %v1627
    %v1629 = vmul.f32 %v1226, 1.442695
    %v1630 = vpow.pop %v1629
    %v1631 = vmul.f32 %v1227, 1.442695
    %v1632 = vpow.pop %v1631
    %v1633 = vmul.f32 %v1228, 1.442695
    %v1634 = vpow.pop %v1633
    %v1635 = vmul.f32 %v1229, 1.442695
    %v1636 = vpow.pop %v1635
    %v1637 = vmul.f32 %v1230, 1.442695
    %v1638 = vpow.pop %v1637
    %v1639 = vmul.f32 %v1231, 1.442695
    %v1640 = vpow.pop %v1639
    %v1641 = vmul.f32 %v1232, 1.442695
    %v1642 = vpow.pop %v1641
    %v1643 = vmul.f32 %v1233, 1.442695
    %v1644 = vpow.pop %v1643
    %v1645 = vmul.f32 %v1234, 1.442695
    %v1646 = vpow.pop %v1645
    %v1647 = vmul.f32 %v1235, 1.442695
    %v1648 = vpow.pop %v1647
    %v1649 = vmul.f32 %v1236, 1.442695
    %v1650 = vpow.pop %v1649
    %v1651 = vmul.f32 %v1237, 1.442695
    %v1652 = vpow.pop %v1651
    %v1653 = vmul.f32 %v1238, 1.442695
    %v1654 = vpow.pop %v1653
    %v1655 = vmul.f32 %v1239, 1.442695
    %v1656 = vpow.pop %v1655
    %v1657 = vmul.f32 %v1240, 1.442695
    %v1658 = vpow.pop %v1657
    %v1659 = vmul.f32 %v1241, 1.442695
    %v1660 = vpow.pop %v1659
    %v1661 = vmul.f32 %v1242, 1.442695
    %v1662 = vpow.pop %v1661
    %v1663 = vmul.f32 %v1243, 1.442695
    %v1664 = vpow.pop %v1663
    %v1665 = vmul.f32 %v1244, 1.442695
    %v1666 = vpow.pop %v1665
    %v1667 = vmul.f32 %v1245, 1.442695
    %v1668 = vpow.pop %v1667
    %v1669 = vmul.f32 %v1246, 1.442695
    %v1670 = vpow.pop %v1669
    %v1671 = vmul.f32 %v1247, 1.442695
    %v1672 = vpow.pop %v1671
    %v1673 = vmul.f32 %v1248, 1.442695
    %v1674 = vpow.pop %v1673
    %v1675 = vmul.f32 %v1249, 1.442695
    %v1676 = vpow.pop %v1675
    %v1677 = vmul.f32 %v1250, 1.442695
    %v1678 = vpow.pop %v1677
    %v1679 = vmul.f32 %v1251, 1.442695
    %v1680 = vpow.pop %v1679
    %v1681 = vmul.f32 %v1252, 1.442695
    %v1682 = vpow.pop %v1681
    %v1683 = vmul.f32 %v1253, 1.442695
    %v1684 = vpow.pop %v1683
    %v1685 = vmul.f32 %v1254, 1.442695
    %v1686 = vpow.pop %v1685
    %v1687 = vmul.f32 %v1255, 1.442695
    %v1688 = vpow.pop %v1687
    %v1689 = vmul.f32 %v1256, 1.442695
    %v1690 = vpow.pop %v1689
    %v1691 = vmul.f32 %v1257, 1.442695
    %v1692 = vpow.pop %v1691
    %v1693 = vmul.f32 %v1258, 1.442695
    %v1694 = vpow.pop %v1693
    %v1695 = vmul.f32 %v1259, 1.442695
    %v1696 = vpow.pop %v1695
    %v1697 = vmul.f32 %v1260, 1.442695
    %v1698 = vpow.pop %v1697
    %v1699 = vmul.f32 %v1261, 1.442695
    %v1700 = vpow.pop %v1699
    %v1701 = vmul.f32 %v1262, 1.442695
    %v1702 = vpow.pop %v1701
    %v1703 = vmul.f32 %v1263, 1.442695
    %v1704 = vpow.pop %v1703
    %v1705 = vmul.f32 %v1264, 1.442695
    %v1706 = vpow.pop %v1705
    %v1707 = vmul.f32 %v1265, 1.442695
    %v1708 = vpow.pop %v1707
    %v1709 = vmul.f32 %v1266, 1.442695
    %v1710 = vpow.pop %v1709
    %v1711 = vmul.f32 %v1267, 1.442695
    %v1712 = vpow.pop %v1711
    %v1713 = vmul.f32 %v1268, 1.442695
    %v1714 = vpow.pop %v1713
    %v1715 = vmul.f32 %v1269, 1.442695
    %v1716 = vpow.pop %v1715
    %v1717 = vmul.f32 %v1270, 1.442695
    %v1718 = vpow.pop %v1717
    %v1719 = vmul.f32 %v1271, 1.442695
    %v1720 = vpow.pop %v1719
    %v1721 = vmul.f32 %v1272, 1.442695
    %v1722 = vpow.pop %v1721
    %v1723 = vmul.f32 %v1273, 1.442695
    %v1724 = vpow.pop %v1723
    %v1725 = vmul.f32 %v1274, 1.442695
    %v1726 = vpow.pop %v1725
    %v1727 = vmul.f32 %v1275, 1.442695
    %v1728 = vpow.pop %v1727
    %v1729 = vmul.f32 %v1276, 1.442695
    %v1730 = vpow.pop %v1729
    %v1731 = vmul.f32 %v1277, 1.442695
    %v1732 = vpow.pop %v1731
    %v1733 = vmul.f32 %v1278, 1.442695
    %v1734 = vpow.pop %v1733
    %v1735 = vmul.f32 %v1279, 1.442695
    %v1736 = vpow.pop %v1735
    %v1737 = vmul.f32 %v1280, 1.442695
    %v1738 = vpow.pop %v1737
    %v1739 = vmul.f32 %v1281, 1.442695
    %v1740 = vpow.pop %v1739
    %v1741 = vmul.f32 %v1282, 1.442695
    %v1742 = vpow.pop %v1741
    %v1743 = vmul.f32 %v1283, 1.442695
    %v1744 = vpow.pop %v1743
    %v1745 = vmul.f32 %v1284, 1.442695
    %v1746 = vpow.pop %v1745
    %v1747 = vmul.f32 %v1285, 1.442695
    %v1748 = vpow.pop %v1747
    %v1749 = vmul.f32 %v1286, 1.442695
    %v1750 = vpow.pop %v1749
    %v1751 = vmul.f32 %v1287, 1.442695
    %v1752 = vpow.pop %v1751
    %v1753 = vmul.f32 %v1288, 1.442695
    %v1754 = vpow.pop %v1753
    %v1755 = vmul.f32 %v1289, 1.442695
    %v1756 = vpow.pop %v1755
    %v1757 = vmul.f32 %v1290, 1.442695
    %v1758 = vpow.pop %v1757
    %v1759 = vmul.f32 %v1291, 1.442695
    %v1760 = vpow.pop %v1759
    %v1761 = vmul.f32 %v1292, 1.442695
    %v1762 = vpow.pop %v1761
    %v1763 = vmul.f32 %v1293, 1.442695
    %v1764 = vpow.pop %v1763
    %v1765 = vmul.f32 %v1294, 1.442695
    %v1766 = vpow.pop %v1765
    %v1767 = vmul.f32 %v1295, 1.442695
    %v1768 = vpow.pop %v1767
    %v1769 = vmul.f32 %v1296, 1.442695
    %v1770 = vpow.pop %v1769
    %v1771 = vmul.f32 %v1297, 1.442695
    %v1772 = vpow.pop %v1771
    %v1773 = vmul.f32 %v1298, 1.442695
    %v1774 = vpow.pop %v1773
    %v1775 = vmul.f32 %v1299, 1.442695
    %v1776 = vpow.pop %v1775
    %v1777 = vmul.f32 %v1300, 1.442695
    %v1778 = vpow.pop %v1777
    %v1779 = vmul.f32 %v1301, 1.442695
    %v1780 = vpow.pop %v1779
    %v1781 = vmul.f32 %v1302, 1.442695
    %v1782 = vpow.pop %v1781
    %v1783 = vmul.f32 %v1303, 1.442695
    %v1784 = vpow.pop %v1783
    %v1785 = vmul.f32 %v1304, 1.442695
    %v1786 = vpow.pop %v1785
    %v1787 = vmul.f32 %v1305, 1.442695
    %v1788 = vpow.pop %v1787
    %v1789 = vmul.f32 %v1306, 1.442695
    %v1790 = vpow.pop %v1789
    %v1791 = vmul.f32 %v1307, 1.442695
    %v1792 = vpow.pop %v1791
    %v1793 = vmul.f32 %v1308, 1.442695
    %v1794 = vpow.pop %v1793
    %v1795 = vmul.f32 %v1309, 1.442695
    %v1796 = vpow.pop %v1795
    %v1797 = vmul.f32 %v1310, 1.442695
    %v1798 = vpow.pop %v1797
    %v1799 = vmul.f32 %v1311, 1.442695
    %v1800 = vpow.pop %v1799
    %v1801 = vmul.f32 %v1312, 1.442695
    %v1802 = vpow.pop %v1801
    %v1803 = vmul.f32 %v1313, 1.442695
    %v1804 = vpow.pop %v1803
    %v1805 = vmul.f32 %v1314, 1.442695
    %v1806 = vpow.pop %v1805
    %v1807 = vmul.f32 %v1315, 1.442695
    %v1808 = vpow.pop %v1807
    %v1809 = vmul.f32 %v1316, 1.442695
    %v1810 = vpow.pop %v1809
    %v1811 = vmul.f32 %v1317, 1.442695
    %v1812 = vpow.pop %v1811
    %v1813 = vmul.f32 %v1318, 1.442695
    %v1814 = vpow.pop %v1813
    %v1815 = vmul.f32 %v1319, 1.442695
    %v1816 = vpow.pop %v1815
    %v1817 = vmul.f32 %v1320, 1.442695
    %v1818 = vpow.pop %v1817
    %v1819 = vmul.f32 %v1321, 1.442695
    %v1820 = vpow.pop %v1819
    %v1821 = vmul.f32 %v1322, 1.442695
    %v1822 = vpow.pop %v1821
    %v1823 = vmul.f32 %v1323, 1.442695
    %v1824 = vpow.pop %v1823
    %v1825 = vmul.f32 %v1324, 1.442695
    %v1826 = vpow.pop %v1825
    %v1827 = vmul.f32 %v1325, 1.442695
    %v1828 = vpow.pop %v1827
    %v1829 = vmul.f32 %v1326, 1.442695
    %v1830 = vpow.pop %v1829
    %v1831 = vmul.f32 %v1327, 1.442695
    %v1832 = vpow.pop %v1831
    %v1833 = vmul.f32 %v1328, 1.442695
    %v1834 = vpow.pop %v1833
    %v1835 = vmul.f32 %v1329, 1.442695
    %v1836 = vpow.pop %v1835
    %v1837 = vmul.f32 %v1330, 1.442695
    %v1838 = vpow.pop %v1837
    %v1839 = vmul.f32 %v1331, 1.442695
    %v1840 = vpow.pop %v1839
    %v1841 = vmul.f32 %v1332, 1.442695
    %v1842 = vpow.pop %v1841
    %v1843 = vmul.f32 %v1333, 1.442695
    %v1844 = vpow.pop %v1843
    %v1845 = vmul.f32 %v1334, 1.442695
    %v1846 = vpow.pop %v1845
    %v1847 = vrot.slane %v1336, 4
    %v1848 = vadd.f32 %v1336, %v1847
    %v1849 = vrot.slane %v1848, 2
    %v1850 = vadd.f32 %v1848, %v1849
    %v1851 = vrot.slane %v1850, 1
    %v1852 = vadd.f32 %v1850, %v1851
    %v1853 = vrot.slane %v1338, 4
    %v1854 = vadd.f32 %v1338, %v1853
    %v1855 = vrot.slane %v1854, 2
    %v1856 = vadd.f32 %v1854, %v1855
    %v1857 = vrot.slane %v1856, 1
    %v1858 = vadd.f32 %v1856, %v1857
    %v1859 = vrot.slane %v1340, 4
    %v1860 = vadd.f32 %v1340, %v1859
    %v1861 = vrot.slane %v1860, 2
    %v1862 = vadd.f32 %v1860, %v1861
    %v1863 = vrot.slane %v1862, 1
    %v1864 = vadd.f32 %v1862, %v1863
    %v1865 = vrot.slane %v1342, 4
    %v1866 = vadd.f32 %v1342, %v1865
    %v1867 = vrot.slane %v1866, 2
    %v1868 = vadd.f32 %v1866, %v1867
    %v1869 = vrot.slane %v1868, 1
    %v1870 = vadd.f32 %v1868, %v1869
    %v1871 = vrot.slane %v1344, 4
    %v1872 = vadd.f32 %v1344, %v1871
    %v1873 = vrot.slane %v1872, 2
    %v1874 = vadd.f32 %v1872, %v1873
    %v1875 = vrot.slane %v1874, 1
    %v1876 = vadd.f32 %v1874, %v1875
    %v1877 = vrot.slane %v1346, 4
    %v1878 = vadd.f32 %v1346, %v1877
    %v1879 = vrot.slane %v1878, 2
    %v1880 = vadd.f32 %v1878, %v1879
    %v1881 = vrot.slane %v1880, 1
    %v1882 = vadd.f32 %v1880, %v1881
    %v1883 = vrot.slane %v1348, 4
    %v1884 = vadd.f32 %v1348, %v1883
    %v1885 = vrot.slane %v1884, 2
    %v1886 = vadd.f32 %v1884, %v1885
    %v1887 = vrot.slane %v1886, 1
    %v1888 = vadd.f32 %v1886, %v1887
    %v1889 = vrot.slane %v1350, 4
    %v1890 = vadd.f32 %v1350, %v1889
    %v1891 = vrot.slane %v1890, 2
    %v1892 = vadd.f32 %v1890, %v1891
    %v1893 = vrot.slane %v1892, 1
    %v1894 = vadd.f32 %v1892, %v1893
    %v1895 = vrot.slane %v1352, 4
    %v1896 = vadd.f32 %v1352, %v1895
    %v1897 = vrot.slane %v1896, 2
    %v1898 = vadd.f32 %v1896, %v1897
    %v1899 = vrot.slane %v1898, 1
    %v1900 = vadd.f32 %v1898, %v1899
    %v1901 = vrot.slane %v1354, 4
    %v1902 = vadd.f32 %v1354, %v1901
    %v1903 = vrot.slane %v1902, 2
    %v1904 = vadd.f32 %v1902, %v1903
    %v1905 = vrot.slane %v1904, 1
    %v1906 = vadd.f32 %v1904, %v1905
    %v1907 = vrot.slane %v1356, 4
    %v1908 = vadd.f32 %v1356, %v1907
    %v1909 = vrot.slane %v1908, 2
    %v1910 = vadd.f32 %v1908, %v1909
    %v1911 = vrot.slane %v1910, 1
    %v1912 = vadd.f32 %v1910, %v1911
    %v1913 = vrot.slane %v1358, 4
    %v1914 = vadd.f32 %v1358, %v1913
    %v1915 = vrot.slane %v1914, 2
    %v1916 = vadd.f32 %v1914, %v1915
    %v1917 = vrot.slane %v1916, 1
    %v1918 = vadd.f32 %v1916, %v1917
    %v1919 = vrot.slane %v1360, 4
    %v1920 = vadd.f32 %v1360, %v1919
    %v1921 = vrot.slane %v1920, 2
    %v1922 = vadd.f32 %v1920, %v1921
    %v1923 = vrot.slane %v1922, 1
    %v1924 = vadd.f32 %v1922, %v1923
    %v1925 = vrot.slane %v1362, 4
    %v1926 = vadd.f32 %v1362, %v1925
    %v1927 = vrot.slane %v1926, 2
    %v1928 = vadd.f32 %v1926, %v1927
    %v1929 = vrot.slane %v1928, 1
    %v1930 = vadd.f32 %v1928, %v1929
    %v1931 = vrot.slane %v1364, 4
    %v1932 = vadd.f32 %v1364, %v1931
    %v1933 = vrot.slane %v1932, 2
    %v1934 = vadd.f32 %v1932, %v1933
    %v1935 = vrot.slane %v1934, 1
    %v1936 = vadd.f32 %v1934, %v1935
    %v1937 = vrot.slane %v1366, 4
    %v1938 = vadd.f32 %v1366, %v1937
    %v1939 = vrot.slane %v1938, 2
    %v1940 = vadd.f32 %v1938, %v1939
    %v1941 = vrot.slane %v1940, 1
    %v1942 = vadd.f32 %v1940, %v1941
    %v1943 = vrot.slane %v1368, 4
    %v1944 = vadd.f32 %v1368, %v1943
    %v1945 = vrot.slane %v1944, 2
    %v1946 = vadd.f32 %v1944, %v1945
    %v1947 = vrot.slane %v1946, 1
    %v1948 = vadd.f32 %v1946, %v1947
    %v1949 = vrot.slane %v1370, 4
    %v1950 = vadd.f32 %v1370, %v1949
    %v1951 = vrot.slane %v1950, 2
    %v1952 = vadd.f32 %v1950, %v1951
    %v1953 = vrot.slane %v1952, 1
    %v1954 = vadd.f32 %v1952, %v1953
    %v1955 = vrot.slane %v1372, 4
    %v1956 = vadd.f32 %v1372, %v1955
    %v1957 = vrot.slane %v1956, 2
    %v1958 = vadd.f32 %v1956, %v1957
    %v1959 = vrot.slane %v1958, 1
    %v1960 = vadd.f32 %v1958, %v1959
    %v1961 = vrot.slane %v1374, 4
    %v1962 = vadd.f32 %v1374, %v1961
    %v1963 = vrot.slane %v1962, 2
    %v1964 = vadd.f32 %v1962, %v1963
    %v1965 = vrot.slane %v1964, 1
    %v1966 = vadd.f32 %v1964, %v1965
    %v1967 = vrot.slane %v1376, 4
    %v1968 = vadd.f32 %v1376, %v1967
    %v1969 = vrot.slane %v1968, 2
    %v1970 = vadd.f32 %v1968, %v1969
    %v1971 = vrot.slane %v1970, 1
    %v1972 = vadd.f32 %v1970, %v1971
    %v1973 = vrot.slane %v1378, 4
    %v1974 = vadd.f32 %v1378, %v1973
    %v1975 = vrot.slane %v1974, 2
    %v1976 = vadd.f32 %v1974, %v1975
    %v1977 = vrot.slane %v1976, 1
    %v1978 = vadd.f32 %v1976, %v1977
    %v1979 = vrot.slane %v1380, 4
    %v1980 = vadd.f32 %v1380, %v1979
    %v1981 = vrot.slane %v1980, 2
    %v1982 = vadd.f32 %v1980, %v1981
    %v1983 = vrot.slane %v1982, 1
    %v1984 = vadd.f32 %v1982, %v1983
    %v1985 = vrot.slane %v1382, 4
    %v1986 = vadd.f32 %v1382, %v1985
    %v1987 = vrot.slane %v1986, 2
    %v1988 = vadd.f32 %v1986, %v1987
    %v1989 = vrot.slane %v1988, 1
    %v1990 = vadd.f32 %v1988, %v1989
    %v1991 = vrot.slane %v1384, 4
    %v1992 = vadd.f32 %v1384, %v1991
    %v1993 = vrot.slane %v1992, 2
    %v1994 = vadd.f32 %v1992, %v1993
    %v1995 = vrot.slane %v1994, 1
    %v1996 = vadd.f32 %v1994, %v1995
    %v1997 = vrot.slane %v1386, 4
    %v1998 = vadd.f32 %v1386, %v1997
    %v1999 = vrot.slane %v1998, 2
    %v2000 = vadd.f32 %v1998, %v1999
    %v2001 = vrot.slane %v2000, 1
    %v2002 = vadd.f32 %v2000, %v2001
    %v2003 = vrot.slane %v1388, 4
    %v2004 = vadd.f32 %v1388, %v2003
    %v2005 = vrot.slane %v2004, 2
    %v2006 = vadd.f32 %v2004, %v2005
    %v2007 = vrot.slane %v2006, 1
    %v2008 = vadd.f32 %v2006, %v2007
    %v2009 = vrot.slane %v1390, 4
    %v2010 = vadd.f32 %v1390, %v2009
    %v2011 = vrot.slane %v2010, 2
    %v2012 = vadd.f32 %v2010, %v2011
    %v2013 = vrot.slane %v2012, 1
    %v2014 = vadd.f32 %v2012, %v2013
    %v2015 = vrot.slane %v1392, 4
    %v2016 = vadd.f32 %v1392, %v2015
    %v2017 = vrot.slane %v2016, 2
    %v2018 = vadd.f32 %v2016, %v2017
    %v2019 = vrot.slane %v2018, 1
    %v2020 = vadd.f32 %v2018, %v2019
    %v2021 = vrot.slane %v1394, 4
    %v2022 = vadd.f32 %v1394, %v2021
    %v2023 = vrot.slane %v2022, 2
    %v2024 = vadd.f32 %v2022, %v2023
    %v2025 = vrot.slane %v2024, 1
    %v2026 = vadd.f32 %v2024, %v2025
    %v2027 = vrot.slane %v1396, 4
    %v2028 = vadd.f32 %v1396, %v2027
    %v2029 = vrot.slane %v2028, 2
    %v2030 = vadd.f32 %v2028, %v2029
    %v2031 = vrot.slane %v2030, 1
    %v2032 = vadd.f32 %v2030, %v2031
    %v2033 = vrot.slane %v1398, 4
    %v2034 = vadd.f32 %v1398, %v2033
    %v2035 = vrot.slane %v2034, 2
    %v2036 = vadd.f32 %v2034, %v2035
    %v2037 = vrot.slane %v2036, 1
    %v2038 = vadd.f32 %v2036, %v2037
    %v2039 = vrot.slane %v1400, 4
    %v2040 = vadd.f32 %v1400, %v2039
    %v2041 = vrot.slane %v2040, 2
    %v2042 = vadd.f32 %v2040, %v2041
    %v2043 = vrot.slane %v2042, 1
    %v2044 = vadd.f32 %v2042, %v2043
    %v2045 = vrot.slane %v1402, 4
    %v2046 = vadd.f32 %v1402, %v2045
    %v2047 = vrot.slane %v2046, 2
    %v2048 = vadd.f32 %v2046, %v2047
    %v2049 = vrot.slane %v2048, 1
    %v2050 = vadd.f32 %v2048, %v2049
    %v2051 = vrot.slane %v1404, 4
    %v2052 = vadd.f32 %v1404, %v2051
    %v2053 = vrot.slane %v2052, 2
    %v2054 = vadd.f32 %v2052, %v2053
    %v2055 = vrot.slane %v2054, 1
    %v2056 = vadd.f32 %v2054, %v2055
    %v2057 = vrot.slane %v1406, 4
    %v2058 = vadd.f32 %v1406, %v2057
    %v2059 = vrot.slane %v2058, 2
    %v2060 = vadd.f32 %v2058, %v2059
    %v2061 = vrot.slane %v2060, 1
    %v2062 = vadd.f32 %v2060, %v2061
    %v2063 = vrot.slane %v1408, 4
    %v2064 = vadd.f32 %v1408, %v2063
    %v2065 = vrot.slane %v2064, 2
    %v2066 = vadd.f32 %v2064, %v2065
    %v2067 = vrot.slane %v2066, 1
    %v2068 = vadd.f32 %v2066, %v2067
    %v2069 = vrot.slane %v1410, 4
    %v2070 = vadd.f32 %v1410, %v2069
    %v2071 = vrot.slane %v2070, 2
    %v2072 = vadd.f32 %v2070, %v2071
    %v2073 = vrot.slane %v2072, 1
    %v2074 = vadd.f32 %v2072, %v2073
    %v2075 = vrot.slane %v1412, 4
    %v2076 = vadd.f32 %v1412, %v2075
    %v2077 = vrot.slane %v2076, 2
    %v2078 = vadd.f32 %v2076, %v2077
    %v2079 = vrot.slane %v2078, 1
    %v2080 = vadd.f32 %v2078, %v2079
    %v2081 = vrot.slane %v1414, 4
    %v2082 = vadd.f32 %v1414, %v2081
    %v2083 = vrot.slane %v2082, 2
    %v2084 = vadd.f32 %v2082, %v2083
    %v2085 = vrot.slane %v2084, 1
    %v2086 = vadd.f32 %v2084, %v2085
    %v2087 = vrot.slane %v1416, 4
    %v2088 = vadd.f32 %v1416, %v2087
    %v2089 = vrot.slane %v2088, 2
    %v2090 = vadd.f32 %v2088, %v2089
    %v2091 = vrot.slane %v2090, 1
    %v2092 = vadd.f32 %v2090, %v2091
    %v2093 = vrot.slane %v1418, 4
    %v2094 = vadd.f32 %v1418, %v2093
    %v2095 = vrot.slane %v2094, 2
    %v2096 = vadd.f32 %v2094, %v2095
    %v2097 = vrot.slane %v2096, 1
    %v2098 = vadd.f32 %v2096, %v2097
    %v2099 = vrot.slane %v1420, 4
    %v2100 = vadd.f32 %v1420, %v2099
    %v2101 = vrot.slane %v2100, 2
    %v2102 = vadd.f32 %v2100, %v2101
    %v2103 = vrot.slane %v2102, 1
    %v2104 = vadd.f32 %v2102, %v2103
    %v2105 = vrot.slane %v1422, 4
    %v2106 = vadd.f32 %v1422, %v2105
    %v2107 = vrot.slane %v2106, 2
    %v2108 = vadd.f32 %v2106, %v2107
    %v2109 = vrot.slane %v2108, 1
    %v2110 = vadd.f32 %v2108, %v2109
    %v2111 = vrot.slane %v1424, 4
    %v2112 = vadd.f32 %v1424, %v2111
    %v2113 = vrot.slane %v2112, 2
    %v2114 = vadd.f32 %v2112, %v2113
    %v2115 = vrot.slane %v2114, 1
    %v2116 = vadd.f32 %v2114, %v2115
    %v2117 = vrot.slane %v1426, 4
    %v2118 = vadd.f32 %v1426, %v2117
    %v2119 = vrot.slane %v2118, 2
    %v2120 = vadd.f32 %v2118, %v2119
    %v2121 = vrot.slane %v2120, 1
    %v2122 = vadd.f32 %v2120, %v2121
    %v2123 = vrot.slane %v1428, 4
    %v2124 = vadd.f32 %v1428, %v2123
    %v2125 = vrot.slane %v2124, 2
    %v2126 = vadd.f32 %v2124, %v2125
    %v2127 = vrot.slane %v2126, 1
    %v2128 = vadd.f32 %v2126, %v2127
    %v2129 = vrot.slane %v1430, 4
    %v2130 = vadd.f32 %v1430, %v2129
    %v2131 = vrot.slane %v2130, 2
    %v2132 = vadd.f32 %v2130, %v2131
    %v2133 = vrot.slane %v2132, 1
    %v2134 = vadd.f32 %v2132, %v2133
    %v2135 = vrot.slane %v1432, 4
    %v2136 = vadd.f32 %v1432, %v2135
    %v2137 = vrot.slane %v2136, 2
    %v2138 = vadd.f32 %v2136, %v2137
    %v2139 = vrot.slane %v2138, 1
    %v2140 = vadd.f32 %v2138, %v2139
    %v2141 = vrot.slane %v1434, 4
    %v2142 = vadd.f32 %v1434, %v2141
    %v2143 = vrot.slane %v2142, 2
    %v2144 = vadd.f32 %v2142, %v2143
    %v2145 = vrot.slane %v2144, 1
    %v2146 = vadd.f32 %v2144, %v2145
    %v2147 = vrot.slane %v1436, 4
    %v2148 = vadd.f32 %v1436, %v2147
    %v2149 = vrot.slane %v2148, 2
    %v2150 = vadd.f32 %v2148, %v2149
    %v2151 = vrot.slane %v2150, 1
    %v2152 = vadd.f32 %v2150, %v2151
    %v2153 = vrot.slane %v1438, 4
    %v2154 = vadd.f32 %v1438, %v2153
    %v2155 = vrot.slane %v2154, 2
    %v2156 = vadd.f32 %v2154, %v2155
    %v2157 = vrot.slane %v2156, 1
    %v2158 = vadd.f32 %v2156, %v2157
    %v2159 = vrot.slane %v1440, 4
    %v2160 = vadd.f32 %v1440, %v2159
    %v2161 = vrot.slane %v2160, 2
    %v2162 = vadd.f32 %v2160, %v2161
    %v2163 = vrot.slane %v2162, 1
    %v2164 = vadd.f32 %v2162, %v2163
    %v2165 = vrot.slane %v1442, 4
    %v2166 = vadd.f32 %v1442, %v2165
    %v2167 = vrot.slane %v2166, 2
    %v2168 = vadd.f32 %v2166, %v2167
    %v2169 = vrot.slane %v2168, 1
    %v2170 = vadd.f32 %v2168, %v2169
    %v2171 = vrot.slane %v1444, 4
    %v2172 = vadd.f32 %v1444, %v2171
    %v2173 = vrot.slane %v2172, 2
    %v2174 = vadd.f32 %v2172, %v2173
    %v2175 = vrot.slane %v2174, 1
    %v2176 = vadd.f32 %v2174, %v2175
    %v2177 = vrot.slane %v1446, 4
    %v2178 = vadd.f32 %v1446, %v2177
    %v2179 = vrot.slane %v2178, 2
    %v2180 = vadd.f32 %v2178, %v2179
    %v2181 = vrot.slane %v2180, 1
    %v2182 = vadd.f32 %v2180, %v2181
    %v2183 = vrot.slane %v1448, 4
    %v2184 = vadd.f32 %v1448, %v2183
    %v2185 = vrot.slane %v2184, 2
    %v2186 = vadd.f32 %v2184, %v2185
    %v2187 = vrot.slane %v2186, 1
    %v2188 = vadd.f32 %v2186, %v2187
    %v2189 = vrot.slane %v1450, 4
    %v2190 = vadd.f32 %v1450, %v2189
    %v2191 = vrot.slane %v2190, 2
    %v2192 = vadd.f32 %v2190, %v2191
    %v2193 = vrot.slane %v2192, 1
    %v2194 = vadd.f32 %v2192, %v2193
    %v2195 = vrot.slane %v1452, 4
    %v2196 = vadd.f32 %v1452, %v2195
    %v2197 = vrot.slane %v2196, 2
    %v2198 = vadd.f32 %v2196, %v2197
    %v2199 = vrot.slane %v2198, 1
    %v2200 = vadd.f32 %v2198, %v2199
    %v2201 = vrot.slane %v1454, 4
    %v2202 = vadd.f32 %v1454, %v2201
    %v2203 = vrot.slane %v2202, 2
    %v2204 = vadd.f32 %v2202, %v2203
    %v2205 = vrot.slane %v2204, 1
    %v2206 = vadd.f32 %v2204, %v2205
    %v2207 = vrot.slane %v1456, 4
    %v2208 = vadd.f32 %v1456, %v2207
    %v2209 = vrot.slane %v2208, 2
    %v2210 = vadd.f32 %v2208, %v2209
    %v2211 = vrot.slane %v2210, 1
    %v2212 = vadd.f32 %v2210, %v2211
    %v2213 = vrot.slane %v1458, 4
    %v2214 = vadd.f32 %v1458, %v2213
    %v2215 = vrot.slane %v2214, 2
    %v2216 = vadd.f32 %v2214, %v2215
    %v2217 = vrot.slane %v2216, 1
    %v2218 = vadd.f32 %v2216, %v2217
    %v2219 = vrot.slane %v1460, 4
    %v2220 = vadd.f32 %v1460, %v2219
    %v2221 = vrot.slane %v2220, 2
    %v2222 = vadd.f32 %v2220, %v2221
    %v2223 = vrot.slane %v2222, 1
    %v2224 = vadd.f32 %v2222, %v2223
    %v2225 = vrot.slane %v1462, 4
    %v2226 = vadd.f32 %v1462, %v2225
    %v2227 = vrot.slane %v2226, 2
    %v2228 = vadd.f32 %v2226, %v2227
    %v2229 = vrot.slane %v2228, 1
    %v2230 = vadd.f32 %v2228, %v2229
    %v2231 = vrot.slane %v1464, 4
    %v2232 = vadd.f32 %v1464, %v2231
    %v2233 = vrot.slane %v2232, 2
    %v2234 = vadd.f32 %v2232, %v2233
    %v2235 = vrot.slane %v2234, 1
    %v2236 = vadd.f32 %v2234, %v2235
    %v2237 = vrot.slane %v1466, 4
    %v2238 = vadd.f32 %v1466, %v2237
    %v2239 = vrot.slane %v2238, 2
    %v2240 = vadd.f32 %v2238, %v2239
    %v2241 = vrot.slane %v2240, 1
    %v2242 = vadd.f32 %v2240, %v2241
    %v2243 = vrot.slane %v1468, 4
    %v2244 = vadd.f32 %v1468, %v2243
    %v2245 = vrot.slane %v2244, 2
    %v2246 = vadd.f32 %v2244, %v2245
    %v2247 = vrot.slane %v2246, 1
    %v2248 = vadd.f32 %v2246, %v2247
    %v2249 = vrot.slane %v1470, 4
    %v2250 = vadd.f32 %v1470, %v2249
    %v2251 = vrot.slane %v2250, 2
    %v2252 = vadd.f32 %v2250, %v2251
    %v2253 = vrot.slane %v2252, 1
    %v2254 = vadd.f32 %v2252, %v2253
    %v2255 = vrot.slane %v1472, 4
    %v2256 = vadd.f32 %v1472, %v2255
    %v2257 = vrot.slane %v2256, 2
    %v2258 = vadd.f32 %v2256, %v2257
    %v2259 = vrot.slane %v2258, 1
    %v2260 = vadd.f32 %v2258, %v2259
    %v2261 = vrot.slane %v1474, 4
    %v2262 = vadd.f32 %v1474, %v2261
    %v2263 = vrot.slane %v2262, 2
    %v2264 = vadd.f32 %v2262, %v2263
    %v2265 = vrot.slane %v2264, 1
    %v2266 = vadd.f32 %v2264, %v2265
    %v2267 = vrot.slane %v1476, 4
    %v2268 = vadd.f32 %v1476, %v2267
    %v2269 = vrot.slane %v2268, 2
    %v2270 = vadd.f32 %v2268, %v2269
    %v2271 = vrot.slane %v2270, 1
    %v2272 = vadd.f32 %v2270, %v2271
    %v2273 = vrot.slane %v1478, 4
    %v2274 = vadd.f32 %v1478, %v2273
    %v2275 = vrot.slane %v2274, 2
    %v2276 = vadd.f32 %v2274, %v2275
    %v2277 = vrot.slane %v2276, 1
    %v2278 = vadd.f32 %v2276, %v2277
    %v2279 = vrot.slane %v1480, 4
    %v2280 = vadd.f32 %v1480, %v2279
    %v2281 = vrot.slane %v2280, 2
    %v2282 = vadd.f32 %v2280, %v2281
    %v2283 = vrot.slane %v2282, 1
    %v2284 = vadd.f32 %v2282, %v2283
    %v2285 = vrot.slane %v1482, 4
    %v2286 = vadd.f32 %v1482, %v2285
    %v2287 = vrot.slane %v2286, 2
    %v2288 = vadd.f32 %v2286, %v2287
    %v2289 = vrot.slane %v2288, 1
    %v2290 = vadd.f32 %v2288, %v2289
    %v2291 = vrot.slane %v1484, 4
    %v2292 = vadd.f32 %v1484, %v2291
    %v2293 = vrot.slane %v2292, 2
    %v2294 = vadd.f32 %v2292, %v2293
    %v2295 = vrot.slane %v2294, 1
    %v2296 = vadd.f32 %v2294, %v2295
    %v2297 = vrot.slane %v1486, 4
    %v2298 = vadd.f32 %v1486, %v2297
    %v2299 = vrot.slane %v2298, 2
    %v2300 = vadd.f32 %v2298, %v2299
    %v2301 = vrot.slane %v2300, 1
    %v2302 = vadd.f32 %v2300, %v2301
    %v2303 = vrot.slane %v1488, 4
    %v2304 = vadd.f32 %v1488, %v2303
    %v2305 = vrot.slane %v2304, 2
    %v2306 = vadd.f32 %v2304, %v2305
    %v2307 = vrot.slane %v2306, 1
    %v2308 = vadd.f32 %v2306, %v2307
    %v2309 = vrot.slane %v1490, 4
    %v2310 = vadd.f32 %v1490, %v2309
    %v2311 = vrot.slane %v2310, 2
    %v2312 = vadd.f32 %v2310, %v2311
    %v2313 = vrot.slane %v2312, 1
    %v2314 = vadd.f32 %v2312, %v2313
    %v2315 = vrot.slane %v1492, 4
    %v2316 = vadd.f32 %v1492, %v2315
    %v2317 = vrot.slane %v2316, 2
    %v2318 = vadd.f32 %v2316, %v2317
    %v2319 = vrot.slane %v2318, 1
    %v2320 = vadd.f32 %v2318, %v2319
    %v2321 = vrot.slane %v1494, 4
    %v2322 = vadd.f32 %v1494, %v2321
    %v2323 = vrot.slane %v2322, 2
    %v2324 = vadd.f32 %v2322, %v2323
    %v2325 = vrot.slane %v2324, 1
    %v2326 = vadd.f32 %v2324, %v2325
    %v2327 = vrot.slane %v1496, 4
    %v2328 = vadd.f32 %v1496, %v2327
    %v2329 = vrot.slane %v2328, 2
    %v2330 = vadd.f32 %v2328, %v2329
    %v2331 = vrot.slane %v2330, 1
    %v2332 = vadd.f32 %v2330, %v2331
    %v2333 = vrot.slane %v1498, 4
    %v2334 = vadd.f32 %v1498, %v2333
    %v2335 = vrot.slane %v2334, 2
    %v2336 = vadd.f32 %v2334, %v2335
    %v2337 = vrot.slane %v2336, 1
    %v2338 = vadd.f32 %v2336, %v2337
    %v2339 = vrot.slane %v1500, 4
    %v2340 = vadd.f32 %v1500, %v2339
    %v2341 = vrot.slane %v2340, 2
    %v2342 = vadd.f32 %v2340, %v2341
    %v2343 = vrot.slane %v2342, 1
    %v2344 = vadd.f32 %v2342, %v2343
    %v2345 = vrot.slane %v1502, 4
    %v2346 = vadd.f32 %v1502, %v2345
    %v2347 = vrot.slane %v2346, 2
    %v2348 = vadd.f32 %v2346, %v2347
    %v2349 = vrot.slane %v2348, 1
    %v2350 = vadd.f32 %v2348, %v2349
    %v2351 = vrot.slane %v1504, 4
    %v2352 = vadd.f32 %v1504, %v2351
    %v2353 = vrot.slane %v2352, 2
    %v2354 = vadd.f32 %v2352, %v2353
    %v2355 = vrot.slane %v2354, 1
    %v2356 = vadd.f32 %v2354, %v2355
    %v2357 = vrot.slane %v1506, 4
    %v2358 = vadd.f32 %v1506, %v2357
    %v2359 = vrot.slane %v2358, 2
    %v2360 = vadd.f32 %v2358, %v2359
    %v2361 = vrot.slane %v2360, 1
    %v2362 = vadd.f32 %v2360, %v2361
    %v2363 = vrot.slane %v1508, 4
    %v2364 = vadd.f32 %v1508, %v2363
    %v2365 = vrot.slane %v2364, 2
    %v2366 = vadd.f32 %v2364, %v2365
    %v2367 = vrot.slane %v2366, 1
    %v2368 = vadd.f32 %v2366, %v2367
    %v2369 = vrot.slane %v1510, 4
    %v2370 = vadd.f32 %v1510, %v2369
    %v2371 = vrot.slane %v2370, 2
    %v2372 = vadd.f32 %v2370, %v2371
    %v2373 = vrot.slane %v2372, 1
    %v2374 = vadd.f32 %v2372, %v2373
    %v2375 = vrot.slane %v1512, 4
    %v2376 = vadd.f32 %v1512, %v2375
    %v2377 = vrot.slane %v2376, 2
    %v2378 = vadd.f32 %v2376, %v2377
    %v2379 = vrot.slane %v2378, 1
    %v2380 = vadd.f32 %v2378, %v2379
    %v2381 = vrot.slane %v1514, 4
    %v2382 = vadd.f32 %v1514, %v2381
    %v2383 = vrot.slane %v2382, 2
    %v2384 = vadd.f32 %v2382, %v2383
    %v2385 = vrot.slane %v2384, 1
    %v2386 = vadd.f32 %v2384, %v2385
    %v2387 = vrot.slane %v1516, 4
    %v2388 = vadd.f32 %v1516, %v2387
    %v2389 = vrot.slane %v2388, 2
    %v2390 = vadd.f32 %v2388, %v2389
    %v2391 = vrot.slane %v2390, 1
    %v2392 = vadd.f32 %v2390, %v2391
    %v2393 = vrot.slane %v1518, 4
    %v2394 = vadd.f32 %v1518, %v2393
    %v2395 = vrot.slane %v2394, 2
    %v2396 = vadd.f32 %v2394, %v2395
    %v2397 = vrot.slane %v2396, 1
    %v2398 = vadd.f32 %v2396, %v2397
    %v2399 = vrot.slane %v1520, 4
    %v2400 = vadd.f32 %v1520, %v2399
    %v2401 = vrot.slane %v2400, 2
    %v2402 = vadd.f32 %v2400, %v2401
    %v2403 = vrot.slane %v2402, 1
    %v2404 = vadd.f32 %v2402, %v2403
    %v2405 = vrot.slane %v1522, 4
    %v2406 = vadd.f32 %v1522, %v2405
    %v2407 = vrot.slane %v2406, 2
    %v2408 = vadd.f32 %v2406, %v2407
    %v2409 = vrot.slane %v2408, 1
    %v2410 = vadd.f32 %v2408, %v2409
    %v2411 = vrot.slane %v1524, 4
    %v2412 = vadd.f32 %v1524, %v2411
    %v2413 = vrot.slane %v2412, 2
    %v2414 = vadd.f32 %v2412, %v2413
    %v2415 = vrot.slane %v2414, 1
    %v2416 = vadd.f32 %v2414, %v2415
    %v2417 = vrot.slane %v1526, 4
    %v2418 = vadd.f32 %v1526, %v2417
    %v2419 = vrot.slane %v2418, 2
    %v2420 = vadd.f32 %v2418, %v2419
    %v2421 = vrot.slane %v2420, 1
    %v2422 = vadd.f32 %v2420, %v2421
    %v2423 = vrot.slane %v1528, 4
    %v2424 = vadd.f32 %v1528, %v2423
    %v2425 = vrot.slane %v2424, 2
    %v2426 = vadd.f32 %v2424, %v2425
    %v2427 = vrot.slane %v2426, 1
    %v2428 = vadd.f32 %v2426, %v2427
    %v2429 = vrot.slane %v1530, 4
    %v2430 = vadd.f32 %v1530, %v2429
    %v2431 = vrot.slane %v2430, 2
    %v2432 = vadd.f32 %v2430, %v2431
    %v2433 = vrot.slane %v2432, 1
    %v2434 = vadd.f32 %v2432, %v2433
    %v2435 = vrot.slane %v1532, 4
    %v2436 = vadd.f32 %v1532, %v2435
    %v2437 = vrot.slane %v2436, 2
    %v2438 = vadd.f32 %v2436, %v2437
    %v2439 = vrot.slane %v2438, 1
    %v2440 = vadd.f32 %v2438, %v2439
    %v2441 = vrot.slane %v1534, 4
    %v2442 = vadd.f32 %v1534, %v2441
    %v2443 = vrot.slane %v2442, 2
    %v2444 = vadd.f32 %v2442, %v2443
    %v2445 = vrot.slane %v2444, 1
    %v2446 = vadd.f32 %v2444, %v2445
    %v2447 = vrot.slane %v1536, 4
    %v2448 = vadd.f32 %v1536, %v2447
    %v2449 = vrot.slane %v2448, 2
    %v2450 = vadd.f32 %v2448, %v2449
    %v2451 = vrot.slane %v2450, 1
    %v2452 = vadd.f32 %v2450, %v2451
    %v2453 = vrot.slane %v1538, 4
    %v2454 = vadd.f32 %v1538, %v2453
    %v2455 = vrot.slane %v2454, 2
    %v2456 = vadd.f32 %v2454, %v2455
    %v2457 = vrot.slane %v2456, 1
    %v2458 = vadd.f32 %v2456, %v2457
    %v2459 = vrot.slane %v1540, 4
    %v2460 = vadd.f32 %v1540, %v2459
    %v2461 = vrot.slane %v2460, 2
    %v2462 = vadd.f32 %v2460, %v2461
    %v2463 = vrot.slane %v2462, 1
    %v2464 = vadd.f32 %v2462, %v2463
    %v2465 = vrot.slane %v1542, 4
    %v2466 = vadd.f32 %v1542, %v2465
    %v2467 = vrot.slane %v2466, 2
    %v2468 = vadd.f32 %v2466, %v2467
    %v2469 = vrot.slane %v2468, 1
    %v2470 = vadd.f32 %v2468, %v2469
    %v2471 = vrot.slane %v1544, 4
    %v2472 = vadd.f32 %v1544, %v2471
    %v2473 = vrot.slane %v2472, 2
    %v2474 = vadd.f32 %v2472, %v2473
    %v2475 = vrot.slane %v2474, 1
    %v2476 = vadd.f32 %v2474, %v2475
    %v2477 = vrot.slane %v1546, 4
    %v2478 = vadd.f32 %v1546, %v2477
    %v2479 = vrot.slane %v2478, 2
    %v2480 = vadd.f32 %v2478, %v2479
    %v2481 = vrot.slane %v2480, 1
    %v2482 = vadd.f32 %v2480, %v2481
    %v2483 = vrot.slane %v1548, 4
    %v2484 = vadd.f32 %v1548, %v2483
    %v2485 = vrot.slane %v2484, 2
    %v2486 = vadd.f32 %v2484, %v2485
    %v2487 = vrot.slane %v2486, 1
    %v2488 = vadd.f32 %v2486, %v2487
    %v2489 = vrot.slane %v1550, 4
    %v2490 = vadd.f32 %v1550, %v2489
    %v2491 = vrot.slane %v2490, 2
    %v2492 = vadd.f32 %v2490, %v2491
    %v2493 = vrot.slane %v2492, 1
    %v2494 = vadd.f32 %v2492, %v2493
    %v2495 = vrot.slane %v1552, 4
    %v2496 = vadd.f32 %v1552, %v2495
    %v2497 = vrot.slane %v2496, 2
    %v2498 = vadd.f32 %v2496, %v2497
    %v2499 = vrot.slane %v2498, 1
    %v2500 = vadd.f32 %v2498, %v2499
    %v2501 = vrot.slane %v1554, 4
    %v2502 = vadd.f32 %v1554, %v2501
    %v2503 = vrot.slane %v2502, 2
    %v2504 = vadd.f32 %v2502, %v2503
    %v2505 = vrot.slane %v2504, 1
    %v2506 = vadd.f32 %v2504, %v2505
    %v2507 = vrot.slane %v1556, 4
    %v2508 = vadd.f32 %v1556, %v2507
    %v2509 = vrot.slane %v2508, 2
    %v2510 = vadd.f32 %v2508, %v2509
    %v2511 = vrot.slane %v2510, 1
    %v2512 = vadd.f32 %v2510, %v2511
    %v2513 = vrot.slane %v1558, 4
    %v2514 = vadd.f32 %v1558, %v2513
    %v2515 = vrot.slane %v2514, 2
    %v2516 = vadd.f32 %v2514, %v2515
    %v2517 = vrot.slane %v2516, 1
    %v2518 = vadd.f32 %v2516, %v2517
    %v2519 = vrot.slane %v1560, 4
    %v2520 = vadd.f32 %v1560, %v2519
    %v2521 = vrot.slane %v2520, 2
    %v2522 = vadd.f32 %v2520, %v2521
    %v2523 = vrot.slane %v2522, 1
    %v2524 = vadd.f32 %v2522, %v2523
    %v2525 = vrot.slane %v1562, 4
    %v2526 = vadd.f32 %v1562, %v2525
    %v2527 = vrot.slane %v2526, 2
    %v2528 = vadd.f32 %v2526, %v2527
    %v2529 = vrot.slane %v2528, 1
    %v2530 = vadd.f32 %v2528, %v2529
    %v2531 = vrot.slane %v1564, 4
    %v2532 = vadd.f32 %v1564, %v2531
    %v2533 = vrot.slane %v2532, 2
    %v2534 = vadd.f32 %v2532, %v2533
    %v2535 = vrot.slane %v2534, 1
    %v2536 = vadd.f32 %v2534, %v2535
    %v2537 = vrot.slane %v1566, 4
    %v2538 = vadd.f32 %v1566, %v2537
    %v2539 = vrot.slane %v2538, 2
    %v2540 = vadd.f32 %v2538, %v2539
    %v2541 = vrot.slane %v2540, 1
    %v2542 = vadd.f32 %v2540, %v2541
    %v2543 = vrot.slane %v1568, 4
    %v2544 = vadd.f32 %v1568, %v2543
    %v2545 = vrot.slane %v2544, 2
    %v2546 = vadd.f32 %v2544, %v2545
    %v2547 = vrot.slane %v2546, 1
    %v2548 = vadd.f32 %v2546, %v2547
    %v2549 = vrot.slane %v1570, 4
    %v2550 = vadd.f32 %v1570, %v2549
    %v2551 = vrot.slane %v2550, 2
    %v2552 = vadd.f32 %v2550, %v2551
    %v2553 = vrot.slane %v2552, 1
    %v2554 = vadd.f32 %v2552, %v2553
    %v2555 = vrot.slane %v1572, 4
    %v2556 = vadd.f32 %v1572, %v2555
    %v2557 = vrot.slane %v2556, 2
    %v2558 = vadd.f32 %v2556, %v2557
    %v2559 = vrot.slane %v2558, 1
    %v2560 = vadd.f32 %v2558, %v2559
    %v2561 = vrot.slane %v1574, 4
    %v2562 = vadd.f32 %v1574, %v2561
    %v2563 = vrot.slane %v2562, 2
    %v2564 = vadd.f32 %v2562, %v2563
    %v2565 = vrot.slane %v2564, 1
    %v2566 = vadd.f32 %v2564, %v2565
    %v2567 = vrot.slane %v1576, 4
    %v2568 = vadd.f32 %v1576, %v2567
    %v2569 = vrot.slane %v2568, 2
    %v2570 = vadd.f32 %v2568, %v2569
    %v2571 = vrot.slane %v2570, 1
    %v2572 = vadd.f32 %v2570, %v2571
    %v2573 = vrot.slane %v1578, 4
    %v2574 = vadd.f32 %v1578, %v2573
    %v2575 = vrot.slane %v2574, 2
    %v2576 = vadd.f32 %v2574, %v2575
    %v2577 = vrot.slane %v2576, 1
    %v2578 = vadd.f32 %v2576, %v2577
    %v2579 = vrot.slane %v1580, 4
    %v2580 = vadd.f32 %v1580, %v2579
    %v2581 = vrot.slane %v2580, 2
    %v2582 = vadd.f32 %v2580, %v2581
    %v2583 = vrot.slane %v2582, 1
    %v2584 = vadd.f32 %v2582, %v2583
    %v2585 = vrot.slane %v1582, 4
    %v2586 = vadd.f32 %v1582, %v2585
    %v2587 = vrot.slane %v2586, 2
    %v2588 = vadd.f32 %v2586, %v2587
    %v2589 = vrot.slane %v2588, 1
    %v2590 = vadd.f32 %v2588, %v2589
    %v2591 = vrot.slane %v1584, 4
    %v2592 = vadd.f32 %v1584, %v2591
    %v2593 = vrot.slane %v2592, 2
    %v2594 = vadd.f32 %v2592, %v2593
    %v2595 = vrot.slane %v2594, 1
    %v2596 = vadd.f32 %v2594, %v2595
    %v2597 = vrot.slane %v1586, 4
    %v2598 = vadd.f32 %v1586, %v2597
    %v2599 = vrot.slane %v2598, 2
    %v2600 = vadd.f32 %v2598, %v2599
    %v2601 = vrot.slane %v2600, 1
    %v2602 = vadd.f32 %v2600, %v2601
    %v2603 = vrot.slane %v1588, 4
    %v2604 = vadd.f32 %v1588, %v2603
    %v2605 = vrot.slane %v2604, 2
    %v2606 = vadd.f32 %v2604, %v2605
    %v2607 = vrot.slane %v2606, 1
    %v2608 = vadd.f32 %v2606, %v2607
    %v2609 = vrot.slane %v1590, 4
    %v2610 = vadd.f32 %v1590, %v2609
    %v2611 = vrot.slane %v2610, 2
    %v2612 = vadd.f32 %v2610, %v2611
    %v2613 = vrot.slane %v2612, 1
    %v2614 = vadd.f32 %v2612, %v2613
    %v2615 = vrot.slane %v1592, 4
    %v2616 = vadd.f32 %v1592, %v2615
    %v2617 = vrot.slane %v2616, 2
    %v2618 = vadd.f32 %v2616, %v2617
    %v2619 = vrot.slane %v2618, 1
    %v2620 = vadd.f32 %v2618, %v2619
    %v2621 = vrot.slane %v1594, 4
    %v2622 = vadd.f32 %v1594, %v2621
    %v2623 = vrot.slane %v2622, 2
    %v2624 = vadd.f32 %v2622, %v2623
    %v2625 = vrot.slane %v2624, 1
    %v2626 = vadd.f32 %v2624, %v2625
    %v2627 = vrot.slane %v1596, 4
    %v2628 = vadd.f32 %v1596, %v2627
    %v2629 = vrot.slane %v2628, 2
    %v2630 = vadd.f32 %v2628, %v2629
    %v2631 = vrot.slane %v2630, 1
    %v2632 = vadd.f32 %v2630, %v2631
    %v2633 = vrot.slane %v1598, 4
    %v2634 = vadd.f32 %v1598, %v2633
    %v2635 = vrot.slane %v2634, 2
    %v2636 = vadd.f32 %v2634, %v2635
    %v2637 = vrot.slane %v2636, 1
    %v2638 = vadd.f32 %v2636, %v2637
    %v2639 = vrot.slane %v1600, 4
    %v2640 = vadd.f32 %v1600, %v2639
    %v2641 = vrot.slane %v2640, 2
    %v2642 = vadd.f32 %v2640, %v2641
    %v2643 = vrot.slane %v2642, 1
    %v2644 = vadd.f32 %v2642, %v2643
    %v2645 = vrot.slane %v1602, 4
    %v2646 = vadd.f32 %v1602, %v2645
    %v2647 = vrot.slane %v2646, 2
    %v2648 = vadd.f32 %v2646, %v2647
    %v2649 = vrot.slane %v2648, 1
    %v2650 = vadd.f32 %v2648, %v2649
    %v2651 = vrot.slane %v1604, 4
    %v2652 = vadd.f32 %v1604, %v2651
    %v2653 = vrot.slane %v2652, 2
    %v2654 = vadd.f32 %v2652, %v2653
    %v2655 = vrot.slane %v2654, 1
    %v2656 = vadd.f32 %v2654, %v2655
    %v2657 = vrot.slane %v1606, 4
    %v2658 = vadd.f32 %v1606, %v2657
    %v2659 = vrot.slane %v2658, 2
    %v2660 = vadd.f32 %v2658, %v2659
    %v2661 = vrot.slane %v2660, 1
    %v2662 = vadd.f32 %v2660, %v2661
    %v2663 = vrot.slane %v1608, 4
    %v2664 = vadd.f32 %v1608, %v2663
    %v2665 = vrot.slane %v2664, 2
    %v2666 = vadd.f32 %v2664, %v2665
    %v2667 = vrot.slane %v2666, 1
    %v2668 = vadd.f32 %v2666, %v2667
    %v2669 = vrot.slane %v1610, 4
    %v2670 = vadd.f32 %v1610, %v2669
    %v2671 = vrot.slane %v2670, 2
    %v2672 = vadd.f32 %v2670, %v2671
    %v2673 = vrot.slane %v2672, 1
    %v2674 = vadd.f32 %v2672, %v2673
    %v2675 = vrot.slane %v1612, 4
    %v2676 = vadd.f32 %v1612, %v2675
    %v2677 = vrot.slane %v2676, 2
    %v2678 = vadd.f32 %v2676, %v2677
    %v2679 = vrot.slane %v2678, 1
    %v2680 = vadd.f32 %v2678, %v2679
    %v2681 = vrot.slane %v1614, 4
    %v2682 = vadd.f32 %v1614, %v2681
    %v2683 = vrot.slane %v2682, 2
    %v2684 = vadd.f32 %v2682, %v2683
    %v2685 = vrot.slane %v2684, 1
    %v2686 = vadd.f32 %v2684, %v2685
    %v2687 = vrot.slane %v1616, 4
    %v2688 = vadd.f32 %v1616, %v2687
    %v2689 = vrot.slane %v2688, 2
    %v2690 = vadd.f32 %v2688, %v2689
    %v2691 = vrot.slane %v2690, 1
    %v2692 = vadd.f32 %v2690, %v2691
    %v2693 = vrot.slane %v1618, 4
    %v2694 = vadd.f32 %v1618, %v2693
    %v2695 = vrot.slane %v2694, 2
    %v2696 = vadd.f32 %v2694, %v2695
    %v2697 = vrot.slane %v2696, 1
    %v2698 = vadd.f32 %v2696, %v2697
    %v2699 = vrot.slane %v1620, 4
    %v2700 = vadd.f32 %v1620, %v2699
    %v2701 = vrot.slane %v2700, 2
    %v2702 = vadd.f32 %v2700, %v2701
    %v2703 = vrot.slane %v2702, 1
    %v2704 = vadd.f32 %v2702, %v2703
    %v2705 = vrot.slane %v1622, 4
    %v2706 = vadd.f32 %v1622, %v2705
    %v2707 = vrot.slane %v2706, 2
    %v2708 = vadd.f32 %v2706, %v2707
    %v2709 = vrot.slane %v2708, 1
    %v2710 = vadd.f32 %v2708, %v2709
    %v2711 = vrot.slane %v1624, 4
    %v2712 = vadd.f32 %v1624, %v2711
    %v2713 = vrot.slane %v2712, 2
    %v2714 = vadd.f32 %v2712, %v2713
    %v2715 = vrot.slane %v2714, 1
    %v2716 = vadd.f32 %v2714, %v2715
    %v2717 = vrot.slane %v1626, 4
    %v2718 = vadd.f32 %v1626, %v2717
    %v2719 = vrot.slane %v2718, 2
    %v2720 = vadd.f32 %v2718, %v2719
    %v2721 = vrot.slane %v2720, 1
    %v2722 = vadd.f32 %v2720, %v2721
    %v2723 = vrot.slane %v1628, 4
    %v2724 = vadd.f32 %v1628, %v2723
    %v2725 = vrot.slane %v2724, 2
    %v2726 = vadd.f32 %v2724, %v2725
    %v2727 = vrot.slane %v2726, 1
    %v2728 = vadd.f32 %v2726, %v2727
    %v2729 = vrot.slane %v1630, 4
    %v2730 = vadd.f32 %v1630, %v2729
    %v2731 = vrot.slane %v2730, 2
    %v2732 = vadd.f32 %v2730, %v2731
    %v2733 = vrot.slane %v2732, 1
    %v2734 = vadd.f32 %v2732, %v2733
    %v2735 = vrot.slane %v1632, 4
    %v2736 = vadd.f32 %v1632, %v2735
    %v2737 = vrot.slane %v2736, 2
    %v2738 = vadd.f32 %v2736, %v2737
    %v2739 = vrot.slane %v2738, 1
    %v2740 = vadd.f32 %v2738, %v2739
    %v2741 = vrot.slane %v1634, 4
    %v2742 = vadd.f32 %v1634, %v2741
    %v2743 = vrot.slane %v2742, 2
    %v2744 = vadd.f32 %v2742, %v2743
    %v2745 = vrot.slane %v2744, 1
    %v2746 = vadd.f32 %v2744, %v2745
    %v2747 = vrot.slane %v1636, 4
    %v2748 = vadd.f32 %v1636, %v2747
    %v2749 = vrot.slane %v2748, 2
    %v2750 = vadd.f32 %v2748, %v2749
    %v2751 = vrot.slane %v2750, 1
    %v2752 = vadd.f32 %v2750, %v2751
    %v2753 = vrot.slane %v1638, 4
    %v2754 = vadd.f32 %v1638, %v2753
    %v2755 = vrot.slane %v2754, 2
    %v2756 = vadd.f32 %v2754, %v2755
    %v2757 = vrot.slane %v2756, 1
    %v2758 = vadd.f32 %v2756, %v2757
    %v2759 = vrot.slane %v1640, 4
    %v2760 = vadd.f32 %v1640, %v2759
    %v2761 = vrot.slane %v2760, 2
    %v2762 = vadd.f32 %v2760, %v2761
    %v2763 = vrot.slane %v2762, 1
    %v2764 = vadd.f32 %v2762, %v2763
    %v2765 = vrot.slane %v1642, 4
    %v2766 = vadd.f32 %v1642, %v2765
    %v2767 = vrot.slane %v2766, 2
    %v2768 = vadd.f32 %v2766, %v2767
    %v2769 = vrot.slane %v2768, 1
    %v2770 = vadd.f32 %v2768, %v2769
    %v2771 = vrot.slane %v1644, 4
    %v2772 = vadd.f32 %v1644, %v2771
    %v2773 = vrot.slane %v2772, 2
    %v2774 = vadd.f32 %v2772, %v2773
    %v2775 = vrot.slane %v2774, 1
    %v2776 = vadd.f32 %v2774, %v2775
    %v2777 = vrot.slane %v1646, 4
    %v2778 = vadd.f32 %v1646, %v2777
    %v2779 = vrot.slane %v2778, 2
    %v2780 = vadd.f32 %v2778, %v2779
    %v2781 = vrot.slane %v2780, 1
    %v2782 = vadd.f32 %v2780, %v2781
    %v2783 = vrot.slane %v1648, 4
    %v2784 = vadd.f32 %v1648, %v2783
    %v2785 = vrot.slane %v2784, 2
    %v2786 = vadd.f32 %v2784, %v2785
    %v2787 = vrot.slane %v2786, 1
    %v2788 = vadd.f32 %v2786, %v2787
    %v2789 = vrot.slane %v1650, 4
    %v2790 = vadd.f32 %v1650, %v2789
    %v2791 = vrot.slane %v2790, 2
    %v2792 = vadd.f32 %v2790, %v2791
    %v2793 = vrot.slane %v2792, 1
    %v2794 = vadd.f32 %v2792, %v2793
    %v2795 = vrot.slane %v1652, 4
    %v2796 = vadd.f32 %v1652, %v2795
    %v2797 = vrot.slane %v2796, 2
    %v2798 = vadd.f32 %v2796, %v2797
    %v2799 = vrot.slane %v2798, 1
    %v2800 = vadd.f32 %v2798, %v2799
    %v2801 = vrot.slane %v1654, 4
    %v2802 = vadd.f32 %v1654, %v2801
    %v2803 = vrot.slane %v2802, 2
    %v2804 = vadd.f32 %v2802, %v2803
    %v2805 = vrot.slane %v2804, 1
    %v2806 = vadd.f32 %v2804, %v2805
    %v2807 = vrot.slane %v1656, 4
    %v2808 = vadd.f32 %v1656, %v2807
    %v2809 = vrot.slane %v2808, 2
    %v2810 = vadd.f32 %v2808, %v2809
    %v2811 = vrot.slane %v2810, 1
    %v2812 = vadd.f32 %v2810, %v2811
    %v2813 = vrot.slane %v1658, 4
    %v2814 = vadd.f32 %v1658, %v2813
    %v2815 = vrot.slane %v2814, 2
    %v2816 = vadd.f32 %v2814, %v2815
    %v2817 = vrot.slane %v2816, 1
    %v2818 = vadd.f32 %v2816, %v2817
    %v2819 = vrot.slane %v1660, 4
    %v2820 = vadd.f32 %v1660, %v2819
    %v2821 = vrot.slane %v2820, 2
    %v2822 = vadd.f32 %v2820, %v2821
    %v2823 = vrot.slane %v2822, 1
    %v2824 = vadd.f32 %v2822, %v2823
    %v2825 = vrot.slane %v1662, 4
    %v2826 = vadd.f32 %v1662, %v2825
    %v2827 = vrot.slane %v2826, 2
    %v2828 = vadd.f32 %v2826, %v2827
    %v2829 = vrot.slane %v2828, 1
    %v2830 = vadd.f32 %v2828, %v2829
    %v2831 = vrot.slane %v1664, 4
    %v2832 = vadd.f32 %v1664, %v2831
    %v2833 = vrot.slane %v2832, 2
    %v2834 = vadd.f32 %v2832, %v2833
    %v2835 = vrot.slane %v2834, 1
    %v2836 = vadd.f32 %v2834, %v2835
    %v2837 = vrot.slane %v1666, 4
    %v2838 = vadd.f32 %v1666, %v2837
    %v2839 = vrot.slane %v2838, 2
    %v2840 = vadd.f32 %v2838, %v2839
    %v2841 = vrot.slane %v2840, 1
    %v2842 = vadd.f32 %v2840, %v2841
    %v2843 = vrot.slane %v1668, 4
    %v2844 = vadd.f32 %v1668, %v2843
    %v2845 = vrot.slane %v2844, 2
    %v2846 = vadd.f32 %v2844, %v2845
    %v2847 = vrot.slane %v2846, 1
    %v2848 = vadd.f32 %v2846, %v2847
    %v2849 = vrot.slane %v1670, 4
    %v2850 = vadd.f32 %v1670, %v2849
    %v2851 = vrot.slane %v2850, 2
    %v2852 = vadd.f32 %v2850, %v2851
    %v2853 = vrot.slane %v2852, 1
    %v2854 = vadd.f32 %v2852, %v2853
    %v2855 = vrot.slane %v1672, 4
    %v2856 = vadd.f32 %v1672, %v2855
    %v2857 = vrot.slane %v2856, 2
    %v2858 = vadd.f32 %v2856, %v2857
    %v2859 = vrot.slane %v2858, 1
    %v2860 = vadd.f32 %v2858, %v2859
    %v2861 = vrot.slane %v1674, 4
    %v2862 = vadd.f32 %v1674, %v2861
    %v2863 = vrot.slane %v2862, 2
    %v2864 = vadd.f32 %v2862, %v2863
    %v2865 = vrot.slane %v2864, 1
    %v2866 = vadd.f32 %v2864, %v2865
    %v2867 = vrot.slane %v1676, 4
    %v2868 = vadd.f32 %v1676, %v2867
    %v2869 = vrot.slane %v2868, 2
    %v2870 = vadd.f32 %v2868, %v2869
    %v2871 = vrot.slane %v2870, 1
    %v2872 = vadd.f32 %v2870, %v2871
    %v2873 = vrot.slane %v1678, 4
    %v2874 = vadd.f32 %v1678, %v2873
    %v2875 = vrot.slane %v2874, 2
    %v2876 = vadd.f32 %v2874, %v2875
    %v2877 = vrot.slane %v2876, 1
    %v2878 = vadd.f32 %v2876, %v2877
    %v2879 = vrot.slane %v1680, 4
    %v2880 = vadd.f32 %v1680, %v2879
    %v2881 = vrot.slane %v2880, 2
    %v2882 = vadd.f32 %v2880, %v2881
    %v2883 = vrot.slane %v2882, 1
    %v2884 = vadd.f32 %v2882, %v2883
    %v2885 = vrot.slane %v1682, 4
    %v2886 = vadd.f32 %v1682, %v2885
    %v2887 = vrot.slane %v2886, 2
    %v2888 = vadd.f32 %v2886, %v2887
    %v2889 = vrot.slane %v2888, 1
    %v2890 = vadd.f32 %v2888, %v2889
    %v2891 = vrot.slane %v1684, 4
    %v2892 = vadd.f32 %v1684, %v2891
    %v2893 = vrot.slane %v2892, 2
    %v2894 = vadd.f32 %v2892, %v2893
    %v2895 = vrot.slane %v2894, 1
    %v2896 = vadd.f32 %v2894, %v2895
    %v2897 = vrot.slane %v1686, 4
    %v2898 = vadd.f32 %v1686, %v2897
    %v2899 = vrot.slane %v2898, 2
    %v2900 = vadd.f32 %v2898, %v2899
    %v2901 = vrot.slane %v2900, 1
    %v2902 = vadd.f32 %v2900, %v2901
    %v2903 = vrot.slane %v1688, 4
    %v2904 = vadd.f32 %v1688, %v2903
    %v2905 = vrot.slane %v2904, 2
    %v2906 = vadd.f32 %v2904, %v2905
    %v2907 = vrot.slane %v2906, 1
    %v2908 = vadd.f32 %v2906, %v2907
    %v2909 = vrot.slane %v1690, 4
    %v2910 = vadd.f32 %v1690, %v2909
    %v2911 = vrot.slane %v2910, 2
    %v2912 = vadd.f32 %v2910, %v2911
    %v2913 = vrot.slane %v2912, 1
    %v2914 = vadd.f32 %v2912, %v2913
    %v2915 = vrot.slane %v1692, 4
    %v2916 = vadd.f32 %v1692, %v2915
    %v2917 = vrot.slane %v2916, 2
    %v2918 = vadd.f32 %v2916, %v2917
    %v2919 = vrot.slane %v2918, 1
    %v2920 = vadd.f32 %v2918, %v2919
    %v2921 = vrot.slane %v1694, 4
    %v2922 = vadd.f32 %v1694, %v2921
    %v2923 = vrot.slane %v2922, 2
    %v2924 = vadd.f32 %v2922, %v2923
    %v2925 = vrot.slane %v2924, 1
    %v2926 = vadd.f32 %v2924, %v2925
    %v2927 = vrot.slane %v1696, 4
    %v2928 = vadd.f32 %v1696, %v2927
    %v2929 = vrot.slane %v2928, 2
    %v2930 = vadd.f32 %v2928, %v2929
    %v2931 = vrot.slane %v2930, 1
    %v2932 = vadd.f32 %v2930, %v2931
    %v2933 = vrot.slane %v1698, 4
    %v2934 = vadd.f32 %v1698, %v2933
    %v2935 = vrot.slane %v2934, 2
    %v2936 = vadd.f32 %v2934, %v2935
    %v2937 = vrot.slane %v2936, 1
    %v2938 = vadd.f32 %v2936, %v2937
    %v2939 = vrot.slane %v1700, 4
    %v2940 = vadd.f32 %v1700, %v2939
    %v2941 = vrot.slane %v2940, 2
    %v2942 = vadd.f32 %v2940, %v2941
    %v2943 = vrot.slane %v2942, 1
    %v2944 = vadd.f32 %v2942, %v2943
    %v2945 = vrot.slane %v1702, 4
    %v2946 = vadd.f32 %v1702, %v2945
    %v2947 = vrot.slane %v2946, 2
    %v2948 = vadd.f32 %v2946, %v2947
    %v2949 = vrot.slane %v2948, 1
    %v2950 = vadd.f32 %v2948, %v2949
    %v2951 = vrot.slane %v1704, 4
    %v2952 = vadd.f32 %v1704, %v2951
    %v2953 = vrot.slane %v2952, 2
    %v2954 = vadd.f32 %v2952, %v2953
    %v2955 = vrot.slane %v2954, 1
    %v2956 = vadd.f32 %v2954, %v2955
    %v2957 = vrot.slane %v1706, 4
    %v2958 = vadd.f32 %v1706, %v2957
    %v2959 = vrot.slane %v2958, 2
    %v2960 = vadd.f32 %v2958, %v2959
    %v2961 = vrot.slane %v2960, 1
    %v2962 = vadd.f32 %v2960, %v2961
    %v2963 = vrot.slane %v1708, 4
    %v2964 = vadd.f32 %v1708, %v2963
    %v2965 = vrot.slane %v2964, 2
    %v2966 = vadd.f32 %v2964, %v2965
    %v2967 = vrot.slane %v2966, 1
    %v2968 = vadd.f32 %v2966, %v2967
    %v2969 = vrot.slane %v1710, 4
    %v2970 = vadd.f32 %v1710, %v2969
    %v2971 = vrot.slane %v2970, 2
    %v2972 = vadd.f32 %v2970, %v2971
    %v2973 = vrot.slane %v2972, 1
    %v2974 = vadd.f32 %v2972, %v2973
    %v2975 = vrot.slane %v1712, 4
    %v2976 = vadd.f32 %v1712, %v2975
    %v2977 = vrot.slane %v2976, 2
    %v2978 = vadd.f32 %v2976, %v2977
    %v2979 = vrot.slane %v2978, 1
    %v2980 = vadd.f32 %v2978, %v2979
    %v2981 = vrot.slane %v1714, 4
    %v2982 = vadd.f32 %v1714, %v2981
    %v2983 = vrot.slane %v2982, 2
    %v2984 = vadd.f32 %v2982, %v2983
    %v2985 = vrot.slane %v2984, 1
    %v2986 = vadd.f32 %v2984, %v2985
    %v2987 = vrot.slane %v1716, 4
    %v2988 = vadd.f32 %v1716, %v2987
    %v2989 = vrot.slane %v2988, 2
    %v2990 = vadd.f32 %v2988, %v2989
    %v2991 = vrot.slane %v2990, 1
    %v2992 = vadd.f32 %v2990, %v2991
    %v2993 = vrot.slane %v1718, 4
    %v2994 = vadd.f32 %v1718, %v2993
    %v2995 = vrot.slane %v2994, 2
    %v2996 = vadd.f32 %v2994, %v2995
    %v2997 = vrot.slane %v2996, 1
    %v2998 = vadd.f32 %v2996, %v2997
    %v2999 = vrot.slane %v1720, 4
    %v3000 = vadd.f32 %v1720, %v2999
    %v3001 = vrot.slane %v3000, 2
    %v3002 = vadd.f32 %v3000, %v3001
    %v3003 = vrot.slane %v3002, 1
    %v3004 = vadd.f32 %v3002, %v3003
    %v3005 = vrot.slane %v1722, 4
    %v3006 = vadd.f32 %v1722, %v3005
    %v3007 = vrot.slane %v3006, 2
    %v3008 = vadd.f32 %v3006, %v3007
    %v3009 = vrot.slane %v3008, 1
    %v3010 = vadd.f32 %v3008, %v3009
    %v3011 = vrot.slane %v1724, 4
    %v3012 = vadd.f32 %v1724, %v3011
    %v3013 = vrot.slane %v3012, 2
    %v3014 = vadd.f32 %v3012, %v3013
    %v3015 = vrot.slane %v3014, 1
    %v3016 = vadd.f32 %v3014, %v3015
    %v3017 = vrot.slane %v1726, 4
    %v3018 = vadd.f32 %v1726, %v3017
    %v3019 = vrot.slane %v3018, 2
    %v3020 = vadd.f32 %v3018, %v3019
    %v3021 = vrot.slane %v3020, 1
    %v3022 = vadd.f32 %v3020, %v3021
    %v3023 = vrot.slane %v1728, 4
    %v3024 = vadd.f32 %v1728, %v3023
    %v3025 = vrot.slane %v3024, 2
    %v3026 = vadd.f32 %v3024, %v3025
    %v3027 = vrot.slane %v3026, 1
    %v3028 = vadd.f32 %v3026, %v3027
    %v3029 = vrot.slane %v1730, 4
    %v3030 = vadd.f32 %v1730, %v3029
    %v3031 = vrot.slane %v3030, 2
    %v3032 = vadd.f32 %v3030, %v3031
    %v3033 = vrot.slane %v3032, 1
    %v3034 = vadd.f32 %v3032, %v3033
    %v3035 = vrot.slane %v1732, 4
    %v3036 = vadd.f32 %v1732, %v3035
    %v3037 = vrot.slane %v3036, 2
    %v3038 = vadd.f32 %v3036, %v3037
    %v3039 = vrot.slane %v3038, 1
    %v3040 = vadd.f32 %v3038, %v3039
    %v3041 = vrot.slane %v1734, 4
    %v3042 = vadd.f32 %v1734, %v3041
    %v3043 = vrot.slane %v3042, 2
    %v3044 = vadd.f32 %v3042, %v3043
    %v3045 = vrot.slane %v3044, 1
    %v3046 = vadd.f32 %v3044, %v3045
    %v3047 = vrot.slane %v1736, 4
    %v3048 = vadd.f32 %v1736, %v3047
    %v3049 = vrot.slane %v3048, 2
    %v3050 = vadd.f32 %v3048, %v3049
    %v3051 = vrot.slane %v3050, 1
    %v3052 = vadd.f32 %v3050, %v3051
    %v3053 = vrot.slane %v1738, 4
    %v3054 = vadd.f32 %v1738, %v3053
    %v3055 = vrot.slane %v3054, 2
    %v3056 = vadd.f32 %v3054, %v3055
    %v3057 = vrot.slane %v3056, 1
    %v3058 = vadd.f32 %v3056, %v3057
    %v3059 = vrot.slane %v1740, 4
    %v3060 = vadd.f32 %v1740, %v3059
    %v3061 = vrot.slane %v3060, 2
    %v3062 = vadd.f32 %v3060, %v3061
    %v3063 = vrot.slane %v3062, 1
    %v3064 = vadd.f32 %v3062, %v3063
    %v3065 = vrot.slane %v1742, 4
    %v3066 = vadd.f32 %v1742, %v3065
    %v3067 = vrot.slane %v3066, 2
    %v3068 = vadd.f32 %v3066, %v3067
    %v3069 = vrot.slane %v3068, 1
    %v3070 = vadd.f32 %v3068, %v3069
    %v3071 = vrot.slane %v1744, 4
    %v3072 = vadd.f32 %v1744, %v3071
    %v3073 = vrot.slane %v3072, 2
    %v3074 = vadd.f32 %v3072, %v3073
    %v3075 = vrot.slane %v3074, 1
    %v3076 = vadd.f32 %v3074, %v3075
    %v3077 = vrot.slane %v1746, 4
    %v3078 = vadd.f32 %v1746, %v3077
    %v3079 = vrot.slane %v3078, 2
    %v3080 = vadd.f32 %v3078, %v3079
    %v3081 = vrot.slane %v3080, 1
    %v3082 = vadd.f32 %v3080, %v3081
    %v3083 = vrot.slane %v1748, 4
    %v3084 = vadd.f32 %v1748, %v3083
    %v3085 = vrot.slane %v3084, 2
    %v3086 = vadd.f32 %v3084, %v3085
    %v3087 = vrot.slane %v3086, 1
    %v3088 = vadd.f32 %v3086, %v3087
    %v3089 = vrot.slane %v1750, 4
    %v3090 = vadd.f32 %v1750, %v3089
    %v3091 = vrot.slane %v3090, 2
    %v3092 = vadd.f32 %v3090, %v3091
    %v3093 = vrot.slane %v3092, 1
    %v3094 = vadd.f32 %v3092, %v3093
    %v3095 = vrot.slane %v1752, 4
    %v3096 = vadd.f32 %v1752, %v3095
    %v3097 = vrot.slane %v3096, 2
    %v3098 = vadd.f32 %v3096, %v3097
    %v3099 = vrot.slane %v3098, 1
    %v3100 = vadd.f32 %v3098, %v3099
    %v3101 = vrot.slane %v1754, 4
    %v3102 = vadd.f32 %v1754, %v3101
    %v3103 = vrot.slane %v3102, 2
    %v3104 = vadd.f32 %v3102, %v3103
    %v3105 = vrot.slane %v3104, 1
    %v3106 = vadd.f32 %v3104, %v3105
    %v3107 = vrot.slane %v1756, 4
    %v3108 = vadd.f32 %v1756, %v3107
    %v3109 = vrot.slane %v3108, 2
    %v3110 = vadd.f32 %v3108, %v3109
    %v3111 = vrot.slane %v3110, 1
    %v3112 = vadd.f32 %v3110, %v3111
    %v3113 = vrot.slane %v1758, 4
    %v3114 = vadd.f32 %v1758, %v3113
    %v3115 = vrot.slane %v3114, 2
    %v3116 = vadd.f32 %v3114, %v3115
    %v3117 = vrot.slane %v3116, 1
    %v3118 = vadd.f32 %v3116, %v3117
    %v3119 = vrot.slane %v1760, 4
    %v3120 = vadd.f32 %v1760, %v3119
    %v3121 = vrot.slane %v3120, 2
    %v3122 = vadd.f32 %v3120, %v3121
    %v3123 = vrot.slane %v3122, 1
    %v3124 = vadd.f32 %v3122, %v3123
    %v3125 = vrot.slane %v1762, 4
    %v3126 = vadd.f32 %v1762, %v3125
    %v3127 = vrot.slane %v3126, 2
    %v3128 = vadd.f32 %v3126, %v3127
    %v3129 = vrot.slane %v3128, 1
    %v3130 = vadd.f32 %v3128, %v3129
    %v3131 = vrot.slane %v1764, 4
    %v3132 = vadd.f32 %v1764, %v3131
    %v3133 = vrot.slane %v3132, 2
    %v3134 = vadd.f32 %v3132, %v3133
    %v3135 = vrot.slane %v3134, 1
    %v3136 = vadd.f32 %v3134, %v3135
    %v3137 = vrot.slane %v1766, 4
    %v3138 = vadd.f32 %v1766, %v3137
    %v3139 = vrot.slane %v3138, 2
    %v3140 = vadd.f32 %v3138, %v3139
    %v3141 = vrot.slane %v3140, 1
    %v3142 = vadd.f32 %v3140, %v3141
    %v3143 = vrot.slane %v1768, 4
    %v3144 = vadd.f32 %v1768, %v3143
    %v3145 = vrot.slane %v3144, 2
    %v3146 = vadd.f32 %v3144, %v3145
    %v3147 = vrot.slane %v3146, 1
    %v3148 = vadd.f32 %v3146, %v3147
    %v3149 = vrot.slane %v1770, 4
    %v3150 = vadd.f32 %v1770, %v3149
    %v3151 = vrot.slane %v3150, 2
    %v3152 = vadd.f32 %v3150, %v3151
    %v3153 = vrot.slane %v3152, 1
    %v3154 = vadd.f32 %v3152, %v3153
    %v3155 = vrot.slane %v1772, 4
    %v3156 = vadd.f32 %v1772, %v3155
    %v3157 = vrot.slane %v3156, 2
    %v3158 = vadd.f32 %v3156, %v3157
    %v3159 = vrot.slane %v3158, 1
    %v3160 = vadd.f32 %v3158, %v3159
    %v3161 = vrot.slane %v1774, 4
    %v3162 = vadd.f32 %v1774, %v3161
    %v3163 = vrot.slane %v3162, 2
    %v3164 = vadd.f32 %v3162, %v3163
    %v3165 = vrot.slane %v3164, 1
    %v3166 = vadd.f32 %v3164, %v3165
    %v3167 = vrot.slane %v1776, 4
    %v3168 = vadd.f32 %v1776, %v3167
    %v3169 = vrot.slane %v3168, 2
    %v3170 = vadd.f32 %v3168, %v3169
    %v3171 = vrot.slane %v3170, 1
    %v3172 = vadd.f32 %v3170, %v3171
    %v3173 = vrot.slane %v1778, 4
    %v3174 = vadd.f32 %v1778, %v3173
    %v3175 = vrot.slane %v3174, 2
    %v3176 = vadd.f32 %v3174, %v3175
    %v3177 = vrot.slane %v3176, 1
    %v3178 = vadd.f32 %v3176, %v3177
    %v3179 = vrot.slane %v1780, 4
    %v3180 = vadd.f32 %v1780, %v3179
    %v3181 = vrot.slane %v3180, 2
    %v3182 = vadd.f32 %v3180, %v3181
    %v3183 = vrot.slane %v3182, 1
    %v3184 = vadd.f32 %v3182, %v3183
    %v3185 = vrot.slane %v1782, 4
    %v3186 = vadd.f32 %v1782, %v3185
    %v3187 = vrot.slane %v3186, 2
    %v3188 = vadd.f32 %v3186, %v3187
    %v3189 = vrot.slane %v3188, 1
    %v3190 = vadd.f32 %v3188, %v3189
    %v3191 = vrot.slane %v1784, 4
    %v3192 = vadd.f32 %v1784, %v3191
    %v3193 = vrot.slane %v3192, 2
    %v3194 = vadd.f32 %v3192, %v3193
    %v3195 = vrot.slane %v3194, 1
    %v3196 = vadd.f32 %v3194, %v3195
    %v3197 = vrot.slane %v1786, 4
    %v3198 = vadd.f32 %v1786, %v3197
    %v3199 = vrot.slane %v3198, 2
    %v3200 = vadd.f32 %v3198, %v3199
    %v3201 = vrot.slane %v3200, 1
    %v3202 = vadd.f32 %v3200, %v3201
    %v3203 = vrot.slane %v1788, 4
    %v3204 = vadd.f32 %v1788, %v3203
    %v3205 = vrot.slane %v3204, 2
    %v3206 = vadd.f32 %v3204, %v3205
    %v3207 = vrot.slane %v3206, 1
    %v3208 = vadd.f32 %v3206, %v3207
    %v3209 = vrot.slane %v1790, 4
    %v3210 = vadd.f32 %v1790, %v3209
    %v3211 = vrot.slane %v3210, 2
    %v3212 = vadd.f32 %v3210, %v3211
    %v3213 = vrot.slane %v3212, 1
    %v3214 = vadd.f32 %v3212, %v3213
    %v3215 = vrot.slane %v1792, 4
    %v3216 = vadd.f32 %v1792, %v3215
    %v3217 = vrot.slane %v3216, 2
    %v3218 = vadd.f32 %v3216, %v3217
    %v3219 = vrot.slane %v3218, 1
    %v3220 = vadd.f32 %v3218, %v3219
    %v3221 = vrot.slane %v1794, 4
    %v3222 = vadd.f32 %v1794, %v3221
    %v3223 = vrot.slane %v3222, 2
    %v3224 = vadd.f32 %v3222, %v3223
    %v3225 = vrot.slane %v3224, 1
    %v3226 = vadd.f32 %v3224, %v3225
    %v3227 = vrot.slane %v1796, 4
    %v3228 = vadd.f32 %v1796, %v3227
    %v3229 = vrot.slane %v3228, 2
    %v3230 = vadd.f32 %v3228, %v3229
    %v3231 = vrot.slane %v3230, 1
    %v3232 = vadd.f32 %v3230, %v3231
    %v3233 = vrot.slane %v1798, 4
    %v3234 = vadd.f32 %v1798, %v3233
    %v3235 = vrot.slane %v3234, 2
    %v3236 = vadd.f32 %v3234, %v3235
    %v3237 = vrot.slane %v3236, 1
    %v3238 = vadd.f32 %v3236, %v3237
    %v3239 = vrot.slane %v1800, 4
    %v3240 = vadd.f32 %v1800, %v3239
    %v3241 = vrot.slane %v3240, 2
    %v3242 = vadd.f32 %v3240, %v3241
    %v3243 = vrot.slane %v3242, 1
    %v3244 = vadd.f32 %v3242, %v3243
    %v3245 = vrot.slane %v1802, 4
    %v3246 = vadd.f32 %v1802, %v3245
    %v3247 = vrot.slane %v3246, 2
    %v3248 = vadd.f32 %v3246, %v3247
    %v3249 = vrot.slane %v3248, 1
    %v3250 = vadd.f32 %v3248, %v3249
    %v3251 = vrot.slane %v1804, 4
    %v3252 = vadd.f32 %v1804, %v3251
    %v3253 = vrot.slane %v3252, 2
    %v3254 = vadd.f32 %v3252, %v3253
    %v3255 = vrot.slane %v3254, 1
    %v3256 = vadd.f32 %v3254, %v3255
    %v3257 = vrot.slane %v1806, 4
    %v3258 = vadd.f32 %v1806, %v3257
    %v3259 = vrot.slane %v3258, 2
    %v3260 = vadd.f32 %v3258, %v3259
    %v3261 = vrot.slane %v3260, 1
    %v3262 = vadd.f32 %v3260, %v3261
    %v3263 = vrot.slane %v1808, 4
    %v3264 = vadd.f32 %v1808, %v3263
    %v3265 = vrot.slane %v3264, 2
    %v3266 = vadd.f32 %v3264, %v3265
    %v3267 = vrot.slane %v3266, 1
    %v3268 = vadd.f32 %v3266, %v3267
    %v3269 = vrot.slane %v1810, 4
    %v3270 = vadd.f32 %v1810, %v3269
    %v3271 = vrot.slane %v3270, 2
    %v3272 = vadd.f32 %v3270, %v3271
    %v3273 = vrot.slane %v3272, 1
    %v3274 = vadd.f32 %v3272, %v3273
    %v3275 = vrot.slane %v1812, 4
    %v3276 = vadd.f32 %v1812, %v3275
    %v3277 = vrot.slane %v3276, 2
    %v3278 = vadd.f32 %v3276, %v3277
    %v3279 = vrot.slane %v3278, 1
    %v3280 = vadd.f32 %v3278, %v3279
    %v3281 = vrot.slane %v1814, 4
    %v3282 = vadd.f32 %v1814, %v3281
    %v3283 = vrot.slane %v3282, 2
    %v3284 = vadd.f32 %v3282, %v3283
    %v3285 = vrot.slane %v3284, 1
    %v3286 = vadd.f32 %v3284, %v3285
    %v3287 = vrot.slane %v1816, 4
    %v3288 = vadd.f32 %v1816, %v3287
    %v3289 = vrot.slane %v3288, 2
    %v3290 = vadd.f32 %v3288, %v3289
    %v3291 = vrot.slane %v3290, 1
    %v3292 = vadd.f32 %v3290, %v3291
    %v3293 = vrot.slane %v1818, 4
    %v3294 = vadd.f32 %v1818, %v3293
    %v3295 = vrot.slane %v3294, 2
    %v3296 = vadd.f32 %v3294, %v3295
    %v3297 = vrot.slane %v3296, 1
    %v3298 = vadd.f32 %v3296, %v3297
    %v3299 = vrot.slane %v1820, 4
    %v3300 = vadd.f32 %v1820, %v3299
    %v3301 = vrot.slane %v3300, 2
    %v3302 = vadd.f32 %v3300, %v3301
    %v3303 = vrot.slane %v3302, 1
    %v3304 = vadd.f32 %v3302, %v3303
    %v3305 = vrot.slane %v1822, 4
    %v3306 = vadd.f32 %v1822, %v3305
    %v3307 = vrot.slane %v3306, 2
    %v3308 = vadd.f32 %v3306, %v3307
    %v3309 = vrot.slane %v3308, 1
    %v3310 = vadd.f32 %v3308, %v3309
    %v3311 = vrot.slane %v1824, 4
    %v3312 = vadd.f32 %v1824, %v3311
    %v3313 = vrot.slane %v3312, 2
    %v3314 = vadd.f32 %v3312, %v3313
    %v3315 = vrot.slane %v3314, 1
    %v3316 = vadd.f32 %v3314, %v3315
    %v3317 = vrot.slane %v1826, 4
    %v3318 = vadd.f32 %v1826, %v3317
    %v3319 = vrot.slane %v3318, 2
    %v3320 = vadd.f32 %v3318, %v3319
    %v3321 = vrot.slane %v3320, 1
    %v3322 = vadd.f32 %v3320, %v3321
    %v3323 = vrot.slane %v1828, 4
    %v3324 = vadd.f32 %v1828, %v3323
    %v3325 = vrot.slane %v3324, 2
    %v3326 = vadd.f32 %v3324, %v3325
    %v3327 = vrot.slane %v3326, 1
    %v3328 = vadd.f32 %v3326, %v3327
    %v3329 = vrot.slane %v1830, 4
    %v3330 = vadd.f32 %v1830, %v3329
    %v3331 = vrot.slane %v3330, 2
    %v3332 = vadd.f32 %v3330, %v3331
    %v3333 = vrot.slane %v3332, 1
    %v3334 = vadd.f32 %v3332, %v3333
    %v3335 = vrot.slane %v1832, 4
    %v3336 = vadd.f32 %v1832, %v3335
    %v3337 = vrot.slane %v3336, 2
    %v3338 = vadd.f32 %v3336, %v3337
    %v3339 = vrot.slane %v3338, 1
    %v3340 = vadd.f32 %v3338, %v3339
    %v3341 = vrot.slane %v1834, 4
    %v3342 = vadd.f32 %v1834, %v3341
    %v3343 = vrot.slane %v3342, 2
    %v3344 = vadd.f32 %v3342, %v3343
    %v3345 = vrot.slane %v3344, 1
    %v3346 = vadd.f32 %v3344, %v3345
    %v3347 = vrot.slane %v1836, 4
    %v3348 = vadd.f32 %v1836, %v3347
    %v3349 = vrot.slane %v3348, 2
    %v3350 = vadd.f32 %v3348, %v3349
    %v3351 = vrot.slane %v3350, 1
    %v3352 = vadd.f32 %v3350, %v3351
    %v3353 = vrot.slane %v1838, 4
    %v3354 = vadd.f32 %v1838, %v3353
    %v3355 = vrot.slane %v3354, 2
    %v3356 = vadd.f32 %v3354, %v3355
    %v3357 = vrot.slane %v3356, 1
    %v3358 = vadd.f32 %v3356, %v3357
    %v3359 = vrot.slane %v1840, 4
    %v3360 = vadd.f32 %v1840, %v3359
    %v3361 = vrot.slane %v3360, 2
    %v3362 = vadd.f32 %v3360, %v3361
    %v3363 = vrot.slane %v3362, 1
    %v3364 = vadd.f32 %v3362, %v3363
    %v3365 = vrot.slane %v1842, 4
    %v3366 = vadd.f32 %v1842, %v3365
    %v3367 = vrot.slane %v3366, 2
    %v3368 = vadd.f32 %v3366, %v3367
    %v3369 = vrot.slane %v3368, 1
    %v3370 = vadd.f32 %v3368, %v3369
    %v3371 = vrot.slane %v1844, 4
    %v3372 = vadd.f32 %v1844, %v3371
    %v3373 = vrot.slane %v3372, 2
    %v3374 = vadd.f32 %v3372, %v3373
    %v3375 = vrot.slane %v3374, 1
    %v3376 = vadd.f32 %v3374, %v3375
    %v3377 = vrot.slane %v1846, 4
    %v3378 = vadd.f32 %v1846, %v3377
    %v3379 = vrot.slane %v3378, 2
    %v3380 = vadd.f32 %v3378, %v3379
    %v3381 = vrot.slane %v3380, 1
    %v3382 = vadd.f32 %v3380, %v3381
    %v3383 = vrcp.pop 8.0
    %v3384 = vmul.f32 %v1852, %v3383
    %v3385 = vmul.f32 %v1858, %v3383
    %v3386 = vmul.f32 %v1864, %v3383
    %v3387 = vmul.f32 %v1870, %v3383
    %v3388 = vmul.f32 %v1876, %v3383
    %v3389 = vmul.f32 %v1882, %v3383
    %v3390 = vmul.f32 %v1888, %v3383
    %v3391 = vmul.f32 %v1894, %v3383
    %v3392 = vmul.f32 %v1900, %v3383
    %v3393 = vmul.f32 %v1906, %v3383
    %v3394 = vmul.f32 %v1912, %v3383
    %v3395 = vmul.f32 %v1918, %v3383
    %v3396 = vmul.f32 %v1924, %v3383
    %v3397 = vmul.f32 %v1930, %v3383
    %v3398 = vmul.f32 %v1936, %v3383
    %v3399 = vmul.f32 %v1942, %v3383
    %v3400 = vmul.f32 %v1948, %v3383
    %v3401 = vmul.f32 %v1954, %v3383
    %v3402 = vmul.f32 %v1960, %v3383
    %v3403 = vmul.f32 %v1966, %v3383
    %v3404 = vmul.f32 %v1972, %v3383
    %v3405 = vmul.f32 %v1978, %v3383
    %v3406 = vmul.f32 %v1984, %v3383
    %v3407 = vmul.f32 %v1990, %v3383
    %v3408 = vmul.f32 %v1996, %v3383
    %v3409 = vmul.f32 %v2002, %v3383
    %v3410 = vmul.f32 %v2008, %v3383
    %v3411 = vmul.f32 %v2014, %v3383
    %v3412 = vmul.f32 %v2020, %v3383
    %v3413 = vmul.f32 %v2026, %v3383
    %v3414 = vmul.f32 %v2032, %v3383
    %v3415 = vmul.f32 %v2038, %v3383
    %v3416 = vmul.f32 %v2044, %v3383
    %v3417 = vmul.f32 %v2050, %v3383
    %v3418 = vmul.f32 %v2056, %v3383
    %v3419 = vmul.f32 %v2062, %v3383
    %v3420 = vmul.f32 %v2068, %v3383
    %v3421 = vmul.f32 %v2074, %v3383
    %v3422 = vmul.f32 %v2080, %v3383
    %v3423 = vmul.f32 %v2086, %v3383
    %v3424 = vmul.f32 %v2092, %v3383
    %v3425 = vmul.f32 %v2098, %v3383
    %v3426 = vmul.f32 %v2104, %v3383
    %v3427 = vmul.f32 %v2110, %v3383
    %v3428 = vmul.f32 %v2116, %v3383
    %v3429 = vmul.f32 %v2122, %v3383
    %v3430 = vmul.f32 %v2128, %v3383
    %v3431 = vmul.f32 %v2134, %v3383
    %v3432 = vmul.f32 %v2140, %v3383
    %v3433 = vmul.f32 %v2146, %v3383
    %v3434 = vmul.f32 %v2152, %v3383
    %v3435 = vmul.f32 %v2158, %v3383
    %v3436 = vmul.f32 %v2164, %v3383
    %v3437 = vmul.f32 %v2170, %v3383
    %v3438 = vmul.f32 %v2176, %v3383
    %v3439 = vmul.f32 %v2182, %v3383
    %v3440 = vmul.f32 %v2188, %v3383
    %v3441 = vmul.f32 %v2194, %v3383
    %v3442 = vmul.f32 %v2200, %v3383
    %v3443 = vmul.f32 %v2206, %v3383
    %v3444 = vmul.f32 %v2212, %v3383
    %v3445 = vmul.f32 %v2218, %v3383
    %v3446 = vmul.f32 %v2224, %v3383
    %v3447 = vmul.f32 %v2230, %v3383
    %v3448 = vmul.f32 %v2236, %v3383
    %v3449 = vmul.f32 %v2242, %v3383
    %v3450 = vmul.f32 %v2248, %v3383
    %v3451 = vmul.f32 %v2254, %v3383
    %v3452 = vmul.f32 %v2260, %v3383
    %v3453 = vmul.f32 %v2266, %v3383
    %v3454 = vmul.f32 %v2272, %v3383
    %v3455 = vmul.f32 %v2278, %v3383
    %v3456 = vmul.f32 %v2284, %v3383
    %v3457 = vmul.f32 %v2290, %v3383
    %v3458 = vmul.f32 %v2296, %v3383
    %v3459 = vmul.f32 %v2302, %v3383
    %v3460 = vmul.f32 %v2308, %v3383
    %v3461 = vmul.f32 %v2314, %v3383
    %v3462 = vmul.f32 %v2320, %v3383
    %v3463 = vmul.f32 %v2326, %v3383
    %v3464 = vmul.f32 %v2332, %v3383
    %v3465 = vmul.f32 %v2338, %v3383
    %v3466 = vmul.f32 %v2344, %v3383
    %v3467 = vmul.f32 %v2350, %v3383
    %v3468 = vmul.f32 %v2356, %v3383
    %v3469 = vmul.f32 %v2362, %v3383
    %v3470 = vmul.f32 %v2368, %v3383
    %v3471 = vmul.f32 %v2374, %v3383
    %v3472 = vmul.f32 %v2380, %v3383
    %v3473 = vmul.f32 %v2386, %v3383
    %v3474 = vmul.f32 %v2392, %v3383
    %v3475 = vmul.f32 %v2398, %v3383
    %v3476 = vmul.f32 %v2404, %v3383
    %v3477 = vmul.f32 %v2410, %v3383
    %v3478 = vmul.f32 %v2416, %v3383
    %v3479 = vmul.f32 %v2422, %v3383
    %v3480 = vmul.f32 %v2428, %v3383
    %v3481 = vmul.f32 %v2434, %v3383
    %v3482 = vmul.f32 %v2440, %v3383
    %v3483 = vmul.f32 %v2446, %v3383
    %v3484 = vmul.f32 %v2452, %v3383
    %v3485 = vmul.f32 %v2458, %v3383
    %v3486 = vmul.f32 %v2464, %v3383
    %v3487 = vmul.f32 %v2470, %v3383
    %v3488 = vmul.f32 %v2476, %v3383
    %v3489 = vmul.f32 %v2482, %v3383
    %v3490 = vmul.f32 %v2488, %v3383
    %v3491 = vmul.f32 %v2494, %v3383
    %v3492 = vmul.f32 %v2500, %v3383
    %v3493 = vmul.f32 %v2506, %v3383
    %v3494 = vmul.f32 %v2512, %v3383
    %v3495 = vmul.f32 %v2518, %v3383
    %v3496 = vmul.f32 %v2524, %v3383
    %v3497 = vmul.f32 %v2530, %v3383
    %v3498 = vmul.f32 %v2536, %v3383
    %v3499 = vmul.f32 %v2542, %v3383
    %v3500 = vmul.f32 %v2548, %v3383
    %v3501 = vmul.f32 %v2554, %v3383
    %v3502 = vmul.f32 %v2560, %v3383
    %v3503 = vmul.f32 %v2566, %v3383
    %v3504 = vmul.f32 %v2572, %v3383
    %v3505 = vmul.f32 %v2578, %v3383
    %v3506 = vmul.f32 %v2584, %v3383
    %v3507 = vmul.f32 %v2590, %v3383
    %v3508 = vmul.f32 %v2596, %v3383
    %v3509 = vmul.f32 %v2602, %v3383
    %v3510 = vmul.f32 %v2608, %v3383
    %v3511 = vmul.f32 %v2614, %v3383
    %v3512 = vmul.f32 %v2620, %v3383
    %v3513 = vmul.f32 %v2626, %v3383
    %v3514 = vmul.f32 %v2632, %v3383
    %v3515 = vmul.f32 %v2638, %v3383
    %v3516 = vmul.f32 %v2644, %v3383
    %v3517 = vmul.f32 %v2650, %v3383
    %v3518 = vmul.f32 %v2656, %v3383
    %v3519 = vmul.f32 %v2662, %v3383
    %v3520 = vmul.f32 %v2668, %v3383
    %v3521 = vmul.f32 %v2674, %v3383
    %v3522 = vmul.f32 %v2680, %v3383
    %v3523 = vmul.f32 %v2686, %v3383
    %v3524 = vmul.f32 %v2692, %v3383
    %v3525 = vmul.f32 %v2698, %v3383
    %v3526 = vmul.f32 %v2704, %v3383
    %v3527 = vmul.f32 %v2710, %v3383
    %v3528 = vmul.f32 %v2716, %v3383
    %v3529 = vmul.f32 %v2722, %v3383
    %v3530 = vmul.f32 %v2728, %v3383
    %v3531 = vmul.f32 %v2734, %v3383
    %v3532 = vmul.f32 %v2740, %v3383
    %v3533 = vmul.f32 %v2746, %v3383
    %v3534 = vmul.f32 %v2752, %v3383
    %v3535 = vmul.f32 %v2758, %v3383
    %v3536 = vmul.f32 %v2764, %v3383
    %v3537 = vmul.f32 %v2770, %v3383
    %v3538 = vmul.f32 %v2776, %v3383
    %v3539 = vmul.f32 %v2782, %v3383
    %v3540 = vmul.f32 %v2788, %v3383
    %v3541 = vmul.f32 %v2794, %v3383
    %v3542 = vmul.f32 %v2800, %v3383
    %v3543 = vmul.f32 %v2806, %v3383
    %v3544 = vmul.f32 %v2812, %v3383
    %v3545 = vmul.f32 %v2818, %v3383
    %v3546 = vmul.f32 %v2824, %v3383
    %v3547 = vmul.f32 %v2830, %v3383
    %v3548 = vmul.f32 %v2836, %v3383
    %v3549 = vmul.f32 %v2842, %v3383
    %v3550 = vmul.f32 %v2848, %v3383
    %v3551 = vmul.f32 %v2854, %v3383
    %v3552 = vmul.f32 %v2860, %v3383
    %v3553 = vmul.f32 %v2866, %v3383
    %v3554 = vmul.f32 %v2872, %v3383
    %v3555 = vmul.f32 %v2878, %v3383
    %v3556 = vmul.f32 %v2884, %v3383
    %v3557 = vmul.f32 %v2890, %v3383
    %v3558 = vmul.f32 %v2896, %v3383
    %v3559 = vmul.f32 %v2902, %v3383
    %v3560 = vmul.f32 %v2908, %v3383
    %v3561 = vmul.f32 %v2914, %v3383
    %v3562 = vmul.f32 %v2920, %v3383
    %v3563 = vmul.f32 %v2926, %v3383
    %v3564 = vmul.f32 %v2932, %v3383
    %v3565 = vmul.f32 %v2938, %v3383
    %v3566 = vmul.f32 %v2944, %v3383
    %v3567 = vmul.f32 %v2950, %v3383
    %v3568 = vmul.f32 %v2956, %v3383
    %v3569 = vmul.f32 %v2962, %v3383
    %v3570 = vmul.f32 %v2968, %v3383
    %v3571 = vmul.f32 %v2974, %v3383
    %v3572 = vmul.f32 %v2980, %v3383
    %v3573 = vmul.f32 %v2986, %v3383
    %v3574 = vmul.f32 %v2992, %v3383
    %v3575 = vmul.f32 %v2998, %v3383
    %v3576 = vmul.f32 %v3004, %v3383
    %v3577 = vmul.f32 %v3010, %v3383
    %v3578 = vmul.f32 %v3016, %v3383
    %v3579 = vmul.f32 %v3022, %v3383
    %v3580 = vmul.f32 %v3028, %v3383
    %v3581 = vmul.f32 %v3034, %v3383
    %v3582 = vmul.f32 %v3040, %v3383
    %v3583 = vmul.f32 %v3046, %v3383
    %v3584 = vmul.f32 %v3052, %v3383
    %v3585 = vmul.f32 %v3058, %v3383
    %v3586 = vmul.f32 %v3064, %v3383
    %v3587 = vmul.f32 %v3070, %v3383
    %v3588 = vmul.f32 %v3076, %v3383
    %v3589 = vmul.f32 %v3082, %v3383
    %v3590 = vmul.f32 %v3088, %v3383
    %v3591 = vmul.f32 %v3094, %v3383
    %v3592 = vmul.f32 %v3100, %v3383
    %v3593 = vmul.f32 %v3106, %v3383
    %v3594 = vmul.f32 %v3112, %v3383
    %v3595 = vmul.f32 %v3118, %v3383
    %v3596 = vmul.f32 %v3124, %v3383
    %v3597 = vmul.f32 %v3130, %v3383
    %v3598 = vmul.f32 %v3136, %v3383
    %v3599 = vmul.f32 %v3142, %v3383
    %v3600 = vmul.f32 %v3148, %v3383
    %v3601 = vmul.f32 %v3154, %v3383
    %v3602 = vmul.f32 %v3160, %v3383
    %v3603 = vmul.f32 %v3166, %v3383
    %v3604 = vmul.f32 %v3172, %v3383
    %v3605 = vmul.f32 %v3178, %v3383
    %v3606 = vmul.f32 %v3184, %v3383
    %v3607 = vmul.f32 %v3190, %v3383
    %v3608 = vmul.f32 %v3196, %v3383
    %v3609 = vmul.f32 %v3202, %v3383
    %v3610 = vmul.f32 %v3208, %v3383
    %v3611 = vmul.f32 %v3214, %v3383
    %v3612 = vmul.f32 %v3220, %v3383
    %v3613 = vmul.f32 %v3226, %v3383
    %v3614 = vmul.f32 %v3232, %v3383
    %v3615 = vmul.f32 %v3238, %v3383
    %v3616 = vmul.f32 %v3244, %v3383
    %v3617 = vmul.f32 %v3250, %v3383
    %v3618 = vmul.f32 %v3256, %v3383
    %v3619 = vmul.f32 %v3262, %v3383
    %v3620 = vmul.f32 %v3268, %v3383
    %v3621 = vmul.f32 %v3274, %v3383
    %v3622 = vmul.f32 %v3280, %v3383
    %v3623 = vmul.f32 %v3286, %v3383
    %v3624 = vmul.f32 %v3292, %v3383
    %v3625 = vmul.f32 %v3298, %v3383
    %v3626 = vmul.f32 %v3304, %v3383
    %v3627 = vmul.f32 %v3310, %v3383
    %v3628 = vmul.f32 %v3316, %v3383
    %v3629 = vmul.f32 %v3322, %v3383
    %v3630 = vmul.f32 %v3328, %v3383
    %v3631 = vmul.f32 %v3334, %v3383
    %v3632 = vmul.f32 %v3340, %v3383
    %v3633 = vmul.f32 %v3346, %v3383
    %v3634 = vmul.f32 %v3352, %v3383
    %v3635 = vmul.f32 %v3358, %v3383
    %v3636 = vmul.f32 %v3364, %v3383
    %v3637 = vmul.f32 %v3370, %v3383
    %v3638 = vmul.f32 %v3376, %v3383
    %v3639 = vmul.f32 %v3382, %v3383
    %v3640 = vlog2.pop %v3384
    %v3641 = vmul.f32 %v3640, 0.6931472
    %v3642 = vlog2.pop %v3385
    %v3643 = vmul.f32 %v3642, 0.6931472
    %v3644 = vlog2.pop %v3386
    %v3645 = vmul.f32 %v3644, 0.6931472
    %v3646 = vlog2.pop %v3387
    %v3647 = vmul.f32 %v3646, 0.6931472
    %v3648 = vlog2.pop %v3388
    %v3649 = vmul.f32 %v3648, 0.6931472
    %v3650 = vlog2.pop %v3389
    %v3651 = vmul.f32 %v3650, 0.6931472
    %v3652 = vlog2.pop %v3390
    %v3653 = vmul.f32 %v3652, 0.6931472
    %v3654 = vlog2.pop %v3391
    %v3655 = vmul.f32 %v3654, 0.6931472
    %v3656 = vlog2.pop %v3392
    %v3657 = vmul.f32 %v3656, 0.6931472
    %v3658 = vlog2.pop %v3393
    %v3659 = vmul.f32 %v3658, 0.6931472
    %v3660 = vlog2.pop %v3394
    %v3661 = vmul.f32 %v3660, 0.6931472
    %v3662 = vlog2.pop %v3395
    %v3663 = vmul.f32 %v3662, 0.6931472
    %v3664 = vlog2.pop %v3396
    %v3665 = vmul.f32 %v3664, 0.6931472
    %v3666 = vlog2.pop %v3397
    %v3667 = vmul.f32 %v3666, 0.6931472
    %v3668 = vlog2.pop %v3398
    %v3669 = vmul.f32 %v3668, 0.6931472
    %v3670 = vlog2.pop %v3399
    %v3671 = vmul.f32 %v3670, 0.6931472
    %v3672 = vlog2.pop %v3400
    %v3673 = vmul.f32 %v3672, 0.6931472
    %v3674 = vlog2.pop %v3401
    %v3675 = vmul.f32 %v3674, 0.6931472
    %v3676 = vlog2.pop %v3402
    %v3677 = vmul.f32 %v3676, 0.6931472
    %v3678 = vlog2.pop %v3403
    %v3679 = vmul.f32 %v3678, 0.6931472
    %v3680 = vlog2.pop %v3404
    %v3681 = vmul.f32 %v3680, 0.6931472
    %v3682 = vlog2.pop %v3405
    %v3683 = vmul.f32 %v3682, 0.6931472
    %v3684 = vlog2.pop %v3406
    %v3685 = vmul.f32 %v3684, 0.6931472
    %v3686 = vlog2.pop %v3407
    %v3687 = vmul.f32 %v3686, 0.6931472
    %v3688 = vlog2.pop %v3408
    %v3689 = vmul.f32 %v3688, 0.6931472
    %v3690 = vlog2.pop %v3409
    %v3691 = vmul.f32 %v3690, 0.6931472
    %v3692 = vlog2.pop %v3410
    %v3693 = vmul.f32 %v3692, 0.6931472
    %v3694 = vlog2.pop %v3411
    %v3695 = vmul.f32 %v3694, 0.6931472
    %v3696 = vlog2.pop %v3412
    %v3697 = vmul.f32 %v3696, 0.6931472
    %v3698 = vlog2.pop %v3413
    %v3699 = vmul.f32 %v3698, 0.6931472
    %v3700 = vlog2.pop %v3414
    %v3701 = vmul.f32 %v3700, 0.6931472
    %v3702 = vlog2.pop %v3415
    %v3703 = vmul.f32 %v3702, 0.6931472
    %v3704 = vlog2.pop %v3416
    %v3705 = vmul.f32 %v3704, 0.6931472
    %v3706 = vlog2.pop %v3417
    %v3707 = vmul.f32 %v3706, 0.6931472
    %v3708 = vlog2.pop %v3418
    %v3709 = vmul.f32 %v3708, 0.6931472
    %v3710 = vlog2.pop %v3419
    %v3711 = vmul.f32 %v3710, 0.6931472
    %v3712 = vlog2.pop %v3420
    %v3713 = vmul.f32 %v3712, 0.6931472
    %v3714 = vlog2.pop %v3421
    %v3715 = vmul.f32 %v3714, 0.6931472
    %v3716 = vlog2.pop %v3422
    %v3717 = vmul.f32 %v3716, 0.6931472
    %v3718 = vlog2.pop %v3423
    %v3719 = vmul.f32 %v3718, 0.6931472
    %v3720 = vlog2.pop %v3424
    %v3721 = vmul.f32 %v3720, 0.6931472
    %v3722 = vlog2.pop %v3425
    %v3723 = vmul.f32 %v3722, 0.6931472
    %v3724 = vlog2.pop %v3426
    %v3725 = vmul.f32 %v3724, 0.6931472
    %v3726 = vlog2.pop %v3427
    %v3727 = vmul.f32 %v3726, 0.6931472
    %v3728 = vlog2.pop %v3428
    %v3729 = vmul.f32 %v3728, 0.6931472
    %v3730 = vlog2.pop %v3429
    %v3731 = vmul.f32 %v3730, 0.6931472
    %v3732 = vlog2.pop %v3430
    %v3733 = vmul.f32 %v3732, 0.6931472
    %v3734 = vlog2.pop %v3431
    %v3735 = vmul.f32 %v3734, 0.6931472
    %v3736 = vlog2.pop %v3432
    %v3737 = vmul.f32 %v3736, 0.6931472
    %v3738 = vlog2.pop %v3433
    %v3739 = vmul.f32 %v3738, 0.6931472
    %v3740 = vlog2.pop %v3434
    %v3741 = vmul.f32 %v3740, 0.6931472
    %v3742 = vlog2.pop %v3435
    %v3743 = vmul.f32 %v3742, 0.6931472
    %v3744 = vlog2.pop %v3436
    %v3745 = vmul.f32 %v3744, 0.6931472
    %v3746 = vlog2.pop %v3437
    %v3747 = vmul.f32 %v3746, 0.6931472
    %v3748 = vlog2.pop %v3438
    %v3749 = vmul.f32 %v3748, 0.6931472
    %v3750 = vlog2.pop %v3439
    %v3751 = vmul.f32 %v3750, 0.6931472
    %v3752 = vlog2.pop %v3440
    %v3753 = vmul.f32 %v3752, 0.6931472
    %v3754 = vlog2.pop %v3441
    %v3755 = vmul.f32 %v3754, 0.6931472
    %v3756 = vlog2.pop %v3442
    %v3757 = vmul.f32 %v3756, 0.6931472
    %v3758 = vlog2.pop %v3443
    %v3759 = vmul.f32 %v3758, 0.6931472
    %v3760 = vlog2.pop %v3444
    %v3761 = vmul.f32 %v3760, 0.6931472
    %v3762 = vlog2.pop %v3445
    %v3763 = vmul.f32 %v3762, 0.6931472
    %v3764 = vlog2.pop %v3446
    %v3765 = vmul.f32 %v3764, 0.6931472
    %v3766 = vlog2.pop %v3447
    %v3767 = vmul.f32 %v3766, 0.6931472
    %v3768 = vlog2.pop %v3448
    %v3769 = vmul.f32 %v3768, 0.6931472
    %v3770 = vlog2.pop %v3449
    %v3771 = vmul.f32 %v3770, 0.6931472
    %v3772 = vlog2.pop %v3450
    %v3773 = vmul.f32 %v3772, 0.6931472
    %v3774 = vlog2.pop %v3451
    %v3775 = vmul.f32 %v3774, 0.6931472
    %v3776 = vlog2.pop %v3452
    %v3777 = vmul.f32 %v3776, 0.6931472
    %v3778 = vlog2.pop %v3453
    %v3779 = vmul.f32 %v3778, 0.6931472
    %v3780 = vlog2.pop %v3454
    %v3781 = vmul.f32 %v3780, 0.6931472
    %v3782 = vlog2.pop %v3455
    %v3783 = vmul.f32 %v3782, 0.6931472
    %v3784 = vlog2.pop %v3456
    %v3785 = vmul.f32 %v3784, 0.6931472
    %v3786 = vlog2.pop %v3457
    %v3787 = vmul.f32 %v3786, 0.6931472
    %v3788 = vlog2.pop %v3458
    %v3789 = vmul.f32 %v3788, 0.6931472
    %v3790 = vlog2.pop %v3459
    %v3791 = vmul.f32 %v3790, 0.6931472
    %v3792 = vlog2.pop %v3460
    %v3793 = vmul.f32 %v3792, 0.6931472
    %v3794 = vlog2.pop %v3461
    %v3795 = vmul.f32 %v3794, 0.6931472
    %v3796 = vlog2.pop %v3462
    %v3797 = vmul.f32 %v3796, 0.6931472
    %v3798 = vlog2.pop %v3463
    %v3799 = vmul.f32 %v3798, 0.6931472
    %v3800 = vlog2.pop %v3464
    %v3801 = vmul.f32 %v3800, 0.6931472
    %v3802 = vlog2.pop %v3465
    %v3803 = vmul.f32 %v3802, 0.6931472
    %v3804 = vlog2.pop %v3466
    %v3805 = vmul.f32 %v3804, 0.6931472
    %v3806 = vlog2.pop %v3467
    %v3807 = vmul.f32 %v3806, 0.6931472
    %v3808 = vlog2.pop %v3468
    %v3809 = vmul.f32 %v3808, 0.6931472
    %v3810 = vlog2.pop %v3469
    %v3811 = vmul.f32 %v3810, 0.6931472
    %v3812 = vlog2.pop %v3470
    %v3813 = vmul.f32 %v3812, 0.6931472
    %v3814 = vlog2.pop %v3471
    %v3815 = vmul.f32 %v3814, 0.6931472
    %v3816 = vlog2.pop %v3472
    %v3817 = vmul.f32 %v3816, 0.6931472
    %v3818 = vlog2.pop %v3473
    %v3819 = vmul.f32 %v3818, 0.6931472
    %v3820 = vlog2.pop %v3474
    %v3821 = vmul.f32 %v3820, 0.6931472
    %v3822 = vlog2.pop %v3475
    %v3823 = vmul.f32 %v3822, 0.6931472
    %v3824 = vlog2.pop %v3476
    %v3825 = vmul.f32 %v3824, 0.6931472
    %v3826 = vlog2.pop %v3477
    %v3827 = vmul.f32 %v3826, 0.6931472
    %v3828 = vlog2.pop %v3478
    %v3829 = vmul.f32 %v3828, 0.6931472
    %v3830 = vlog2.pop %v3479
    %v3831 = vmul.f32 %v3830, 0.6931472
    %v3832 = vlog2.pop %v3480
    %v3833 = vmul.f32 %v3832, 0.6931472
    %v3834 = vlog2.pop %v3481
    %v3835 = vmul.f32 %v3834, 0.6931472
    %v3836 = vlog2.pop %v3482
    %v3837 = vmul.f32 %v3836, 0.6931472
    %v3838 = vlog2.pop %v3483
    %v3839 = vmul.f32 %v3838, 0.6931472
    %v3840 = vlog2.pop %v3484
    %v3841 = vmul.f32 %v3840, 0.6931472
    %v3842 = vlog2.pop %v3485
    %v3843 = vmul.f32 %v3842, 0.6931472
    %v3844 = vlog2.pop %v3486
    %v3845 = vmul.f32 %v3844, 0.6931472
    %v3846 = vlog2.pop %v3487
    %v3847 = vmul.f32 %v3846, 0.6931472
    %v3848 = vlog2.pop %v3488
    %v3849 = vmul.f32 %v3848, 0.6931472
    %v3850 = vlog2.pop %v3489
    %v3851 = vmul.f32 %v3850, 0.6931472
    %v3852 = vlog2.pop %v3490
    %v3853 = vmul.f32 %v3852, 0.6931472
    %v3854 = vlog2.pop %v3491
    %v3855 = vmul.f32 %v3854, 0.6931472
    %v3856 = vlog2.pop %v3492
    %v3857 = vmul.f32 %v3856, 0.6931472
    %v3858 = vlog2.pop %v3493
    %v3859 = vmul.f32 %v3858, 0.6931472
    %v3860 = vlog2.pop %v3494
    %v3861 = vmul.f32 %v3860, 0.6931472
    %v3862 = vlog2.pop %v3495
    %v3863 = vmul.f32 %v3862, 0.6931472
    %v3864 = vlog2.pop %v3496
    %v3865 = vmul.f32 %v3864, 0.6931472
    %v3866 = vlog2.pop %v3497
    %v3867 = vmul.f32 %v3866, 0.6931472
    %v3868 = vlog2.pop %v3498
    %v3869 = vmul.f32 %v3868, 0.6931472
    %v3870 = vlog2.pop %v3499
    %v3871 = vmul.f32 %v3870, 0.6931472
    %v3872 = vlog2.pop %v3500
    %v3873 = vmul.f32 %v3872, 0.6931472
    %v3874 = vlog2.pop %v3501
    %v3875 = vmul.f32 %v3874, 0.6931472
    %v3876 = vlog2.pop %v3502
    %v3877 = vmul.f32 %v3876, 0.6931472
    %v3878 = vlog2.pop %v3503
    %v3879 = vmul.f32 %v3878, 0.6931472
    %v3880 = vlog2.pop %v3504
    %v3881 = vmul.f32 %v3880, 0.6931472
    %v3882 = vlog2.pop %v3505
    %v3883 = vmul.f32 %v3882, 0.6931472
    %v3884 = vlog2.pop %v3506
    %v3885 = vmul.f32 %v3884, 0.6931472
    %v3886 = vlog2.pop %v3507
    %v3887 = vmul.f32 %v3886, 0.6931472
    %v3888 = vlog2.pop %v3508
    %v3889 = vmul.f32 %v3888, 0.6931472
    %v3890 = vlog2.pop %v3509
    %v3891 = vmul.f32 %v3890, 0.6931472
    %v3892 = vlog2.pop %v3510
    %v3893 = vmul.f32 %v3892, 0.6931472
    %v3894 = vlog2.pop %v3511
    %v3895 = vmul.f32 %v3894, 0.6931472
    %v3896 = vlog2.pop %v3512
    %v3897 = vmul.f32 %v3896, 0.6931472
    %v3898 = vlog2.pop %v3513
    %v3899 = vmul.f32 %v3898, 0.6931472
    %v3900 = vlog2.pop %v3514
    %v3901 = vmul.f32 %v3900, 0.6931472
    %v3902 = vlog2.pop %v3515
    %v3903 = vmul.f32 %v3902, 0.6931472
    %v3904 = vlog2.pop %v3516
    %v3905 = vmul.f32 %v3904, 0.6931472
    %v3906 = vlog2.pop %v3517
    %v3907 = vmul.f32 %v3906, 0.6931472
    %v3908 = vlog2.pop %v3518
    %v3909 = vmul.f32 %v3908, 0.6931472
    %v3910 = vlog2.pop %v3519
    %v3911 = vmul.f32 %v3910, 0.6931472
    %v3912 = vlog2.pop %v3520
    %v3913 = vmul.f32 %v3912, 0.6931472
    %v3914 = vlog2.pop %v3521
    %v3915 = vmul.f32 %v3914, 0.6931472
    %v3916 = vlog2.pop %v3522
    %v3917 = vmul.f32 %v3916, 0.6931472
    %v3918 = vlog2.pop %v3523
    %v3919 = vmul.f32 %v3918, 0.6931472
    %v3920 = vlog2.pop %v3524
    %v3921 = vmul.f32 %v3920, 0.6931472
    %v3922 = vlog2.pop %v3525
    %v3923 = vmul.f32 %v3922, 0.6931472
    %v3924 = vlog2.pop %v3526
    %v3925 = vmul.f32 %v3924, 0.6931472
    %v3926 = vlog2.pop %v3527
    %v3927 = vmul.f32 %v3926, 0.6931472
    %v3928 = vlog2.pop %v3528
    %v3929 = vmul.f32 %v3928, 0.6931472
    %v3930 = vlog2.pop %v3529
    %v3931 = vmul.f32 %v3930, 0.6931472
    %v3932 = vlog2.pop %v3530
    %v3933 = vmul.f32 %v3932, 0.6931472
    %v3934 = vlog2.pop %v3531
    %v3935 = vmul.f32 %v3934, 0.6931472
    %v3936 = vlog2.pop %v3532
    %v3937 = vmul.f32 %v3936, 0.6931472
    %v3938 = vlog2.pop %v3533
    %v3939 = vmul.f32 %v3938, 0.6931472
    %v3940 = vlog2.pop %v3534
    %v3941 = vmul.f32 %v3940, 0.6931472
    %v3942 = vlog2.pop %v3535
    %v3943 = vmul.f32 %v3942, 0.6931472
    %v3944 = vlog2.pop %v3536
    %v3945 = vmul.f32 %v3944, 0.6931472
    %v3946 = vlog2.pop %v3537
    %v3947 = vmul.f32 %v3946, 0.6931472
    %v3948 = vlog2.pop %v3538
    %v3949 = vmul.f32 %v3948, 0.6931472
    %v3950 = vlog2.pop %v3539
    %v3951 = vmul.f32 %v3950, 0.6931472
    %v3952 = vlog2.pop %v3540
    %v3953 = vmul.f32 %v3952, 0.6931472
    %v3954 = vlog2.pop %v3541
    %v3955 = vmul.f32 %v3954, 0.6931472
    %v3956 = vlog2.pop %v3542
    %v3957 = vmul.f32 %v3956, 0.6931472
    %v3958 = vlog2.pop %v3543
    %v3959 = vmul.f32 %v3958, 0.6931472
    %v3960 = vlog2.pop %v3544
    %v3961 = vmul.f32 %v3960, 0.6931472
    %v3962 = vlog2.pop %v3545
    %v3963 = vmul.f32 %v3962, 0.6931472
    %v3964 = vlog2.pop %v3546
    %v3965 = vmul.f32 %v3964, 0.6931472
    %v3966 = vlog2.pop %v3547
    %v3967 = vmul.f32 %v3966, 0.6931472
    %v3968 = vlog2.pop %v3548
    %v3969 = vmul.f32 %v3968, 0.6931472
    %v3970 = vlog2.pop %v3549
    %v3971 = vmul.f32 %v3970, 0.6931472
    %v3972 = vlog2.pop %v3550
    %v3973 = vmul.f32 %v3972, 0.6931472
    %v3974 = vlog2.pop %v3551
    %v3975 = vmul.f32 %v3974, 0.6931472
    %v3976 = vlog2.pop %v3552
    %v3977 = vmul.f32 %v3976, 0.6931472
    %v3978 = vlog2.pop %v3553
    %v3979 = vmul.f32 %v3978, 0.6931472
    %v3980 = vlog2.pop %v3554
    %v3981 = vmul.f32 %v3980, 0.6931472
    %v3982 = vlog2.pop %v3555
    %v3983 = vmul.f32 %v3982, 0.6931472
    %v3984 = vlog2.pop %v3556
    %v3985 = vmul.f32 %v3984, 0.6931472
    %v3986 = vlog2.pop %v3557
    %v3987 = vmul.f32 %v3986, 0.6931472
    %v3988 = vlog2.pop %v3558
    %v3989 = vmul.f32 %v3988, 0.6931472
    %v3990 = vlog2.pop %v3559
    %v3991 = vmul.f32 %v3990, 0.6931472
    %v3992 = vlog2.pop %v3560
    %v3993 = vmul.f32 %v3992, 0.6931472
    %v3994 = vlog2.pop %v3561
    %v3995 = vmul.f32 %v3994, 0.6931472
    %v3996 = vlog2.pop %v3562
    %v3997 = vmul.f32 %v3996, 0.6931472
    %v3998 = vlog2.pop %v3563
    %v3999 = vmul.f32 %v3998, 0.6931472
    %v4000 = vlog2.pop %v3564
    %v4001 = vmul.f32 %v4000, 0.6931472
    %v4002 = vlog2.pop %v3565
    %v4003 = vmul.f32 %v4002, 0.6931472
    %v4004 = vlog2.pop %v3566
    %v4005 = vmul.f32 %v4004, 0.6931472
    %v4006 = vlog2.pop %v3567
    %v4007 = vmul.f32 %v4006, 0.6931472
    %v4008 = vlog2.pop %v3568
    %v4009 = vmul.f32 %v4008, 0.6931472
    %v4010 = vlog2.pop %v3569
    %v4011 = vmul.f32 %v4010, 0.6931472
    %v4012 = vlog2.pop %v3570
    %v4013 = vmul.f32 %v4012, 0.6931472
    %v4014 = vlog2.pop %v3571
    %v4015 = vmul.f32 %v4014, 0.6931472
    %v4016 = vlog2.pop %v3572
    %v4017 = vmul.f32 %v4016, 0.6931472
    %v4018 = vlog2.pop %v3573
    %v4019 = vmul.f32 %v4018, 0.6931472
    %v4020 = vlog2.pop %v3574
    %v4021 = vmul.f32 %v4020, 0.6931472
    %v4022 = vlog2.pop %v3575
    %v4023 = vmul.f32 %v4022, 0.6931472
    %v4024 = vlog2.pop %v3576
    %v4025 = vmul.f32 %v4024, 0.6931472
    %v4026 = vlog2.pop %v3577
    %v4027 = vmul.f32 %v4026, 0.6931472
    %v4028 = vlog2.pop %v3578
    %v4029 = vmul.f32 %v4028, 0.6931472
    %v4030 = vlog2.pop %v3579
    %v4031 = vmul.f32 %v4030, 0.6931472
    %v4032 = vlog2.pop %v3580
    %v4033 = vmul.f32 %v4032, 0.6931472
    %v4034 = vlog2.pop %v3581
    %v4035 = vmul.f32 %v4034, 0.6931472
    %v4036 = vlog2.pop %v3582
    %v4037 = vmul.f32 %v4036, 0.6931472
    %v4038 = vlog2.pop %v3583
    %v4039 = vmul.f32 %v4038, 0.6931472
    %v4040 = vlog2.pop %v3584
    %v4041 = vmul.f32 %v4040, 0.6931472
    %v4042 = vlog2.pop %v3585
    %v4043 = vmul.f32 %v4042, 0.6931472
    %v4044 = vlog2.pop %v3586
    %v4045 = vmul.f32 %v4044, 0.6931472
    %v4046 = vlog2.pop %v3587
    %v4047 = vmul.f32 %v4046, 0.6931472
    %v4048 = vlog2.pop %v3588
    %v4049 = vmul.f32 %v4048, 0.6931472
    %v4050 = vlog2.pop %v3589
    %v4051 = vmul.f32 %v4050, 0.6931472
    %v4052 = vlog2.pop %v3590
    %v4053 = vmul.f32 %v4052, 0.6931472
    %v4054 = vlog2.pop %v3591
    %v4055 = vmul.f32 %v4054, 0.6931472
    %v4056 = vlog2.pop %v3592
    %v4057 = vmul.f32 %v4056, 0.6931472
    %v4058 = vlog2.pop %v3593
    %v4059 = vmul.f32 %v4058, 0.6931472
    %v4060 = vlog2.pop %v3594
    %v4061 = vmul.f32 %v4060, 0.6931472
    %v4062 = vlog2.pop %v3595
    %v4063 = vmul.f32 %v4062, 0.6931472
    %v4064 = vlog2.pop %v3596
    %v4065 = vmul.f32 %v4064, 0.6931472
    %v4066 = vlog2.pop %v3597
    %v4067 = vmul.f32 %v4066, 0.6931472
    %v4068 = vlog2.pop %v3598
    %v4069 = vmul.f32 %v4068, 0.6931472
    %v4070 = vlog2.pop %v3599
    %v4071 = vmul.f32 %v4070, 0.6931472
    %v4072 = vlog2.pop %v3600
    %v4073 = vmul.f32 %v4072, 0.6931472
    %v4074 = vlog2.pop %v3601
    %v4075 = vmul.f32 %v4074, 0.6931472
    %v4076 = vlog2.pop %v3602
    %v4077 = vmul.f32 %v4076, 0.6931472
    %v4078 = vlog2.pop %v3603
    %v4079 = vmul.f32 %v4078, 0.6931472
    %v4080 = vlog2.pop %v3604
    %v4081 = vmul.f32 %v4080, 0.6931472
    %v4082 = vlog2.pop %v3605
    %v4083 = vmul.f32 %v4082, 0.6931472
    %v4084 = vlog2.pop %v3606
    %v4085 = vmul.f32 %v4084, 0.6931472
    %v4086 = vlog2.pop %v3607
    %v4087 = vmul.f32 %v4086, 0.6931472
    %v4088 = vlog2.pop %v3608
    %v4089 = vmul.f32 %v4088, 0.6931472
    %v4090 = vlog2.pop %v3609
    %v4091 = vmul.f32 %v4090, 0.6931472
    %v4092 = vlog2.pop %v3610
    %v4093 = vmul.f32 %v4092, 0.6931472
    %v4094 = vlog2.pop %v3611
    %v4095 = vmul.f32 %v4094, 0.6931472
    %v4096 = vlog2.pop %v3612
    %v4097 = vmul.f32 %v4096, 0.6931472
    %v4098 = vlog2.pop %v3613
    %v4099 = vmul.f32 %v4098, 0.6931472
    %v4100 = vlog2.pop %v3614
    %v4101 = vmul.f32 %v4100, 0.6931472
    %v4102 = vlog2.pop %v3615
    %v4103 = vmul.f32 %v4102, 0.6931472
    %v4104 = vlog2.pop %v3616
    %v4105 = vmul.f32 %v4104, 0.6931472
    %v4106 = vlog2.pop %v3617
    %v4107 = vmul.f32 %v4106, 0.6931472
    %v4108 = vlog2.pop %v3618
    %v4109 = vmul.f32 %v4108, 0.6931472
    %v4110 = vlog2.pop %v3619
    %v4111 = vmul.f32 %v4110, 0.6931472
    %v4112 = vlog2.pop %v3620
    %v4113 = vmul.f32 %v4112, 0.6931472
    %v4114 = vlog2.pop %v3621
    %v4115 = vmul.f32 %v4114, 0.6931472
    %v4116 = vlog2.pop %v3622
    %v4117 = vmul.f32 %v4116, 0.6931472
    %v4118 = vlog2.pop %v3623
    %v4119 = vmul.f32 %v4118, 0.6931472
    %v4120 = vlog2.pop %v3624
    %v4121 = vmul.f32 %v4120, 0.6931472
    %v4122 = vlog2.pop %v3625
    %v4123 = vmul.f32 %v4122, 0.6931472
    %v4124 = vlog2.pop %v3626
    %v4125 = vmul.f32 %v4124, 0.6931472
    %v4126 = vlog2.pop %v3627
    %v4127 = vmul.f32 %v4126, 0.6931472
    %v4128 = vlog2.pop %v3628
    %v4129 = vmul.f32 %v4128, 0.6931472
    %v4130 = vlog2.pop %v3629
    %v4131 = vmul.f32 %v4130, 0.6931472
    %v4132 = vlog2.pop %v3630
    %v4133 = vmul.f32 %v4132, 0.6931472
    %v4134 = vlog2.pop %v3631
    %v4135 = vmul.f32 %v4134, 0.6931472
    %v4136 = vlog2.pop %v3632
    %v4137 = vmul.f32 %v4136, 0.6931472
    %v4138 = vlog2.pop %v3633
    %v4139 = vmul.f32 %v4138, 0.6931472
    %v4140 = vlog2.pop %v3634
    %v4141 = vmul.f32 %v4140, 0.6931472
    %v4142 = vlog2.pop %v3635
    %v4143 = vmul.f32 %v4142, 0.6931472
    %v4144 = vlog2.pop %v3636
    %v4145 = vmul.f32 %v4144, 0.6931472
    %v4146 = vlog2.pop %v3637
    %v4147 = vmul.f32 %v4146, 0.6931472
    %v4148 = vlog2.pop %v3638
    %v4149 = vmul.f32 %v4148, 0.6931472
    %v4150 = vlog2.pop %v3639
    %v4151 = vmul.f32 %v4150, 0.6931472
    %v4152 = vstv %s53
    %v4153 = vmul.f32 %v3641, %v4152
    %v4154 = vmul.f32 %v3643, %v4152
    %v4155 = vmul.f32 %v3645, %v4152
    %v4156 = vmul.f32 %v3647, %v4152
    %v4157 = vmul.f32 %v3649, %v4152
    %v4158 = vmul.f32 %v3651, %v4152
    %v4159 = vmul.f32 %v3653, %v4152
    %v4160 = vmul.f32 %v3655, %v4152
    %v4161 = vmul.f32 %v3657, %v4152
    %v4162 = vmul.f32 %v3659, %v4152
    %v4163 = vmul.f32 %v3661, %v4152
    %v4164 = vmul.f32 %v3663, %v4152
    %v4165 = vmul.f32 %v3665, %v4152
    %v4166 = vmul.f32 %v3667, %v4152
    %v4167 = vmul.f32 %v3669, %v4152
    %v4168 = vmul.f32 %v3671, %v4152
    %v4169 = vmul.f32 %v3673, %v4152
    %v4170 = vmul.f32 %v3675, %v4152
    %v4171 = vmul.f32 %v3677, %v4152
    %v4172 = vmul.f32 %v3679, %v4152
    %v4173 = vmul.f32 %v3681, %v4152
    %v4174 = vmul.f32 %v3683, %v4152
    %v4175 = vmul.f32 %v3685, %v4152
    %v4176 = vmul.f32 %v3687, %v4152
    %v4177 = vmul.f32 %v3689, %v4152
    %v4178 = vmul.f32 %v3691, %v4152
    %v4179 = vmul.f32 %v3693, %v4152
    %v4180 = vmul.f32 %v3695, %v4152
    %v4181 = vmul.f32 %v3697, %v4152
    %v4182 = vmul.f32 %v3699, %v4152
    %v4183 = vmul.f32 %v3701, %v4152
    %v4184 = vmul.f32 %v3703, %v4152
    %v4185 = vmul.f32 %v3705, %v4152
    %v4186 = vmul.f32 %v3707, %v4152
    %v4187 = vmul.f32 %v3709, %v4152
    %v4188 = vmul.f32 %v3711, %v4152
    %v4189 = vmul.f32 %v3713, %v4152
    %v4190 = vmul.f32 %v3715, %v4152
    %v4191 = vmul.f32 %v3717, %v4152
    %v4192 = vmul.f32 %v3719, %v4152
    %v4193 = vmul.f32 %v3721, %v4152
    %v4194 = vmul.f32 %v3723, %v4152
    %v4195 = vmul.f32 %v3725, %v4152
    %v4196 = vmul.f32 %v3727, %v4152
    %v4197 = vmul.f32 %v3729, %v4152
    %v4198 = vmul.f32 %v3731, %v4152
    %v4199 = vmul.f32 %v3733, %v4152
    %v4200 = vmul.f32 %v3735, %v4152
    %v4201 = vmul.f32 %v3737, %v4152
    %v4202 = vmul.f32 %v3739, %v4152
    %v4203 = vmul.f32 %v3741, %v4152
    %v4204 = vmul.f32 %v3743, %v4152
    %v4205 = vmul.f32 %v3745, %v4152
    %v4206 = vmul.f32 %v3747, %v4152
    %v4207 = vmul.f32 %v3749, %v4152
    %v4208 = vmul.f32 %v3751, %v4152
    %v4209 = vmul.f32 %v3753, %v4152
    %v4210 = vmul.f32 %v3755, %v4152
    %v4211 = vmul.f32 %v3757, %v4152
    %v4212 = vmul.f32 %v3759, %v4152
    %v4213 = vmul.f32 %v3761, %v4152
    %v4214 = vmul.f32 %v3763, %v4152
    %v4215 = vmul.f32 %v3765, %v4152
    %v4216 = vmul.f32 %v3767, %v4152
    %v4217 = vmul.f32 %v3769, %v4152
    %v4218 = vmul.f32 %v3771, %v4152
    %v4219 = vmul.f32 %v3773, %v4152
    %v4220 = vmul.f32 %v3775, %v4152
    %v4221 = vmul.f32 %v3777, %v4152
    %v4222 = vmul.f32 %v3779, %v4152
    %v4223 = vmul.f32 %v3781, %v4152
    %v4224 = vmul.f32 %v3783, %v4152
    %v4225 = vmul.f32 %v3785, %v4152
    %v4226 = vmul.f32 %v3787, %v4152
    %v4227 = vmul.f32 %v3789, %v4152
    %v4228 = vmul.f32 %v3791, %v4152
    %v4229 = vmul.f32 %v3793, %v4152
    %v4230 = vmul.f32 %v3795, %v4152
    %v4231 = vmul.f32 %v3797, %v4152
    %v4232 = vmul.f32 %v3799, %v4152
    %v4233 = vmul.f32 %v3801, %v4152
    %v4234 = vmul.f32 %v3803, %v4152
    %v4235 = vmul.f32 %v3805, %v4152
    %v4236 = vmul.f32 %v3807, %v4152
    %v4237 = vmul.f32 %v3809, %v4152
    %v4238 = vmul.f32 %v3811, %v4152
    %v4239 = vmul.f32 %v3813, %v4152
    %v4240 = vmul.f32 %v3815, %v4152
    %v4241 = vmul.f32 %v3817, %v4152
    %v4242 = vmul.f32 %v3819, %v4152
    %v4243 = vmul.f32 %v3821, %v4152
    %v4244 = vmul.f32 %v3823, %v4152
    %v4245 = vmul.f32 %v3825, %v4152
    %v4246 = vmul.f32 %v3827, %v4152
    %v4247 = vmul.f32 %v3829, %v4152
    %v4248 = vmul.f32 %v3831, %v4152
    %v4249 = vmul.f32 %v3833, %v4152
    %v4250 = vmul.f32 %v3835, %v4152
    %v4251 = vmul.f32 %v3837, %v4152
    %v4252 = vmul.f32 %v3839, %v4152
    %v4253 = vmul.f32 %v3841, %v4152
    %v4254 = vmul.f32 %v3843, %v4152
    %v4255 = vmul.f32 %v3845, %v4152
    %v4256 = vmul.f32 %v3847, %v4152
    %v4257 = vmul.f32 %v3849, %v4152
    %v4258 = vmul.f32 %v3851, %v4152
    %v4259 = vmul.f32 %v3853, %v4152
    %v4260 = vmul.f32 %v3855, %v4152
    %v4261 = vmul.f32 %v3857, %v4152
    %v4262 = vmul.f32 %v3859, %v4152
    %v4263 = vmul.f32 %v3861, %v4152
    %v4264 = vmul.f32 %v3863, %v4152
    %v4265 = vmul.f32 %v3865, %v4152
    %v4266 = vmul.f32 %v3867, %v4152
    %v4267 = vmul.f32 %v3869, %v4152
    %v4268 = vmul.f32 %v3871, %v4152
    %v4269 = vmul.f32 %v3873, %v4152
    %v4270 = vmul.f32 %v3875, %v4152
    %v4271 = vmul.f32 %v3877, %v4152
    %v4272 = vmul.f32 %v3879, %v4152
    %v4273 = vmul.f32 %v3881, %v4152
    %v4274 = vmul.f32 %v3883, %v4152
    %v4275 = vmul.f32 %v3885, %v4152
    %v4276 = vmul.f32 %v3887, %v4152
    %v4277 = vmul.f32 %v3889, %v4152
    %v4278 = vmul.f32 %v3891, %v4152
    %v4279 = vmul.f32 %v3893, %v4152
    %v4280 = vmul.f32 %v3895, %v4152
    %v4281 = vmul.f32 %v3897, %v4152
    %v4282 = vmul.f32 %v3899, %v4152
    %v4283 = vmul.f32 %v3901, %v4152
    %v4284 = vmul.f32 %v3903, %v4152
    %v4285 = vmul.f32 %v3905, %v4152
    %v4286 = vmul.f32 %v3907, %v4152
    %v4287 = vmul.f32 %v3909, %v4152
    %v4288 = vmul.f32 %v3911, %v4152
    %v4289 = vmul.f32 %v3913, %v4152
    %v4290 = vmul.f32 %v3915, %v4152
    %v4291 = vmul.f32 %v3917, %v4152
    %v4292 = vmul.f32 %v3919, %v4152
    %v4293 = vmul.f32 %v3921, %v4152
    %v4294 = vmul.f32 %v3923, %v4152
    %v4295 = vmul.f32 %v3925, %v4152
    %v4296 = vmul.f32 %v3927, %v4152
    %v4297 = vmul.f32 %v3929, %v4152
    %v4298 = vmul.f32 %v3931, %v4152
    %v4299 = vmul.f32 %v3933, %v4152
    %v4300 = vmul.f32 %v3935, %v4152
    %v4301 = vmul.f32 %v3937, %v4152
    %v4302 = vmul.f32 %v3939, %v4152
    %v4303 = vmul.f32 %v3941, %v4152
    %v4304 = vmul.f32 %v3943, %v4152
    %v4305 = vmul.f32 %v3945, %v4152
    %v4306 = vmul.f32 %v3947, %v4152
    %v4307 = vmul.f32 %v3949, %v4152
    %v4308 = vmul.f32 %v3951, %v4152
    %v4309 = vmul.f32 %v3953, %v4152
    %v4310 = vmul.f32 %v3955, %v4152
    %v4311 = vmul.f32 %v3957, %v4152
    %v4312 = vmul.f32 %v3959, %v4152
    %v4313 = vmul.f32 %v3961, %v4152
    %v4314 = vmul.f32 %v3963, %v4152
    %v4315 = vmul.f32 %v3965, %v4152
    %v4316 = vmul.f32 %v3967, %v4152
    %v4317 = vmul.f32 %v3969, %v4152
    %v4318 = vmul.f32 %v3971, %v4152
    %v4319 = vmul.f32 %v3973, %v4152
    %v4320 = vmul.f32 %v3975, %v4152
    %v4321 = vmul.f32 %v3977, %v4152
    %v4322 = vmul.f32 %v3979, %v4152
    %v4323 = vmul.f32 %v3981, %v4152
    %v4324 = vmul.f32 %v3983, %v4152
    %v4325 = vmul.f32 %v3985, %v4152
    %v4326 = vmul.f32 %v3987, %v4152
    %v4327 = vmul.f32 %v3989, %v4152
    %v4328 = vmul.f32 %v3991, %v4152
    %v4329 = vmul.f32 %v3993, %v4152
    %v4330 = vmul.f32 %v3995, %v4152
    %v4331 = vmul.f32 %v3997, %v4152
    %v4332 = vmul.f32 %v3999, %v4152
    %v4333 = vmul.f32 %v4001, %v4152
    %v4334 = vmul.f32 %v4003, %v4152
    %v4335 = vmul.f32 %v4005, %v4152
    %v4336 = vmul.f32 %v4007, %v4152
    %v4337 = vmul.f32 %v4009, %v4152
    %v4338 = vmul.f32 %v4011, %v4152
    %v4339 = vmul.f32 %v4013, %v4152
    %v4340 = vmul.f32 %v4015, %v4152
    %v4341 = vmul.f32 %v4017, %v4152
    %v4342 = vmul.f32 %v4019, %v4152
    %v4343 = vmul.f32 %v4021, %v4152
    %v4344 = vmul.f32 %v4023, %v4152
    %v4345 = vmul.f32 %v4025, %v4152
    %v4346 = vmul.f32 %v4027, %v4152
    %v4347 = vmul.f32 %v4029, %v4152
    %v4348 = vmul.f32 %v4031, %v4152
    %v4349 = vmul.f32 %v4033, %v4152
    %v4350 = vmul.f32 %v4035, %v4152
    %v4351 = vmul.f32 %v4037, %v4152
    %v4352 = vmul.f32 %v4039, %v4152
    %v4353 = vmul.f32 %v4041, %v4152
    %v4354 = vmul.f32 %v4043, %v4152
    %v4355 = vmul.f32 %v4045, %v4152
    %v4356 = vmul.f32 %v4047, %v4152
    %v4357 = vmul.f32 %v4049, %v4152
    %v4358 = vmul.f32 %v4051, %v4152
    %v4359 = vmul.f32 %v4053, %v4152
    %v4360 = vmul.f32 %v4055, %v4152
    %v4361 = vmul.f32 %v4057, %v4152
    %v4362 = vmul.f32 %v4059, %v4152
    %v4363 = vmul.f32 %v4061, %v4152
    %v4364 = vmul.f32 %v4063, %v4152
    %v4365 = vmul.f32 %v4065, %v4152
    %v4366 = vmul.f32 %v4067, %v4152
    %v4367 = vmul.f32 %v4069, %v4152
    %v4368 = vmul.f32 %v4071, %v4152
    %v4369 = vmul.f32 %v4073, %v4152
    %v4370 = vmul.f32 %v4075, %v4152
    %v4371 = vmul.f32 %v4077, %v4152
    %v4372 = vmul.f32 %v4079, %v4152
    %v4373 = vmul.f32 %v4081, %v4152
    %v4374 = vmul.f32 %v4083, %v4152
    %v4375 = vmul.f32 %v4085, %v4152
    %v4376 = vmul.f32 %v4087, %v4152
    %v4377 = vmul.f32 %v4089, %v4152
    %v4378 = vmul.f32 %v4091, %v4152
    %v4379 = vmul.f32 %v4093, %v4152
    %v4380 = vmul.f32 %v4095, %v4152
    %v4381 = vmul.f32 %v4097, %v4152
    %v4382 = vmul.f32 %v4099, %v4152
    %v4383 = vmul.f32 %v4101, %v4152
    %v4384 = vmul.f32 %v4103, %v4152
    %v4385 = vmul.f32 %v4105, %v4152
    %v4386 = vmul.f32 %v4107, %v4152
    %v4387 = vmul.f32 %v4109, %v4152
    %v4388 = vmul.f32 %v4111, %v4152
    %v4389 = vmul.f32 %v4113, %v4152
    %v4390 = vmul.f32 %v4115, %v4152
    %v4391 = vmul.f32 %v4117, %v4152
    %v4392 = vmul.f32 %v4119, %v4152
    %v4393 = vmul.f32 %v4121, %v4152
    %v4394 = vmul.f32 %v4123, %v4152
    %v4395 = vmul.f32 %v4125, %v4152
    %v4396 = vmul.f32 %v4127, %v4152
    %v4397 = vmul.f32 %v4129, %v4152
    %v4398 = vmul.f32 %v4131, %v4152
    %v4399 = vmul.f32 %v4133, %v4152
    %v4400 = vmul.f32 %v4135, %v4152
    %v4401 = vmul.f32 %v4137, %v4152
    %v4402 = vmul.f32 %v4139, %v4152
    %v4403 = vmul.f32 %v4141, %v4152
    %v4404 = vmul.f32 %v4143, %v4152
    %v4405 = vmul.f32 %v4145, %v4152
    %v4406 = vmul.f32 %v4147, %v4152
    %v4407 = vmul.f32 %v4149, %v4152
    %v4408 = vmul.f32 %v4151, %v4152
    %v4409 = vmul.f32 %v4153, 1.442695
    %v4410 = vpow.pop %v4409
    %v4411 = vmul.f32 %v4154, 1.442695
    %v4412 = vpow.pop %v4411
    %v4413 = vmul.f32 %v4155, 1.442695
    %v4414 = vpow.pop %v4413
    %v4415 = vmul.f32 %v4156, 1.442695
    %v4416 = vpow.pop %v4415
    %v4417 = vmul.f32 %v4157, 1.442695
    %v4418 = vpow.pop %v4417
    %v4419 = vmul.f32 %v4158, 1.442695
    %v4420 = vpow.pop %v4419
    %v4421 = vmul.f32 %v4159, 1.442695
    %v4422 = vpow.pop %v4421
    %v4423 = vmul.f32 %v4160, 1.442695
    %v4424 = vpow.pop %v4423
    %v4425 = vmul.f32 %v4161, 1.442695
    %v4426 = vpow.pop %v4425
    %v4427 = vmul.f32 %v4162, 1.442695
    %v4428 = vpow.pop %v4427
    %v4429 = vmul.f32 %v4163, 1.442695
    %v4430 = vpow.pop %v4429
    %v4431 = vmul.f32 %v4164, 1.442695
    %v4432 = vpow.pop %v4431
    %v4433 = vmul.f32 %v4165, 1.442695
    %v4434 = vpow.pop %v4433
    %v4435 = vmul.f32 %v4166, 1.442695
    %v4436 = vpow.pop %v4435
    %v4437 = vmul.f32 %v4167, 1.442695
    %v4438 = vpow.pop %v4437
    %v4439 = vmul.f32 %v4168, 1.442695
    %v4440 = vpow.pop %v4439
    %v4441 = vmul.f32 %v4169, 1.442695
    %v4442 = vpow.pop %v4441
    %v4443 = vmul.f32 %v4170, 1.442695
    %v4444 = vpow.pop %v4443
    %v4445 = vmul.f32 %v4171, 1.442695
    %v4446 = vpow.pop %v4445
    %v4447 = vmul.f32 %v4172, 1.442695
    %v4448 = vpow.pop %v4447
    %v4449 = vmul.f32 %v4173, 1.442695
    %v4450 = vpow.pop %v4449
    %v4451 = vmul.f32 %v4174, 1.442695
    %v4452 = vpow.pop %v4451
    %v4453 = vmul.f32 %v4175, 1.442695
    %v4454 = vpow.pop %v4453
    %v4455 = vmul.f32 %v4176, 1.442695
    %v4456 = vpow.pop %v4455
    %v4457 = vmul.f32 %v4177, 1.442695
    %v4458 = vpow.pop %v4457
    %v4459 = vmul.f32 %v4178, 1.442695
    %v4460 = vpow.pop %v4459
    %v4461 = vmul.f32 %v4179, 1.442695
    %v4462 = vpow.pop %v4461
    %v4463 = vmul.f32 %v4180, 1.442695
    %v4464 = vpow.pop %v4463
    %v4465 = vmul.f32 %v4181, 1.442695
    %v4466 = vpow.pop %v4465
    %v4467 = vmul.f32 %v4182, 1.442695
    %v4468 = vpow.pop %v4467
    %v4469 = vmul.f32 %v4183, 1.442695
    %v4470 = vpow.pop %v4469
    %v4471 = vmul.f32 %v4184, 1.442695
    %v4472 = vpow.pop %v4471
    %v4473 = vmul.f32 %v4185, 1.442695
    %v4474 = vpow.pop %v4473
    %v4475 = vmul.f32 %v4186, 1.442695
    %v4476 = vpow.pop %v4475
    %v4477 = vmul.f32 %v4187, 1.442695
    %v4478 = vpow.pop %v4477
    %v4479 = vmul.f32 %v4188, 1.442695
    %v4480 = vpow.pop %v4479
    %v4481 = vmul.f32 %v4189, 1.442695
    %v4482 = vpow.pop %v4481
    %v4483 = vmul.f32 %v4190, 1.442695
    %v4484 = vpow.pop %v4483
    %v4485 = vmul.f32 %v4191, 1.442695
    %v4486 = vpow.pop %v4485
    %v4487 = vmul.f32 %v4192, 1.442695
    %v4488 = vpow.pop %v4487
    %v4489 = vmul.f32 %v4193, 1.442695
    %v4490 = vpow.pop %v4489
    %v4491 = vmul.f32 %v4194, 1.442695
    %v4492 = vpow.pop %v4491
    %v4493 = vmul.f32 %v4195, 1.442695
    %v4494 = vpow.pop %v4493
    %v4495 = vmul.f32 %v4196, 1.442695
    %v4496 = vpow.pop %v4495
    %v4497 = vmul.f32 %v4197, 1.442695
    %v4498 = vpow.pop %v4497
    %v4499 = vmul.f32 %v4198, 1.442695
    %v4500 = vpow.pop %v4499
    %v4501 = vmul.f32 %v4199, 1.442695
    %v4502 = vpow.pop %v4501
    %v4503 = vmul.f32 %v4200, 1.442695
    %v4504 = vpow.pop %v4503
    %v4505 = vmul.f32 %v4201, 1.442695
    %v4506 = vpow.pop %v4505
    %v4507 = vmul.f32 %v4202, 1.442695
    %v4508 = vpow.pop %v4507
    %v4509 = vmul.f32 %v4203, 1.442695
    %v4510 = vpow.pop %v4509
    %v4511 = vmul.f32 %v4204, 1.442695
    %v4512 = vpow.pop %v4511
    %v4513 = vmul.f32 %v4205, 1.442695
    %v4514 = vpow.pop %v4513
    %v4515 = vmul.f32 %v4206, 1.442695
    %v4516 = vpow.pop %v4515
    %v4517 = vmul.f32 %v4207, 1.442695
    %v4518 = vpow.pop %v4517
    %v4519 = vmul.f32 %v4208, 1.442695
    %v4520 = vpow.pop %v4519
    %v4521 = vmul.f32 %v4209, 1.442695
    %v4522 = vpow.pop %v4521
    %v4523 = vmul.f32 %v4210, 1.442695
    %v4524 = vpow.pop %v4523
    %v4525 = vmul.f32 %v4211, 1.442695
    %v4526 = vpow.pop %v4525
    %v4527 = vmul.f32 %v4212, 1.442695
    %v4528 = vpow.pop %v4527
    %v4529 = vmul.f32 %v4213, 1.442695
    %v4530 = vpow.pop %v4529
    %v4531 = vmul.f32 %v4214, 1.442695
    %v4532 = vpow.pop %v4531
    %v4533 = vmul.f32 %v4215, 1.442695
    %v4534 = vpow.pop %v4533
    %v4535 = vmul.f32 %v4216, 1.442695
    %v4536 = vpow.pop %v4535
    %v4537 = vmul.f32 %v4217, 1.442695
    %v4538 = vpow.pop %v4537
    %v4539 = vmul.f32 %v4218, 1.442695
    %v4540 = vpow.pop %v4539
    %v4541 = vmul.f32 %v4219, 1.442695
    %v4542 = vpow.pop %v4541
    %v4543 = vmul.f32 %v4220, 1.442695
    %v4544 = vpow.pop %v4543
    %v4545 = vmul.f32 %v4221, 1.442695
    %v4546 = vpow.pop %v4545
    %v4547 = vmul.f32 %v4222, 1.442695
    %v4548 = vpow.pop %v4547
    %v4549 = vmul.f32 %v4223, 1.442695
    %v4550 = vpow.pop %v4549
    %v4551 = vmul.f32 %v4224, 1.442695
    %v4552 = vpow.pop %v4551
    %v4553 = vmul.f32 %v4225, 1.442695
    %v4554 = vpow.pop %v4553
    %v4555 = vmul.f32 %v4226, 1.442695
    %v4556 = vpow.pop %v4555
    %v4557 = vmul.f32 %v4227, 1.442695
    %v4558 = vpow.pop %v4557
    %v4559 = vmul.f32 %v4228, 1.442695
    %v4560 = vpow.pop %v4559
    %v4561 = vmul.f32 %v4229, 1.442695
    %v4562 = vpow.pop %v4561
    %v4563 = vmul.f32 %v4230, 1.442695
    %v4564 = vpow.pop %v4563
    %v4565 = vmul.f32 %v4231, 1.442695
    %v4566 = vpow.pop %v4565
    %v4567 = vmul.f32 %v4232, 1.442695
    %v4568 = vpow.pop %v4567
    %v4569 = vmul.f32 %v4233, 1.442695
    %v4570 = vpow.pop %v4569
    %v4571 = vmul.f32 %v4234, 1.442695
    %v4572 = vpow.pop %v4571
    %v4573 = vmul.f32 %v4235, 1.442695
    %v4574 = vpow.pop %v4573
    %v4575 = vmul.f32 %v4236, 1.442695
    %v4576 = vpow.pop %v4575
    %v4577 = vmul.f32 %v4237, 1.442695
    %v4578 = vpow.pop %v4577
    %v4579 = vmul.f32 %v4238, 1.442695
    %v4580 = vpow.pop %v4579
    %v4581 = vmul.f32 %v4239, 1.442695
    %v4582 = vpow.pop %v4581
    %v4583 = vmul.f32 %v4240, 1.442695
    %v4584 = vpow.pop %v4583
    %v4585 = vmul.f32 %v4241, 1.442695
    %v4586 = vpow.pop %v4585
    %v4587 = vmul.f32 %v4242, 1.442695
    %v4588 = vpow.pop %v4587
    %v4589 = vmul.f32 %v4243, 1.442695
    %v4590 = vpow.pop %v4589
    %v4591 = vmul.f32 %v4244, 1.442695
    %v4592 = vpow.pop %v4591
    %v4593 = vmul.f32 %v4245, 1.442695
    %v4594 = vpow.pop %v4593
    %v4595 = vmul.f32 %v4246, 1.442695
    %v4596 = vpow.pop %v4595
    %v4597 = vmul.f32 %v4247, 1.442695
    %v4598 = vpow.pop %v4597
    %v4599 = vmul.f32 %v4248, 1.442695
    %v4600 = vpow.pop %v4599
    %v4601 = vmul.f32 %v4249, 1.442695
    %v4602 = vpow.pop %v4601
    %v4603 = vmul.f32 %v4250, 1.442695
    %v4604 = vpow.pop %v4603
    %v4605 = vmul.f32 %v4251, 1.442695
    %v4606 = vpow.pop %v4605
    %v4607 = vmul.f32 %v4252, 1.442695
    %v4608 = vpow.pop %v4607
    %v4609 = vmul.f32 %v4253, 1.442695
    %v4610 = vpow.pop %v4609
    %v4611 = vmul.f32 %v4254, 1.442695
    %v4612 = vpow.pop %v4611
    %v4613 = vmul.f32 %v4255, 1.442695
    %v4614 = vpow.pop %v4613
    %v4615 = vmul.f32 %v4256, 1.442695
    %v4616 = vpow.pop %v4615
    %v4617 = vmul.f32 %v4257, 1.442695
    %v4618 = vpow.pop %v4617
    %v4619 = vmul.f32 %v4258, 1.442695
    %v4620 = vpow.pop %v4619
    %v4621 = vmul.f32 %v4259, 1.442695
    %v4622 = vpow.pop %v4621
    %v4623 = vmul.f32 %v4260, 1.442695
    %v4624 = vpow.pop %v4623
    %v4625 = vmul.f32 %v4261, 1.442695
    %v4626 = vpow.pop %v4625
    %v4627 = vmul.f32 %v4262, 1.442695
    %v4628 = vpow.pop %v4627
    %v4629 = vmul.f32 %v4263, 1.442695
    %v4630 = vpow.pop %v4629
    %v4631 = vmul.f32 %v4264, 1.442695
    %v4632 = vpow.pop %v4631
    %v4633 = vmul.f32 %v4265, 1.442695
    %v4634 = vpow.pop %v4633
    %v4635 = vmul.f32 %v4266, 1.442695
    %v4636 = vpow.pop %v4635
    %v4637 = vmul.f32 %v4267, 1.442695
    %v4638 = vpow.pop %v4637
    %v4639 = vmul.f32 %v4268, 1.442695
    %v4640 = vpow.pop %v4639
    %v4641 = vmul.f32 %v4269, 1.442695
    %v4642 = vpow.pop %v4641
    %v4643 = vmul.f32 %v4270, 1.442695
    %v4644 = vpow.pop %v4643
    %v4645 = vmul.f32 %v4271, 1.442695
    %v4646 = vpow.pop %v4645
    %v4647 = vmul.f32 %v4272, 1.442695
    %v4648 = vpow.pop %v4647
    %v4649 = vmul.f32 %v4273, 1.442695
    %v4650 = vpow.pop %v4649
    %v4651 = vmul.f32 %v4274, 1.442695
    %v4652 = vpow.pop %v4651
    %v4653 = vmul.f32 %v4275, 1.442695
    %v4654 = vpow.pop %v4653
    %v4655 = vmul.f32 %v4276, 1.442695
    %v4656 = vpow.pop %v4655
    %v4657 = vmul.f32 %v4277, 1.442695
    %v4658 = vpow.pop %v4657
    %v4659 = vmul.f32 %v4278, 1.442695
    %v4660 = vpow.pop %v4659
    %v4661 = vmul.f32 %v4279, 1.442695
    %v4662 = vpow.pop %v4661
    %v4663 = vmul.f32 %v4280, 1.442695
    %v4664 = vpow.pop %v4663
    %v4665 = vmul.f32 %v4281, 1.442695
    %v4666 = vpow.pop %v4665
    %v4667 = vmul.f32 %v4282, 1.442695
    %v4668 = vpow.pop %v4667
    %v4669 = vmul.f32 %v4283, 1.442695
    %v4670 = vpow.pop %v4669
    %v4671 = vmul.f32 %v4284, 1.442695
    %v4672 = vpow.pop %v4671
    %v4673 = vmul.f32 %v4285, 1.442695
    %v4674 = vpow.pop %v4673
    %v4675 = vmul.f32 %v4286, 1.442695
    %v4676 = vpow.pop %v4675
    %v4677 = vmul.f32 %v4287, 1.442695
    %v4678 = vpow.pop %v4677
    %v4679 = vmul.f32 %v4288, 1.442695
    %v4680 = vpow.pop %v4679
    %v4681 = vmul.f32 %v4289, 1.442695
    %v4682 = vpow.pop %v4681
    %v4683 = vmul.f32 %v4290, 1.442695
    %v4684 = vpow.pop %v4683
    %v4685 = vmul.f32 %v4291, 1.442695
    %v4686 = vpow.pop %v4685
    %v4687 = vmul.f32 %v4292, 1.442695
    %v4688 = vpow.pop %v4687
    %v4689 = vmul.f32 %v4293, 1.442695
    %v4690 = vpow.pop %v4689
    %v4691 = vmul.f32 %v4294, 1.442695
    %v4692 = vpow.pop %v4691
    %v4693 = vmul.f32 %v4295, 1.442695
    %v4694 = vpow.pop %v4693
    %v4695 = vmul.f32 %v4296, 1.442695
    %v4696 = vpow.pop %v4695
    %v4697 = vmul.f32 %v4297, 1.442695
    %v4698 = vpow.pop %v4697
    %v4699 = vmul.f32 %v4298, 1.442695
    %v4700 = vpow.pop %v4699
    %v4701 = vmul.f32 %v4299, 1.442695
    %v4702 = vpow.pop %v4701
    %v4703 = vmul.f32 %v4300, 1.442695
    %v4704 = vpow.pop %v4703
    %v4705 = vmul.f32 %v4301, 1.442695
    %v4706 = vpow.pop %v4705
    %v4707 = vmul.f32 %v4302, 1.442695
    %v4708 = vpow.pop %v4707
    %v4709 = vmul.f32 %v4303, 1.442695
    %v4710 = vpow.pop %v4709
    %v4711 = vmul.f32 %v4304, 1.442695
    %v4712 = vpow.pop %v4711
    %v4713 = vmul.f32 %v4305, 1.442695
    %v4714 = vpow.pop %v4713
    %v4715 = vmul.f32 %v4306, 1.442695
    %v4716 = vpow.pop %v4715
    %v4717 = vmul.f32 %v4307, 1.442695
    %v4718 = vpow.pop %v4717
    %v4719 = vmul.f32 %v4308, 1.442695
    %v4720 = vpow.pop %v4719
    %v4721 = vmul.f32 %v4309, 1.442695
    %v4722 = vpow.pop %v4721
    %v4723 = vmul.f32 %v4310, 1.442695
    %v4724 = vpow.pop %v4723
    %v4725 = vmul.f32 %v4311, 1.442695
    %v4726 = vpow.pop %v4725
    %v4727 = vmul.f32 %v4312, 1.442695
    %v4728 = vpow.pop %v4727
    %v4729 = vmul.f32 %v4313, 1.442695
    %v4730 = vpow.pop %v4729
    %v4731 = vmul.f32 %v4314, 1.442695
    %v4732 = vpow.pop %v4731
    %v4733 = vmul.f32 %v4315, 1.442695
    %v4734 = vpow.pop %v4733
    %v4735 = vmul.f32 %v4316, 1.442695
    %v4736 = vpow.pop %v4735
    %v4737 = vmul.f32 %v4317, 1.442695
    %v4738 = vpow.pop %v4737
    %v4739 = vmul.f32 %v4318, 1.442695
    %v4740 = vpow.pop %v4739
    %v4741 = vmul.f32 %v4319, 1.442695
    %v4742 = vpow.pop %v4741
    %v4743 = vmul.f32 %v4320, 1.442695
    %v4744 = vpow.pop %v4743
    %v4745 = vmul.f32 %v4321, 1.442695
    %v4746 = vpow.pop %v4745
    %v4747 = vmul.f32 %v4322, 1.442695
    %v4748 = vpow.pop %v4747
    %v4749 = vmul.f32 %v4323, 1.442695
    %v4750 = vpow.pop %v4749
    %v4751 = vmul.f32 %v4324, 1.442695
    %v4752 = vpow.pop %v4751
    %v4753 = vmul.f32 %v4325, 1.442695
    %v4754 = vpow.pop %v4753
    %v4755 = vmul.f32 %v4326, 1.442695
    %v4756 = vpow.pop %v4755
    %v4757 = vmul.f32 %v4327, 1.442695
    %v4758 = vpow.pop %v4757
    %v4759 = vmul.f32 %v4328, 1.442695
    %v4760 = vpow.pop %v4759
    %v4761 = vmul.f32 %v4329, 1.442695
    %v4762 = vpow.pop %v4761
    %v4763 = vmul.f32 %v4330, 1.442695
    %v4764 = vpow.pop %v4763
    %v4765 = vmul.f32 %v4331, 1.442695
    %v4766 = vpow.pop %v4765
    %v4767 = vmul.f32 %v4332, 1.442695
    %v4768 = vpow.pop %v4767
    %v4769 = vmul.f32 %v4333, 1.442695
    %v4770 = vpow.pop %v4769
    %v4771 = vmul.f32 %v4334, 1.442695
    %v4772 = vpow.pop %v4771
    %v4773 = vmul.f32 %v4335, 1.442695
    %v4774 = vpow.pop %v4773
    %v4775 = vmul.f32 %v4336, 1.442695
    %v4776 = vpow.pop %v4775
    %v4777 = vmul.f32 %v4337, 1.442695
    %v4778 = vpow.pop %v4777
    %v4779 = vmul.f32 %v4338, 1.442695
    %v4780 = vpow.pop %v4779
    %v4781 = vmul.f32 %v4339, 1.442695
    %v4782 = vpow.pop %v4781
    %v4783 = vmul.f32 %v4340, 1.442695
    %v4784 = vpow.pop %v4783
    %v4785 = vmul.f32 %v4341, 1.442695
    %v4786 = vpow.pop %v4785
    %v4787 = vmul.f32 %v4342, 1.442695
    %v4788 = vpow.pop %v4787
    %v4789 = vmul.f32 %v4343, 1.442695
    %v4790 = vpow.pop %v4789
    %v4791 = vmul.f32 %v4344, 1.442695
    %v4792 = vpow.pop %v4791
    %v4793 = vmul.f32 %v4345, 1.442695
    %v4794 = vpow.pop %v4793
    %v4795 = vmul.f32 %v4346, 1.442695
    %v4796 = vpow.pop %v4795
    %v4797 = vmul.f32 %v4347, 1.442695
    %v4798 = vpow.pop %v4797
    %v4799 = vmul.f32 %v4348, 1.442695
    %v4800 = vpow.pop %v4799
    %v4801 = vmul.f32 %v4349, 1.442695
    %v4802 = vpow.pop %v4801
    %v4803 = vmul.f32 %v4350, 1.442695
    %v4804 = vpow.pop %v4803
    %v4805 = vmul.f32 %v4351, 1.442695
    %v4806 = vpow.pop %v4805
    %v4807 = vmul.f32 %v4352, 1.442695
    %v4808 = vpow.pop %v4807
    %v4809 = vmul.f32 %v4353, 1.442695
    %v4810 = vpow.pop %v4809
    %v4811 = vmul.f32 %v4354, 1.442695
    %v4812 = vpow.pop %v4811
    %v4813 = vmul.f32 %v4355, 1.442695
    %v4814 = vpow.pop %v4813
    %v4815 = vmul.f32 %v4356, 1.442695
    %v4816 = vpow.pop %v4815
    %v4817 = vmul.f32 %v4357, 1.442695
    %v4818 = vpow.pop %v4817
    %v4819 = vmul.f32 %v4358, 1.442695
    %v4820 = vpow.pop %v4819
    %v4821 = vmul.f32 %v4359, 1.442695
    %v4822 = vpow.pop %v4821
    %v4823 = vmul.f32 %v4360, 1.442695
    %v4824 = vpow.pop %v4823
    %v4825 = vmul.f32 %v4361, 1.442695
    %v4826 = vpow.pop %v4825
    %v4827 = vmul.f32 %v4362, 1.442695
    %v4828 = vpow.pop %v4827
    %v4829 = vmul.f32 %v4363, 1.442695
    %v4830 = vpow.pop %v4829
    %v4831 = vmul.f32 %v4364, 1.442695
    %v4832 = vpow.pop %v4831
    %v4833 = vmul.f32 %v4365, 1.442695
    %v4834 = vpow.pop %v4833
    %v4835 = vmul.f32 %v4366, 1.442695
    %v4836 = vpow.pop %v4835
    %v4837 = vmul.f32 %v4367, 1.442695
    %v4838 = vpow.pop %v4837
    %v4839 = vmul.f32 %v4368, 1.442695
    %v4840 = vpow.pop %v4839
    %v4841 = vmul.f32 %v4369, 1.442695
    %v4842 = vpow.pop %v4841
    %v4843 = vmul.f32 %v4370, 1.442695
    %v4844 = vpow.pop %v4843
    %v4845 = vmul.f32 %v4371, 1.442695
    %v4846 = vpow.pop %v4845
    %v4847 = vmul.f32 %v4372, 1.442695
    %v4848 = vpow.pop %v4847
    %v4849 = vmul.f32 %v4373, 1.442695
    %v4850 = vpow.pop %v4849
    %v4851 = vmul.f32 %v4374, 1.442695
    %v4852 = vpow.pop %v4851
    %v4853 = vmul.f32 %v4375, 1.442695
    %v4854 = vpow.pop %v4853
    %v4855 = vmul.f32 %v4376, 1.442695
    %v4856 = vpow.pop %v4855
    %v4857 = vmul.f32 %v4377, 1.442695
    %v4858 = vpow.pop %v4857
    %v4859 = vmul.f32 %v4378, 1.442695
    %v4860 = vpow.pop %v4859
    %v4861 = vmul.f32 %v4379, 1.442695
    %v4862 = vpow.pop %v4861
    %v4863 = vmul.f32 %v4380, 1.442695
    %v4864 = vpow.pop %v4863
    %v4865 = vmul.f32 %v4381, 1.442695
    %v4866 = vpow.pop %v4865
    %v4867 = vmul.f32 %v4382, 1.442695
    %v4868 = vpow.pop %v4867
    %v4869 = vmul.f32 %v4383, 1.442695
    %v4870 = vpow.pop %v4869
    %v4871 = vmul.f32 %v4384, 1.442695
    %v4872 = vpow.pop %v4871
    %v4873 = vmul.f32 %v4385, 1.442695
    %v4874 = vpow.pop %v4873
    %v4875 = vmul.f32 %v4386, 1.442695
    %v4876 = vpow.pop %v4875
    %v4877 = vmul.f32 %v4387, 1.442695
    %v4878 = vpow.pop %v4877
    %v4879 = vmul.f32 %v4388, 1.442695
    %v4880 = vpow.pop %v4879
    %v4881 = vmul.f32 %v4389, 1.442695
    %v4882 = vpow.pop %v4881
    %v4883 = vmul.f32 %v4390, 1.442695
    %v4884 = vpow.pop %v4883
    %v4885 = vmul.f32 %v4391, 1.442695
    %v4886 = vpow.pop %v4885
    %v4887 = vmul.f32 %v4392, 1.442695
    %v4888 = vpow.pop %v4887
    %v4889 = vmul.f32 %v4393, 1.442695
    %v4890 = vpow.pop %v4889
    %v4891 = vmul.f32 %v4394, 1.442695
    %v4892 = vpow.pop %v4891
    %v4893 = vmul.f32 %v4395, 1.442695
    %v4894 = vpow.pop %v4893
    %v4895 = vmul.f32 %v4396, 1.442695
    %v4896 = vpow.pop %v4895
    %v4897 = vmul.f32 %v4397, 1.442695
    %v4898 = vpow.pop %v4897
    %v4899 = vmul.f32 %v4398, 1.442695
    %v4900 = vpow.pop %v4899
    %v4901 = vmul.f32 %v4399, 1.442695
    %v4902 = vpow.pop %v4901
    %v4903 = vmul.f32 %v4400, 1.442695
    %v4904 = vpow.pop %v4903
    %v4905 = vmul.f32 %v4401, 1.442695
    %v4906 = vpow.pop %v4905
    %v4907 = vmul.f32 %v4402, 1.442695
    %v4908 = vpow.pop %v4907
    %v4909 = vmul.f32 %v4403, 1.442695
    %v4910 = vpow.pop %v4909
    %v4911 = vmul.f32 %v4404, 1.442695
    %v4912 = vpow.pop %v4911
    %v4913 = vmul.f32 %v4405, 1.442695
    %v4914 = vpow.pop %v4913
    %v4915 = vmul.f32 %v4406, 1.442695
    %v4916 = vpow.pop %v4915
    %v4917 = vmul.f32 %v4407, 1.442695
    %v4918 = vpow.pop %v4917
    %v4919 = vmul.f32 %v4408, 1.442695
    %v4920 = vpow.pop %v4919
    %vm5177 = vcmask 1041409
    %v5178 = vsel %vm5177, %v4442, %v4410
    %vm5179 = vcmask 1042434
    %v5180 = vsel %vm5179, %v4474, %v5178
    %vm5181 = vcmask 1043459
    %v5182 = vsel %vm5181, %v4506, %v5180
    %vm5183 = vcmask 1044484
    %v5184 = vsel %vm5183, %v4538, %v5182
    %vm5185 = vcmask 1045509
    %v5186 = vsel %vm5185, %v4570, %v5184
    %vm5187 = vcmask 1046534
    %v5188 = vsel %vm5187, %v4602, %v5186
    %vm5189 = vcmask 1047559
    %v5190 = vsel %vm5189, %v4634, %v5188
    %v5191 = vsel %vm5177, %v4444, %v4412
    %v5192 = vsel %vm5179, %v4476, %v5191
    %v5193 = vsel %vm5181, %v4508, %v5192
    %v5194 = vsel %vm5183, %v4540, %v5193
    %v5195 = vsel %vm5185, %v4572, %v5194
    %v5196 = vsel %vm5187, %v4604, %v5195
    %v5197 = vsel %vm5189, %v4636, %v5196
    %v5198 = vsel %vm5177, %v4446, %v4414
    %v5199 = vsel %vm5179, %v4478, %v5198
    %v5200 = vsel %vm5181, %v4510, %v5199
    %v5201 = vsel %vm5183, %v4542, %v5200
    %v5202 = vsel %vm5185, %v4574, %v5201
    %v5203 = vsel %vm5187, %v4606, %v5202
    %v5204 = vsel %vm5189, %v4638, %v5203
    %v5205 = vsel %vm5177, %v4448, %v4416
    %v5206 = vsel %vm5179, %v4480, %v5205
    %v5207 = vsel %vm5181, %v4512, %v5206
    %v5208 = vsel %vm5183, %v4544, %v5207
    %v5209 = vsel %vm5185, %v4576, %v5208
    %v5210 = vsel %vm5187, %v4608, %v5209
    %v5211 = vsel %vm5189, %v4640, %v5210
    %v5212 = vsel %vm5177, %v4450, %v4418
    %v5213 = vsel %vm5179, %v4482, %v5212
    %v5214 = vsel %vm5181, %v4514, %v5213
    %v5215 = vsel %vm5183, %v4546, %v5214
    %v5216 = vsel %vm5185, %v4578, %v5215
    %v5217 = vsel %vm5187, %v4610, %v5216
    %v5218 = vsel %vm5189, %v4642, %v5217
    %v5219 = vsel %vm5177, %v4452, %v4420
    %v5220 = vsel %vm5179, %v4484, %v5219
    %v5221 = vsel %vm5181, %v4516, %v5220
    %v5222 = vsel %vm5183, %v4548, %v5221
    %v5223 = vsel %vm5185, %v4580, %v5222
    %v5224 = vsel %vm5187, %v4612, %v5223
    %v5225 = vsel %vm5189, %v4644, %v5224
    %v5226 = vsel %vm5177, %v4454, %v4422
    %v5227 = vsel %vm5179, %v4486, %v5226
    %v5228 = vsel %vm5181, %v4518, %v5227
    %v5229 = vsel %vm5183, %v4550, %v5228
    %v5230 = vsel %vm5185, %v4582, %v5229
    %v5231 = vsel %vm5187, %v4614, %v5230
    %v5232 = vsel %vm5189, %v4646, %v5231
    %v5233 = vsel %vm5177, %v4456, %v4424
    %v5234 = vsel %vm5179, %v4488, %v5233
    %v5235 = vsel %vm5181, %v4520, %v5234
    %v5236 = vsel %vm5183, %v4552, %v5235
    %v5237 = vsel %vm5185, %v4584, %v5236
    %v5238 = vsel %vm5187, %v4616, %v5237
    %v5239 = vsel %vm5189, %v4648, %v5238
    %v5240 = vsel %vm5177, %v4458, %v4426
    %v5241 = vsel %vm5179, %v4490, %v5240
    %v5242 = vsel %vm5181, %v4522, %v5241
    %v5243 = vsel %vm5183, %v4554, %v5242
    %v5244 = vsel %vm5185, %v4586, %v5243
    %v5245 = vsel %vm5187, %v4618, %v5244
    %v5246 = vsel %vm5189, %v4650, %v5245
    %v5247 = vsel %vm5177, %v4460, %v4428
    %v5248 = vsel %vm5179, %v4492, %v5247
    %v5249 = vsel %vm5181, %v4524, %v5248
    %v5250 = vsel %vm5183, %v4556, %v5249
    %v5251 = vsel %vm5185, %v4588, %v5250
    %v5252 = vsel %vm5187, %v4620, %v5251
    %v5253 = vsel %vm5189, %v4652, %v5252
    %v5254 = vsel %vm5177, %v4462, %v4430
    %v5255 = vsel %vm5179, %v4494, %v5254
    %v5256 = vsel %vm5181, %v4526, %v5255
    %v5257 = vsel %vm5183, %v4558, %v5256
    %v5258 = vsel %vm5185, %v4590, %v5257
    %v5259 = vsel %vm5187, %v4622, %v5258
    %v5260 = vsel %vm5189, %v4654, %v5259
    %v5261 = vsel %vm5177, %v4464, %v4432
    %v5262 = vsel %vm5179, %v4496, %v5261
    %v5263 = vsel %vm5181, %v4528, %v5262
    %v5264 = vsel %vm5183, %v4560, %v5263
    %v5265 = vsel %vm5185, %v4592, %v5264
    %v5266 = vsel %vm5187, %v4624, %v5265
    %v5267 = vsel %vm5189, %v4656, %v5266
    %v5268 = vsel %vm5177, %v4466, %v4434
    %v5269 = vsel %vm5179, %v4498, %v5268
    %v5270 = vsel %vm5181, %v4530, %v5269
    %v5271 = vsel %vm5183, %v4562, %v5270
    %v5272 = vsel %vm5185, %v4594, %v5271
    %v5273 = vsel %vm5187, %v4626, %v5272
    %v5274 = vsel %vm5189, %v4658, %v5273
    %v5275 = vsel %vm5177, %v4468, %v4436
    %v5276 = vsel %vm5179, %v4500, %v5275
    %v5277 = vsel %vm5181, %v4532, %v5276
    %v5278 = vsel %vm5183, %v4564, %v5277
    %v5279 = vsel %vm5185, %v4596, %v5278
    %v5280 = vsel %vm5187, %v4628, %v5279
    %v5281 = vsel %vm5189, %v4660, %v5280
    %v5282 = vsel %vm5177, %v4470, %v4438
    %v5283 = vsel %vm5179, %v4502, %v5282
    %v5284 = vsel %vm5181, %v4534, %v5283
    %v5285 = vsel %vm5183, %v4566, %v5284
    %v5286 = vsel %vm5185, %v4598, %v5285
    %v5287 = vsel %vm5187, %v4630, %v5286
    %v5288 = vsel %vm5189, %v4662, %v5287
    %v5289 = vsel %vm5177, %v4472, %v4440
    %v5290 = vsel %vm5179, %v4504, %v5289
    %v5291 = vsel %vm5181, %v4536, %v5290
    %v5292 = vsel %vm5183, %v4568, %v5291
    %v5293 = vsel %vm5185, %v4600, %v5292
    %v5294 = vsel %vm5187, %v4632, %v5293
    %v5295 = vsel %vm5189, %v4664, %v5294
    %v5296 = vsel %vm5177, %v4698, %v4666
    %v5297 = vsel %vm5179, %v4730, %v5296
    %v5298 = vsel %vm5181, %v4762, %v5297
    %v5299 = vsel %vm5183, %v4794, %v5298
    %v5300 = vsel %vm5185, %v4826, %v5299
    %v5301 = vsel %vm5187, %v4858, %v5300
    %v5302 = vsel %vm5189, %v4890, %v5301
    %v5303 = vsel %vm5177, %v4700, %v4668
    %v5304 = vsel %vm5179, %v4732, %v5303
    %v5305 = vsel %vm5181, %v4764, %v5304
    %v5306 = vsel %vm5183, %v4796, %v5305
    %v5307 = vsel %vm5185, %v4828, %v5306
    %v5308 = vsel %vm5187, %v4860, %v5307
    %v5309 = vsel %vm5189, %v4892, %v5308
    %v5310 = vsel %vm5177, %v4702, %v4670
    %v5311 = vsel %vm5179, %v4734, %v5310
    %v5312 = vsel %vm5181, %v4766, %v5311
    %v5313 = vsel %vm5183, %v4798, %v5312
    %v5314 = vsel %vm5185, %v4830, %v5313
    %v5315 = vsel %vm5187, %v4862, %v5314
    %v5316 = vsel %vm5189, %v4894, %v5315
    %v5317 = vsel %vm5177, %v4704, %v4672
    %v5318 = vsel %vm5179, %v4736, %v5317
    %v5319 = vsel %vm5181, %v4768, %v5318
    %v5320 = vsel %vm5183, %v4800, %v5319
    %v5321 = vsel %vm5185, %v4832, %v5320
    %v5322 = vsel %vm5187, %v4864, %v5321
    %v5323 = vsel %vm5189, %v4896, %v5322
    %v5324 = vsel %vm5177, %v4706, %v4674
    %v5325 = vsel %vm5179, %v4738, %v5324
    %v5326 = vsel %vm5181, %v4770, %v5325
    %v5327 = vsel %vm5183, %v4802, %v5326
    %v5328 = vsel %vm5185, %v4834, %v5327
    %v5329 = vsel %vm5187, %v4866, %v5328
    %v5330 = vsel %vm5189, %v4898, %v5329
    %v5331 = vsel %vm5177, %v4708, %v4676
    %v5332 = vsel %vm5179, %v4740, %v5331
    %v5333 = vsel %vm5181, %v4772, %v5332
    %v5334 = vsel %vm5183, %v4804, %v5333
    %v5335 = vsel %vm5185, %v4836, %v5334
    %v5336 = vsel %vm5187, %v4868, %v5335
    %v5337 = vsel %vm5189, %v4900, %v5336
    %v5338 = vsel %vm5177, %v4710, %v4678
    %v5339 = vsel %vm5179, %v4742, %v5338
    %v5340 = vsel %vm5181, %v4774, %v5339
    %v5341 = vsel %vm5183, %v4806, %v5340
    %v5342 = vsel %vm5185, %v4838, %v5341
    %v5343 = vsel %vm5187, %v4870, %v5342
    %v5344 = vsel %vm5189, %v4902, %v5343
    %v5345 = vsel %vm5177, %v4712, %v4680
    %v5346 = vsel %vm5179, %v4744, %v5345
    %v5347 = vsel %vm5181, %v4776, %v5346
    %v5348 = vsel %vm5183, %v4808, %v5347
    %v5349 = vsel %vm5185, %v4840, %v5348
    %v5350 = vsel %vm5187, %v4872, %v5349
    %v5351 = vsel %vm5189, %v4904, %v5350
    %v5352 = vsel %vm5177, %v4714, %v4682
    %v5353 = vsel %vm5179, %v4746, %v5352
    %v5354 = vsel %vm5181, %v4778, %v5353
    %v5355 = vsel %vm5183, %v4810, %v5354
    %v5356 = vsel %vm5185, %v4842, %v5355
    %v5357 = vsel %vm5187, %v4874, %v5356
    %v5358 = vsel %vm5189, %v4906, %v5357
    %v5359 = vsel %vm5177, %v4716, %v4684
    %v5360 = vsel %vm5179, %v4748, %v5359
    %v5361 = vsel %vm5181, %v4780, %v5360
    %v5362 = vsel %vm5183, %v4812, %v5361
    %v5363 = vsel %vm5185, %v4844, %v5362
    %v5364 = vsel %vm5187, %v4876, %v5363
    %v5365 = vsel %vm5189, %v4908, %v5364
    %v5366 = vsel %vm5177, %v4718, %v4686
    %v5367 = vsel %vm5179, %v4750, %v5366
    %v5368 = vsel %vm5181, %v4782, %v5367
    %v5369 = vsel %vm5183, %v4814, %v5368
    %v5370 = vsel %vm5185, %v4846, %v5369
    %v5371 = vsel %vm5187, %v4878, %v5370
    %v5372 = vsel %vm5189, %v4910, %v5371
    %v5373 = vsel %vm5177, %v4720, %v4688
    %v5374 = vsel %vm5179, %v4752, %v5373
    %v5375 = vsel %vm5181, %v4784, %v5374
    %v5376 = vsel %vm5183, %v4816, %v5375
    %v5377 = vsel %vm5185, %v4848, %v5376
    %v5378 = vsel %vm5187, %v4880, %v5377
    %v5379 = vsel %vm5189, %v4912, %v5378
    %v5380 = vsel %vm5177, %v4722, %v4690
    %v5381 = vsel %vm5179, %v4754, %v5380
    %v5382 = vsel %vm5181, %v4786, %v5381
    %v5383 = vsel %vm5183, %v4818, %v5382
    %v5384 = vsel %vm5185, %v4850, %v5383
    %v5385 = vsel %vm5187, %v4882, %v5384
    %v5386 = vsel %vm5189, %v4914, %v5385
    %v5387 = vsel %vm5177, %v4724, %v4692
    %v5388 = vsel %vm5179, %v4756, %v5387
    %v5389 = vsel %vm5181, %v4788, %v5388
    %v5390 = vsel %vm5183, %v4820, %v5389
    %v5391 = vsel %vm5185, %v4852, %v5390
    %v5392 = vsel %vm5187, %v4884, %v5391
    %v5393 = vsel %vm5189, %v4916, %v5392
    %v5394 = vsel %vm5177, %v4726, %v4694
    %v5395 = vsel %vm5179, %v4758, %v5394
    %v5396 = vsel %vm5181, %v4790, %v5395
    %v5397 = vsel %vm5183, %v4822, %v5396
    %v5398 = vsel %vm5185, %v4854, %v5397
    %v5399 = vsel %vm5187, %v4886, %v5398
    %v5400 = vsel %vm5189, %v4918, %v5399
    %v5401 = vsel %vm5177, %v4728, %v4696
    %v5402 = vsel %vm5179, %v4760, %v5401
    %v5403 = vsel %vm5181, %v4792, %v5402
    %v5404 = vsel %vm5183, %v4824, %v5403
    %v5405 = vsel %vm5185, %v4856, %v5404
    %v5406 = vsel %vm5187, %v4888, %v5405
    %v5407 = vsel %vm5189, %v4920, %v5406
    %v5440 = vld [vmem:[%s2] sm:$0xff]
    %v5441 = vld [vmem:[%s2 + $0x8] sm:$0xff]
    %v5442 = vld [vmem:[%s2 + $0x10] sm:$0xff]
    %v5443 = vld [vmem:[%s2 + $0x18] sm:$0xff]
    %vm5444 = vcmask 138240
    %v5446 = vsel %vm5444, %v5440, 0
    %v5449 = vsel %vm5444, %v5441, 0
    %v5452 = vsel %vm5444, %v5442, 0
    %v5455 = vsel %vm5444, %v5443, 0
    %vm5457 = vcmask 1040384
    %v5459 = vsel %vm5457, 1.0, 0
    %5461 = vmatprep.subr.mxu0 %v5197
    %5462 = vmatpush1.msra.mxu0 %v5190
    %5463 = vmatprep.subr.mxu0 %v5309
    %5464 = vmatpush1.msra.mxu0 %v5302
    %5465 = vmatprep.subr.mxu0 %v5459
    %5466 = vmatpush1.msra.mxu0 %v5459
    %5467 = vmatprep.subr.mxu0 0.0
    %5468 = vmatpush1.msra.mxu0 0.0
    %5469 = vmatprep.subr.mxu0 0.0
    %5470 = vmatpush1.msra.mxu0 0.0
    %5471 = vmatprep.subr.mxu0 0.0
    %5472 = vmatpush1.msra.mxu0 0.0
    %5473 = vmatprep.subr.mxu0 0.0
    %5474 = vmatpush1.msra.mxu0 0.0
    %5475 = vmatprep.subr.mxu0 0.0
    %5476 = vmatpush1.msra.mxu0 0.0
    %5477 = vmatprep.subr.mxu0 0.0
    %5478 = vmatpush1.msra.mxu0 0.0
    %5479 = vmatprep.subr.mxu0 0.0
    %5480 = vmatpush1.msra.mxu0 0.0
    %5481 = vmatprep.subr.mxu0 0.0
    %5482 = vmatpush1.msra.mxu0 0.0
    %5483 = vmatprep.subr.mxu0 0.0
    %5484 = vmatpush1.msra.mxu0 0.0
    %5485 = vmatprep.subr.mxu0 0.0
    %5486 = vmatpush1.msra.mxu0 0.0
    %5487 = vmatprep.subr.mxu0 0.0
    %5488 = vmatpush1.msra.mxu0 0.0
    %5489 = vmatprep.subr.mxu0 0.0
    %5490 = vmatpush1.msra.mxu0 0.0
    %5491 = vmatprep.subr.mxu0 0.0
    %5492 = vmatpush1.msra.mxu0 0.0
    %5493 = vmatprep.subr.mxu0 0.0
    %5494 = vmatpush1.msra.mxu0 0.0
    %5495 = vmatprep.subr.mxu0 0.0
    %5496 = vmatpush1.msra.mxu0 0.0
    %5497 = vmatprep.subr.mxu0 0.0
    %5498 = vmatpush1.msra.mxu0 0.0
    %5499 = vmatprep.subr.mxu0 0.0
    %5500 = vmatpush1.msra.mxu0 0.0
    %5501 = vmatprep.subr.mxu0 0.0
    %5502 = vmatpush1.msra.mxu0 0.0
    %5503 = vmatprep.subr.mxu0 0.0
    %5504 = vmatpush1.msra.mxu0 0.0
    %5505 = vmatprep.subr.mxu0 0.0
    %5506 = vmatpush1.msra.mxu0 0.0
    %5507 = vmatprep.subr.mxu0 0.0
    %5508 = vmatpush1.msra.mxu0 0.0
    %5509 = vmatprep.subr.mxu0 0.0
    %5510 = vmatpush1.msra.mxu0 0.0
    %5511 = vmatprep.subr.mxu0 0.0
    %5512 = vmatpush1.msra.mxu0 0.0
    %5513 = vmatprep.subr.mxu0 0.0
    %5514 = vmatpush1.msra.mxu0 0.0
    %5515 = vmatprep.subr.mxu0 0.0
    %5516 = vmatpush1.msra.mxu0 0.0
    %5517 = vmatprep.subr.mxu0 0.0
    %5518 = vmatpush1.msra.mxu0 0.0
    %5519 = vmatprep.subr.mxu0 0.0
    %5520 = vmatpush1.msra.mxu0 0.0
    %5521 = vmatprep.subr.mxu0 0.0
    %5522 = vmatpush1.msra.mxu0 0.0
    %5523 = vmatprep.subr.mxu0 0.0
    %5524 = vmatpush1.msra.mxu0 0.0
    %5525 = vmatprep.mubr.f32.mxu0 0.0
    %5526 = vmatmul.mubr.f32.gmra.mrb[0].mxu0 %v5446
    %v5527 = vpop.f32.mrb[0].mxu0
    %v5528 = vadd.f32 0.0, %v5527
    %v5529 = vpop.f32.mrb[0].mxu0
    %v5530 = vadd.f32 0.0, %v5529
    %5531 = vmatprep.mubr.f32.mxu0 0.0
    %5532 = vmatmul.mubr.f32.gmra.mrb[0].mxu0 %v5449
    %v5533 = vpop.f32.mrb[0].mxu0
    %v5534 = vadd.f32 0.0, %v5533
    %v5535 = vpop.f32.mrb[0].mxu0
    %v5536 = vadd.f32 0.0, %v5535
    %5537 = vmatprep.mubr.f32.mxu0 0.0
    %5538 = vmatmul.mubr.f32.gmra.mrb[0].mxu0 %v5452
    %v5539 = vpop.f32.mrb[0].mxu0
    %v5540 = vadd.f32 0.0, %v5539
    %v5541 = vpop.f32.mrb[0].mxu0
    %v5542 = vadd.f32 0.0, %v5541
    %5543 = vmatprep.mubr.f32.mxu0 0.0
    %5544 = vmatmul.mubr.f32.gmra.mrb[0].mxu0 %v5455
    %v5545 = vpop.f32.mrb[0].mxu0
    %v5546 = vadd.f32 0.0, %v5545
    %v5547 = vpop.f32.mrb[0].mxu0
    %v5548 = vadd.f32 0.0, %v5547
    %5549 = vdwg.mxu0
    %5550 = vmatprep.subr.mxu0 %v5211
    %5551 = vmatpush1.msra.mxu0 %v5204
    %5552 = vmatprep.subr.mxu0 %v5323
    %5553 = vmatpush1.msra.mxu0 %v5316
    %5554 = vmatprep.subr.mxu0 %v5459
    %5555 = vmatpush1.msra.mxu0 %v5459
    %5556 = vmatprep.subr.mxu0 0.0
    %5557 = vmatpush1.msra.mxu0 0.0
    %5558 = vmatprep.subr.mxu0 0.0
    %5559 = vmatpush1.msra.mxu0 0.0
    %5560 = vmatprep.subr.mxu0 0.0
    %5561 = vmatpush1.msra.mxu0 0.0
    %5562 = vmatprep.subr.mxu0 0.0
    %5563 = vmatpush1.msra.mxu0 0.0
    %5564 = vmatprep.subr.mxu0 0.0
    %5565 = vmatpush1.msra.mxu0 0.0
    %5566 = vmatprep.subr.mxu0 0.0
    %5567 = vmatpush1.msra.mxu0 0.0
    %5568 = vmatprep.subr.mxu0 0.0
    %5569 = vmatpush1.msra.mxu0 0.0
    %5570 = vmatprep.subr.mxu0 0.0
    %5571 = vmatpush1.msra.mxu0 0.0
    %5572 = vmatprep.subr.mxu0 0.0
    %5573 = vmatpush1.msra.mxu0 0.0
    %5574 = vmatprep.subr.mxu0 0.0
    %5575 = vmatpush1.msra.mxu0 0.0
    %5576 = vmatprep.subr.mxu0 0.0
    %5577 = vmatpush1.msra.mxu0 0.0
    %5578 = vmatprep.subr.mxu0 0.0
    %5579 = vmatpush1.msra.mxu0 0.0
    %5580 = vmatprep.subr.mxu0 0.0
    %5581 = vmatpush1.msra.mxu0 0.0
    %5582 = vmatprep.subr.mxu0 0.0
    %5583 = vmatpush1.msra.mxu0 0.0
    %5584 = vmatprep.subr.mxu0 0.0
    %5585 = vmatpush1.msra.mxu0 0.0
    %5586 = vmatprep.subr.mxu0 0.0
    %5587 = vmatpush1.msra.mxu0 0.0
    %5588 = vmatprep.subr.mxu0 0.0
    %5589 = vmatpush1.msra.mxu0 0.0
    %5590 = vmatprep.subr.mxu0 0.0
    %5591 = vmatpush1.msra.mxu0 0.0
    %5592 = vmatprep.subr.mxu0 0.0
    %5593 = vmatpush1.msra.mxu0 0.0
    %5594 = vmatprep.subr.mxu0 0.0
    %5595 = vmatpush1.msra.mxu0 0.0
    %5596 = vmatprep.subr.mxu0 0.0
    %5597 = vmatpush1.msra.mxu0 0.0
    %5598 = vmatprep.subr.mxu0 0.0
    %5599 = vmatpush1.msra.mxu0 0.0
    %5600 = vmatprep.subr.mxu0 0.0
    %5601 = vmatpush1.msra.mxu0 0.0
    %5602 = vmatprep.subr.mxu0 0.0
    %5603 = vmatpush1.msra.mxu0 0.0
    %5604 = vmatprep.subr.mxu0 0.0
    %5605 = vmatpush1.msra.mxu0 0.0
    %5606 = vmatprep.subr.mxu0 0.0
    %5607 = vmatpush1.msra.mxu0 0.0
    %5608 = vmatprep.subr.mxu0 0.0
    %5609 = vmatpush1.msra.mxu0 0.0
    %5610 = vmatprep.subr.mxu0 0.0
    %5611 = vmatpush1.msra.mxu0 0.0
    %5612 = vmatprep.subr.mxu0 0.0
    %5613 = vmatpush1.msra.mxu0 0.0
    %5614 = vmatprep.mubr.f32.mxu0 0.0
    %5615 = vmatmul.mubr.f32.gmra.mrb[0].mxu0 %v5446
    %v5616 = vpop.f32.mrb[0].mxu0
    %v5617 = vadd.f32 0.0, %v5616
    %v5618 = vpop.f32.mrb[0].mxu0
    %v5619 = vadd.f32 0.0, %v5618
    %5620 = vmatprep.mubr.f32.mxu0 0.0
    %5621 = vmatmul.mubr.f32.gmra.mrb[0].mxu0 %v5449
    %v5622 = vpop.f32.mrb[0].mxu0
    %v5623 = vadd.f32 0.0, %v5622
    %v5624 = vpop.f32.mrb[0].mxu0
    %v5625 = vadd.f32 0.0, %v5624
    %5626 = vmatprep.mubr.f32.mxu0 0.0
    %5627 = vmatmul.mubr.f32.gmra.mrb[0].mxu0 %v5452
    %v5628 = vpop.f32.mrb[0].mxu0
    %v5629 = vadd.f32 0.0, %v5628
    %v5630 = vpop.f32.mrb[0].mxu0
    %v5631 = vadd.f32 0.0, %v5630
    %5632 = vmatprep.mubr.f32.mxu0 0.0
    %5633 = vmatmul.mubr.f32.gmra.mrb[0].mxu0 %v5455
    %v5634 = vpop.f32.mrb[0].mxu0
    %v5635 = vadd.f32 0.0, %v5634
    %v5636 = vpop.f32.mrb[0].mxu0
    %v5637 = vadd.f32 0.0, %v5636
    %5638 = vdwg.mxu0
    %5639 = vmatprep.subr.mxu0 %v5225
    %5640 = vmatpush1.msra.mxu0 %v5218
    %5641 = vmatprep.subr.mxu0 %v5337
    %5642 = vmatpush1.msra.mxu0 %v5330
    %5643 = vmatprep.subr.mxu0 %v5459
    %5644 = vmatpush1.msra.mxu0 %v5459
    %5645 = vmatprep.subr.mxu0 0.0
    %5646 = vmatpush1.msra.mxu0 0.0
    %5647 = vmatprep.subr.mxu0 0.0
    %5648 = vmatpush1.msra.mxu0 0.0
    %5649 = vmatprep.subr.mxu0 0.0
    %5650 = vmatpush1.msra.mxu0 0.0
    %5651 = vmatprep.subr.mxu0 0.0
    %5652 = vmatpush1.msra.mxu0 0.0
    %5653 = vmatprep.subr.mxu0 0.0
    %5654 = vmatpush1.msra.mxu0 0.0
    %5655 = vmatprep.subr.mxu0 0.0
    %5656 = vmatpush1.msra.mxu0 0.0
    %5657 = vmatprep.subr.mxu0 0.0
    %5658 = vmatpush1.msra.mxu0 0.0
    %5659 = vmatprep.subr.mxu0 0.0
    %5660 = vmatpush1.msra.mxu0 0.0
    %5661 = vmatprep.subr.mxu0 0.0
    %5662 = vmatpush1.msra.mxu0 0.0
    %5663 = vmatprep.subr.mxu0 0.0
    %5664 = vmatpush1.msra.mxu0 0.0
    %5665 = vmatprep.subr.mxu0 0.0
    %5666 = vmatpush1.msra.mxu0 0.0
    %5667 = vmatprep.subr.mxu0 0.0
    %5668 = vmatpush1.msra.mxu0 0.0
    %5669 = vmatprep.subr.mxu0 0.0
    %5670 = vmatpush1.msra.mxu0 0.0
    %5671 = vmatprep.subr.mxu0 0.0
    %5672 = vmatpush1.msra.mxu0 0.0
    %5673 = vmatprep.subr.mxu0 0.0
    %5674 = vmatpush1.msra.mxu0 0.0
    %5675 = vmatprep.subr.mxu0 0.0
    %5676 = vmatpush1.msra.mxu0 0.0
    %5677 = vmatprep.subr.mxu0 0.0
    %5678 = vmatpush1.msra.mxu0 0.0
    %5679 = vmatprep.subr.mxu0 0.0
    %5680 = vmatpush1.msra.mxu0 0.0
    %5681 = vmatprep.subr.mxu0 0.0
    %5682 = vmatpush1.msra.mxu0 0.0
    %5683 = vmatprep.subr.mxu0 0.0
    %5684 = vmatpush1.msra.mxu0 0.0
    %5685 = vmatprep.subr.mxu0 0.0
    %5686 = vmatpush1.msra.mxu0 0.0
    %5687 = vmatprep.subr.mxu0 0.0
    %5688 = vmatpush1.msra.mxu0 0.0
    %5689 = vmatprep.subr.mxu0 0.0
    %5690 = vmatpush1.msra.mxu0 0.0
    %5691 = vmatprep.subr.mxu0 0.0
    %5692 = vmatpush1.msra.mxu0 0.0
    %5693 = vmatprep.subr.mxu0 0.0
    %5694 = vmatpush1.msra.mxu0 0.0
    %5695 = vmatprep.subr.mxu0 0.0
    %5696 = vmatpush1.msra.mxu0 0.0
    %5697 = vmatprep.subr.mxu0 0.0
    %5698 = vmatpush1.msra.mxu0 0.0
    %5699 = vmatprep.subr.mxu0 0.0
    %5700 = vmatpush1.msra.mxu0 0.0
    %5701 = vmatprep.subr.mxu0 0.0
    %5702 = vmatpush1.msra.mxu0 0.0
    %5703 = vmatprep.mubr.f32.mxu0 0.0
    %5704 = vmatmul.mubr.f32.gmra.mrb[0].mxu0 %v5446
    %v5705 = vpop.f32.mrb[0].mxu0
    %v5706 = vadd.f32 0.0, %v5705
    %v5707 = vpop.f32.mrb[0].mxu0
    %v5708 = vadd.f32 0.0, %v5707
    %5709 = vmatprep.mubr.f32.mxu0 0.0
    %5710 = vmatmul.mubr.f32.gmra.mrb[0].mxu0 %v5449
    %v5711 = vpop.f32.mrb[0].mxu0
    %v5712 = vadd.f32 0.0, %v5711
    %v5713 = vpop.f32.mrb[0].mxu0
    %v5714 = vadd.f32 0.0, %v5713
    %5715 = vmatprep.mubr.f32.mxu0 0.0
    %5716 = vmatmul.mubr.f32.gmra.mrb[0].mxu0 %v5452
    %v5717 = vpop.f32.mrb[0].mxu0
    %v5718 = vadd.f32 0.0, %v5717
    %v5719 = vpop.f32.mrb[0].mxu0
    %v5720 = vadd.f32 0.0, %v5719
    %5721 = vmatprep.mubr.f32.mxu0 0.0
    %5722 = vmatmul.mubr.f32.gmra.mrb[0].mxu0 %v5455
    %v5723 = vpop.f32.mrb[0].mxu0
    %v5724 = vadd.f32 0.0, %v5723
    %v5725 = vpop.f32.mrb[0].mxu0
    %v5726 = vadd.f32 0.0, %v5725
    %5727 = vdwg.mxu0
    %5728 = vmatprep.subr.mxu0 %v5239
    %5729 = vmatpush1.msra.mxu0 %v5232
    %5730 = vmatprep.subr.mxu0 %v5351
    %5731 = vmatpush1.msra.mxu0 %v5344
    %5732 = vmatprep.subr.mxu0 %v5459
    %5733 = vmatpush1.msra.mxu0 %v5459
    %5734 = vmatprep.subr.mxu0 0.0
    %5735 = vmatpush1.msra.mxu0 0.0
    %5736 = vmatprep.subr.mxu0 0.0
    %5737 = vmatpush1.msra.mxu0 0.0
    %5738 = vmatprep.subr.mxu0 0.0
    %5739 = vmatpush1.msra.mxu0 0.0
    %5740 = vmatprep.subr.mxu0 0.0
    %5741 = vmatpush1.msra.mxu0 0.0
    %5742 = vmatprep.subr.mxu0 0.0
    %5743 = vmatpush1.msra.mxu0 0.0
    %5744 = vmatprep.subr.mxu0 0.0
    %5745 = vmatpush1.msra.mxu0 0.0
    %5746 = vmatprep.subr.mxu0 0.0
    %5747 = vmatpush1.msra.mxu0 0.0
    %5748 = vmatprep.subr.mxu0 0.0
    %5749 = vmatpush1.msra.mxu0 0.0
    %5750 = vmatprep.subr.mxu0 0.0
    %5751 = vmatpush1.msra.mxu0 0.0
    %5752 = vmatprep.subr.mxu0 0.0
    %5753 = vmatpush1.msra.mxu0 0.0
    %5754 = vmatprep.subr.mxu0 0.0
    %5755 = vmatpush1.msra.mxu0 0.0
    %5756 = vmatprep.subr.mxu0 0.0
    %5757 = vmatpush1.msra.mxu0 0.0
    %5758 = vmatprep.subr.mxu0 0.0
    %5759 = vmatpush1.msra.mxu0 0.0
    %5760 = vmatprep.subr.mxu0 0.0
    %5761 = vmatpush1.msra.mxu0 0.0
    %5762 = vmatprep.subr.mxu0 0.0
    %5763 = vmatpush1.msra.mxu0 0.0
    %5764 = vmatprep.subr.mxu0 0.0
    %5765 = vmatpush1.msra.mxu0 0.0
    %5766 = vmatprep.subr.mxu0 0.0
    %5767 = vmatpush1.msra.mxu0 0.0
    %5768 = vmatprep.subr.mxu0 0.0
    %5769 = vmatpush1.msra.mxu0 0.0
    %5770 = vmatprep.subr.mxu0 0.0
    %5771 = vmatpush1.msra.mxu0 0.0
    %5772 = vmatprep.subr.mxu0 0.0
    %5773 = vmatpush1.msra.mxu0 0.0
    %5774 = vmatprep.subr.mxu0 0.0
    %5775 = vmatpush1.msra.mxu0 0.0
    %5776 = vmatprep.subr.mxu0 0.0
    %5777 = vmatpush1.msra.mxu0 0.0
    %5778 = vmatprep.subr.mxu0 0.0
    %5779 = vmatpush1.msra.mxu0 0.0
    %5780 = vmatprep.subr.mxu0 0.0
    %5781 = vmatpush1.msra.mxu0 0.0
    %5782 = vmatprep.subr.mxu0 0.0
    %5783 = vmatpush1.msra.mxu0 0.0
    %5784 = vmatprep.subr.mxu0 0.0
    %5785 = vmatpush1.msra.mxu0 0.0
    %5786 = vmatprep.subr.mxu0 0.0
    %5787 = vmatpush1.msra.mxu0 0.0
    %5788 = vmatprep.subr.mxu0 0.0
    %5789 = vmatpush1.msra.mxu0 0.0
    %5790 = vmatprep.subr.mxu0 0.0
    %5791 = vmatpush1.msra.mxu0 0.0
    %5792 = vmatprep.mubr.f32.mxu0 0.0
    %5793 = vmatmul.mubr.f32.gmra.mrb[0].mxu0 %v5446
    %v5794 = vpop.f32.mrb[0].mxu0
    %v5795 = vadd.f32 0.0, %v5794
    %v5796 = vpop.f32.mrb[0].mxu0
    %v5797 = vadd.f32 0.0, %v5796
    %5798 = vmatprep.mubr.f32.mxu0 0.0
    %5799 = vmatmul.mubr.f32.gmra.mrb[0].mxu0 %v5449
    %v5800 = vpop.f32.mrb[0].mxu0
    %v5801 = vadd.f32 0.0, %v5800
    %v5802 = vpop.f32.mrb[0].mxu0
    %v5803 = vadd.f32 0.0, %v5802
    %5804 = vmatprep.mubr.f32.mxu0 0.0
    %5805 = vmatmul.mubr.f32.gmra.mrb[0].mxu0 %v5452
    %v5806 = vpop.f32.mrb[0].mxu0
    %v5807 = vadd.f32 0.0, %v5806
    %v5808 = vpop.f32.mrb[0].mxu0
    %v5809 = vadd.f32 0.0, %v5808
    %5810 = vmatprep.mubr.f32.mxu0 0.0
    %5811 = vmatmul.mubr.f32.gmra.mrb[0].mxu0 %v5455
    %v5812 = vpop.f32.mrb[0].mxu0
    %v5813 = vadd.f32 0.0, %v5812
    %v5814 = vpop.f32.mrb[0].mxu0
    %v5815 = vadd.f32 0.0, %v5814
    %5816 = vdwg.mxu0
    %5817 = vmatprep.subr.mxu0 %v5253
    %5818 = vmatpush1.msra.mxu0 %v5246
    %5819 = vmatprep.subr.mxu0 %v5365
    %5820 = vmatpush1.msra.mxu0 %v5358
    %5821 = vmatprep.subr.mxu0 %v5459
    %5822 = vmatpush1.msra.mxu0 %v5459
    %5823 = vmatprep.subr.mxu0 0.0
    %5824 = vmatpush1.msra.mxu0 0.0
    %5825 = vmatprep.subr.mxu0 0.0
    %5826 = vmatpush1.msra.mxu0 0.0
    %5827 = vmatprep.subr.mxu0 0.0
    %5828 = vmatpush1.msra.mxu0 0.0
    %5829 = vmatprep.subr.mxu0 0.0
    %5830 = vmatpush1.msra.mxu0 0.0
    %5831 = vmatprep.subr.mxu0 0.0
    %5832 = vmatpush1.msra.mxu0 0.0
    %5833 = vmatprep.subr.mxu0 0.0
    %5834 = vmatpush1.msra.mxu0 0.0
    %5835 = vmatprep.subr.mxu0 0.0
    %5836 = vmatpush1.msra.mxu0 0.0
    %5837 = vmatprep.subr.mxu0 0.0
    %5838 = vmatpush1.msra.mxu0 0.0
    %5839 = vmatprep.subr.mxu0 0.0
    %5840 = vmatpush1.msra.mxu0 0.0
    %5841 = vmatprep.subr.mxu0 0.0
    %5842 = vmatpush1.msra.mxu0 0.0
    %5843 = vmatprep.subr.mxu0 0.0
    %5844 = vmatpush1.msra.mxu0 0.0
    %5845 = vmatprep.subr.mxu0 0.0
    %5846 = vmatpush1.msra.mxu0 0.0
    %5847 = vmatprep.subr.mxu0 0.0
    %5848 = vmatpush1.msra.mxu0 0.0
    %5849 = vmatprep.subr.mxu0 0.0
    %5850 = vmatpush1.msra.mxu0 0.0
    %5851 = vmatprep.subr.mxu0 0.0
    %5852 = vmatpush1.msra.mxu0 0.0
    %5853 = vmatprep.subr.mxu0 0.0
    %5854 = vmatpush1.msra.mxu0 0.0
    %5855 = vmatprep.subr.mxu0 0.0
    %5856 = vmatpush1.msra.mxu0 0.0
    %5857 = vmatprep.subr.mxu0 0.0
    %5858 = vmatpush1.msra.mxu0 0.0
    %5859 = vmatprep.subr.mxu0 0.0
    %5860 = vmatpush1.msra.mxu0 0.0
    %5861 = vmatprep.subr.mxu0 0.0
    %5862 = vmatpush1.msra.mxu0 0.0
    %5863 = vmatprep.subr.mxu0 0.0
    %5864 = vmatpush1.msra.mxu0 0.0
    %5865 = vmatprep.subr.mxu0 0.0
    %5866 = vmatpush1.msra.mxu0 0.0
    %5867 = vmatprep.subr.mxu0 0.0
    %5868 = vmatpush1.msra.mxu0 0.0
    %5869 = vmatprep.subr.mxu0 0.0
    %5870 = vmatpush1.msra.mxu0 0.0
    %5871 = vmatprep.subr.mxu0 0.0
    %5872 = vmatpush1.msra.mxu0 0.0
    %5873 = vmatprep.subr.mxu0 0.0
    %5874 = vmatpush1.msra.mxu0 0.0
    %5875 = vmatprep.subr.mxu0 0.0
    %5876 = vmatpush1.msra.mxu0 0.0
    %5877 = vmatprep.subr.mxu0 0.0
    %5878 = vmatpush1.msra.mxu0 0.0
    %5879 = vmatprep.subr.mxu0 0.0
    %5880 = vmatpush1.msra.mxu0 0.0
    %5881 = vmatprep.mubr.f32.mxu0 0.0
    %5882 = vmatmul.mubr.f32.gmra.mrb[0].mxu0 %v5446
    %v5883 = vpop.f32.mrb[0].mxu0
    %v5884 = vadd.f32 0.0, %v5883
    %v5885 = vpop.f32.mrb[0].mxu0
    %v5886 = vadd.f32 0.0, %v5885
    %5887 = vmatprep.mubr.f32.mxu0 0.0
    %5888 = vmatmul.mubr.f32.gmra.mrb[0].mxu0 %v5449
    %v5889 = vpop.f32.mrb[0].mxu0
    %v5890 = vadd.f32 0.0, %v5889
    %v5891 = vpop.f32.mrb[0].mxu0
    %v5892 = vadd.f32 0.0, %v5891
    %5893 = vmatprep.mubr.f32.mxu0 0.0
    %5894 = vmatmul.mubr.f32.gmra.mrb[0].mxu0 %v5452
    %v5895 = vpop.f32.mrb[0].mxu0
    %v5896 = vadd.f32 0.0, %v5895
    %v5897 = vpop.f32.mrb[0].mxu0
    %v5898 = vadd.f32 0.0, %v5897
    %5899 = vmatprep.mubr.f32.mxu0 0.0
    %5900 = vmatmul.mubr.f32.gmra.mrb[0].mxu0 %v5455
    %v5901 = vpop.f32.mrb[0].mxu0
    %v5902 = vadd.f32 0.0, %v5901
    %v5903 = vpop.f32.mrb[0].mxu0
    %v5904 = vadd.f32 0.0, %v5903
    %5905 = vdwg.mxu0
    %5906 = vmatprep.subr.mxu0 %v5267
    %5907 = vmatpush1.msra.mxu0 %v5260
    %5908 = vmatprep.subr.mxu0 %v5379
    %5909 = vmatpush1.msra.mxu0 %v5372
    %5910 = vmatprep.subr.mxu0 %v5459
    %5911 = vmatpush1.msra.mxu0 %v5459
    %5912 = vmatprep.subr.mxu0 0.0
    %5913 = vmatpush1.msra.mxu0 0.0
    %5914 = vmatprep.subr.mxu0 0.0
    %5915 = vmatpush1.msra.mxu0 0.0
    %5916 = vmatprep.subr.mxu0 0.0
    %5917 = vmatpush1.msra.mxu0 0.0
    %5918 = vmatprep.subr.mxu0 0.0
    %5919 = vmatpush1.msra.mxu0 0.0
    %5920 = vmatprep.subr.mxu0 0.0
    %5921 = vmatpush1.msra.mxu0 0.0
    %5922 = vmatprep.subr.mxu0 0.0
    %5923 = vmatpush1.msra.mxu0 0.0
    %5924 = vmatprep.subr.mxu0 0.0
    %5925 = vmatpush1.msra.mxu0 0.0
    %5926 = vmatprep.subr.mxu0 0.0
    %5927 = vmatpush1.msra.mxu0 0.0
    %5928 = vmatprep.subr.mxu0 0.0
    %5929 = vmatpush1.msra.mxu0 0.0
    %5930 = vmatprep.subr.mxu0 0.0
    %5931 = vmatpush1.msra.mxu0 0.0
    %5932 = vmatprep.subr.mxu0 0.0
    %5933 = vmatpush1.msra.mxu0 0.0
    %5934 = vmatprep.subr.mxu0 0.0
    %5935 = vmatpush1.msra.mxu0 0.0
    %5936 = vmatprep.subr.mxu0 0.0
    %5937 = vmatpush1.msra.mxu0 0.0
    %5938 = vmatprep.subr.mxu0 0.0
    %5939 = vmatpush1.msra.mxu0 0.0
    %5940 = vmatprep.subr.mxu0 0.0
    %5941 = vmatpush1.msra.mxu0 0.0
    %5942 = vmatprep.subr.mxu0 0.0
    %5943 = vmatpush1.msra.mxu0 0.0
    %5944 = vmatprep.subr.mxu0 0.0
    %5945 = vmatpush1.msra.mxu0 0.0
    %5946 = vmatprep.subr.mxu0 0.0
    %5947 = vmatpush1.msra.mxu0 0.0
    %5948 = vmatprep.subr.mxu0 0.0
    %5949 = vmatpush1.msra.mxu0 0.0
    %5950 = vmatprep.subr.mxu0 0.0
    %5951 = vmatpush1.msra.mxu0 0.0
    %5952 = vmatprep.subr.mxu0 0.0
    %5953 = vmatpush1.msra.mxu0 0.0
    %5954 = vmatprep.subr.mxu0 0.0
    %5955 = vmatpush1.msra.mxu0 0.0
    %5956 = vmatprep.subr.mxu0 0.0
    %5957 = vmatpush1.msra.mxu0 0.0
    %5958 = vmatprep.subr.mxu0 0.0
    %5959 = vmatpush1.msra.mxu0 0.0
    %5960 = vmatprep.subr.mxu0 0.0
    %5961 = vmatpush1.msra.mxu0 0.0
    %5962 = vmatprep.subr.mxu0 0.0
    %5963 = vmatpush1.msra.mxu0 0.0
    %5964 = vmatprep.subr.mxu0 0.0
    %5965 = vmatpush1.msra.mxu0 0.0
    %5966 = vmatprep.subr.mxu0 0.0
    %5967 = vmatpush1.msra.mxu0 0.0
    %5968 = vmatprep.subr.mxu0 0.0
    %5969 = vmatpush1.msra.mxu0 0.0
    %5970 = vmatprep.mubr.f32.mxu0 0.0
    %5971 = vmatmul.mubr.f32.gmra.mrb[0].mxu0 %v5446
    %v5972 = vpop.f32.mrb[0].mxu0
    %v5973 = vadd.f32 0.0, %v5972
    %v5974 = vpop.f32.mrb[0].mxu0
    %v5975 = vadd.f32 0.0, %v5974
    %5976 = vmatprep.mubr.f32.mxu0 0.0
    %5977 = vmatmul.mubr.f32.gmra.mrb[0].mxu0 %v5449
    %v5978 = vpop.f32.mrb[0].mxu0
    %v5979 = vadd.f32 0.0, %v5978
    %v5980 = vpop.f32.mrb[0].mxu0
    %v5981 = vadd.f32 0.0, %v5980
    %5982 = vmatprep.mubr.f32.mxu0 0.0
    %5983 = vmatmul.mubr.f32.gmra.mrb[0].mxu0 %v5452
    %v5984 = vpop.f32.mrb[0].mxu0
    %v5985 = vadd.f32 0.0, %v5984
    %v5986 = vpop.f32.mrb[0].mxu0
    %v5987 = vadd.f32 0.0, %v5986
    %5988 = vmatprep.mubr.f32.mxu0 0.0
    %5989 = vmatmul.mubr.f32.gmra.mrb[0].mxu0 %v5455
    %v5990 = vpop.f32.mrb[0].mxu0
    %v5991 = vadd.f32 0.0, %v5990
    %v5992 = vpop.f32.mrb[0].mxu0
    %v5993 = vadd.f32 0.0, %v5992
    %5994 = vdwg.mxu0
    %5995 = vmatprep.subr.mxu0 %v5281
    %5996 = vmatpush1.msra.mxu0 %v5274
    %5997 = vmatprep.subr.mxu0 %v5393
    %5998 = vmatpush1.msra.mxu0 %v5386
    %5999 = vmatprep.subr.mxu0 %v5459
    %6000 = vmatpush1.msra.mxu0 %v5459
    %6001 = vmatprep.subr.mxu0 0.0
    %6002 = vmatpush1.msra.mxu0 0.0
    %6003 = vmatprep.subr.mxu0 0.0
    %6004 = vmatpush1.msra.mxu0 0.0
    %6005 = vmatprep.subr.mxu0 0.0
    %6006 = vmatpush1.msra.mxu0 0.0
    %6007 = vmatprep.subr.mxu0 0.0
    %6008 = vmatpush1.msra.mxu0 0.0
    %6009 = vmatprep.subr.mxu0 0.0
    %6010 = vmatpush1.msra.mxu0 0.0
    %6011 = vmatprep.subr.mxu0 0.0
    %6012 = vmatpush1.msra.mxu0 0.0
    %6013 = vmatprep.subr.mxu0 0.0
    %6014 = vmatpush1.msra.mxu0 0.0
    %6015 = vmatprep.subr.mxu0 0.0
    %6016 = vmatpush1.msra.mxu0 0.0
    %6017 = vmatprep.subr.mxu0 0.0
    %6018 = vmatpush1.msra.mxu0 0.0
    %6019 = vmatprep.subr.mxu0 0.0
    %6020 = vmatpush1.msra.mxu0 0.0
    %6021 = vmatprep.subr.mxu0 0.0
    %6022 = vmatpush1.msra.mxu0 0.0
    %6023 = vmatprep.subr.mxu0 0.0
    %6024 = vmatpush1.msra.mxu0 0.0
    %6025 = vmatprep.subr.mxu0 0.0
    %6026 = vmatpush1.msra.mxu0 0.0
    %6027 = vmatprep.subr.mxu0 0.0
    %6028 = vmatpush1.msra.mxu0 0.0
    %6029 = vmatprep.subr.mxu0 0.0
    %6030 = vmatpush1.msra.mxu0 0.0
    %6031 = vmatprep.subr.mxu0 0.0
    %6032 = vmatpush1.msra.mxu0 0.0
    %6033 = vmatprep.subr.mxu0 0.0
    %6034 = vmatpush1.msra.mxu0 0.0
    %6035 = vmatprep.subr.mxu0 0.0
    %6036 = vmatpush1.msra.mxu0 0.0
    %6037 = vmatprep.subr.mxu0 0.0
    %6038 = vmatpush1.msra.mxu0 0.0
    %6039 = vmatprep.subr.mxu0 0.0
    %6040 = vmatpush1.msra.mxu0 0.0
    %6041 = vmatprep.subr.mxu0 0.0
    %6042 = vmatpush1.msra.mxu0 0.0
    %6043 = vmatprep.subr.mxu0 0.0
    %6044 = vmatpush1.msra.mxu0 0.0
    %6045 = vmatprep.subr.mxu0 0.0
    %6046 = vmatpush1.msra.mxu0 0.0
    %6047 = vmatprep.subr.mxu0 0.0
    %6048 = vmatpush1.msra.mxu0 0.0
    %6049 = vmatprep.subr.mxu0 0.0
    %6050 = vmatpush1.msra.mxu0 0.0
    %6051 = vmatprep.subr.mxu0 0.0
    %6052 = vmatpush1.msra.mxu0 0.0
    %6053 = vmatprep.subr.mxu0 0.0
    %6054 = vmatpush1.msra.mxu0 0.0
    %6055 = vmatprep.subr.mxu0 0.0
    %6056 = vmatpush1.msra.mxu0 0.0
    %6057 = vmatprep.subr.mxu0 0.0
    %6058 = vmatpush1.msra.mxu0 0.0
    %6059 = vmatprep.mubr.f32.mxu0 0.0
    %6060 = vmatmul.mubr.f32.gmra.mrb[0].mxu0 %v5446
    %v6061 = vpop.f32.mrb[0].mxu0
    %v6062 = vadd.f32 0.0, %v6061
    %v6063 = vpop.f32.mrb[0].mxu0
    %v6064 = vadd.f32 0.0, %v6063
    %6065 = vmatprep.mubr.f32.mxu0 0.0
    %6066 = vmatmul.mubr.f32.gmra.mrb[0].mxu0 %v5449
    %v6067 = vpop.f32.mrb[0].mxu0
    %v6068 = vadd.f32 0.0, %v6067
    %v6069 = vpop.f32.mrb[0].mxu0
    %v6070 = vadd.f32 0.0, %v6069
    %6071 = vmatprep.mubr.f32.mxu0 0.0
    %6072 = vmatmul.mubr.f32.gmra.mrb[0].mxu0 %v5452
    %v6073 = vpop.f32.mrb[0].mxu0
    %v6074 = vadd.f32 0.0, %v6073
    %v6075 = vpop.f32.mrb[0].mxu0
    %v6076 = vadd.f32 0.0, %v6075
    %6077 = vmatprep.mubr.f32.mxu0 0.0
    %6078 = vmatmul.mubr.f32.gmra.mrb[0].mxu0 %v5455
    %v6079 = vpop.f32.mrb[0].mxu0
    %v6080 = vadd.f32 0.0, %v6079
    %v6081 = vpop.f32.mrb[0].mxu0
    %v6082 = vadd.f32 0.0, %v6081
    %6083 = vdwg.mxu0
    %6084 = vmatprep.subr.mxu0 %v5295
    %6085 = vmatpush1.msra.mxu0 %v5288
    %6086 = vmatprep.subr.mxu0 %v5407
    %6087 = vmatpush1.msra.mxu0 %v5400
    %6088 = vmatprep.subr.mxu0 %v5459
    %6089 = vmatpush1.msra.mxu0 %v5459
    %6090 = vmatprep.subr.mxu0 0.0
    %6091 = vmatpush1.msra.mxu0 0.0
    %6092 = vmatprep.subr.mxu0 0.0
    %6093 = vmatpush1.msra.mxu0 0.0
    %6094 = vmatprep.subr.mxu0 0.0
    %6095 = vmatpush1.msra.mxu0 0.0
    %6096 = vmatprep.subr.mxu0 0.0
    %6097 = vmatpush1.msra.mxu0 0.0
    %6098 = vmatprep.subr.mxu0 0.0
    %6099 = vmatpush1.msra.mxu0 0.0
    %6100 = vmatprep.subr.mxu0 0.0
    %6101 = vmatpush1.msra.mxu0 0.0
    %6102 = vmatprep.subr.mxu0 0.0
    %6103 = vmatpush1.msra.mxu0 0.0
    %6104 = vmatprep.subr.mxu0 0.0
    %6105 = vmatpush1.msra.mxu0 0.0
    %6106 = vmatprep.subr.mxu0 0.0
    %6107 = vmatpush1.msra.mxu0 0.0
    %6108 = vmatprep.subr.mxu0 0.0
    %6109 = vmatpush1.msra.mxu0 0.0
    %6110 = vmatprep.subr.mxu0 0.0
    %6111 = vmatpush1.msra.mxu0 0.0
    %6112 = vmatprep.subr.mxu0 0.0
    %6113 = vmatpush1.msra.mxu0 0.0
    %6114 = vmatprep.subr.mxu0 0.0
    %6115 = vmatpush1.msra.mxu0 0.0
    %6116 = vmatprep.subr.mxu0 0.0
    %6117 = vmatpush1.msra.mxu0 0.0
    %6118 = vmatprep.subr.mxu0 0.0
    %6119 = vmatpush1.msra.mxu0 0.0
    %6120 = vmatprep.subr.mxu0 0.0
    %6121 = vmatpush1.msra.mxu0 0.0
    %6122 = vmatprep.subr.mxu0 0.0
    %6123 = vmatpush1.msra.mxu0 0.0
    %6124 = vmatprep.subr.mxu0 0.0
    %6125 = vmatpush1.msra.mxu0 0.0
    %6126 = vmatprep.subr.mxu0 0.0
    %6127 = vmatpush1.msra.mxu0 0.0
    %6128 = vmatprep.subr.mxu0 0.0
    %6129 = vmatpush1.msra.mxu0 0.0
    %6130 = vmatprep.subr.mxu0 0.0
    %6131 = vmatpush1.msra.mxu0 0.0
    %6132 = vmatprep.subr.mxu0 0.0
    %6133 = vmatpush1.msra.mxu0 0.0
    %6134 = vmatprep.subr.mxu0 0.0
    %6135 = vmatpush1.msra.mxu0 0.0
    %6136 = vmatprep.subr.mxu0 0.0
    %6137 = vmatpush1.msra.mxu0 0.0
    %6138 = vmatprep.subr.mxu0 0.0
    %6139 = vmatpush1.msra.mxu0 0.0
    %6140 = vmatprep.subr.mxu0 0.0
    %6141 = vmatpush1.msra.mxu0 0.0
    %6142 = vmatprep.subr.mxu0 0.0
    %6143 = vmatpush1.msra.mxu0 0.0
    %6144 = vmatprep.subr.mxu0 0.0
    %6145 = vmatpush1.msra.mxu0 0.0
    %6146 = vmatprep.subr.mxu0 0.0
    %6147 = vmatpush1.msra.mxu0 0.0
    %6148 = vmatprep.mubr.f32.mxu0 0.0
    %6149 = vmatmul.mubr.f32.gmra.mrb[0].mxu0 %v5446
    %v6150 = vpop.f32.mrb[0].mxu0
    %v6151 = vadd.f32 0.0, %v6150
    %v6152 = vpop.f32.mrb[0].mxu0
    %v6153 = vadd.f32 0.0, %v6152
    %6154 = vmatprep.mubr.f32.mxu0 0.0
    %6155 = vmatmul.mubr.f32.gmra.mrb[0].mxu0 %v5449
    %v6156 = vpop.f32.mrb[0].mxu0
    %v6157 = vadd.f32 0.0, %v6156
    %v6158 = vpop.f32.mrb[0].mxu0
    %v6159 = vadd.f32 0.0, %v6158
    %6160 = vmatprep.mubr.f32.mxu0 0.0
    %6161 = vmatmul.mubr.f32.gmra.mrb[0].mxu0 %v5452
    %v6162 = vpop.f32.mrb[0].mxu0
    %v6163 = vadd.f32 0.0, %v6162
    %v6164 = vpop.f32.mrb[0].mxu0
    %v6165 = vadd.f32 0.0, %v6164
    %6166 = vmatprep.mubr.f32.mxu0 0.0
    %6167 = vmatmul.mubr.f32.gmra.mrb[0].mxu0 %v5455
    %v6168 = vpop.f32.mrb[0].mxu0
    %v6169 = vadd.f32 0.0, %v6168
    %v6170 = vpop.f32.mrb[0].mxu0
    %v6171 = vadd.f32 0.0, %v6170
    %6172 = vdwg.mxu0
    %v6173 = vmax.f32 %v5528, 0.0
    %v6174 = vmax.f32 %v5530, 0.0
    %v6175 = vmax.f32 %v5617, 0.0
    %v6176 = vmax.f32 %v5619, 0.0
    %v6177 = vmax.f32 %v5706, 0.0
    %v6178 = vmax.f32 %v5708, 0.0
    %v6179 = vmax.f32 %v5795, 0.0
    %v6180 = vmax.f32 %v5797, 0.0
    %v6181 = vmax.f32 %v5884, 0.0
    %v6182 = vmax.f32 %v5886, 0.0
    %v6183 = vmax.f32 %v5973, 0.0
    %v6184 = vmax.f32 %v5975, 0.0
    %v6185 = vmax.f32 %v6062, 0.0
    %v6186 = vmax.f32 %v6064, 0.0
    %v6187 = vmax.f32 %v6151, 0.0
    %v6188 = vmax.f32 %v6153, 0.0
    %v6189 = vmax.f32 %v5534, 0.0
    %v6190 = vmax.f32 %v5536, 0.0
    %v6191 = vmax.f32 %v5623, 0.0
    %v6192 = vmax.f32 %v5625, 0.0
    %v6193 = vmax.f32 %v5712, 0.0
    %v6194 = vmax.f32 %v5714, 0.0
    %v6195 = vmax.f32 %v5801, 0.0
    %v6196 = vmax.f32 %v5803, 0.0
    %v6197 = vmax.f32 %v5890, 0.0
    %v6198 = vmax.f32 %v5892, 0.0
    %v6199 = vmax.f32 %v5979, 0.0
    %v6200 = vmax.f32 %v5981, 0.0
    %v6201 = vmax.f32 %v6068, 0.0
    %v6202 = vmax.f32 %v6070, 0.0
    %v6203 = vmax.f32 %v6157, 0.0
    %v6204 = vmax.f32 %v6159, 0.0
    %v6205 = vmax.f32 %v5540, 0.0
    %v6206 = vmax.f32 %v5542, 0.0
    %v6207 = vmax.f32 %v5629, 0.0
    %v6208 = vmax.f32 %v5631, 0.0
    %v6209 = vmax.f32 %v5718, 0.0
    %v6210 = vmax.f32 %v5720, 0.0
    %v6211 = vmax.f32 %v5807, 0.0
    %v6212 = vmax.f32 %v5809, 0.0
    %v6213 = vmax.f32 %v5896, 0.0
    %v6214 = vmax.f32 %v5898, 0.0
    %v6215 = vmax.f32 %v5985, 0.0
    %v6216 = vmax.f32 %v5987, 0.0
    %v6217 = vmax.f32 %v6074, 0.0
    %v6218 = vmax.f32 %v6076, 0.0
    %v6219 = vmax.f32 %v6163, 0.0
    %v6220 = vmax.f32 %v6165, 0.0
    %v6221 = vmax.f32 %v5546, 0.0
    %v6222 = vmax.f32 %v5548, 0.0
    %v6223 = vmax.f32 %v5635, 0.0
    %v6224 = vmax.f32 %v5637, 0.0
    %v6225 = vmax.f32 %v5724, 0.0
    %v6226 = vmax.f32 %v5726, 0.0
    %v6227 = vmax.f32 %v5813, 0.0
    %v6228 = vmax.f32 %v5815, 0.0
    %v6229 = vmax.f32 %v5902, 0.0
    %v6230 = vmax.f32 %v5904, 0.0
    %v6231 = vmax.f32 %v5991, 0.0
    %v6232 = vmax.f32 %v5993, 0.0
    %v6233 = vmax.f32 %v6080, 0.0
    %v6234 = vmax.f32 %v6082, 0.0
    %v6235 = vmax.f32 %v6169, 0.0
    %v6236 = vmax.f32 %v6171, 0.0
    %v6237 = vld [vmem:[%s3] sm:$0xff]
    %vm6238 = vcmask 269312
    %v6240 = vsel %vm6238, %v6237, 0
    %6242 = vmatprep.subr.mxu0 %v6174
    %6243 = vmatpush1.msra.mxu0 %v6173
    %6244 = vmatprep.subr.mxu0 %v6190
    %6245 = vmatpush1.msra.mxu0 %v6189
    %6246 = vmatprep.subr.mxu0 %v6206
    %6247 = vmatpush1.msra.mxu0 %v6205
    %6248 = vmatprep.subr.mxu0 %v6222
    %6249 = vmatpush1.msra.mxu0 %v6221
    %6250 = vmatprep.subr.mxu0 %v5459
    %6251 = vmatpush1.msra.mxu0 %v5459
    %6252 = vmatprep.subr.mxu0 0.0
    %6253 = vmatpush1.msra.mxu0 0.0
    %6254 = vmatprep.subr.mxu0 0.0
    %6255 = vmatpush1.msra.mxu0 0.0
    %6256 = vmatprep.subr.mxu0 0.0
    %6257 = vmatpush1.msra.mxu0 0.0
    %6258 = vmatprep.subr.mxu0 0.0
    %6259 = vmatpush1.msra.mxu0 0.0
    %6260 = vmatprep.subr.mxu0 0.0
    %6261 = vmatpush1.msra.mxu0 0.0
    %6262 = vmatprep.subr.mxu0 0.0
    %6263 = vmatpush1.msra.mxu0 0.0
    %6264 = vmatprep.subr.mxu0 0.0
    %6265 = vmatpush1.msra.mxu0 0.0
    %6266 = vmatprep.subr.mxu0 0.0
    %6267 = vmatpush1.msra.mxu0 0.0
    %6268 = vmatprep.subr.mxu0 0.0
    %6269 = vmatpush1.msra.mxu0 0.0
    %6270 = vmatprep.subr.mxu0 0.0
    %6271 = vmatpush1.msra.mxu0 0.0
    %6272 = vmatprep.subr.mxu0 0.0
    %6273 = vmatpush1.msra.mxu0 0.0
    %6274 = vmatprep.subr.mxu0 0.0
    %6275 = vmatpush1.msra.mxu0 0.0
    %6276 = vmatprep.subr.mxu0 0.0
    %6277 = vmatpush1.msra.mxu0 0.0
    %6278 = vmatprep.subr.mxu0 0.0
    %6279 = vmatpush1.msra.mxu0 0.0
    %6280 = vmatprep.subr.mxu0 0.0
    %6281 = vmatpush1.msra.mxu0 0.0
    %6282 = vmatprep.subr.mxu0 0.0
    %6283 = vmatpush1.msra.mxu0 0.0
    %6284 = vmatprep.subr.mxu0 0.0
    %6285 = vmatpush1.msra.mxu0 0.0
    %6286 = vmatprep.subr.mxu0 0.0
    %6287 = vmatpush1.msra.mxu0 0.0
    %6288 = vmatprep.subr.mxu0 0.0
    %6289 = vmatpush1.msra.mxu0 0.0
    %6290 = vmatprep.subr.mxu0 0.0
    %6291 = vmatpush1.msra.mxu0 0.0
    %6292 = vmatprep.subr.mxu0 0.0
    %6293 = vmatpush1.msra.mxu0 0.0
    %6294 = vmatprep.subr.mxu0 0.0
    %6295 = vmatpush1.msra.mxu0 0.0
    %6296 = vmatprep.subr.mxu0 0.0
    %6297 = vmatpush1.msra.mxu0 0.0
    %6298 = vmatprep.subr.mxu0 0.0
    %6299 = vmatpush1.msra.mxu0 0.0
    %6300 = vmatprep.subr.mxu0 0.0
    %6301 = vmatpush1.msra.mxu0 0.0
    %6302 = vmatprep.subr.mxu0 0.0
    %6303 = vmatpush1.msra.mxu0 0.0
    %6304 = vmatprep.subr.mxu0 0.0
    %6305 = vmatpush1.msra.mxu0 0.0
    %6306 = vmatprep.mubr.f32.mxu0 0.0
    %6307 = vmatmul.mubr.f32.gmra.mrb[0].mxu0 %v6240
    %v6308 = vpop.f32.mrb[0].mxu0
    %v6309 = vadd.f32 0.0, %v6308
    %v6310 = vpop.f32.mrb[0].mxu0
    %v6311 = vadd.f32 0.0, %v6310
    %6312 = vdwg.mxu0
    %6313 = vmatprep.subr.mxu0 %v6176
    %6314 = vmatpush1.msra.mxu0 %v6175
    %6315 = vmatprep.subr.mxu0 %v6192
    %6316 = vmatpush1.msra.mxu0 %v6191
    %6317 = vmatprep.subr.mxu0 %v6208
    %6318 = vmatpush1.msra.mxu0 %v6207
    %6319 = vmatprep.subr.mxu0 %v6224
    %6320 = vmatpush1.msra.mxu0 %v6223
    %6321 = vmatprep.subr.mxu0 %v5459
    %6322 = vmatpush1.msra.mxu0 %v5459
    %6323 = vmatprep.subr.mxu0 0.0
    %6324 = vmatpush1.msra.mxu0 0.0
    %6325 = vmatprep.subr.mxu0 0.0
    %6326 = vmatpush1.msra.mxu0 0.0
    %6327 = vmatprep.subr.mxu0 0.0
    %6328 = vmatpush1.msra.mxu0 0.0
    %6329 = vmatprep.subr.mxu0 0.0
    %6330 = vmatpush1.msra.mxu0 0.0
    %6331 = vmatprep.subr.mxu0 0.0
    %6332 = vmatpush1.msra.mxu0 0.0
    %6333 = vmatprep.subr.mxu0 0.0
    %6334 = vmatpush1.msra.mxu0 0.0
    %6335 = vmatprep.subr.mxu0 0.0
    %6336 = vmatpush1.msra.mxu0 0.0
    %6337 = vmatprep.subr.mxu0 0.0
    %6338 = vmatpush1.msra.mxu0 0.0
    %6339 = vmatprep.subr.mxu0 0.0
    %6340 = vmatpush1.msra.mxu0 0.0
    %6341 = vmatprep.subr.mxu0 0.0
    %6342 = vmatpush1.msra.mxu0 0.0
    %6343 = vmatprep.subr.mxu0 0.0
    %6344 = vmatpush1.msra.mxu0 0.0
    %6345 = vmatprep.subr.mxu0 0.0
    %6346 = vmatpush1.msra.mxu0 0.0
    %6347 = vmatprep.subr.mxu0 0.0
    %6348 = vmatpush1.msra.mxu0 0.0
    %6349 = vmatprep.subr.mxu0 0.0
    %6350 = vmatpush1.msra.mxu0 0.0
    %6351 = vmatprep.subr.mxu0 0.0
    %6352 = vmatpush1.msra.mxu0 0.0
    %6353 = vmatprep.subr.mxu0 0.0
    %6354 = vmatpush1.msra.mxu0 0.0
    %6355 = vmatprep.subr.mxu0 0.0
    %6356 = vmatpush1.msra.mxu0 0.0
    %6357 = vmatprep.subr.mxu0 0.0
    %6358 = vmatpush1.msra.mxu0 0.0
    %6359 = vmatprep.subr.mxu0 0.0
    %6360 = vmatpush1.msra.mxu0 0.0
    %6361 = vmatprep.subr.mxu0 0.0
    %6362 = vmatpush1.msra.mxu0 0.0
    %6363 = vmatprep.subr.mxu0 0.0
    %6364 = vmatpush1.msra.mxu0 0.0
    %6365 = vmatprep.subr.mxu0 0.0
    %6366 = vmatpush1.msra.mxu0 0.0
    %6367 = vmatprep.subr.mxu0 0.0
    %6368 = vmatpush1.msra.mxu0 0.0
    %6369 = vmatprep.subr.mxu0 0.0
    %6370 = vmatpush1.msra.mxu0 0.0
    %6371 = vmatprep.subr.mxu0 0.0
    %6372 = vmatpush1.msra.mxu0 0.0
    %6373 = vmatprep.subr.mxu0 0.0
    %6374 = vmatpush1.msra.mxu0 0.0
    %6375 = vmatprep.subr.mxu0 0.0
    %6376 = vmatpush1.msra.mxu0 0.0
    %6377 = vmatprep.mubr.f32.mxu0 0.0
    %6378 = vmatmul.mubr.f32.gmra.mrb[0].mxu0 %v6240
    %v6379 = vpop.f32.mrb[0].mxu0
    %v6380 = vadd.f32 0.0, %v6379
    %v6381 = vpop.f32.mrb[0].mxu0
    %v6382 = vadd.f32 0.0, %v6381
    %6383 = vdwg.mxu0
    %6384 = vmatprep.subr.mxu0 %v6178
    %6385 = vmatpush1.msra.mxu0 %v6177
    %6386 = vmatprep.subr.mxu0 %v6194
    %6387 = vmatpush1.msra.mxu0 %v6193
    %6388 = vmatprep.subr.mxu0 %v6210
    %6389 = vmatpush1.msra.mxu0 %v6209
    %6390 = vmatprep.subr.mxu0 %v6226
    %6391 = vmatpush1.msra.mxu0 %v6225
    %6392 = vmatprep.subr.mxu0 %v5459
    %6393 = vmatpush1.msra.mxu0 %v5459
    %6394 = vmatprep.subr.mxu0 0.0
    %6395 = vmatpush1.msra.mxu0 0.0
    %6396 = vmatprep.subr.mxu0 0.0
    %6397 = vmatpush1.msra.mxu0 0.0
    %6398 = vmatprep.subr.mxu0 0.0
    %6399 = vmatpush1.msra.mxu0 0.0
    %6400 = vmatprep.subr.mxu0 0.0
    %6401 = vmatpush1.msra.mxu0 0.0
    %6402 = vmatprep.subr.mxu0 0.0
    %6403 = vmatpush1.msra.mxu0 0.0
    %6404 = vmatprep.subr.mxu0 0.0
    %6405 = vmatpush1.msra.mxu0 0.0
    %6406 = vmatprep.subr.mxu0 0.0
    %6407 = vmatpush1.msra.mxu0 0.0
    %6408 = vmatprep.subr.mxu0 0.0
    %6409 = vmatpush1.msra.mxu0 0.0
    %6410 = vmatprep.subr.mxu0 0.0
    %6411 = vmatpush1.msra.mxu0 0.0
    %6412 = vmatprep.subr.mxu0 0.0
    %6413 = vmatpush1.msra.mxu0 0.0
    %6414 = vmatprep.subr.mxu0 0.0
    %6415 = vmatpush1.msra.mxu0 0.0
    %6416 = vmatprep.subr.mxu0 0.0
    %6417 = vmatpush1.msra.mxu0 0.0
    %6418 = vmatprep.subr.mxu0 0.0
    %6419 = vmatpush1.msra.mxu0 0.0
    %6420 = vmatprep.subr.mxu0 0.0
    %6421 = vmatpush1.msra.mxu0 0.0
    %6422 = vmatprep.subr.mxu0 0.0
    %6423 = vmatpush1.msra.mxu0 0.0
    %6424 = vmatprep.subr.mxu0 0.0
    %6425 = vmatpush1.msra.mxu0 0.0
    %6426 = vmatprep.subr.mxu0 0.0
    %6427 = vmatpush1.msra.mxu0 0.0
    %6428 = vmatprep.subr.mxu0 0.0
    %6429 = vmatpush1.msra.mxu0 0.0
    %6430 = vmatprep.subr.mxu0 0.0
    %6431 = vmatpush1.msra.mxu0 0.0
    %6432 = vmatprep.subr.mxu0 0.0
    %6433 = vmatpush1.msra.mxu0 0.0
    %6434 = vmatprep.subr.mxu0 0.0
    %6435 = vmatpush1.msra.mxu0 0.0
    %6436 = vmatprep.subr.mxu0 0.0
    %6437 = vmatpush1.msra.mxu0 0.0
    %6438 = vmatprep.subr.mxu0 0.0
    %6439 = vmatpush1.msra.mxu0 0.0
    %6440 = vmatprep.subr.mxu0 0.0
    %6441 = vmatpush1.msra.mxu0 0.0
    %6442 = vmatprep.subr.mxu0 0.0
    %6443 = vmatpush1.msra.mxu0 0.0
    %6444 = vmatprep.subr.mxu0 0.0
    %6445 = vmatpush1.msra.mxu0 0.0
    %6446 = vmatprep.subr.mxu0 0.0
    %6447 = vmatpush1.msra.mxu0 0.0
    %6448 = vmatprep.mubr.f32.mxu0 0.0
    %6449 = vmatmul.mubr.f32.gmra.mrb[0].mxu0 %v6240
    %v6450 = vpop.f32.mrb[0].mxu0
    %v6451 = vadd.f32 0.0, %v6450
    %v6452 = vpop.f32.mrb[0].mxu0
    %v6453 = vadd.f32 0.0, %v6452
    %6454 = vdwg.mxu0
    %6455 = vmatprep.subr.mxu0 %v6180
    %6456 = vmatpush1.msra.mxu0 %v6179
    %6457 = vmatprep.subr.mxu0 %v6196
    %6458 = vmatpush1.msra.mxu0 %v6195
    %6459 = vmatprep.subr.mxu0 %v6212
    %6460 = vmatpush1.msra.mxu0 %v6211
    %6461 = vmatprep.subr.mxu0 %v6228
    %6462 = vmatpush1.msra.mxu0 %v6227
    %6463 = vmatprep.subr.mxu0 %v5459
    %6464 = vmatpush1.msra.mxu0 %v5459
    %6465 = vmatprep.subr.mxu0 0.0
    %6466 = vmatpush1.msra.mxu0 0.0
    %6467 = vmatprep.subr.mxu0 0.0
    %6468 = vmatpush1.msra.mxu0 0.0
    %6469 = vmatprep.subr.mxu0 0.0
    %6470 = vmatpush1.msra.mxu0 0.0
    %6471 = vmatprep.subr.mxu0 0.0
    %6472 = vmatpush1.msra.mxu0 0.0
    %6473 = vmatprep.subr.mxu0 0.0
    %6474 = vmatpush1.msra.mxu0 0.0
    %6475 = vmatprep.subr.mxu0 0.0
    %6476 = vmatpush1.msra.mxu0 0.0
    %6477 = vmatprep.subr.mxu0 0.0
    %6478 = vmatpush1.msra.mxu0 0.0
    %6479 = vmatprep.subr.mxu0 0.0
    %6480 = vmatpush1.msra.mxu0 0.0
    %6481 = vmatprep.subr.mxu0 0.0
    %6482 = vmatpush1.msra.mxu0 0.0
    %6483 = vmatprep.subr.mxu0 0.0
    %6484 = vmatpush1.msra.mxu0 0.0
    %6485 = vmatprep.subr.mxu0 0.0
    %6486 = vmatpush1.msra.mxu0 0.0
    %6487 = vmatprep.subr.mxu0 0.0
    %6488 = vmatpush1.msra.mxu0 0.0
    %6489 = vmatprep.subr.mxu0 0.0
    %6490 = vmatpush1.msra.mxu0 0.0
    %6491 = vmatprep.subr.mxu0 0.0
    %6492 = vmatpush1.msra.mxu0 0.0
    %6493 = vmatprep.subr.mxu0 0.0
    %6494 = vmatpush1.msra.mxu0 0.0
    %6495 = vmatprep.subr.mxu0 0.0
    %6496 = vmatpush1.msra.mxu0 0.0
    %6497 = vmatprep.subr.mxu0 0.0
    %6498 = vmatpush1.msra.mxu0 0.0
    %6499 = vmatprep.subr.mxu0 0.0
    %6500 = vmatpush1.msra.mxu0 0.0
    %6501 = vmatprep.subr.mxu0 0.0
    %6502 = vmatpush1.msra.mxu0 0.0
    %6503 = vmatprep.subr.mxu0 0.0
    %6504 = vmatpush1.msra.mxu0 0.0
    %6505 = vmatprep.subr.mxu0 0.0
    %6506 = vmatpush1.msra.mxu0 0.0
    %6507 = vmatprep.subr.mxu0 0.0
    %6508 = vmatpush1.msra.mxu0 0.0
    %6509 = vmatprep.subr.mxu0 0.0
    %6510 = vmatpush1.msra.mxu0 0.0
    %6511 = vmatprep.subr.mxu0 0.0
    %6512 = vmatpush1.msra.mxu0 0.0
    %6513 = vmatprep.subr.mxu0 0.0
    %6514 = vmatpush1.msra.mxu0 0.0
    %6515 = vmatprep.subr.mxu0 0.0
    %6516 = vmatpush1.msra.mxu0 0.0
    %6517 = vmatprep.subr.mxu0 0.0
    %6518 = vmatpush1.msra.mxu0 0.0
    %6519 = vmatprep.mubr.f32.mxu0 0.0
    %6520 = vmatmul.mubr.f32.gmra.mrb[0].mxu0 %v6240
    %v6521 = vpop.f32.mrb[0].mxu0
    %v6522 = vadd.f32 0.0, %v6521
    %v6523 = vpop.f32.mrb[0].mxu0
    %v6524 = vadd.f32 0.0, %v6523
    %6525 = vdwg.mxu0
    %6526 = vmatprep.subr.mxu0 %v6182
    %6527 = vmatpush1.msra.mxu0 %v6181
    %6528 = vmatprep.subr.mxu0 %v6198
    %6529 = vmatpush1.msra.mxu0 %v6197
    %6530 = vmatprep.subr.mxu0 %v6214
    %6531 = vmatpush1.msra.mxu0 %v6213
    %6532 = vmatprep.subr.mxu0 %v6230
    %6533 = vmatpush1.msra.mxu0 %v6229
    %6534 = vmatprep.subr.mxu0 %v5459
    %6535 = vmatpush1.msra.mxu0 %v5459
    %6536 = vmatprep.subr.mxu0 0.0
    %6537 = vmatpush1.msra.mxu0 0.0
    %6538 = vmatprep.subr.mxu0 0.0
    %6539 = vmatpush1.msra.mxu0 0.0
    %6540 = vmatprep.subr.mxu0 0.0
    %6541 = vmatpush1.msra.mxu0 0.0
    %6542 = vmatprep.subr.mxu0 0.0
    %6543 = vmatpush1.msra.mxu0 0.0
    %6544 = vmatprep.subr.mxu0 0.0
    %6545 = vmatpush1.msra.mxu0 0.0
    %6546 = vmatprep.subr.mxu0 0.0
    %6547 = vmatpush1.msra.mxu0 0.0
    %6548 = vmatprep.subr.mxu0 0.0
    %6549 = vmatpush1.msra.mxu0 0.0
    %6550 = vmatprep.subr.mxu0 0.0
    %6551 = vmatpush1.msra.mxu0 0.0
    %6552 = vmatprep.subr.mxu0 0.0
    %6553 = vmatpush1.msra.mxu0 0.0
    %6554 = vmatprep.subr.mxu0 0.0
    %6555 = vmatpush1.msra.mxu0 0.0
    %6556 = vmatprep.subr.mxu0 0.0
    %6557 = vmatpush1.msra.mxu0 0.0
    %6558 = vmatprep.subr.mxu0 0.0
    %6559 = vmatpush1.msra.mxu0 0.0
    %6560 = vmatprep.subr.mxu0 0.0
    %6561 = vmatpush1.msra.mxu0 0.0
    %6562 = vmatprep.subr.mxu0 0.0
    %6563 = vmatpush1.msra.mxu0 0.0
    %6564 = vmatprep.subr.mxu0 0.0
    %6565 = vmatpush1.msra.mxu0 0.0
    %6566 = vmatprep.subr.mxu0 0.0
    %6567 = vmatpush1.msra.mxu0 0.0
    %6568 = vmatprep.subr.mxu0 0.0
    %6569 = vmatpush1.msra.mxu0 0.0
    %6570 = vmatprep.subr.mxu0 0.0
    %6571 = vmatpush1.msra.mxu0 0.0
    %6572 = vmatprep.subr.mxu0 0.0
    %6573 = vmatpush1.msra.mxu0 0.0
    %6574 = vmatprep.subr.mxu0 0.0
    %6575 = vmatpush1.msra.mxu0 0.0
    %6576 = vmatprep.subr.mxu0 0.0
    %6577 = vmatpush1.msra.mxu0 0.0
    %6578 = vmatprep.subr.mxu0 0.0
    %6579 = vmatpush1.msra.mxu0 0.0
    %6580 = vmatprep.subr.mxu0 0.0
    %6581 = vmatpush1.msra.mxu0 0.0
    %6582 = vmatprep.subr.mxu0 0.0
    %6583 = vmatpush1.msra.mxu0 0.0
    %6584 = vmatprep.subr.mxu0 0.0
    %6585 = vmatpush1.msra.mxu0 0.0
    %6586 = vmatprep.subr.mxu0 0.0
    %6587 = vmatpush1.msra.mxu0 0.0
    %6588 = vmatprep.subr.mxu0 0.0
    %6589 = vmatpush1.msra.mxu0 0.0
    %6590 = vmatprep.mubr.f32.mxu0 0.0
    %6591 = vmatmul.mubr.f32.gmra.mrb[0].mxu0 %v6240
    %v6592 = vpop.f32.mrb[0].mxu0
    %v6593 = vadd.f32 0.0, %v6592
    %v6594 = vpop.f32.mrb[0].mxu0
    %v6595 = vadd.f32 0.0, %v6594
    %6596 = vdwg.mxu0
    %6597 = vmatprep.subr.mxu0 %v6184
    %6598 = vmatpush1.msra.mxu0 %v6183
    %6599 = vmatprep.subr.mxu0 %v6200
    %6600 = vmatpush1.msra.mxu0 %v6199
    %6601 = vmatprep.subr.mxu0 %v6216
    %6602 = vmatpush1.msra.mxu0 %v6215
    %6603 = vmatprep.subr.mxu0 %v6232
    %6604 = vmatpush1.msra.mxu0 %v6231
    %6605 = vmatprep.subr.mxu0 %v5459
    %6606 = vmatpush1.msra.mxu0 %v5459
    %6607 = vmatprep.subr.mxu0 0.0
    %6608 = vmatpush1.msra.mxu0 0.0
    %6609 = vmatprep.subr.mxu0 0.0
    %6610 = vmatpush1.msra.mxu0 0.0
    %6611 = vmatprep.subr.mxu0 0.0
    %6612 = vmatpush1.msra.mxu0 0.0
    %6613 = vmatprep.subr.mxu0 0.0
    %6614 = vmatpush1.msra.mxu0 0.0
    %6615 = vmatprep.subr.mxu0 0.0
    %6616 = vmatpush1.msra.mxu0 0.0
    %6617 = vmatprep.subr.mxu0 0.0
    %6618 = vmatpush1.msra.mxu0 0.0
    %6619 = vmatprep.subr.mxu0 0.0
    %6620 = vmatpush1.msra.mxu0 0.0
    %6621 = vmatprep.subr.mxu0 0.0
    %6622 = vmatpush1.msra.mxu0 0.0
    %6623 = vmatprep.subr.mxu0 0.0
    %6624 = vmatpush1.msra.mxu0 0.0
    %6625 = vmatprep.subr.mxu0 0.0
    %6626 = vmatpush1.msra.mxu0 0.0
    %6627 = vmatprep.subr.mxu0 0.0
    %6628 = vmatpush1.msra.mxu0 0.0
    %6629 = vmatprep.subr.mxu0 0.0
    %6630 = vmatpush1.msra.mxu0 0.0
    %6631 = vmatprep.subr.mxu0 0.0
    %6632 = vmatpush1.msra.mxu0 0.0
    %6633 = vmatprep.subr.mxu0 0.0
    %6634 = vmatpush1.msra.mxu0 0.0
    %6635 = vmatprep.subr.mxu0 0.0
    %6636 = vmatpush1.msra.mxu0 0.0
    %6637 = vmatprep.subr.mxu0 0.0
    %6638 = vmatpush1.msra.mxu0 0.0
    %6639 = vmatprep.subr.mxu0 0.0
    %6640 = vmatpush1.msra.mxu0 0.0
    %6641 = vmatprep.subr.mxu0 0.0
    %6642 = vmatpush1.msra.mxu0 0.0
    %6643 = vmatprep.subr.mxu0 0.0
    %6644 = vmatpush1.msra.mxu0 0.0
    %6645 = vmatprep.subr.mxu0 0.0
    %6646 = vmatpush1.msra.mxu0 0.0
    %6647 = vmatprep.subr.mxu0 0.0
    %6648 = vmatpush1.msra.mxu0 0.0
    %6649 = vmatprep.subr.mxu0 0.0
    %6650 = vmatpush1.msra.mxu0 0.0
    %6651 = vmatprep.subr.mxu0 0.0
    %6652 = vmatpush1.msra.mxu0 0.0
    %6653 = vmatprep.subr.mxu0 0.0
    %6654 = vmatpush1.msra.mxu0 0.0
    %6655 = vmatprep.subr.mxu0 0.0
    %6656 = vmatpush1.msra.mxu0 0.0
    %6657 = vmatprep.subr.mxu0 0.0
    %6658 = vmatpush1.msra.mxu0 0.0
    %6659 = vmatprep.subr.mxu0 0.0
    %6660 = vmatpush1.msra.mxu0 0.0
    %6661 = vmatprep.mubr.f32.mxu0 0.0
    %6662 = vmatmul.mubr.f32.gmra.mrb[0].mxu0 %v6240
    %v6663 = vpop.f32.mrb[0].mxu0
    %v6664 = vadd.f32 0.0, %v6663
    %v6665 = vpop.f32.mrb[0].mxu0
    %v6666 = vadd.f32 0.0, %v6665
    %6667 = vdwg.mxu0
    %6668 = vmatprep.subr.mxu0 %v6186
    %6669 = vmatpush1.msra.mxu0 %v6185
    %6670 = vmatprep.subr.mxu0 %v6202
    %6671 = vmatpush1.msra.mxu0 %v6201
    %6672 = vmatprep.subr.mxu0 %v6218
    %6673 = vmatpush1.msra.mxu0 %v6217
    %6674 = vmatprep.subr.mxu0 %v6234
    %6675 = vmatpush1.msra.mxu0 %v6233
    %6676 = vmatprep.subr.mxu0 %v5459
    %6677 = vmatpush1.msra.mxu0 %v5459
    %6678 = vmatprep.subr.mxu0 0.0
    %6679 = vmatpush1.msra.mxu0 0.0
    %6680 = vmatprep.subr.mxu0 0.0
    %6681 = vmatpush1.msra.mxu0 0.0
    %6682 = vmatprep.subr.mxu0 0.0
    %6683 = vmatpush1.msra.mxu0 0.0
    %6684 = vmatprep.subr.mxu0 0.0
    %6685 = vmatpush1.msra.mxu0 0.0
    %6686 = vmatprep.subr.mxu0 0.0
    %6687 = vmatpush1.msra.mxu0 0.0
    %6688 = vmatprep.subr.mxu0 0.0
    %6689 = vmatpush1.msra.mxu0 0.0
    %6690 = vmatprep.subr.mxu0 0.0
    %6691 = vmatpush1.msra.mxu0 0.0
    %6692 = vmatprep.subr.mxu0 0.0
    %6693 = vmatpush1.msra.mxu0 0.0
    %6694 = vmatprep.subr.mxu0 0.0
    %6695 = vmatpush1.msra.mxu0 0.0
    %6696 = vmatprep.subr.mxu0 0.0
    %6697 = vmatpush1.msra.mxu0 0.0
    %6698 = vmatprep.subr.mxu0 0.0
    %6699 = vmatpush1.msra.mxu0 0.0
    %6700 = vmatprep.subr.mxu0 0.0
    %6701 = vmatpush1.msra.mxu0 0.0
    %6702 = vmatprep.subr.mxu0 0.0
    %6703 = vmatpush1.msra.mxu0 0.0
    %6704 = vmatprep.subr.mxu0 0.0
    %6705 = vmatpush1.msra.mxu0 0.0
    %6706 = vmatprep.subr.mxu0 0.0
    %6707 = vmatpush1.msra.mxu0 0.0
    %6708 = vmatprep.subr.mxu0 0.0
    %6709 = vmatpush1.msra.mxu0 0.0
    %6710 = vmatprep.subr.mxu0 0.0
    %6711 = vmatpush1.msra.mxu0 0.0
    %6712 = vmatprep.subr.mxu0 0.0
    %6713 = vmatpush1.msra.mxu0 0.0
    %6714 = vmatprep.subr.mxu0 0.0
    %6715 = vmatpush1.msra.mxu0 0.0
    %6716 = vmatprep.subr.mxu0 0.0
    %6717 = vmatpush1.msra.mxu0 0.0
    %6718 = vmatprep.subr.mxu0 0.0
    %6719 = vmatpush1.msra.mxu0 0.0
    %6720 = vmatprep.subr.mxu0 0.0
    %6721 = vmatpush1.msra.mxu0 0.0
    %6722 = vmatprep.subr.mxu0 0.0
    %6723 = vmatpush1.msra.mxu0 0.0
    %6724 = vmatprep.subr.mxu0 0.0
    %6725 = vmatpush1.msra.mxu0 0.0
    %6726 = vmatprep.subr.mxu0 0.0
    %6727 = vmatpush1.msra.mxu0 0.0
    %6728 = vmatprep.subr.mxu0 0.0
    %6729 = vmatpush1.msra.mxu0 0.0
    %6730 = vmatprep.subr.mxu0 0.0
    %6731 = vmatpush1.msra.mxu0 0.0
    %6732 = vmatprep.mubr.f32.mxu0 0.0
    %6733 = vmatmul.mubr.f32.gmra.mrb[0].mxu0 %v6240
    %v6734 = vpop.f32.mrb[0].mxu0
    %v6735 = vadd.f32 0.0, %v6734
    %v6736 = vpop.f32.mrb[0].mxu0
    %v6737 = vadd.f32 0.0, %v6736
    %6738 = vdwg.mxu0
    %6739 = vmatprep.subr.mxu0 %v6188
    %6740 = vmatpush1.msra.mxu0 %v6187
    %6741 = vmatprep.subr.mxu0 %v6204
    %6742 = vmatpush1.msra.mxu0 %v6203
    %6743 = vmatprep.subr.mxu0 %v6220
    %6744 = vmatpush1.msra.mxu0 %v6219
    %6745 = vmatprep.subr.mxu0 %v6236
    %6746 = vmatpush1.msra.mxu0 %v6235
    %6747 = vmatprep.subr.mxu0 %v5459
    %6748 = vmatpush1.msra.mxu0 %v5459
    %6749 = vmatprep.subr.mxu0 0.0
    %6750 = vmatpush1.msra.mxu0 0.0
    %6751 = vmatprep.subr.mxu0 0.0
    %6752 = vmatpush1.msra.mxu0 0.0
    %6753 = vmatprep.subr.mxu0 0.0
    %6754 = vmatpush1.msra.mxu0 0.0
    %6755 = vmatprep.subr.mxu0 0.0
    %6756 = vmatpush1.msra.mxu0 0.0
    %6757 = vmatprep.subr.mxu0 0.0
    %6758 = vmatpush1.msra.mxu0 0.0
    %6759 = vmatprep.subr.mxu0 0.0
    %6760 = vmatpush1.msra.mxu0 0.0
    %6761 = vmatprep.subr.mxu0 0.0
    %6762 = vmatpush1.msra.mxu0 0.0
    %6763 = vmatprep.subr.mxu0 0.0
    %6764 = vmatpush1.msra.mxu0 0.0
    %6765 = vmatprep.subr.mxu0 0.0
    %6766 = vmatpush1.msra.mxu0 0.0
    %6767 = vmatprep.subr.mxu0 0.0
    %6768 = vmatpush1.msra.mxu0 0.0
    %6769 = vmatprep.subr.mxu0 0.0
    %6770 = vmatpush1.msra.mxu0 0.0
    %6771 = vmatprep.subr.mxu0 0.0
    %6772 = vmatpush1.msra.mxu0 0.0
    %6773 = vmatprep.subr.mxu0 0.0
    %6774 = vmatpush1.msra.mxu0 0.0
    %6775 = vmatprep.subr.mxu0 0.0
    %6776 = vmatpush1.msra.mxu0 0.0
    %6777 = vmatprep.subr.mxu0 0.0
    %6778 = vmatpush1.msra.mxu0 0.0
    %6779 = vmatprep.subr.mxu0 0.0
    %6780 = vmatpush1.msra.mxu0 0.0
    %6781 = vmatprep.subr.mxu0 0.0
    %6782 = vmatpush1.msra.mxu0 0.0
    %6783 = vmatprep.subr.mxu0 0.0
    %6784 = vmatpush1.msra.mxu0 0.0
    %6785 = vmatprep.subr.mxu0 0.0
    %6786 = vmatpush1.msra.mxu0 0.0
    %6787 = vmatprep.subr.mxu0 0.0
    %6788 = vmatpush1.msra.mxu0 0.0
    %6789 = vmatprep.subr.mxu0 0.0
    %6790 = vmatpush1.msra.mxu0 0.0
    %6791 = vmatprep.subr.mxu0 0.0
    %6792 = vmatpush1.msra.mxu0 0.0
    %6793 = vmatprep.subr.mxu0 0.0
    %6794 = vmatpush1.msra.mxu0 0.0
    %6795 = vmatprep.subr.mxu0 0.0
    %6796 = vmatpush1.msra.mxu0 0.0
    %6797 = vmatprep.subr.mxu0 0.0
    %6798 = vmatpush1.msra.mxu0 0.0
    %6799 = vmatprep.subr.mxu0 0.0
    %6800 = vmatpush1.msra.mxu0 0.0
    %6801 = vmatprep.subr.mxu0 0.0
    %6802 = vmatpush1.msra.mxu0 0.0
    %6803 = vmatprep.mubr.f32.mxu0 0.0
    %6804 = vmatmul.mubr.f32.gmra.mrb[0].mxu0 %v6240
    %v6805 = vpop.f32.mrb[0].mxu0
    %v6806 = vadd.f32 0.0, %v6805
    %v6807 = vpop.f32.mrb[0].mxu0
    %v6808 = vadd.f32 0.0, %v6807
    %6809 = vdwg.mxu0
    %v6810 = vtanh.pop %v6309
    %v6811 = vtanh.pop %v6311
    %v6812 = vtanh.pop %v6380
    %v6813 = vtanh.pop %v6382
    %v6814 = vtanh.pop %v6451
    %v6815 = vtanh.pop %v6453
    %v6816 = vtanh.pop %v6522
    %v6817 = vtanh.pop %v6524
    %v6818 = vtanh.pop %v6593
    %v6819 = vtanh.pop %v6595
    %v6820 = vtanh.pop %v6664
    %v6821 = vtanh.pop %v6666
    %v6822 = vtanh.pop %v6735
    %v6823 = vtanh.pop %v6737
    %v6824 = vtanh.pop %v6806
    %v6825 = vtanh.pop %v6808
    %v6826 = vmul.f32 %v6810, 1.442695
    %v6827 = vpow.pop %v6826
    %v6828 = vmul.f32 %v6811, 1.442695
    %v6829 = vpow.pop %v6828
    %v6830 = vmul.f32 %v6812, 1.442695
    %v6831 = vpow.pop %v6830
    %v6832 = vmul.f32 %v6813, 1.442695
    %v6833 = vpow.pop %v6832
    %v6834 = vmul.f32 %v6814, 1.442695
    %v6835 = vpow.pop %v6834
    %v6836 = vmul.f32 %v6815, 1.442695
    %v6837 = vpow.pop %v6836
    %v6838 = vmul.f32 %v6816, 1.442695
    %v6839 = vpow.pop %v6838
    %v6840 = vmul.f32 %v6817, 1.442695
    %v6841 = vpow.pop %v6840
    %v6842 = vmul.f32 %v6818, 1.442695
    %v6843 = vpow.pop %v6842
    %v6844 = vmul.f32 %v6819, 1.442695
    %v6845 = vpow.pop %v6844
    %v6846 = vmul.f32 %v6820, 1.442695
    %v6847 = vpow.pop %v6846
    %v6848 = vmul.f32 %v6821, 1.442695
    %v6849 = vpow.pop %v6848
    %v6850 = vmul.f32 %v6822, 1.442695
    %v6851 = vpow.pop %v6850
    %v6852 = vmul.f32 %v6823, 1.442695
    %v6853 = vpow.pop %v6852
    %v6854 = vmul.f32 %v6824, 1.442695
    %v6855 = vpow.pop %v6854
    %v6856 = vmul.f32 %v6825, 1.442695
    %v6857 = vpow.pop %v6856
    %v6874 = vrot.slane %v6827, 4
    %v6875 = vrot.slane %v6829, 4
    %v6876 = vrot.slane %v6831, 4
    %v6877 = vrot.slane %v6833, 4
    %v6878 = vrot.slane %v6835, 4
    %v6879 = vrot.slane %v6837, 4
    %v6880 = vrot.slane %v6839, 4
    %v6881 = vrot.slane %v6841, 4
    %v6882 = vrot.slane %v6843, 4
    %v6883 = vrot.slane %v6845, 4
    %v6884 = vrot.slane %v6847, 4
    %v6885 = vrot.slane %v6849, 4
    %v6886 = vrot.slane %v6851, 4
    %v6887 = vrot.slane %v6853, 4
    %v6888 = vrot.slane %v6855, 4
    %v6889 = vrot.slane %v6857, 4
    %v6906 = vmul.f32 %v6309, %v6874
    %v6907 = vmul.f32 %v6311, %v6875
    %v6908 = vmul.f32 %v6380, %v6876
    %v6909 = vmul.f32 %v6382, %v6877
    %v6910 = vmul.f32 %v6451, %v6878
    %v6911 = vmul.f32 %v6453, %v6879
    %v6912 = vmul.f32 %v6522, %v6880
    %v6913 = vmul.f32 %v6524, %v6881
    %v6914 = vmul.f32 %v6593, %v6882
    %v6915 = vmul.f32 %v6595, %v6883
    %v6916 = vmul.f32 %v6664, %v6884
    %v6917 = vmul.f32 %v6666, %v6885
    %v6918 = vmul.f32 %v6735, %v6886
    %v6919 = vmul.f32 %v6737, %v6887
    %v6920 = vmul.f32 %v6806, %v6888
    %v6921 = vmul.f32 %v6808, %v6889
    %vm6922 = vcmask 1043456
    %v6923 = vsel %vm6922, %v6827, %v6906
    %v6924 = vsel %vm6922, %v6829, %v6907
    %v6925 = vsel %vm6922, %v6831, %v6908
    %v6926 = vsel %vm6922, %v6833, %v6909
    %v6927 = vsel %vm6922, %v6835, %v6910
    %v6928 = vsel %vm6922, %v6837, %v6911
    %v6929 = vsel %vm6922, %v6839, %v6912
    %v6930 = vsel %vm6922, %v6841, %v6913
    %v6931 = vsel %vm6922, %v6843, %v6914
    %v6932 = vsel %vm6922, %v6845, %v6915
    %v6933 = vsel %vm6922, %v6847, %v6916
    %v6934 = vsel %vm6922, %v6849, %v6917
    %v6935 = vsel %vm6922, %v6851, %v6918
    %v6936 = vsel %vm6922, %v6853, %v6919
    %v6937 = vsel %vm6922, %v6855, %v6920
    %v6938 = vsel %vm6922, %v6857, %v6921
    %v6939 = vld [vmem:[#allocation6] sm:$0xff]
    %v6940 = vld [vmem:[#allocation6 + $0x8] sm:$0xff]
    %v6941 = vld [vmem:[#allocation6 + $0x10] sm:$0xff]
    %v6942 = vld [vmem:[#allocation6 + $0x18] sm:$0xff]
    %v6943 = vld [vmem:[#allocation6 + $0x20] sm:$0xff]
    %v6944 = vld [vmem:[#allocation6 + $0x28] sm:$0xff]
    %v6945 = vld [vmem:[#allocation6 + $0x30] sm:$0xff]
    %v6946 = vld [vmem:[#allocation6 + $0x38] sm:$0xff]
    %v6947 = vld [vmem:[#allocation6 + $0x40] sm:$0xff]
    %v6948 = vld [vmem:[#allocation6 + $0x48] sm:$0xff]
    %v6949 = vld [vmem:[#allocation6 + $0x50] sm:$0xff]
    %v6950 = vld [vmem:[#allocation6 + $0x58] sm:$0xff]
    %v6951 = vld [vmem:[#allocation6 + $0x60] sm:$0xff]
    %v6952 = vld [vmem:[#allocation6 + $0x68] sm:$0xff]
    %v6953 = vld [vmem:[#allocation6 + $0x70] sm:$0xff]
    %v6954 = vld [vmem:[#allocation6 + $0x78] sm:$0xff]
    %v6955 = vld [vmem:[#allocation6 + $0x80] sm:$0xff]
    %v6956 = vld [vmem:[#allocation6 + $0x88] sm:$0xff]
    %v6957 = vld [vmem:[#allocation6 + $0x90] sm:$0xff]
    %v6958 = vld [vmem:[#allocation6 + $0x98] sm:$0xff]
    %v6959 = vld [vmem:[#allocation6 + $0xa0] sm:$0xff]
    %v6960 = vld [vmem:[#allocation6 + $0xa8] sm:$0xff]
    %v6961 = vld [vmem:[#allocation6 + $0xb0] sm:$0xff]
    %v6962 = vld [vmem:[#allocation6 + $0xb8] sm:$0xff]
    %v6963 = vld [vmem:[#allocation6 + $0xc0] sm:$0xff]
    %v6964 = vld [vmem:[#allocation6 + $0xc8] sm:$0xff]
    %v6965 = vld [vmem:[#allocation6 + $0xd0] sm:$0xff]
    %v6966 = vld [vmem:[#allocation6 + $0xd8] sm:$0xff]
    %v6967 = vld [vmem:[#allocation6 + $0xe0] sm:$0xff]
    %v6968 = vld [vmem:[#allocation6 + $0xe8] sm:$0xff]
    %v6969 = vld [vmem:[#allocation6 + $0xf0] sm:$0xff]
    %v6970 = vld [vmem:[#allocation6 + $0xf8] sm:$0xff]
    %v6971 = vld [vmem:[#allocation6 + $0x100] sm:$0xff]
    %v6972 = vld [vmem:[#allocation6 + $0x108] sm:$0xff]
    %v6973 = vld [vmem:[#allocation6 + $0x110] sm:$0xff]
    %v6974 = vld [vmem:[#allocation6 + $0x118] sm:$0xff]
    %v6975 = vld [vmem:[#allocation6 + $0x120] sm:$0xff]
    %v6976 = vld [vmem:[#allocation6 + $0x128] sm:$0xff]
    %v6977 = vld [vmem:[#allocation6 + $0x130] sm:$0xff]
    %v6978 = vld [vmem:[#allocation6 + $0x138] sm:$0xff]
    %v6979 = vld [vmem:[#allocation6 + $0x140] sm:$0xff]
    %v6980 = vld [vmem:[#allocation6 + $0x148] sm:$0xff]
    %v6981 = vld [vmem:[#allocation6 + $0x150] sm:$0xff]
    %v6982 = vld [vmem:[#allocation6 + $0x158] sm:$0xff]
    %v6983 = vld [vmem:[#allocation6 + $0x160] sm:$0xff]
    %v6984 = vld [vmem:[#allocation6 + $0x168] sm:$0xff]
    %v6985 = vld [vmem:[#allocation6 + $0x170] sm:$0xff]
    %v6986 = vld [vmem:[#allocation6 + $0x178] sm:$0xff]
    %v6987 = vld [vmem:[#allocation6 + $0x180] sm:$0xff]
    %v6988 = vld [vmem:[#allocation6 + $0x188] sm:$0xff]
    %v6989 = vld [vmem:[#allocation6 + $0x190] sm:$0xff]
    %v6990 = vld [vmem:[#allocation6 + $0x198] sm:$0xff]
    %v6991 = vld [vmem:[#allocation6 + $0x1a0] sm:$0xff]
    %v6992 = vld [vmem:[#allocation6 + $0x1a8] sm:$0xff]
    %v6993 = vld [vmem:[#allocation6 + $0x1b0] sm:$0xff]
    %v6994 = vld [vmem:[#allocation6 + $0x1b8] sm:$0xff]
    %v6995 = vld [vmem:[#allocation6 + $0x1c0] sm:$0xff]
    %v6996 = vld [vmem:[#allocation6 + $0x1c8] sm:$0xff]
    %v6997 = vld [vmem:[#allocation6 + $0x1d0] sm:$0xff]
    %v6998 = vld [vmem:[#allocation6 + $0x1d8] sm:$0xff]
    %v6999 = vld [vmem:[#allocation6 + $0x1e0] sm:$0xff]
    %v7000 = vld [vmem:[#allocation6 + $0x1e8] sm:$0xff]
    %v7001 = vld [vmem:[#allocation6 + $0x1f0] sm:$0xff]
    %v7002 = vld [vmem:[#allocation6 + $0x1f8] sm:$0xff]
    %v7003 = vld [vmem:[#allocation6 + $0x200] sm:$0xff]
    %v7004 = vld [vmem:[#allocation6 + $0x208] sm:$0xff]
    %v7005 = vld [vmem:[#allocation6 + $0x210] sm:$0xff]
    %v7006 = vld [vmem:[#allocation6 + $0x218] sm:$0xff]
    %v7007 = vld [vmem:[#allocation6 + $0x220] sm:$0xff]
    %v7008 = vld [vmem:[#allocation6 + $0x228] sm:$0xff]
    %v7009 = vld [vmem:[#allocation6 + $0x230] sm:$0xff]
    %v7010 = vld [vmem:[#allocation6 + $0x238] sm:$0xff]
    %v7011 = vld [vmem:[#allocation6 + $0x240] sm:$0xff]
    %v7012 = vld [vmem:[#allocation6 + $0x248] sm:$0xff]
    %v7013 = vld [vmem:[#allocation6 + $0x250] sm:$0xff]
    %v7014 = vld [vmem:[#allocation6 + $0x258] sm:$0xff]
    %v7015 = vld [vmem:[#allocation6 + $0x260] sm:$0xff]
    %v7016 = vld [vmem:[#allocation6 + $0x268] sm:$0xff]
    %v7017 = vld [vmem:[#allocation6 + $0x270] sm:$0xff]
    %v7018 = vld [vmem:[#allocation6 + $0x278] sm:$0xff]
    %v7019 = vld [vmem:[#allocation6 + $0x280] sm:$0xff]
    %v7020 = vld [vmem:[#allocation6 + $0x288] sm:$0xff]
    %v7021 = vld [vmem:[#allocation6 + $0x290] sm:$0xff]
    %v7022 = vld [vmem:[#allocation6 + $0x298] sm:$0xff]
    %v7023 = vld [vmem:[#allocation6 + $0x2a0] sm:$0xff]
    %v7024 = vld [vmem:[#allocation6 + $0x2a8] sm:$0xff]
    %v7025 = vld [vmem:[#allocation6 + $0x2b0] sm:$0xff]
    %v7026 = vld [vmem:[#allocation6 + $0x2b8] sm:$0xff]
    %v7027 = vld [vmem:[#allocation6 + $0x2c0] sm:$0xff]
    %v7028 = vld [vmem:[#allocation6 + $0x2c8] sm:$0xff]
    %v7029 = vld [vmem:[#allocation6 + $0x2d0] sm:$0xff]
    %v7030 = vld [vmem:[#allocation6 + $0x2d8] sm:$0xff]
    %v7031 = vld [vmem:[#allocation6 + $0x2e0] sm:$0xff]
    %v7032 = vld [vmem:[#allocation6 + $0x2e8] sm:$0xff]
    %v7033 = vld [vmem:[#allocation6 + $0x2f0] sm:$0xff]
    %v7034 = vld [vmem:[#allocation6 + $0x2f8] sm:$0xff]
    %v7035 = vld [vmem:[#allocation6 + $0x300] sm:$0xff]
    %v7036 = vld [vmem:[#allocation6 + $0x308] sm:$0xff]
    %v7037 = vld [vmem:[#allocation6 + $0x310] sm:$0xff]
    %v7038 = vld [vmem:[#allocation6 + $0x318] sm:$0xff]
    %v7039 = vld [vmem:[#allocation6 + $0x320] sm:$0xff]
    %v7040 = vld [vmem:[#allocation6 + $0x328] sm:$0xff]
    %v7041 = vld [vmem:[#allocation6 + $0x330] sm:$0xff]
    %v7042 = vld [vmem:[#allocation6 + $0x338] sm:$0xff]
    %v7043 = vld [vmem:[#allocation6 + $0x340] sm:$0xff]
    %v7044 = vld [vmem:[#allocation6 + $0x348] sm:$0xff]
    %v7045 = vld [vmem:[#allocation6 + $0x350] sm:$0xff]
    %v7046 = vld [vmem:[#allocation6 + $0x358] sm:$0xff]
    %v7047 = vld [vmem:[#allocation6 + $0x360] sm:$0xff]
    %v7048 = vld [vmem:[#allocation6 + $0x368] sm:$0xff]
    %v7049 = vld [vmem:[#allocation6 + $0x370] sm:$0xff]
    %v7050 = vld [vmem:[#allocation6 + $0x378] sm:$0xff]
    %v7051 = vld [vmem:[#allocation6 + $0x380] sm:$0xff]
    %v7052 = vld [vmem:[#allocation6 + $0x388] sm:$0xff]
    %v7053 = vld [vmem:[#allocation6 + $0x390] sm:$0xff]
    %v7054 = vld [vmem:[#allocation6 + $0x398] sm:$0xff]
    %v7055 = vld [vmem:[#allocation6 + $0x3a0] sm:$0xff]
    %v7056 = vld [vmem:[#allocation6 + $0x3a8] sm:$0xff]
    %v7057 = vld [vmem:[#allocation6 + $0x3b0] sm:$0xff]
    %v7058 = vld [vmem:[#allocation6 + $0x3b8] sm:$0xff]
    %v7059 = vld [vmem:[#allocation6 + $0x3c0] sm:$0xff]
    %v7060 = vld [vmem:[#allocation6 + $0x3c8] sm:$0xff]
    %v7061 = vld [vmem:[#allocation6 + $0x3d0] sm:$0xff]
    %v7062 = vld [vmem:[#allocation6 + $0x3d8] sm:$0xff]
    %v7063 = vld [vmem:[#allocation6 + $0x3e0] sm:$0xff]
    %v7064 = vld [vmem:[#allocation6 + $0x3e8] sm:$0xff]
    %v7065 = vld [vmem:[#allocation6 + $0x3f0] sm:$0xff]
    %v7066 = vld [vmem:[#allocation6 + $0x3f8] sm:$0xff]
    %v7067 = vld [vmem:[#allocation6 + $0x400] sm:$0xff]
    %v7068 = vld [vmem:[#allocation6 + $0x408] sm:$0xff]
    %v7069 = vld [vmem:[#allocation6 + $0x410] sm:$0xff]
    %v7070 = vld [vmem:[#allocation6 + $0x418] sm:$0xff]
    %v7071 = vld [vmem:[#allocation6 + $0x420] sm:$0xff]
    %v7072 = vld [vmem:[#allocation6 + $0x428] sm:$0xff]
    %v7073 = vld [vmem:[#allocation6 + $0x430] sm:$0xff]
    %v7074 = vld [vmem:[#allocation6 + $0x438] sm:$0xff]
    %v7075 = vld [vmem:[#allocation6 + $0x440] sm:$0xff]
    %v7076 = vld [vmem:[#allocation6 + $0x448] sm:$0xff]
    %v7077 = vld [vmem:[#allocation6 + $0x450] sm:$0xff]
    %v7078 = vld [vmem:[#allocation6 + $0x458] sm:$0xff]
    %v7079 = vld [vmem:[#allocation6 + $0x460] sm:$0xff]
    %v7080 = vld [vmem:[#allocation6 + $0x468] sm:$0xff]
    %v7081 = vld [vmem:[#allocation6 + $0x470] sm:$0xff]
    %v7082 = vld [vmem:[#allocation6 + $0x478] sm:$0xff]
    %v7083 = vld [vmem:[#allocation6 + $0x480] sm:$0xff]
    %v7084 = vld [vmem:[#allocation6 + $0x488] sm:$0xff]
    %v7085 = vld [vmem:[#allocation6 + $0x490] sm:$0xff]
    %v7086 = vld [vmem:[#allocation6 + $0x498] sm:$0xff]
    %v7087 = vld [vmem:[#allocation6 + $0x4a0] sm:$0xff]
    %v7088 = vld [vmem:[#allocation6 + $0x4a8] sm:$0xff]
    %v7089 = vld [vmem:[#allocation6 + $0x4b0] sm:$0xff]
    %v7090 = vld [vmem:[#allocation6 + $0x4b8] sm:$0xff]
    %v7091 = vld [vmem:[#allocation6 + $0x4c0] sm:$0xff]
    %v7092 = vld [vmem:[#allocation6 + $0x4c8] sm:$0xff]
    %v7093 = vld [vmem:[#allocation6 + $0x4d0] sm:$0xff]
    %v7094 = vld [vmem:[#allocation6 + $0x4d8] sm:$0xff]
    %v7095 = vld [vmem:[#allocation6 + $0x4e0] sm:$0xff]
    %v7096 = vld [vmem:[#allocation6 + $0x4e8] sm:$0xff]
    %v7097 = vld [vmem:[#allocation6 + $0x4f0] sm:$0xff]
    %v7098 = vld [vmem:[#allocation6 + $0x4f8] sm:$0xff]
    %v7099 = vld [vmem:[#allocation6 + $0x500] sm:$0xff]
    %v7100 = vld [vmem:[#allocation6 + $0x508] sm:$0xff]
    %v7101 = vld [vmem:[#allocation6 + $0x510] sm:$0xff]
    %v7102 = vld [vmem:[#allocation6 + $0x518] sm:$0xff]
    %v7103 = vld [vmem:[#allocation6 + $0x520] sm:$0xff]
    %v7104 = vld [vmem:[#allocation6 + $0x528] sm:$0xff]
    %v7105 = vld [vmem:[#allocation6 + $0x530] sm:$0xff]
    %v7106 = vld [vmem:[#allocation6 + $0x538] sm:$0xff]
    %v7107 = vld [vmem:[#allocation6 + $0x540] sm:$0xff]
    %v7108 = vld [vmem:[#allocation6 + $0x548] sm:$0xff]
    %v7109 = vld [vmem:[#allocation6 + $0x550] sm:$0xff]
    %v7110 = vld [vmem:[#allocation6 + $0x558] sm:$0xff]
    %v7111 = vld [vmem:[#allocation6 + $0x560] sm:$0xff]
    %v7112 = vld [vmem:[#allocation6 + $0x568] sm:$0xff]
    %v7113 = vld [vmem:[#allocation6 + $0x570] sm:$0xff]
    %v7114 = vld [vmem:[#allocation6 + $0x578] sm:$0xff]
    %v7115 = vld [vmem:[#allocation6 + $0x580] sm:$0xff]
    %v7116 = vld [vmem:[#allocation6 + $0x588] sm:$0xff]
    %v7117 = vld [vmem:[#allocation6 + $0x590] sm:$0xff]
    %v7118 = vld [vmem:[#allocation6 + $0x598] sm:$0xff]
    %v7119 = vld [vmem:[#allocation6 + $0x5a0] sm:$0xff]
    %v7120 = vld [vmem:[#allocation6 + $0x5a8] sm:$0xff]
    %v7121 = vld [vmem:[#allocation6 + $0x5b0] sm:$0xff]
    %v7122 = vld [vmem:[#allocation6 + $0x5b8] sm:$0xff]
    %v7123 = vld [vmem:[#allocation6 + $0x5c0] sm:$0xff]
    %v7124 = vld [vmem:[#allocation6 + $0x5c8] sm:$0xff]
    %v7125 = vld [vmem:[#allocation6 + $0x5d0] sm:$0xff]
    %v7126 = vld [vmem:[#allocation6 + $0x5d8] sm:$0xff]
    %v7127 = vld [vmem:[#allocation6 + $0x5e0] sm:$0xff]
    %v7128 = vld [vmem:[#allocation6 + $0x5e8] sm:$0xff]
    %v7129 = vld [vmem:[#allocation6 + $0x5f0] sm:$0xff]
    %v7130 = vld [vmem:[#allocation6 + $0x5f8] sm:$0xff]
    %v7131 = vld [vmem:[#allocation6 + $0x600] sm:$0xff]
    %v7132 = vld [vmem:[#allocation6 + $0x608] sm:$0xff]
    %v7133 = vld [vmem:[#allocation6 + $0x610] sm:$0xff]
    %v7134 = vld [vmem:[#allocation6 + $0x618] sm:$0xff]
    %v7135 = vld [vmem:[#allocation6 + $0x620] sm:$0xff]
    %v7136 = vld [vmem:[#allocation6 + $0x628] sm:$0xff]
    %v7137 = vld [vmem:[#allocation6 + $0x630] sm:$0xff]
    %v7138 = vld [vmem:[#allocation6 + $0x638] sm:$0xff]
    %v7139 = vld [vmem:[#allocation6 + $0x640] sm:$0xff]
    %v7140 = vld [vmem:[#allocation6 + $0x648] sm:$0xff]
    %v7141 = vld [vmem:[#allocation6 + $0x650] sm:$0xff]
    %v7142 = vld [vmem:[#allocation6 + $0x658] sm:$0xff]
    %v7143 = vld [vmem:[#allocation6 + $0x660] sm:$0xff]
    %v7144 = vld [vmem:[#allocation6 + $0x668] sm:$0xff]
    %v7145 = vld [vmem:[#allocation6 + $0x670] sm:$0xff]
    %v7146 = vld [vmem:[#allocation6 + $0x678] sm:$0xff]
    %v7147 = vld [vmem:[#allocation6 + $0x680] sm:$0xff]
    %v7148 = vld [vmem:[#allocation6 + $0x688] sm:$0xff]
    %v7149 = vld [vmem:[#allocation6 + $0x690] sm:$0xff]
    %v7150 = vld [vmem:[#allocation6 + $0x698] sm:$0xff]
    %v7151 = vld [vmem:[#allocation6 + $0x6a0] sm:$0xff]
    %v7152 = vld [vmem:[#allocation6 + $0x6a8] sm:$0xff]
    %v7153 = vld [vmem:[#allocation6 + $0x6b0] sm:$0xff]
    %v7154 = vld [vmem:[#allocation6 + $0x6b8] sm:$0xff]
    %v7155 = vld [vmem:[#allocation6 + $0x6c0] sm:$0xff]
    %v7156 = vld [vmem:[#allocation6 + $0x6c8] sm:$0xff]
    %v7157 = vld [vmem:[#allocation6 + $0x6d0] sm:$0xff]
    %v7158 = vld [vmem:[#allocation6 + $0x6d8] sm:$0xff]
    %v7159 = vld [vmem:[#allocation6 + $0x6e0] sm:$0xff]
    %v7160 = vld [vmem:[#allocation6 + $0x6e8] sm:$0xff]
    %v7161 = vld [vmem:[#allocation6 + $0x6f0] sm:$0xff]
    %v7162 = vld [vmem:[#allocation6 + $0x6f8] sm:$0xff]
    %v7163 = vld [vmem:[#allocation6 + $0x700] sm:$0xff]
    %v7164 = vld [vmem:[#allocation6 + $0x708] sm:$0xff]
    %v7165 = vld [vmem:[#allocation6 + $0x710] sm:$0xff]
    %v7166 = vld [vmem:[#allocation6 + $0x718] sm:$0xff]
    %v7167 = vld [vmem:[#allocation6 + $0x720] sm:$0xff]
    %v7168 = vld [vmem:[#allocation6 + $0x728] sm:$0xff]
    %v7169 = vld [vmem:[#allocation6 + $0x730] sm:$0xff]
    %v7170 = vld [vmem:[#allocation6 + $0x738] sm:$0xff]
    %v7171 = vld [vmem:[#allocation6 + $0x740] sm:$0xff]
    %v7172 = vld [vmem:[#allocation6 + $0x748] sm:$0xff]
    %v7173 = vld [vmem:[#allocation6 + $0x750] sm:$0xff]
    %v7174 = vld [vmem:[#allocation6 + $0x758] sm:$0xff]
    %v7175 = vld [vmem:[#allocation6 + $0x760] sm:$0xff]
    %v7176 = vld [vmem:[#allocation6 + $0x768] sm:$0xff]
    %v7177 = vld [vmem:[#allocation6 + $0x770] sm:$0xff]
    %v7178 = vld [vmem:[#allocation6 + $0x778] sm:$0xff]
    %v7179 = vld [vmem:[#allocation6 + $0x780] sm:$0xff]
    %v7180 = vld [vmem:[#allocation6 + $0x788] sm:$0xff]
    %v7181 = vld [vmem:[#allocation6 + $0x790] sm:$0xff]
    %v7182 = vld [vmem:[#allocation6 + $0x798] sm:$0xff]
    %v7183 = vld [vmem:[#allocation6 + $0x7a0] sm:$0xff]
    %v7184 = vld [vmem:[#allocation6 + $0x7a8] sm:$0xff]
    %v7185 = vld [vmem:[#allocation6 + $0x7b0] sm:$0xff]
    %v7186 = vld [vmem:[#allocation6 + $0x7b8] sm:$0xff]
    %v7187 = vld [vmem:[#allocation6 + $0x7c0] sm:$0xff]
    %v7188 = vld [vmem:[#allocation6 + $0x7c8] sm:$0xff]
    %v7189 = vld [vmem:[#allocation6 + $0x7d0] sm:$0xff]
    %v7190 = vld [vmem:[#allocation6 + $0x7d8] sm:$0xff]
    %v7191 = vld [vmem:[#allocation6 + $0x7e0] sm:$0xff]
    %v7192 = vld [vmem:[#allocation6 + $0x7e8] sm:$0xff]
    %v7193 = vld [vmem:[#allocation6 + $0x7f0] sm:$0xff]
    %v7194 = vld [vmem:[#allocation6 + $0x7f8] sm:$0xff]
    %7195 = vmatprep.subr.mxu0 0.0
    %7196 = vmatpush1.msra.mxu0 %v6939
    %7197 = vmatprep.subr.mxu0 0.0
    %7198 = vmatpush1.msra.mxu0 %v6940
    %7199 = vmatprep.subr.mxu0 0.0
    %7200 = vmatpush1.msra.mxu0 %v6941
    %7201 = vmatprep.subr.mxu0 0.0
    %7202 = vmatpush1.msra.mxu0 %v6942
    %7203 = vmatprep.subr.mxu0 0.0
    %7204 = vmatpush1.msra.mxu0 %v6943
    %7205 = vmatprep.subr.mxu0 0.0
    %7206 = vmatpush1.msra.mxu0 %v6944
    %7207 = vmatprep.subr.mxu0 0.0
    %7208 = vmatpush1.msra.mxu0 %v6945
    %7209 = vmatprep.subr.mxu0 0.0
    %7210 = vmatpush1.msra.mxu0 %v6946
    %7211 = vmatprep.subr.mxu0 0.0
    %7212 = vmatpush1.msra.mxu0 %v6947
    %7213 = vmatprep.subr.mxu0 0.0
    %7214 = vmatpush1.msra.mxu0 %v6948
    %7215 = vmatprep.subr.mxu0 0.0
    %7216 = vmatpush1.msra.mxu0 %v6949
    %7217 = vmatprep.subr.mxu0 0.0
    %7218 = vmatpush1.msra.mxu0 %v6950
    %7219 = vmatprep.subr.mxu0 0.0
    %7220 = vmatpush1.msra.mxu0 %v6951
    %7221 = vmatprep.subr.mxu0 0.0
    %7222 = vmatpush1.msra.mxu0 %v6952
    %7223 = vmatprep.subr.mxu0 0.0
    %7224 = vmatpush1.msra.mxu0 %v6953
    %7225 = vmatprep.subr.mxu0 0.0
    %7226 = vmatpush1.msra.mxu0 %v6954
    %7227 = vmatprep.subr.mxu0 0.0
    %7228 = vmatpush1.msra.mxu0 %v6955
    %7229 = vmatprep.subr.mxu0 0.0
    %7230 = vmatpush1.msra.mxu0 %v6956
    %7231 = vmatprep.subr.mxu0 0.0
    %7232 = vmatpush1.msra.mxu0 %v6957
    %7233 = vmatprep.subr.mxu0 0.0
    %7234 = vmatpush1.msra.mxu0 %v6958
    %7235 = vmatprep.subr.mxu0 0.0
    %7236 = vmatpush1.msra.mxu0 %v6959
    %7237 = vmatprep.subr.mxu0 0.0
    %7238 = vmatpush1.msra.mxu0 %v6960
    %7239 = vmatprep.subr.mxu0 0.0
    %7240 = vmatpush1.msra.mxu0 %v6961
    %7241 = vmatprep.subr.mxu0 0.0
    %7242 = vmatpush1.msra.mxu0 %v6962
    %7243 = vmatprep.subr.mxu0 0.0
    %7244 = vmatpush1.msra.mxu0 %v6963
    %7245 = vmatprep.subr.mxu0 0.0
    %7246 = vmatpush1.msra.mxu0 %v6964
    %7247 = vmatprep.subr.mxu0 0.0
    %7248 = vmatpush1.msra.mxu0 %v6965
    %7249 = vmatprep.subr.mxu0 0.0
    %7250 = vmatpush1.msra.mxu0 %v6966
    %7251 = vmatprep.subr.mxu0 0.0
    %7252 = vmatpush1.msra.mxu0 %v6967
    %7253 = vmatprep.subr.mxu0 0.0
    %7254 = vmatpush1.msra.mxu0 %v6968
    %7255 = vmatprep.subr.mxu0 0.0
    %7256 = vmatpush1.msra.mxu0 %v6969
    %7257 = vmatprep.subr.mxu0 0.0
    %7258 = vmatpush1.msra.mxu0 %v6970
    %7259 = vmatprep.mubr.f32.mxu0 %v6924
    %7260 = vmatmul.mubr.f32.gmra.mrb[0].mxu0 %v6923
    %v7261 = vpop.f32.mrb[0].mxu0
    %v7262 = vadd.f32 0.0, %v7261
    %v7263 = vpop.f32.mrb[0].mxu0
    %7264 = vdwg.mxu0
    %7265 = vmatprep.subr.mxu0 0.0
    %7266 = vmatpush1.msra.mxu0 %v6971
    %7267 = vmatprep.subr.mxu0 0.0
    %7268 = vmatpush1.msra.mxu0 %v6972
    %7269 = vmatprep.subr.mxu0 0.0
    %7270 = vmatpush1.msra.mxu0 %v6973
    %7271 = vmatprep.subr.mxu0 0.0
    %7272 = vmatpush1.msra.mxu0 %v6974
    %7273 = vmatprep.subr.mxu0 0.0
    %7274 = vmatpush1.msra.mxu0 %v6975
    %7275 = vmatprep.subr.mxu0 0.0
    %7276 = vmatpush1.msra.mxu0 %v6976
    %7277 = vmatprep.subr.mxu0 0.0
    %7278 = vmatpush1.msra.mxu0 %v6977
    %7279 = vmatprep.subr.mxu0 0.0
    %7280 = vmatpush1.msra.mxu0 %v6978
    %7281 = vmatprep.subr.mxu0 0.0
    %7282 = vmatpush1.msra.mxu0 %v6979
    %7283 = vmatprep.subr.mxu0 0.0
    %7284 = vmatpush1.msra.mxu0 %v6980
    %7285 = vmatprep.subr.mxu0 0.0
    %7286 = vmatpush1.msra.mxu0 %v6981
    %7287 = vmatprep.subr.mxu0 0.0
    %7288 = vmatpush1.msra.mxu0 %v6982
    %7289 = vmatprep.subr.mxu0 0.0
    %7290 = vmatpush1.msra.mxu0 %v6983
    %7291 = vmatprep.subr.mxu0 0.0
    %7292 = vmatpush1.msra.mxu0 %v6984
    %7293 = vmatprep.subr.mxu0 0.0
    %7294 = vmatpush1.msra.mxu0 %v6985
    %7295 = vmatprep.subr.mxu0 0.0
    %7296 = vmatpush1.msra.mxu0 %v6986
    %7297 = vmatprep.subr.mxu0 0.0
    %7298 = vmatpush1.msra.mxu0 %v6987
    %7299 = vmatprep.subr.mxu0 0.0
    %7300 = vmatpush1.msra.mxu0 %v6988
    %7301 = vmatprep.subr.mxu0 0.0
    %7302 = vmatpush1.msra.mxu0 %v6989
    %7303 = vmatprep.subr.mxu0 0.0
    %7304 = vmatpush1.msra.mxu0 %v6990
    %7305 = vmatprep.subr.mxu0 0.0
    %7306 = vmatpush1.msra.mxu0 %v6991
    %7307 = vmatprep.subr.mxu0 0.0
    %7308 = vmatpush1.msra.mxu0 %v6992
    %7309 = vmatprep.subr.mxu0 0.0
    %7310 = vmatpush1.msra.mxu0 %v6993
    %7311 = vmatprep.subr.mxu0 0.0
    %7312 = vmatpush1.msra.mxu0 %v6994
    %7313 = vmatprep.subr.mxu0 0.0
    %7314 = vmatpush1.msra.mxu0 %v6995
    %7315 = vmatprep.subr.mxu0 0.0
    %7316 = vmatpush1.msra.mxu0 %v6996
    %7317 = vmatprep.subr.mxu0 0.0
    %7318 = vmatpush1.msra.mxu0 %v6997
    %7319 = vmatprep.subr.mxu0 0.0
    %7320 = vmatpush1.msra.mxu0 %v6998
    %7321 = vmatprep.subr.mxu0 0.0
    %7322 = vmatpush1.msra.mxu0 %v6999
    %7323 = vmatprep.subr.mxu0 0.0
    %7324 = vmatpush1.msra.mxu0 %v7000
    %7325 = vmatprep.subr.mxu0 0.0
    %7326 = vmatpush1.msra.mxu0 %v7001
    %7327 = vmatprep.subr.mxu0 0.0
    %7328 = vmatpush1.msra.mxu0 %v7002
    %7329 = vmatprep.mubr.f32.mxu0 %v6926
    %7330 = vmatmul.mubr.f32.gmra.mrb[0].mxu0 %v6925
    %v7331 = vpop.f32.mrb[0].mxu0
    %v7332 = vadd.f32 %v7262, %v7331
    %v7333 = vpop.f32.mrb[0].mxu0
    %7334 = vdwg.mxu0
    %7335 = vmatprep.subr.mxu0 0.0
    %7336 = vmatpush1.msra.mxu0 %v7003
    %7337 = vmatprep.subr.mxu0 0.0
    %7338 = vmatpush1.msra.mxu0 %v7004
    %7339 = vmatprep.subr.mxu0 0.0
    %7340 = vmatpush1.msra.mxu0 %v7005
    %7341 = vmatprep.subr.mxu0 0.0
    %7342 = vmatpush1.msra.mxu0 %v7006
    %7343 = vmatprep.subr.mxu0 0.0
    %7344 = vmatpush1.msra.mxu0 %v7007
    %7345 = vmatprep.subr.mxu0 0.0
    %7346 = vmatpush1.msra.mxu0 %v7008
    %7347 = vmatprep.subr.mxu0 0.0
    %7348 = vmatpush1.msra.mxu0 %v7009
    %7349 = vmatprep.subr.mxu0 0.0
    %7350 = vmatpush1.msra.mxu0 %v7010
    %7351 = vmatprep.subr.mxu0 0.0
    %7352 = vmatpush1.msra.mxu0 %v7011
    %7353 = vmatprep.subr.mxu0 0.0
    %7354 = vmatpush1.msra.mxu0 %v7012
    %7355 = vmatprep.subr.mxu0 0.0
    %7356 = vmatpush1.msra.mxu0 %v7013
    %7357 = vmatprep.subr.mxu0 0.0
    %7358 = vmatpush1.msra.mxu0 %v7014
    %7359 = vmatprep.subr.mxu0 0.0
    %7360 = vmatpush1.msra.mxu0 %v7015
    %7361 = vmatprep.subr.mxu0 0.0
    %7362 = vmatpush1.msra.mxu0 %v7016
    %7363 = vmatprep.subr.mxu0 0.0
    %7364 = vmatpush1.msra.mxu0 %v7017
    %7365 = vmatprep.subr.mxu0 0.0
    %7366 = vmatpush1.msra.mxu0 %v7018
    %7367 = vmatprep.subr.mxu0 0.0
    %7368 = vmatpush1.msra.mxu0 %v7019
    %7369 = vmatprep.subr.mxu0 0.0
    %7370 = vmatpush1.msra.mxu0 %v7020
    %7371 = vmatprep.subr.mxu0 0.0
    %7372 = vmatpush1.msra.mxu0 %v7021
    %7373 = vmatprep.subr.mxu0 0.0
    %7374 = vmatpush1.msra.mxu0 %v7022
    %7375 = vmatprep.subr.mxu0 0.0
    %7376 = vmatpush1.msra.mxu0 %v7023
    %7377 = vmatprep.subr.mxu0 0.0
    %7378 = vmatpush1.msra.mxu0 %v7024
    %7379 = vmatprep.subr.mxu0 0.0
    %7380 = vmatpush1.msra.mxu0 %v7025
    %7381 = vmatprep.subr.mxu0 0.0
    %7382 = vmatpush1.msra.mxu0 %v7026
    %7383 = vmatprep.subr.mxu0 0.0
    %7384 = vmatpush1.msra.mxu0 %v7027
    %7385 = vmatprep.subr.mxu0 0.0
    %7386 = vmatpush1.msra.mxu0 %v7028
    %7387 = vmatprep.subr.mxu0 0.0
    %7388 = vmatpush1.msra.mxu0 %v7029
    %7389 = vmatprep.subr.mxu0 0.0
    %7390 = vmatpush1.msra.mxu0 %v7030
    %7391 = vmatprep.subr.mxu0 0.0
    %7392 = vmatpush1.msra.mxu0 %v7031
    %7393 = vmatprep.subr.mxu0 0.0
    %7394 = vmatpush1.msra.mxu0 %v7032
    %7395 = vmatprep.subr.mxu0 0.0
    %7396 = vmatpush1.msra.mxu0 %v7033
    %7397 = vmatprep.subr.mxu0 0.0
    %7398 = vmatpush1.msra.mxu0 %v7034
    %7399 = vmatprep.mubr.f32.mxu0 %v6928
    %7400 = vmatmul.mubr.f32.gmra.mrb[0].mxu0 %v6927
    %v7401 = vpop.f32.mrb[0].mxu0
    %v7402 = vadd.f32 %v7332, %v7401
    %v7403 = vpop.f32.mrb[0].mxu0
    %7404 = vdwg.mxu0
    %7405 = vmatprep.subr.mxu0 0.0
    %7406 = vmatpush1.msra.mxu0 %v7035
    %7407 = vmatprep.subr.mxu0 0.0
    %7408 = vmatpush1.msra.mxu0 %v7036
    %7409 = vmatprep.subr.mxu0 0.0
    %7410 = vmatpush1.msra.mxu0 %v7037
    %7411 = vmatprep.subr.mxu0 0.0
    %7412 = vmatpush1.msra.mxu0 %v7038
    %7413 = vmatprep.subr.mxu0 0.0
    %7414 = vmatpush1.msra.mxu0 %v7039
    %7415 = vmatprep.subr.mxu0 0.0
    %7416 = vmatpush1.msra.mxu0 %v7040
    %7417 = vmatprep.subr.mxu0 0.0
    %7418 = vmatpush1.msra.mxu0 %v7041
    %7419 = vmatprep.subr.mxu0 0.0
    %7420 = vmatpush1.msra.mxu0 %v7042
    %7421 = vmatprep.subr.mxu0 0.0
    %7422 = vmatpush1.msra.mxu0 %v7043
    %7423 = vmatprep.subr.mxu0 0.0
    %7424 = vmatpush1.msra.mxu0 %v7044
    %7425 = vmatprep.subr.mxu0 0.0
    %7426 = vmatpush1.msra.mxu0 %v7045
    %7427 = vmatprep.subr.mxu0 0.0
    %7428 = vmatpush1.msra.mxu0 %v7046
    %7429 = vmatprep.subr.mxu0 0.0
    %7430 = vmatpush1.msra.mxu0 %v7047
    %7431 = vmatprep.subr.mxu0 0.0
    %7432 = vmatpush1.msra.mxu0 %v7048
    %7433 = vmatprep.subr.mxu0 0.0
    %7434 = vmatpush1.msra.mxu0 %v7049
    %7435 = vmatprep.subr.mxu0 0.0
    %7436 = vmatpush1.msra.mxu0 %v7050
    %7437 = vmatprep.subr.mxu0 0.0
    %7438 = vmatpush1.msra.mxu0 %v7051
    %7439 = vmatprep.subr.mxu0 0.0
    %7440 = vmatpush1.msra.mxu0 %v7052
    %7441 = vmatprep.subr.mxu0 0.0
    %7442 = vmatpush1.msra.mxu0 %v7053
    %7443 = vmatprep.subr.mxu0 0.0
    %7444 = vmatpush1.msra.mxu0 %v7054
    %7445 = vmatprep.subr.mxu0 0.0
    %7446 = vmatpush1.msra.mxu0 %v7055
    %7447 = vmatprep.subr.mxu0 0.0
    %7448 = vmatpush1.msra.mxu0 %v7056
    %7449 = vmatprep.subr.mxu0 0.0
    %7450 = vmatpush1.msra.mxu0 %v7057
    %7451 = vmatprep.subr.mxu0 0.0
    %7452 = vmatpush1.msra.mxu0 %v7058
    %7453 = vmatprep.subr.mxu0 0.0
    %7454 = vmatpush1.msra.mxu0 %v7059
    %7455 = vmatprep.subr.mxu0 0.0
    %7456 = vmatpush1.msra.mxu0 %v7060
    %7457 = vmatprep.subr.mxu0 0.0
    %7458 = vmatpush1.msra.mxu0 %v7061
    %7459 = vmatprep.subr.mxu0 0.0
    %7460 = vmatpush1.msra.mxu0 %v7062
    %7461 = vmatprep.subr.mxu0 0.0
    %7462 = vmatpush1.msra.mxu0 %v7063
    %7463 = vmatprep.subr.mxu0 0.0
    %7464 = vmatpush1.msra.mxu0 %v7064
    %7465 = vmatprep.subr.mxu0 0.0
    %7466 = vmatpush1.msra.mxu0 %v7065
    %7467 = vmatprep.subr.mxu0 0.0
    %7468 = vmatpush1.msra.mxu0 %v7066
    %7469 = vmatprep.mubr.f32.mxu0 %v6930
    %7470 = vmatmul.mubr.f32.gmra.mrb[0].mxu0 %v6929
    %v7471 = vpop.f32.mrb[0].mxu0
    %v7472 = vadd.f32 %v7402, %v7471
    %v7473 = vpop.f32.mrb[0].mxu0
    %7474 = vdwg.mxu0
    %7475 = vmatprep.subr.mxu0 0.0
    %7476 = vmatpush1.msra.mxu0 %v7067
    %7477 = vmatprep.subr.mxu0 0.0
    %7478 = vmatpush1.msra.mxu0 %v7068
    %7479 = vmatprep.subr.mxu0 0.0
    %7480 = vmatpush1.msra.mxu0 %v7069
    %7481 = vmatprep.subr.mxu0 0.0
    %7482 = vmatpush1.msra.mxu0 %v7070
    %7483 = vmatprep.subr.mxu0 0.0
    %7484 = vmatpush1.msra.mxu0 %v7071
    %7485 = vmatprep.subr.mxu0 0.0
    %7486 = vmatpush1.msra.mxu0 %v7072
    %7487 = vmatprep.subr.mxu0 0.0
    %7488 = vmatpush1.msra.mxu0 %v7073
    %7489 = vmatprep.subr.mxu0 0.0
    %7490 = vmatpush1.msra.mxu0 %v7074
    %7491 = vmatprep.subr.mxu0 0.0
    %7492 = vmatpush1.msra.mxu0 %v7075
    %7493 = vmatprep.subr.mxu0 0.0
    %7494 = vmatpush1.msra.mxu0 %v7076
    %7495 = vmatprep.subr.mxu0 0.0
    %7496 = vmatpush1.msra.mxu0 %v7077
    %7497 = vmatprep.subr.mxu0 0.0
    %7498 = vmatpush1.msra.mxu0 %v7078
    %7499 = vmatprep.subr.mxu0 0.0
    %7500 = vmatpush1.msra.mxu0 %v7079
    %7501 = vmatprep.subr.mxu0 0.0
    %7502 = vmatpush1.msra.mxu0 %v7080
    %7503 = vmatprep.subr.mxu0 0.0
    %7504 = vmatpush1.msra.mxu0 %v7081
    %7505 = vmatprep.subr.mxu0 0.0
    %7506 = vmatpush1.msra.mxu0 %v7082
    %7507 = vmatprep.subr.mxu0 0.0
    %7508 = vmatpush1.msra.mxu0 %v7083
    %7509 = vmatprep.subr.mxu0 0.0
    %7510 = vmatpush1.msra.mxu0 %v7084
    %7511 = vmatprep.subr.mxu0 0.0
    %7512 = vmatpush1.msra.mxu0 %v7085
    %7513 = vmatprep.subr.mxu0 0.0
    %7514 = vmatpush1.msra.mxu0 %v7086
    %7515 = vmatprep.subr.mxu0 0.0
    %7516 = vmatpush1.msra.mxu0 %v7087
    %7517 = vmatprep.subr.mxu0 0.0
    %7518 = vmatpush1.msra.mxu0 %v7088
    %7519 = vmatprep.subr.mxu0 0.0
    %7520 = vmatpush1.msra.mxu0 %v7089
    %7521 = vmatprep.subr.mxu0 0.0
    %7522 = vmatpush1.msra.mxu0 %v7090
    %7523 = vmatprep.subr.mxu0 0.0
    %7524 = vmatpush1.msra.mxu0 %v7091
    %7525 = vmatprep.subr.mxu0 0.0
    %7526 = vmatpush1.msra.mxu0 %v7092
    %7527 = vmatprep.subr.mxu0 0.0
    %7528 = vmatpush1.msra.mxu0 %v7093
    %7529 = vmatprep.subr.mxu0 0.0
    %7530 = vmatpush1.msra.mxu0 %v7094
    %7531 = vmatprep.subr.mxu0 0.0
    %7532 = vmatpush1.msra.mxu0 %v7095
    %7533 = vmatprep.subr.mxu0 0.0
    %7534 = vmatpush1.msra.mxu0 %v7096
    %7535 = vmatprep.subr.mxu0 0.0
    %7536 = vmatpush1.msra.mxu0 %v7097
    %7537 = vmatprep.subr.mxu0 0.0
    %7538 = vmatpush1.msra.mxu0 %v7098
    %7539 = vmatprep.mubr.f32.mxu0 %v6932
    %7540 = vmatmul.mubr.f32.gmra.mrb[0].mxu0 %v6931
    %v7541 = vpop.f32.mrb[0].mxu0
    %v7542 = vadd.f32 %v7472, %v7541
    %v7543 = vpop.f32.mrb[0].mxu0
    %7544 = vdwg.mxu0
    %7545 = vmatprep.subr.mxu0 0.0
    %7546 = vmatpush1.msra.mxu0 %v7099
    %7547 = vmatprep.subr.mxu0 0.0
    %7548 = vmatpush1.msra.mxu0 %v7100
    %7549 = vmatprep.subr.mxu0 0.0
    %7550 = vmatpush1.msra.mxu0 %v7101
    %7551 = vmatprep.subr.mxu0 0.0
    %7552 = vmatpush1.msra.mxu0 %v7102
    %7553 = vmatprep.subr.mxu0 0.0
    %7554 = vmatpush1.msra.mxu0 %v7103
    %7555 = vmatprep.subr.mxu0 0.0
    %7556 = vmatpush1.msra.mxu0 %v7104
    %7557 = vmatprep.subr.mxu0 0.0
    %7558 = vmatpush1.msra.mxu0 %v7105
    %7559 = vmatprep.subr.mxu0 0.0
    %7560 = vmatpush1.msra.mxu0 %v7106
    %7561 = vmatprep.subr.mxu0 0.0
    %7562 = vmatpush1.msra.mxu0 %v7107
    %7563 = vmatprep.subr.mxu0 0.0
    %7564 = vmatpush1.msra.mxu0 %v7108
    %7565 = vmatprep.subr.mxu0 0.0
    %7566 = vmatpush1.msra.mxu0 %v7109
    %7567 = vmatprep.subr.mxu0 0.0
    %7568 = vmatpush1.msra.mxu0 %v7110
    %7569 = vmatprep.subr.mxu0 0.0
    %7570 = vmatpush1.msra.mxu0 %v7111
    %7571 = vmatprep.subr.mxu0 0.0
    %7572 = vmatpush1.msra.mxu0 %v7112
    %7573 = vmatprep.subr.mxu0 0.0
    %7574 = vmatpush1.msra.mxu0 %v7113
    %7575 = vmatprep.subr.mxu0 0.0
    %7576 = vmatpush1.msra.mxu0 %v7114
    %7577 = vmatprep.subr.mxu0 0.0
    %7578 = vmatpush1.msra.mxu0 %v7115
    %7579 = vmatprep.subr.mxu0 0.0
    %7580 = vmatpush1.msra.mxu0 %v7116
    %7581 = vmatprep.subr.mxu0 0.0
    %7582 = vmatpush1.msra.mxu0 %v7117
    %7583 = vmatprep.subr.mxu0 0.0
    %7584 = vmatpush1.msra.mxu0 %v7118
    %7585 = vmatprep.subr.mxu0 0.0
    %7586 = vmatpush1.msra.mxu0 %v7119
    %7587 = vmatprep.subr.mxu0 0.0
    %7588 = vmatpush1.msra.mxu0 %v7120
    %7589 = vmatprep.subr.mxu0 0.0
    %7590 = vmatpush1.msra.mxu0 %v7121
    %7591 = vmatprep.subr.mxu0 0.0
    %7592 = vmatpush1.msra.mxu0 %v7122
    %7593 = vmatprep.subr.mxu0 0.0
    %7594 = vmatpush1.msra.mxu0 %v7123
    %7595 = vmatprep.subr.mxu0 0.0
    %7596 = vmatpush1.msra.mxu0 %v7124
    %7597 = vmatprep.subr.mxu0 0.0
    %7598 = vmatpush1.msra.mxu0 %v7125
    %7599 = vmatprep.subr.mxu0 0.0
    %7600 = vmatpush1.msra.mxu0 %v7126
    %7601 = vmatprep.subr.mxu0 0.0
    %7602 = vmatpush1.msra.mxu0 %v7127
    %7603 = vmatprep.subr.mxu0 0.0
    %7604 = vmatpush1.msra.mxu0 %v7128
    %7605 = vmatprep.subr.mxu0 0.0
    %7606 = vmatpush1.msra.mxu0 %v7129
    %7607 = vmatprep.subr.mxu0 0.0
    %7608 = vmatpush1.msra.mxu0 %v7130
    %7609 = vmatprep.mubr.f32.mxu0 %v6934
    %7610 = vmatmul.mubr.f32.gmra.mrb[0].mxu0 %v6933
    %v7611 = vpop.f32.mrb[0].mxu0
    %v7612 = vadd.f32 %v7542, %v7611
    %v7613 = vpop.f32.mrb[0].mxu0
    %7614 = vdwg.mxu0
    %7615 = vmatprep.subr.mxu0 0.0
    %7616 = vmatpush1.msra.mxu0 %v7131
    %7617 = vmatprep.subr.mxu0 0.0
    %7618 = vmatpush1.msra.mxu0 %v7132
    %7619 = vmatprep.subr.mxu0 0.0
    %7620 = vmatpush1.msra.mxu0 %v7133
    %7621 = vmatprep.subr.mxu0 0.0
    %7622 = vmatpush1.msra.mxu0 %v7134
    %7623 = vmatprep.subr.mxu0 0.0
    %7624 = vmatpush1.msra.mxu0 %v7135
    %7625 = vmatprep.subr.mxu0 0.0
    %7626 = vmatpush1.msra.mxu0 %v7136
    %7627 = vmatprep.subr.mxu0 0.0
    %7628 = vmatpush1.msra.mxu0 %v7137
    %7629 = vmatprep.subr.mxu0 0.0
    %7630 = vmatpush1.msra.mxu0 %v7138
    %7631 = vmatprep.subr.mxu0 0.0
    %7632 = vmatpush1.msra.mxu0 %v7139
    %7633 = vmatprep.subr.mxu0 0.0
    %7634 = vmatpush1.msra.mxu0 %v7140
    %7635 = vmatprep.subr.mxu0 0.0
    %7636 = vmatpush1.msra.mxu0 %v7141
    %7637 = vmatprep.subr.mxu0 0.0
    %7638 = vmatpush1.msra.mxu0 %v7142
    %7639 = vmatprep.subr.mxu0 0.0
    %7640 = vmatpush1.msra.mxu0 %v7143
    %7641 = vmatprep.subr.mxu0 0.0
    %7642 = vmatpush1.msra.mxu0 %v7144
    %7643 = vmatprep.subr.mxu0 0.0
    %7644 = vmatpush1.msra.mxu0 %v7145
    %7645 = vmatprep.subr.mxu0 0.0
    %7646 = vmatpush1.msra.mxu0 %v7146
    %7647 = vmatprep.subr.mxu0 0.0
    %7648 = vmatpush1.msra.mxu0 %v7147
    %7649 = vmatprep.subr.mxu0 0.0
    %7650 = vmatpush1.msra.mxu0 %v7148
    %7651 = vmatprep.subr.mxu0 0.0
    %7652 = vmatpush1.msra.mxu0 %v7149
    %7653 = vmatprep.subr.mxu0 0.0
    %7654 = vmatpush1.msra.mxu0 %v7150
    %7655 = vmatprep.subr.mxu0 0.0
    %7656 = vmatpush1.msra.mxu0 %v7151
    %7657 = vmatprep.subr.mxu0 0.0
    %7658 = vmatpush1.msra.mxu0 %v7152
    %7659 = vmatprep.subr.mxu0 0.0
    %7660 = vmatpush1.msra.mxu0 %v7153
    %7661 = vmatprep.subr.mxu0 0.0
    %7662 = vmatpush1.msra.mxu0 %v7154
    %7663 = vmatprep.subr.mxu0 0.0
    %7664 = vmatpush1.msra.mxu0 %v7155
    %7665 = vmatprep.subr.mxu0 0.0
    %7666 = vmatpush1.msra.mxu0 %v7156
    %7667 = vmatprep.subr.mxu0 0.0
    %7668 = vmatpush1.msra.mxu0 %v7157
    %7669 = vmatprep.subr.mxu0 0.0
    %7670 = vmatpush1.msra.mxu0 %v7158
    %7671 = vmatprep.subr.mxu0 0.0
    %7672 = vmatpush1.msra.mxu0 %v7159
    %7673 = vmatprep.subr.mxu0 0.0
    %7674 = vmatpush1.msra.mxu0 %v7160
    %7675 = vmatprep.subr.mxu0 0.0
    %7676 = vmatpush1.msra.mxu0 %v7161
    %7677 = vmatprep.subr.mxu0 0.0
    %7678 = vmatpush1.msra.mxu0 %v7162
    %7679 = vmatprep.mubr.f32.mxu0 %v6936
    %7680 = vmatmul.mubr.f32.gmra.mrb[0].mxu0 %v6935
    %v7681 = vpop.f32.mrb[0].mxu0
    %v7682 = vadd.f32 %v7612, %v7681
    %v7683 = vpop.f32.mrb[0].mxu0
    %7684 = vdwg.mxu0
    %7685 = vmatprep.subr.mxu0 0.0
    %7686 = vmatpush1.msra.mxu0 %v7163
    %7687 = vmatprep.subr.mxu0 0.0
    %7688 = vmatpush1.msra.mxu0 %v7164
    %7689 = vmatprep.subr.mxu0 0.0
    %7690 = vmatpush1.msra.mxu0 %v7165
    %7691 = vmatprep.subr.mxu0 0.0
    %7692 = vmatpush1.msra.mxu0 %v7166
    %7693 = vmatprep.subr.mxu0 0.0
    %7694 = vmatpush1.msra.mxu0 %v7167
    %7695 = vmatprep.subr.mxu0 0.0
    %7696 = vmatpush1.msra.mxu0 %v7168
    %7697 = vmatprep.subr.mxu0 0.0
    %7698 = vmatpush1.msra.mxu0 %v7169
    %7699 = vmatprep.subr.mxu0 0.0
    %7700 = vmatpush1.msra.mxu0 %v7170
    %7701 = vmatprep.subr.mxu0 0.0
    %7702 = vmatpush1.msra.mxu0 %v7171
    %7703 = vmatprep.subr.mxu0 0.0
    %7704 = vmatpush1.msra.mxu0 %v7172
    %7705 = vmatprep.subr.mxu0 0.0
    %7706 = vmatpush1.msra.mxu0 %v7173
    %7707 = vmatprep.subr.mxu0 0.0
    %7708 = vmatpush1.msra.mxu0 %v7174
    %7709 = vmatprep.subr.mxu0 0.0
    %7710 = vmatpush1.msra.mxu0 %v7175
    %7711 = vmatprep.subr.mxu0 0.0
    %7712 = vmatpush1.msra.mxu0 %v7176
    %7713 = vmatprep.subr.mxu0 0.0
    %7714 = vmatpush1.msra.mxu0 %v7177
    %7715 = vmatprep.subr.mxu0 0.0
    %7716 = vmatpush1.msra.mxu0 %v7178
    %7717 = vmatprep.subr.mxu0 0.0
    %7718 = vmatpush1.msra.mxu0 %v7179
    %7719 = vmatprep.subr.mxu0 0.0
    %7720 = vmatpush1.msra.mxu0 %v7180
    %7721 = vmatprep.subr.mxu0 0.0
    %7722 = vmatpush1.msra.mxu0 %v7181
    %7723 = vmatprep.subr.mxu0 0.0
    %7724 = vmatpush1.msra.mxu0 %v7182
    %7725 = vmatprep.subr.mxu0 0.0
    %7726 = vmatpush1.msra.mxu0 %v7183
    %7727 = vmatprep.subr.mxu0 0.0
    %7728 = vmatpush1.msra.mxu0 %v7184
    %7729 = vmatprep.subr.mxu0 0.0
    %7730 = vmatpush1.msra.mxu0 %v7185
    %7731 = vmatprep.subr.mxu0 0.0
    %7732 = vmatpush1.msra.mxu0 %v7186
    %7733 = vmatprep.subr.mxu0 0.0
    %7734 = vmatpush1.msra.mxu0 %v7187
    %7735 = vmatprep.subr.mxu0 0.0
    %7736 = vmatpush1.msra.mxu0 %v7188
    %7737 = vmatprep.subr.mxu0 0.0
    %7738 = vmatpush1.msra.mxu0 %v7189
    %7739 = vmatprep.subr.mxu0 0.0
    %7740 = vmatpush1.msra.mxu0 %v7190
    %7741 = vmatprep.subr.mxu0 0.0
    %7742 = vmatpush1.msra.mxu0 %v7191
    %7743 = vmatprep.subr.mxu0 0.0
    %7744 = vmatpush1.msra.mxu0 %v7192
    %7745 = vmatprep.subr.mxu0 0.0
    %7746 = vmatpush1.msra.mxu0 %v7193
    %7747 = vmatprep.subr.mxu0 0.0
    %7748 = vmatpush1.msra.mxu0 %v7194
    %7749 = vmatprep.mubr.f32.mxu0 %v6938
    %7750 = vmatmul.mubr.f32.gmra.mrb[0].mxu0 %v6937
    %v7751 = vpop.f32.mrb[0].mxu0
    %v7752 = vadd.f32 %v7682, %v7751
    %v7753 = vpop.f32.mrb[0].mxu0
    %7754 = vdwg.mxu0
    %v7755 = vrcp.pop %v7752
    %v7757 = vrot.slane %v7755, 4
    %v7759 = vmul.f32 %v7752, %v7757
    %7760 = vst [vmem:[#allocation8 - $0x4] sm:$0xf0] %v7759
    // Predicated region
    $region30: #{tpu_custom_call.1} parent=1 // pred_check
      _
    $region31: #{tpu_custom_call.1} parent=1 // pred_check_branch
      %7762 = sbr.rel (0) target = $region33
    $region32: #{tpu_custom_call.1} parent=1 // pred_region
      %s7764 = ssub.s32 64, 64
      %7765 = vsyncadd [#allocation5], %s7764
      %s7767 = sshll.u32 [#allocation8], 4
      %s7768 = int_to_ptr.vmem [resolvable:$true] %s7767
      %7770 = dma.vmem_to_hbm [thread:$0]  %s7768, 64, %s5, [#allocation5]
    $region33: #{tpu_custom_call.1} parent=1 // pred_fallthru
      _
    // Predicated region
    $region34: #{tpu_custom_call.1} parent=1 // pred_check
      _
    $region35: #{tpu_custom_call.1} parent=1 // pred_check_branch
      %7772 = sbr.rel (0) target = $region37
    $region36: #{tpu_custom_call.1} parent=1 // pred_region
      %7773 = dma.done [#allocation5], 64
    $region37: #{tpu_custom_call.1} parent=1 // pred_fallthru
      _
    %7774 = vsyncpa [#allocation4], 1
    %7775 = vsyncpa [#allocation7], 1
    %7776 = vsyncpa [#allocation5], 1

</llo_original>
